<compile_context>
chip_gen: v7x
topology: tpu7x:2x2x1
jax: 0.10.0
libtpu: 0.0.40
codegen_flags: <defaults>
</compile_context>

<pallas_src>
import functools
import math

import numpy as np
import jax
import jax.numpy as jnp
from jax import lax
from jax.experimental import pallas as pl
from jax.experimental.pallas import tpu as pltpu  # noqa: F401  (default VMEM placement)

EPS = 1e-5
INV_SQRT2 = 1.0 / math.sqrt(2.0)
KSIZE, STRIDE, PAD = 7, 3, 3


def _gelu(y):
    # exact GELU (PyTorch nn.GELU default, approximate='none')
    return 0.5 * y * (1.0 + lax.erf(y * INV_SQRT2))


def _conv_out_len(t_in):
    return (t_in + 2 * PAD - KSIZE) // STRIDE + 1


# ----------------------------------------------------------------------------
# In-kernel building blocks (operate on values + whole-array VMEM refs).
# ----------------------------------------------------------------------------
def _conv_bn_gelu(x, s_ref, w_ref, b_ref):
    """Conv1d(k=7,s=3,p=3) of both branches + folded BN + GELU.

    x:      (rows_in, C_in)  activation value
    s_ref:  (7, rows_out, rows_in)  0/1 gather operator per tap (zero rows = padding)
    w_ref:  (7, C_in, C_out)        BN-folded, branch-block-diagonal tap weights
    b_ref:  (1, C_out)              BN-folded bias
    """
    acc = None
    for k in range(s_ref.shape[0]):
        g = jnp.dot(s_ref[k], x, preferred_element_type=jnp.float32)       # (rows_out, C_in)
        t = jnp.dot(g, w_ref[k], preferred_element_type=jnp.float32)       # (rows_out, C_out)
        acc = t if acc is None else acc + t
    return _gelu(acc + b_ref[...])


def _bigru(x, wi_ref, bi_ref, wh_ref, bn_ref, T, B):
    """Fused bidirectional GRU layer on time-major rows (row = t*B + b).

    Lane layout of the packed gate axis (6H): [r_f|r_b|z_f|z_b|n_f|n_b].
    Packed hidden state h: (B, 2H) = [h_f | h_b]; w_hh is (2H, 6H) block-diagonal,
    so each step does one MXU matmul for both directions (kept packed: optimal on
    v6e/v7x; acceptable at these sizes on v5e).
    """
    H = wh_ref.shape[0] // 2
    H2, H4, H6 = 2 * H, 4 * H, 6 * H
    g_all = jnp.dot(x, wi_ref[...], preferred_element_type=jnp.float32) + bi_ref[...]

    lane6 = lax.broadcasted_iota(jnp.int32, (1, H6), 1)
    is_fwd6 = (lane6 % H2) < H
    lane2 = lax.broadcasted_iota(jnp.int32, (1, H2), 1)
    is_fwd2 = lane2 < H

    # h-independent fwd/bwd gate selection hoisted off the serial dependence chain
    g_sel = [jnp.where(is_fwd6,
                       g_all[s * B:(s + 1) * B],
                       g_all[(T - 1 - s) * B:(T - s) * B]) for s in range(T)]

    w_hh = wh_ref[...]
    b_hn = bn_ref[...]
    h = jnp.zeros((B, H2), jnp.float32)          # carried in vregs
    hs = []
    for s in range(T):                           # statically unrolled (T is small)
        g = g_sel[s]
        hh = (jnp.zeros((B, H6), jnp.float32) if s == 0
              else jnp.dot(h, w_hh, preferred_element_type=jnp.float32))
        r = jax.nn.sigmoid(g[:, :H2] + hh[:, :H2])
        z = jax.nn.sigmoid(g[:, H2:H4] + hh[:, H2:H4])
        n = jnp.tanh(g[:, H4:] + r * (hh[:, H4:] + b_hn))
        h = (1.0 - z) * n + z * h
        hs.append(h)

    # output at time t = [fwd hidden at step t | bwd hidden at step T-1-t]
    outs = [jnp.where(is_fwd2, hs[t], hs[T - 1 - t]) for t in range(T)]
    return jnp.concatenate(outs, axis=0)         # (T*B, 2H), time-major


# ----------------------------------------------------------------------------
# The single fused kernel: encoders + fcn2/bn2 + GRU1 + GRU2 + decoder heads.
# ----------------------------------------------------------------------------
def _fused_kernel(x_ref,
                  s1_ref, w1_ref, b1_ref,
                  s2_ref, w2_ref, b2_ref,
                  w3_ref, b3_ref,
                  g1wi_ref, g1bi_ref, g1wh_ref, g1bn_ref,
                  g2wi_ref, g2bi_ref, g2wh_ref, g2bn_ref,
                  pout_ref, wd1_ref, bd1_ref, wd2_ref, bd2_ref,
                  o_ref, *, B, propcov):
    f32 = jnp.float32
    T2 = o_ref.shape[0] // B

    x = x_ref[...].astype(f32)                                   # (B*T, 9) batch-major rows

    # encoder conv layer 1 (both branches fused; gather reorders rows to time-major)
    y1 = _conv_bn_gelu(x, s1_ref, w1_ref, b1_ref)                # (T1*B, 64)
    # encoder conv layer 2 (both branches fused)
    y2 = _conv_bn_gelu(y1, s2_ref, w2_ref, b2_ref)               # (T2*B, 128) [feat|ori]
    # fcn2 + batchnorm2 (folded) + GELU ; Dropout(0.5) = identity in eval mode
    x3 = _gelu(jnp.dot(y2, w3_ref[...], preferred_element_type=f32) + b3_ref[...])   # (T2*B, 64)

    # bidirectional GRU stack (time-major rows, packed lanes)
    h1 = _bigru(x3, g1wi_ref, g1bi_ref, g1wh_ref, g1bn_ref, T2, B)   # (T2*B, 128)
    h2 = _bigru(h1, g2wi_ref, g2bi_ref, g2wh_ref, g2bn_ref, T2, B)   # (T2*B, 256)

    # reorder rows to batch-major via a tiny permutation matmul, then fused
    # vel / cov decoder heads; exp(y-5) applied to the cov lanes.
    xd = jnp.dot(pout_ref[...], h2, preferred_element_type=f32)      # (B*T2, 256)
    d = _gelu(jnp.dot(xd, wd1_ref[...], preferred_element_type=f32) + bd1_ref[...])
    y = jnp.dot(d, wd2_ref[...], preferred_element_type=f32) + bd2_ref[...]   # (B*T2, 128)
    if propcov:
        lane = lax.broadcasted_iota(jnp.int32, y.shape, 1)
        y = jnp.where((lane >= 3) & (lane < 6), jnp.exp(y - 5.0), y)
    o_ref[...] = y                                                # lane-dense (128) store


# ----------------------------------------------------------------------------
# One-time weight packing (hoisted out of the per-call path).
# ----------------------------------------------------------------------------
def _conv_select(t_in, t_out, B, in_time_major):
    """0/1 gather operators (one per tap) implementing im2col + zero padding +
    (for conv1) the batch-major -> time-major row reorder, as plain matmuls."""
    S = np.zeros((KSIZE, t_out * B, t_in * B), np.float32)
    for k in range(KSIZE):
        for t in range(t_out):
            src = STRIDE * t - PAD + k
            if 0 <= src < t_in:
                for b in range(B):
                    col = src * B + b if in_time_major else b * t_in + src
                    S[k, t * B + b, col] = 1.0
    return jnp.asarray(S)


def _out_perm(t_out, B):
    """Permutation matrix: time-major rows (t*B+b) -> batch-major rows (b*T2+t)."""
    P = np.zeros((B * t_out, t_out * B), np.float32)
    for b in range(B):
        for t in range(t_out):
            P[b * t_out + t, t * B + b] = 1.0
    return jnp.asarray(P)


def prepare_params(params, batch_size, seq_len, propcov=True):
    """Pack / fold all weights once.  Returns a dict of arrays for the forward."""
    B, T = batch_size, seq_len
    T1 = _conv_out_len(T)
    T2 = _conv_out_len(T1)

    def bn_fold(bn):
        scale = bn["gamma"] / jnp.sqrt(bn["var"] + EPS)
        shift = bn["beta"] - bn["mean"] * scale
        return scale.astype(jnp.float32), shift.astype(jnp.float32)

    def fused_conv_taps(lf, lo):
        wf = lf["conv"]["w"].astype(jnp.float32)   # (cout_f, cin_f, 7)
        bf = lf["conv"]["b"].astype(jnp.float32)
        wo = lo["conv"]["w"].astype(jnp.float32)
        bo = lo["conv"]["b"].astype(jnp.float32)
        sf, hf = bn_fold(lf["bn"])
        so, ho = bn_fold(lo["bn"])
        cof, cif, K = wf.shape
        coo, cio, _ = wo.shape
        w = jnp.zeros((K, cif + cio, cof + coo), jnp.float32)
        w = w.at[:, :cif, :cof].set(jnp.transpose(wf, (2, 1, 0)) * sf)
        w = w.at[:, cif:, cof:].set(jnp.transpose(wo, (2, 1, 0)) * so)
        b = jnp.concatenate([bf * sf + hf, bo * so + ho]).reshape(1, cof + coo)
        return w, b

    def pack_bigru(fwd, bwd, H):
        w_ih_f, w_hh_f, b_ih_f, b_hh_f = [a.astype(jnp.float32) for a in fwd]
        w_ih_b, w_hh_b, b_ih_b, b_hh_b = [a.astype(jnp.float32) for a in bwd]
        g = lambda a, i: a[i * H:(i + 1) * H]
        w_in = jnp.concatenate([g(w_ih_f, 0).T, g(w_ih_b, 0).T,
                                g(w_ih_f, 1).T, g(w_ih_b, 1).T,
                                g(w_ih_f, 2).T, g(w_ih_b, 2).T], axis=1)
        b_in = jnp.concatenate([g(b_ih_f, 0) + g(b_hh_f, 0), g(b_ih_b, 0) + g(b_hh_b, 0),
                                g(b_ih_f, 1) + g(b_hh_f, 1), g(b_ih_b, 1) + g(b_hh_b, 1),
                                g(b_ih_f, 2), g(b_ih_b, 2)]).reshape(1, 6 * H)
        zH = jnp.zeros((H, H), jnp.float32)
        top = jnp.concatenate([g(w_hh_f, 0).T, zH, g(w_hh_f, 1).T, zH, g(w_hh_f, 2).T, zH],
                              axis=1)
        bot = jnp.concatenate([zH, g(w_hh_b, 0).T, zH, g(w_hh_b, 1).T, zH, g(w_hh_b, 2).T],
                              axis=1)
        w_hh = jnp.concatenate([top, bot], axis=0)          # (2H, 6H) block-diagonal
        b_hn = jnp.concatenate([g(b_hh_f, 2), g(b_hh_b, 2)]).reshape(1, 2 * H)
        return w_in, b_in, w_hh, b_hn

    fe = params["feature_encoder"]["layers"]
    oe = params["ori_encoder"]["layers"]
    w1, b1 = fused_conv_taps(fe[0], oe[0])                  # (7, 9, 64), (1, 64)
    w2, b2 = fused_conv_taps(fe[1], oe[1])                  # (7, 64, 128), (1, 128)

    sc2, sh2 = bn_fold(params["batchnorm2"])
    w3 = params["fcn2"]["w"].astype(jnp.float32).T * sc2    # (128, 64)
    b3 = (params["fcn2"]["b"].astype(jnp.float32) * sc2 + sh2).reshape(1, -1)

    g1 = pack_bigru(params["gru1"]["fwd"], params["gru1"]["bwd"], 64)
    g2 = pack_bigru(params["gru2"]["fwd"], params["gru2"]["bwd"], 128)

    vd0, vd1 = params["veldecoder"]
    if propcov:
        cd0, cd1 = params["velcov_decoder"]
        wd1 = jnp.concatenate([vd0["w"].T, cd0["w"].T], axis=1).astype(jnp.float32)   # (256, 256)
        bd1 = jnp.concatenate([vd0["b"], cd0["b"]]).reshape(1, -1).astype(jnp.float32)
        wd2 = jnp.zeros((256, 128), jnp.float32)
        wd2 = wd2.at[:128, 0:3].set(vd1["w"].T).at[128:, 3:6].set(cd1["w"].T)
        bd2 = jnp.zeros((1, 128), jnp.float32)
        bd2 = bd2.at[0, 0:3].set(vd1["b"]).at[0, 3:6].set(cd1["b"])
    else:
        wd1 = vd0["w"].T.astype(jnp.float32)
        bd1 = vd0["b"].reshape(1, -1).astype(jnp.float32)
        wd2 = jnp.zeros((128, 128), jnp.float32).at[:, 0:3].set(vd1["w"].T)
        bd2 = jnp.zeros((1, 128), jnp.float32).at[0, 0:3].set(vd1["b"])

    return {
        "s1": _conv_select(T, T1, B, in_time_major=False),
        "w1": w1, "b1": b1,
        "s2": _conv_select(T1, T2, B, in_time_major=True),
        "w2": w2, "b2": b2,
        "w3": w3, "b3": b3,
        "g1wi": g1[0], "g1bi": g1[1], "g1wh": g1[2], "g1bn": g1[3],
        "g2wi": g2[0], "g2bi": g2[1], "g2wh": g2[2], "g2bn": g2[3],
        "pout": _out_perm(T2, B),
        "wd1": wd1, "bd1": bd1, "wd2": wd2, "bd2": bd2,
    }


# ----------------------------------------------------------------------------
# Forward pass (per-call path: 1 concat + 1 pallas_call + reshape/slices).
# ----------------------------------------------------------------------------
def codenet_motion_with_rot_forward(packed, data, rot, *, propcov=True):
    acc, gyro = data["acc"], data["gyro"]
    B, T, _ = acc.shape
    assert packed["s1"].shape[2] == B * T, "packed params prepared for a different (B, T)"

    x = jnp.concatenate([acc, gyro, rot], axis=-1).astype(jnp.float32)   # (B, T, 9)
    x = x.reshape(B * T, 9)                                              # batch-major rows

    out_rows = packed["pout"].shape[0]          # B * T2
    out_cols = packed["wd2"].shape[1]           # 128 (lane-dense)
    T2 = out_rows // B

    y = pl.pallas_call(
        functools.partial(_fused_kernel, B=B, propcov=propcov),
        out_shape=jax.ShapeDtypeStruct((out_rows, out_cols), jnp.float32),
    )(x,
      packed["s1"], packed["w1"], packed["b1"],
      packed["s2"], packed["w2"], packed["b2"],
      packed["w3"], packed["b3"],
      packed["g1wi"], packed["g1bi"], packed["g1wh"], packed["g1bn"],
      packed["g2wi"], packed["g2bi"], packed["g2wh"], packed["g2bn"],
      packed["pout"], packed["wd1"], packed["bd1"], packed["wd2"], packed["bd2"])

    y = y.reshape(B, T2, out_cols)
    net_vel = y[:, :, 0:3]
    cov = y[:, :, 3:6] if propcov else None
    return {"cov": cov, "net_vel": net_vel}


# ----------------------------------------------------------------------------
# Deterministic parameter initialization (PyTorch-style shapes / bounds).
# ----------------------------------------------------------------------------
def init_params(key):
    keys = iter(jax.random.split(key, 64))

    def lin(out_f, in_f):
        bound = 1.0 / math.sqrt(in_f)
        return {"w": jax.random.uniform(next(keys), (out_f, in_f), jnp.float32, -bound, bound),
                "b": jax.random.uniform(next(keys), (out_f,), jnp.float32, -bound, bound)}

    def conv(c_out, c_in, k):
        bound = 1.0 / math.sqrt(c_in * k)
        return {"w": jax.random.uniform(next(keys), (c_out, c_in, k), jnp.float32, -bound, bound),
                "b": jax.random.uniform(next(keys), (c_out,), jnp.float32, -bound, bound)}

    def bn(c):
        return {"gamma": 1.0 + 0.1 * jax.random.normal(next(keys), (c,), jnp.float32),
                "beta": 0.1 * jax.random.normal(next(keys), (c,), jnp.float32),
                "mean": 0.1 * jax.random.normal(next(keys), (c,), jnp.float32),
                "var": jnp.ones((c,), jnp.float32)}

    def cnn(c_list, k=7):
        return {"layers": [{"conv": conv(c_list[i + 1], c_list[i], k),
                            "bn": bn(c_list[i + 1])}
                           for i in range(len(c_list) - 1)]}

    def gru_dir(inp, hid):
        bound = 1.0 / math.sqrt(hid)
        u = lambda shape: jax.random.uniform(next(keys), shape, jnp.float32, -bound, bound)
        return (u((3 * hid, inp)), u((3 * hid, hid)), u((3 * hid,)), u((3 * hid,)))

    return {
        "feature_encoder": cnn([6, 32, 64]),
        "ori_encoder": cnn([3, 32, 64]),
        "fcn2": lin(64, 128),
        "batchnorm2": bn(64),
        "gru1": {"fwd": gru_dir(64, 64), "bwd": gru_dir(64, 64)},
        "gru2": {"fwd": gru_dir(128, 128), "bwd": gru_dir(128, 128)},
        "veldecoder": [lin(128, 256), lin(3, 128)],
        "velcov_decoder": [lin(128, 256), lin(3, 128)],
    }


if __name__ == "__main__":
    key = jax.random.PRNGKey(0)
    kp, ka, kg, kr = jax.random.split(key, 4)
    params = init_params(kp)

    B, T = 2, 48
    packed = prepare_params(params, batch_size=B, seq_len=T, propcov=True)

    data = {"acc": jax.random.normal(ka, (B, T, 3), jnp.float32),
            "gyro": jax.random.normal(kg, (B, T, 3), jnp.float32)}
    rot = jax.random.normal(kr, (B, T, 3), jnp.float32)

    fwd = jax.jit(functools.partial(codenet_motion_with_rot_forward, propcov=True))
    out = fwd(packed, data, rot)
    jax.block_until_ready(out)

    # conv chain: 48 -> 16 -> 6 time steps
    assert out["net_vel"].shape == (B, 6, 3), out["net_vel"].shape
    assert out["cov"].shape == (B, 6, 3), out["cov"].shape
    assert bool(jnp.all(jnp.isfinite(out["net_vel"]))) and bool(jnp.all(out["cov"] > 0))
    print("KERNEL_OK")
</pallas_src>

<mosaic_0001>
module attributes {stable_mosaic.version = 11 : i64} {
  func.func @_fused_kernel(%arg0: memref<96x9xf32, #tpu.memory_space<vmem>>, %arg1: memref<7x32x96xf32, #tpu.memory_space<vmem>>, %arg2: memref<7x9x64xf32, #tpu.memory_space<vmem>>, %arg3: memref<1x64xf32, #tpu.memory_space<vmem>>, %arg4: memref<7x12x32xf32, #tpu.memory_space<vmem>>, %arg5: memref<7x64x128xf32, #tpu.memory_space<vmem>>, %arg6: memref<1x128xf32, #tpu.memory_space<vmem>>, %arg7: memref<128x64xf32, #tpu.memory_space<vmem>>, %arg8: memref<1x64xf32, #tpu.memory_space<vmem>>, %arg9: memref<64x384xf32, #tpu.memory_space<vmem>>, %arg10: memref<1x384xf32, #tpu.memory_space<vmem>>, %arg11: memref<128x384xf32, #tpu.memory_space<vmem>>, %arg12: memref<1x128xf32, #tpu.memory_space<vmem>>, %arg13: memref<128x768xf32, #tpu.memory_space<vmem>>, %arg14: memref<1x768xf32, #tpu.memory_space<vmem>>, %arg15: memref<256x768xf32, #tpu.memory_space<vmem>>, %arg16: memref<1x256xf32, #tpu.memory_space<vmem>>, %arg17: memref<12x12xf32, #tpu.memory_space<vmem>>, %arg18: memref<256x256xf32, #tpu.memory_space<vmem>>, %arg19: memref<1x256xf32, #tpu.memory_space<vmem>>, %arg20: memref<256x128xf32, #tpu.memory_space<vmem>>, %arg21: memref<1x128xf32, #tpu.memory_space<vmem>>, %arg22: memref<12x128xf32, #tpu.memory_space<vmem>>) attributes {dimension_semantics = [], scalar_prefetch = 0 : i64, scratch_operands = 0 : i64, tpu.core_type = #tpu.core_type<tc>} {
    %c0 = arith.constant 0 : index
    %c0_0 = arith.constant 0 : index
    %0 = vector.load %arg0[%c0, %c0_0] : memref<96x9xf32, #tpu.memory_space<vmem>>, vector<96x9xf32>
    %c0_1 = arith.constant 0 : index
    %c0_2 = arith.constant 0 : index
    %c0_3 = arith.constant 0 : index
    %1 = vector.load %arg1[%c0_1, %c0_2, %c0_3] : memref<7x32x96xf32, #tpu.memory_space<vmem>>, vector<1x32x96xf32>
    %2 = vector.shape_cast %1 : vector<1x32x96xf32> to vector<32x96xf32>
    %cst = arith.constant dense<0.000000e+00> : vector<32x9xf32>
    %3 = tpu.matmul %2, %0, %cst {dimension_numbers = #tpu.dot_dimension_numbers<[1], [0], [0], [1], [0, 0, 1, 1], [], []>} : vector<32x96xf32>, vector<96x9xf32>, vector<32x9xf32> -> vector<32x9xf32>
    %c0_4 = arith.constant 0 : index
    %c0_5 = arith.constant 0 : index
    %c0_6 = arith.constant 0 : index
    %4 = vector.load %arg2[%c0_4, %c0_5, %c0_6] : memref<7x9x64xf32, #tpu.memory_space<vmem>>, vector<1x9x64xf32>
    %5 = vector.shape_cast %4 : vector<1x9x64xf32> to vector<9x64xf32>
    %cst_7 = arith.constant dense<0.000000e+00> : vector<32x64xf32>
    %6 = tpu.matmul %3, %5, %cst_7 {dimension_numbers = #tpu.dot_dimension_numbers<[1], [0], [0], [1], [0, 0, 1, 1], [], []>} : vector<32x9xf32>, vector<9x64xf32>, vector<32x64xf32> -> vector<32x64xf32>
    %c1 = arith.constant 1 : index
    %c0_8 = arith.constant 0 : index
    %c0_9 = arith.constant 0 : index
    %7 = vector.load %arg1[%c1, %c0_8, %c0_9] : memref<7x32x96xf32, #tpu.memory_space<vmem>>, vector<1x32x96xf32>
    %8 = vector.shape_cast %7 : vector<1x32x96xf32> to vector<32x96xf32>
    %cst_10 = arith.constant dense<0.000000e+00> : vector<32x9xf32>
    %9 = tpu.matmul %8, %0, %cst_10 {dimension_numbers = #tpu.dot_dimension_numbers<[1], [0], [0], [1], [0, 0, 1, 1], [], []>} : vector<32x96xf32>, vector<96x9xf32>, vector<32x9xf32> -> vector<32x9xf32>
    %c1_11 = arith.constant 1 : index
    %c0_12 = arith.constant 0 : index
    %c0_13 = arith.constant 0 : index
    %10 = vector.load %arg2[%c1_11, %c0_12, %c0_13] : memref<7x9x64xf32, #tpu.memory_space<vmem>>, vector<1x9x64xf32>
    %11 = vector.shape_cast %10 : vector<1x9x64xf32> to vector<9x64xf32>
    %cst_14 = arith.constant dense<0.000000e+00> : vector<32x64xf32>
    %12 = tpu.matmul %9, %11, %cst_14 {dimension_numbers = #tpu.dot_dimension_numbers<[1], [0], [0], [1], [0, 0, 1, 1], [], []>} : vector<32x9xf32>, vector<9x64xf32>, vector<32x64xf32> -> vector<32x64xf32>
    %13 = arith.addf %6, %12 : vector<32x64xf32>
    %c2 = arith.constant 2 : index
    %c0_15 = arith.constant 0 : index
    %c0_16 = arith.constant 0 : index
    %14 = vector.load %arg1[%c2, %c0_15, %c0_16] : memref<7x32x96xf32, #tpu.memory_space<vmem>>, vector<1x32x96xf32>
    %15 = vector.shape_cast %14 : vector<1x32x96xf32> to vector<32x96xf32>
    %cst_17 = arith.constant dense<0.000000e+00> : vector<32x9xf32>
    %16 = tpu.matmul %15, %0, %cst_17 {dimension_numbers = #tpu.dot_dimension_numbers<[1], [0], [0], [1], [0, 0, 1, 1], [], []>} : vector<32x96xf32>, vector<96x9xf32>, vector<32x9xf32> -> vector<32x9xf32>
    %c2_18 = arith.constant 2 : index
    %c0_19 = arith.constant 0 : index
    %c0_20 = arith.constant 0 : index
    %17 = vector.load %arg2[%c2_18, %c0_19, %c0_20] : memref<7x9x64xf32, #tpu.memory_space<vmem>>, vector<1x9x64xf32>
    %18 = vector.shape_cast %17 : vector<1x9x64xf32> to vector<9x64xf32>
    %cst_21 = arith.constant dense<0.000000e+00> : vector<32x64xf32>
    %19 = tpu.matmul %16, %18, %cst_21 {dimension_numbers = #tpu.dot_dimension_numbers<[1], [0], [0], [1], [0, 0, 1, 1], [], []>} : vector<32x9xf32>, vector<9x64xf32>, vector<32x64xf32> -> vector<32x64xf32>
    %20 = arith.addf %13, %19 : vector<32x64xf32>
    %c3 = arith.constant 3 : index
    %c0_22 = arith.constant 0 : index
    %c0_23 = arith.constant 0 : index
    %21 = vector.load %arg1[%c3, %c0_22, %c0_23] : memref<7x32x96xf32, #tpu.memory_space<vmem>>, vector<1x32x96xf32>
    %22 = vector.shape_cast %21 : vector<1x32x96xf32> to vector<32x96xf32>
    %cst_24 = arith.constant dense<0.000000e+00> : vector<32x9xf32>
    %23 = tpu.matmul %22, %0, %cst_24 {dimension_numbers = #tpu.dot_dimension_numbers<[1], [0], [0], [1], [0, 0, 1, 1], [], []>} : vector<32x96xf32>, vector<96x9xf32>, vector<32x9xf32> -> vector<32x9xf32>
    %c3_25 = arith.constant 3 : index
    %c0_26 = arith.constant 0 : index
    %c0_27 = arith.constant 0 : index
    %24 = vector.load %arg2[%c3_25, %c0_26, %c0_27] : memref<7x9x64xf32, #tpu.memory_space<vmem>>, vector<1x9x64xf32>
    %25 = vector.shape_cast %24 : vector<1x9x64xf32> to vector<9x64xf32>
    %cst_28 = arith.constant dense<0.000000e+00> : vector<32x64xf32>
    %26 = tpu.matmul %23, %25, %cst_28 {dimension_numbers = #tpu.dot_dimension_numbers<[1], [0], [0], [1], [0, 0, 1, 1], [], []>} : vector<32x9xf32>, vector<9x64xf32>, vector<32x64xf32> -> vector<32x64xf32>
    %27 = arith.addf %20, %26 : vector<32x64xf32>
    %c4 = arith.constant 4 : index
    %c0_29 = arith.constant 0 : index
    %c0_30 = arith.constant 0 : index
    %28 = vector.load %arg1[%c4, %c0_29, %c0_30] : memref<7x32x96xf32, #tpu.memory_space<vmem>>, vector<1x32x96xf32>
    %29 = vector.shape_cast %28 : vector<1x32x96xf32> to vector<32x96xf32>
    %cst_31 = arith.constant dense<0.000000e+00> : vector<32x9xf32>
    %30 = tpu.matmul %29, %0, %cst_31 {dimension_numbers = #tpu.dot_dimension_numbers<[1], [0], [0], [1], [0, 0, 1, 1], [], []>} : vector<32x96xf32>, vector<96x9xf32>, vector<32x9xf32> -> vector<32x9xf32>
    %c4_32 = arith.constant 4 : index
    %c0_33 = arith.constant 0 : index
    %c0_34 = arith.constant 0 : index
    %31 = vector.load %arg2[%c4_32, %c0_33, %c0_34] : memref<7x9x64xf32, #tpu.memory_space<vmem>>, vector<1x9x64xf32>
    %32 = vector.shape_cast %31 : vector<1x9x64xf32> to vector<9x64xf32>
    %cst_35 = arith.constant dense<0.000000e+00> : vector<32x64xf32>
    %33 = tpu.matmul %30, %32, %cst_35 {dimension_numbers = #tpu.dot_dimension_numbers<[1], [0], [0], [1], [0, 0, 1, 1], [], []>} : vector<32x9xf32>, vector<9x64xf32>, vector<32x64xf32> -> vector<32x64xf32>
    %34 = arith.addf %27, %33 : vector<32x64xf32>
    %c5 = arith.constant 5 : index
    %c0_36 = arith.constant 0 : index
    %c0_37 = arith.constant 0 : index
    %35 = vector.load %arg1[%c5, %c0_36, %c0_37] : memref<7x32x96xf32, #tpu.memory_space<vmem>>, vector<1x32x96xf32>
    %36 = vector.shape_cast %35 : vector<1x32x96xf32> to vector<32x96xf32>
    %cst_38 = arith.constant dense<0.000000e+00> : vector<32x9xf32>
    %37 = tpu.matmul %36, %0, %cst_38 {dimension_numbers = #tpu.dot_dimension_numbers<[1], [0], [0], [1], [0, 0, 1, 1], [], []>} : vector<32x96xf32>, vector<96x9xf32>, vector<32x9xf32> -> vector<32x9xf32>
    %c5_39 = arith.constant 5 : index
    %c0_40 = arith.constant 0 : index
    %c0_41 = arith.constant 0 : index
    %38 = vector.load %arg2[%c5_39, %c0_40, %c0_41] : memref<7x9x64xf32, #tpu.memory_space<vmem>>, vector<1x9x64xf32>
    %39 = vector.shape_cast %38 : vector<1x9x64xf32> to vector<9x64xf32>
    %cst_42 = arith.constant dense<0.000000e+00> : vector<32x64xf32>
    %40 = tpu.matmul %37, %39, %cst_42 {dimension_numbers = #tpu.dot_dimension_numbers<[1], [0], [0], [1], [0, 0, 1, 1], [], []>} : vector<32x9xf32>, vector<9x64xf32>, vector<32x64xf32> -> vector<32x64xf32>
    %41 = arith.addf %34, %40 : vector<32x64xf32>
    %c6 = arith.constant 6 : index
    %c0_43 = arith.constant 0 : index
    %c0_44 = arith.constant 0 : index
    %42 = vector.load %arg1[%c6, %c0_43, %c0_44] : memref<7x32x96xf32, #tpu.memory_space<vmem>>, vector<1x32x96xf32>
    %43 = vector.shape_cast %42 : vector<1x32x96xf32> to vector<32x96xf32>
    %cst_45 = arith.constant dense<0.000000e+00> : vector<32x9xf32>
    %44 = tpu.matmul %43, %0, %cst_45 {dimension_numbers = #tpu.dot_dimension_numbers<[1], [0], [0], [1], [0, 0, 1, 1], [], []>} : vector<32x96xf32>, vector<96x9xf32>, vector<32x9xf32> -> vector<32x9xf32>
    %c6_46 = arith.constant 6 : index
    %c0_47 = arith.constant 0 : index
    %c0_48 = arith.constant 0 : index
    %45 = vector.load %arg2[%c6_46, %c0_47, %c0_48] : memref<7x9x64xf32, #tpu.memory_space<vmem>>, vector<1x9x64xf32>
    %46 = vector.shape_cast %45 : vector<1x9x64xf32> to vector<9x64xf32>
    %cst_49 = arith.constant dense<0.000000e+00> : vector<32x64xf32>
    %47 = tpu.matmul %44, %46, %cst_49 {dimension_numbers = #tpu.dot_dimension_numbers<[1], [0], [0], [1], [0, 0, 1, 1], [], []>} : vector<32x9xf32>, vector<9x64xf32>, vector<32x64xf32> -> vector<32x64xf32>
    %48 = arith.addf %41, %47 : vector<32x64xf32>
    %c0_50 = arith.constant 0 : index
    %c0_51 = arith.constant 0 : index
    %49 = vector.load %arg3[%c0_50, %c0_51] : memref<1x64xf32, #tpu.memory_space<vmem>>, vector<1x64xf32>
    %50 = vector.broadcast %49 : vector<1x64xf32> to vector<32x64xf32>
    %51 = arith.addf %48, %50 : vector<32x64xf32>
    %cst_52 = arith.constant 5.000000e-01 : f32
    %52 = vector.broadcast %cst_52 : f32 to vector<32x64xf32>
    %53 = arith.mulf %52, %51 : vector<32x64xf32>
    %cst_53 = arith.constant 0.707106769 : f32
    %54 = vector.broadcast %cst_53 : f32 to vector<32x64xf32>
    %55 = arith.mulf %51, %54 : vector<32x64xf32>
    %56 = math.erf %55 : vector<32x64xf32>
    %cst_54 = arith.constant 1.000000e+00 : f32
    %57 = vector.broadcast %cst_54 : f32 to vector<32x64xf32>
    %58 = arith.addf %57, %56 : vector<32x64xf32>
    %59 = arith.mulf %53, %58 : vector<32x64xf32>
    %c0_55 = arith.constant 0 : index
    %c0_56 = arith.constant 0 : index
    %c0_57 = arith.constant 0 : index
    %60 = vector.load %arg4[%c0_55, %c0_56, %c0_57] : memref<7x12x32xf32, #tpu.memory_space<vmem>>, vector<1x12x32xf32>
    %61 = vector.shape_cast %60 : vector<1x12x32xf32> to vector<12x32xf32>
    %cst_58 = arith.constant dense<0.000000e+00> : vector<12x64xf32>
    %62 = tpu.matmul %61, %59, %cst_58 {dimension_numbers = #tpu.dot_dimension_numbers<[1], [0], [0], [1], [0, 0, 1, 1], [], []>} : vector<12x32xf32>, vector<32x64xf32>, vector<12x64xf32> -> vector<12x64xf32>
    %c0_59 = arith.constant 0 : index
    %c0_60 = arith.constant 0 : index
    %c0_61 = arith.constant 0 : index
    %63 = vector.load %arg5[%c0_59, %c0_60, %c0_61] : memref<7x64x128xf32, #tpu.memory_space<vmem>>, vector<1x64x128xf32>
    %64 = vector.shape_cast %63 : vector<1x64x128xf32> to vector<64x128xf32>
    %cst_62 = arith.constant dense<0.000000e+00> : vector<12x128xf32>
    %65 = tpu.matmul %62, %64, %cst_62 {dimension_numbers = #tpu.dot_dimension_numbers<[1], [0], [0], [1], [0, 0, 1, 1], [], []>} : vector<12x64xf32>, vector<64x128xf32>, vector<12x128xf32> -> vector<12x128xf32>
    %c1_63 = arith.constant 1 : index
    %c0_64 = arith.constant 0 : index
    %c0_65 = arith.constant 0 : index
    %66 = vector.load %arg4[%c1_63, %c0_64, %c0_65] : memref<7x12x32xf32, #tpu.memory_space<vmem>>, vector<1x12x32xf32>
    %67 = vector.shape_cast %66 : vector<1x12x32xf32> to vector<12x32xf32>
    %cst_66 = arith.constant dense<0.000000e+00> : vector<12x64xf32>
    %68 = tpu.matmul %67, %59, %cst_66 {dimension_numbers = #tpu.dot_dimension_numbers<[1], [0], [0], [1], [0, 0, 1, 1], [], []>} : vector<12x32xf32>, vector<32x64xf32>, vector<12x64xf32> -> vector<12x64xf32>
    %c1_67 = arith.constant 1 : index
    %c0_68 = arith.constant 0 : index
    %c0_69 = arith.constant 0 : index
    %69 = vector.load %arg5[%c1_67, %c0_68, %c0_69] : memref<7x64x128xf32, #tpu.memory_space<vmem>>, vector<1x64x128xf32>
    %70 = vector.shape_cast %69 : vector<1x64x128xf32> to vector<64x128xf32>
    %cst_70 = arith.constant dense<0.000000e+00> : vector<12x128xf32>
    %71 = tpu.matmul %68, %70, %cst_70 {dimension_numbers = #tpu.dot_dimension_numbers<[1], [0], [0], [1], [0, 0, 1, 1], [], []>} : vector<12x64xf32>, vector<64x128xf32>, vector<12x128xf32> -> vector<12x128xf32>
    %72 = arith.addf %65, %71 : vector<12x128xf32>
    %c2_71 = arith.constant 2 : index
    %c0_72 = arith.constant 0 : index
    %c0_73 = arith.constant 0 : index
    %73 = vector.load %arg4[%c2_71, %c0_72, %c0_73] : memref<7x12x32xf32, #tpu.memory_space<vmem>>, vector<1x12x32xf32>
    %74 = vector.shape_cast %73 : vector<1x12x32xf32> to vector<12x32xf32>
    %cst_74 = arith.constant dense<0.000000e+00> : vector<12x64xf32>
    %75 = tpu.matmul %74, %59, %cst_74 {dimension_numbers = #tpu.dot_dimension_numbers<[1], [0], [0], [1], [0, 0, 1, 1], [], []>} : vector<12x32xf32>, vector<32x64xf32>, vector<12x64xf32> -> vector<12x64xf32>
    %c2_75 = arith.constant 2 : index
    %c0_76 = arith.constant 0 : index
    %c0_77 = arith.constant 0 : index
    %76 = vector.load %arg5[%c2_75, %c0_76, %c0_77] : memref<7x64x128xf32, #tpu.memory_space<vmem>>, vector<1x64x128xf32>
    %77 = vector.shape_cast %76 : vector<1x64x128xf32> to vector<64x128xf32>
    %cst_78 = arith.constant dense<0.000000e+00> : vector<12x128xf32>
    %78 = tpu.matmul %75, %77, %cst_78 {dimension_numbers = #tpu.dot_dimension_numbers<[1], [0], [0], [1], [0, 0, 1, 1], [], []>} : vector<12x64xf32>, vector<64x128xf32>, vector<12x128xf32> -> vector<12x128xf32>
    %79 = arith.addf %72, %78 : vector<12x128xf32>
    %c3_79 = arith.constant 3 : index
    %c0_80 = arith.constant 0 : index
    %c0_81 = arith.constant 0 : index
    %80 = vector.load %arg4[%c3_79, %c0_80, %c0_81] : memref<7x12x32xf32, #tpu.memory_space<vmem>>, vector<1x12x32xf32>
    %81 = vector.shape_cast %80 : vector<1x12x32xf32> to vector<12x32xf32>
    %cst_82 = arith.constant dense<0.000000e+00> : vector<12x64xf32>
    %82 = tpu.matmul %81, %59, %cst_82 {dimension_numbers = #tpu.dot_dimension_numbers<[1], [0], [0], [1], [0, 0, 1, 1], [], []>} : vector<12x32xf32>, vector<32x64xf32>, vector<12x64xf32> -> vector<12x64xf32>
    %c3_83 = arith.constant 3 : index
    %c0_84 = arith.constant 0 : index
    %c0_85 = arith.constant 0 : index
    %83 = vector.load %arg5[%c3_83, %c0_84, %c0_85] : memref<7x64x128xf32, #tpu.memory_space<vmem>>, vector<1x64x128xf32>
    %84 = vector.shape_cast %83 : vector<1x64x128xf32> to vector<64x128xf32>
    %cst_86 = arith.constant dense<0.000000e+00> : vector<12x128xf32>
    %85 = tpu.matmul %82, %84, %cst_86 {dimension_numbers = #tpu.dot_dimension_numbers<[1], [0], [0], [1], [0, 0, 1, 1], [], []>} : vector<12x64xf32>, vector<64x128xf32>, vector<12x128xf32> -> vector<12x128xf32>
    %86 = arith.addf %79, %85 : vector<12x128xf32>
    %c4_87 = arith.constant 4 : index
    %c0_88 = arith.constant 0 : index
    %c0_89 = arith.constant 0 : index
    %87 = vector.load %arg4[%c4_87, %c0_88, %c0_89] : memref<7x12x32xf32, #tpu.memory_space<vmem>>, vector<1x12x32xf32>
    %88 = vector.shape_cast %87 : vector<1x12x32xf32> to vector<12x32xf32>
    %cst_90 = arith.constant dense<0.000000e+00> : vector<12x64xf32>
    %89 = tpu.matmul %88, %59, %cst_90 {dimension_numbers = #tpu.dot_dimension_numbers<[1], [0], [0], [1], [0, 0, 1, 1], [], []>} : vector<12x32xf32>, vector<32x64xf32>, vector<12x64xf32> -> vector<12x64xf32>
    %c4_91 = arith.constant 4 : index
    %c0_92 = arith.constant 0 : index
    %c0_93 = arith.constant 0 : index
    %90 = vector.load %arg5[%c4_91, %c0_92, %c0_93] : memref<7x64x128xf32, #tpu.memory_space<vmem>>, vector<1x64x128xf32>
    %91 = vector.shape_cast %90 : vector<1x64x128xf32> to vector<64x128xf32>
    %cst_94 = arith.constant dense<0.000000e+00> : vector<12x128xf32>
    %92 = tpu.matmul %89, %91, %cst_94 {dimension_numbers = #tpu.dot_dimension_numbers<[1], [0], [0], [1], [0, 0, 1, 1], [], []>} : vector<12x64xf32>, vector<64x128xf32>, vector<12x128xf32> -> vector<12x128xf32>
    %93 = arith.addf %86, %92 : vector<12x128xf32>
    %c5_95 = arith.constant 5 : index
    %c0_96 = arith.constant 0 : index
    %c0_97 = arith.constant 0 : index
    %94 = vector.load %arg4[%c5_95, %c0_96, %c0_97] : memref<7x12x32xf32, #tpu.memory_space<vmem>>, vector<1x12x32xf32>
    %95 = vector.shape_cast %94 : vector<1x12x32xf32> to vector<12x32xf32>
    %cst_98 = arith.constant dense<0.000000e+00> : vector<12x64xf32>
    %96 = tpu.matmul %95, %59, %cst_98 {dimension_numbers = #tpu.dot_dimension_numbers<[1], [0], [0], [1], [0, 0, 1, 1], [], []>} : vector<12x32xf32>, vector<32x64xf32>, vector<12x64xf32> -> vector<12x64xf32>
    %c5_99 = arith.constant 5 : index
    %c0_100 = arith.constant 0 : index
    %c0_101 = arith.constant 0 : index
    %97 = vector.load %arg5[%c5_99, %c0_100, %c0_101] : memref<7x64x128xf32, #tpu.memory_space<vmem>>, vector<1x64x128xf32>
    %98 = vector.shape_cast %97 : vector<1x64x128xf32> to vector<64x128xf32>
    %cst_102 = arith.constant dense<0.000000e+00> : vector<12x128xf32>
    %99 = tpu.matmul %96, %98, %cst_102 {dimension_numbers = #tpu.dot_dimension_numbers<[1], [0], [0], [1], [0, 0, 1, 1], [], []>} : vector<12x64xf32>, vector<64x128xf32>, vector<12x128xf32> -> vector<12x128xf32>
    %100 = arith.addf %93, %99 : vector<12x128xf32>
    %c6_103 = arith.constant 6 : index
    %c0_104 = arith.constant 0 : index
    %c0_105 = arith.constant 0 : index
    %101 = vector.load %arg4[%c6_103, %c0_104, %c0_105] : memref<7x12x32xf32, #tpu.memory_space<vmem>>, vector<1x12x32xf32>
    %102 = vector.shape_cast %101 : vector<1x12x32xf32> to vector<12x32xf32>
    %cst_106 = arith.constant dense<0.000000e+00> : vector<12x64xf32>
    %103 = tpu.matmul %102, %59, %cst_106 {dimension_numbers = #tpu.dot_dimension_numbers<[1], [0], [0], [1], [0, 0, 1, 1], [], []>} : vector<12x32xf32>, vector<32x64xf32>, vector<12x64xf32> -> vector<12x64xf32>
    %c6_107 = arith.constant 6 : index
    %c0_108 = arith.constant 0 : index
    %c0_109 = arith.constant 0 : index
    %104 = vector.load %arg5[%c6_107, %c0_108, %c0_109] : memref<7x64x128xf32, #tpu.memory_space<vmem>>, vector<1x64x128xf32>
    %105 = vector.shape_cast %104 : vector<1x64x128xf32> to vector<64x128xf32>
    %cst_110 = arith.constant dense<0.000000e+00> : vector<12x128xf32>
    %106 = tpu.matmul %103, %105, %cst_110 {dimension_numbers = #tpu.dot_dimension_numbers<[1], [0], [0], [1], [0, 0, 1, 1], [], []>} : vector<12x64xf32>, vector<64x128xf32>, vector<12x128xf32> -> vector<12x128xf32>
    %107 = arith.addf %100, %106 : vector<12x128xf32>
    %c0_111 = arith.constant 0 : index
    %c0_112 = arith.constant 0 : index
    %108 = vector.load %arg6[%c0_111, %c0_112] : memref<1x128xf32, #tpu.memory_space<vmem>>, vector<1x128xf32>
    %109 = vector.broadcast %108 : vector<1x128xf32> to vector<12x128xf32>
    %110 = arith.addf %107, %109 : vector<12x128xf32>
    %cst_113 = arith.constant 5.000000e-01 : f32
    %111 = vector.broadcast %cst_113 : f32 to vector<12x128xf32>
    %112 = arith.mulf %111, %110 : vector<12x128xf32>
    %cst_114 = arith.constant 0.707106769 : f32
    %113 = vector.broadcast %cst_114 : f32 to vector<12x128xf32>
    %114 = arith.mulf %110, %113 : vector<12x128xf32>
    %115 = math.erf %114 : vector<12x128xf32>
    %cst_115 = arith.constant 1.000000e+00 : f32
    %116 = vector.broadcast %cst_115 : f32 to vector<12x128xf32>
    %117 = arith.addf %116, %115 : vector<12x128xf32>
    %118 = arith.mulf %112, %117 : vector<12x128xf32>
    %c0_116 = arith.constant 0 : index
    %c0_117 = arith.constant 0 : index
    %119 = vector.load %arg7[%c0_116, %c0_117] : memref<128x64xf32, #tpu.memory_space<vmem>>, vector<128x64xf32>
    %cst_118 = arith.constant dense<0.000000e+00> : vector<12x64xf32>
    %120 = tpu.matmul %118, %119, %cst_118 {dimension_numbers = #tpu.dot_dimension_numbers<[1], [0], [0], [1], [0, 0, 1, 1], [], []>} : vector<12x128xf32>, vector<128x64xf32>, vector<12x64xf32> -> vector<12x64xf32>
    %c0_119 = arith.constant 0 : index
    %c0_120 = arith.constant 0 : index
    %121 = vector.load %arg8[%c0_119, %c0_120] : memref<1x64xf32, #tpu.memory_space<vmem>>, vector<1x64xf32>
    %122 = vector.broadcast %121 : vector<1x64xf32> to vector<12x64xf32>
    %123 = arith.addf %120, %122 : vector<12x64xf32>
    %cst_121 = arith.constant 5.000000e-01 : f32
    %124 = vector.broadcast %cst_121 : f32 to vector<12x64xf32>
    %125 = arith.mulf %124, %123 : vector<12x64xf32>
    %cst_122 = arith.constant 0.707106769 : f32
    %126 = vector.broadcast %cst_122 : f32 to vector<12x64xf32>
    %127 = arith.mulf %123, %126 : vector<12x64xf32>
    %128 = math.erf %127 : vector<12x64xf32>
    %cst_123 = arith.constant 1.000000e+00 : f32
    %129 = vector.broadcast %cst_123 : f32 to vector<12x64xf32>
    %130 = arith.addf %129, %128 : vector<12x64xf32>
    %131 = arith.mulf %125, %130 : vector<12x64xf32>
    %c0_124 = arith.constant 0 : index
    %c0_125 = arith.constant 0 : index
    %132 = vector.load %arg9[%c0_124, %c0_125] : memref<64x384xf32, #tpu.memory_space<vmem>>, vector<64x384xf32>
    %cst_126 = arith.constant dense<0.000000e+00> : vector<12x384xf32>
    %133 = tpu.matmul %131, %132, %cst_126 {dimension_numbers = #tpu.dot_dimension_numbers<[1], [0], [0], [1], [0, 0, 1, 1], [], []>} : vector<12x64xf32>, vector<64x384xf32>, vector<12x384xf32> -> vector<12x384xf32>
    %c0_127 = arith.constant 0 : index
    %c0_128 = arith.constant 0 : index
    %134 = vector.load %arg10[%c0_127, %c0_128] : memref<1x384xf32, #tpu.memory_space<vmem>>, vector<1x384xf32>
    %135 = vector.broadcast %134 : vector<1x384xf32> to vector<12x384xf32>
    %136 = arith.addf %133, %135 : vector<12x384xf32>
    %137 = tpu.iota {dimensions = array<i32: 1>} : vector<1x384xi32>
    %c128_i32 = arith.constant 128 : i32
    %c0_i32 = arith.constant 0 : i32
    %138 = arith.cmpi eq, %c128_i32, %c0_i32 : i32
    %c1_i32 = arith.constant 1 : i32
    %139 = arith.select %138, %c1_i32, %c128_i32 : i32
    %140 = vector.broadcast %139 : i32 to vector<1x384xi32>
    %141 = arith.remsi %137, %140 : vector<1x384xi32>
    %c0_i32_129 = arith.constant 0 : i32
    %142 = vector.broadcast %c0_i32_129 : i32 to vector<1x384xi32>
    %143 = arith.cmpi ne, %141, %142 : vector<1x384xi32>
    %c0_i32_130 = arith.constant 0 : i32
    %144 = vector.broadcast %c0_i32_130 : i32 to vector<1x384xi32>
    %145 = arith.cmpi slt, %141, %144 : vector<1x384xi32>
    %c0_i32_131 = arith.constant 0 : i32
    %146 = arith.cmpi slt, %139, %c0_i32_131 : i32
    %147 = vector.broadcast %146 : i1 to vector<1x384xi1>
    %148 = vector.broadcast %147 : vector<1x384xi1> to vector<1x384xi1>
    %149 = arith.xori %145, %148 : vector<1x384xi1>
    %150 = arith.andi %149, %143 : vector<1x384xi1>
    %151 = vector.broadcast %139 : i32 to vector<1x384xi32>
    %152 = arith.addi %141, %151 : vector<1x384xi32>
    %153 = arith.select %150, %152, %141 : vector<1x384xi1>, vector<1x384xi32>
    %c64_i32 = arith.constant 64 : i32
    %154 = vector.broadcast %c64_i32 : i32 to vector<1x384xi32>
    %155 = arith.cmpi slt, %153, %154 : vector<1x384xi32>
    %156 = tpu.iota {dimensions = array<i32: 1>} : vector<1x128xi32>
    %c64_i32_132 = arith.constant 64 : i32
    %157 = vector.broadcast %c64_i32_132 : i32 to vector<1x128xi32>
    %158 = arith.cmpi slt, %156, %157 : vector<1x128xi32>
    %159 = vector.extract_strided_slice %136 {offsets = [0, 0], sizes = [2, 384], strides = [1, 1]} : vector<12x384xf32> to vector<2x384xf32>
    %160 = vector.extract_strided_slice %136 {offsets = [10, 0], sizes = [2, 384], strides = [1, 1]} : vector<12x384xf32> to vector<2x384xf32>
    %161 = vector.shape_cast %155 : vector<1x384xi1> to vector<1x384xi1>
    %162 = vector.broadcast %161 : vector<1x384xi1> to vector<2x384xi1>
    %163 = arith.select %162, %159, %160 : vector<2x384xi1>, vector<2x384xf32>
    %164 = vector.extract_strided_slice %136 {offsets = [2, 0], sizes = [2, 384], strides = [1, 1]} : vector<12x384xf32> to vector<2x384xf32>
    %165 = vector.extract_strided_slice %136 {offsets = [8, 0], sizes = [2, 384], strides = [1, 1]} : vector<12x384xf32> to vector<2x384xf32>
    %166 = vector.shape_cast %155 : vector<1x384xi1> to vector<1x384xi1>
    %167 = vector.broadcast %166 : vector<1x384xi1> to vector<2x384xi1>
    %168 = arith.select %167, %164, %165 : vector<2x384xi1>, vector<2x384xf32>
    %169 = vector.extract_strided_slice %136 {offsets = [4, 0], sizes = [2, 384], strides = [1, 1]} : vector<12x384xf32> to vector<2x384xf32>
    %170 = vector.extract_strided_slice %136 {offsets = [6, 0], sizes = [2, 384], strides = [1, 1]} : vector<12x384xf32> to vector<2x384xf32>
    %171 = vector.shape_cast %155 : vector<1x384xi1> to vector<1x384xi1>
    %172 = vector.broadcast %171 : vector<1x384xi1> to vector<2x384xi1>
    %173 = arith.select %172, %169, %170 : vector<2x384xi1>, vector<2x384xf32>
    %174 = vector.extract_strided_slice %136 {offsets = [6, 0], sizes = [2, 384], strides = [1, 1]} : vector<12x384xf32> to vector<2x384xf32>
    %175 = vector.extract_strided_slice %136 {offsets = [4, 0], sizes = [2, 384], strides = [1, 1]} : vector<12x384xf32> to vector<2x384xf32>
    %176 = vector.shape_cast %155 : vector<1x384xi1> to vector<1x384xi1>
    %177 = vector.broadcast %176 : vector<1x384xi1> to vector<2x384xi1>
    %178 = arith.select %177, %174, %175 : vector<2x384xi1>, vector<2x384xf32>
    %179 = vector.extract_strided_slice %136 {offsets = [8, 0], sizes = [2, 384], strides = [1, 1]} : vector<12x384xf32> to vector<2x384xf32>
    %180 = vector.extract_strided_slice %136 {offsets = [2, 0], sizes = [2, 384], strides = [1, 1]} : vector<12x384xf32> to vector<2x384xf32>
    %181 = vector.shape_cast %155 : vector<1x384xi1> to vector<1x384xi1>
    %182 = vector.broadcast %181 : vector<1x384xi1> to vector<2x384xi1>
    %183 = arith.select %182, %179, %180 : vector<2x384xi1>, vector<2x384xf32>
    %184 = vector.extract_strided_slice %136 {offsets = [10, 0], sizes = [2, 384], strides = [1, 1]} : vector<12x384xf32> to vector<2x384xf32>
    %185 = vector.extract_strided_slice %136 {offsets = [0, 0], sizes = [2, 384], strides = [1, 1]} : vector<12x384xf32> to vector<2x384xf32>
    %186 = vector.shape_cast %155 : vector<1x384xi1> to vector<1x384xi1>
    %187 = vector.broadcast %186 : vector<1x384xi1> to vector<2x384xi1>
    %188 = arith.select %187, %184, %185 : vector<2x384xi1>, vector<2x384xf32>
    %c0_133 = arith.constant 0 : index
    %c0_134 = arith.constant 0 : index
    %189 = vector.load %arg11[%c0_133, %c0_134] : memref<128x384xf32, #tpu.memory_space<vmem>>, vector<128x384xf32>
    %c0_135 = arith.constant 0 : index
    %c0_136 = arith.constant 0 : index
    %190 = vector.load %arg12[%c0_135, %c0_136] : memref<1x128xf32, #tpu.memory_space<vmem>>, vector<1x128xf32>
    %cst_137 = arith.constant 0.000000e+00 : f32
    %191 = vector.broadcast %cst_137 : f32 to vector<2x128xf32>
    %cst_138 = arith.constant 0.000000e+00 : f32
    %192 = vector.broadcast %cst_138 : f32 to vector<2x384xf32>
    %193 = vector.extract_strided_slice %163 {offsets = [0, 0], sizes = [2, 128], strides = [1, 1]} : vector<2x384xf32> to vector<2x128xf32>
    %194 = vector.extract_strided_slice %192 {offsets = [0, 0], sizes = [2, 128], strides = [1, 1]} : vector<2x384xf32> to vector<2x128xf32>
    %195 = arith.addf %193, %194 : vector<2x128xf32>
    %196 = arith.negf %195 : vector<2x128xf32>
    %197 = math.exp %196 : vector<2x128xf32>
    %cst_139 = arith.constant 1.000000e+00 : f32
    %198 = vector.broadcast %cst_139 : f32 to vector<2x128xf32>
    %199 = arith.addf %198, %197 : vector<2x128xf32>
    %200 = arith.divf %198, %199 : vector<2x128xf32>
    %201 = vector.extract_strided_slice %163 {offsets = [0, 128], sizes = [2, 128], strides = [1, 1]} : vector<2x384xf32> to vector<2x128xf32>
    %202 = vector.extract_strided_slice %192 {offsets = [0, 128], sizes = [2, 128], strides = [1, 1]} : vector<2x384xf32> to vector<2x128xf32>
    %203 = arith.addf %201, %202 : vector<2x128xf32>
    %204 = arith.negf %203 : vector<2x128xf32>
    %205 = math.exp %204 : vector<2x128xf32>
    %cst_140 = arith.constant 1.000000e+00 : f32
    %206 = vector.broadcast %cst_140 : f32 to vector<2x128xf32>
    %207 = arith.addf %206, %205 : vector<2x128xf32>
    %208 = arith.divf %206, %207 : vector<2x128xf32>
    %209 = vector.extract_strided_slice %163 {offsets = [0, 256], sizes = [2, 128], strides = [1, 1]} : vector<2x384xf32> to vector<2x128xf32>
    %210 = vector.extract_strided_slice %192 {offsets = [0, 256], sizes = [2, 128], strides = [1, 1]} : vector<2x384xf32> to vector<2x128xf32>
    %211 = vector.broadcast %190 : vector<1x128xf32> to vector<2x128xf32>
    %212 = arith.addf %210, %211 : vector<2x128xf32>
    %213 = arith.mulf %200, %212 : vector<2x128xf32>
    %214 = arith.addf %209, %213 : vector<2x128xf32>
    %215 = math.tanh %214 : vector<2x128xf32>
    %cst_141 = arith.constant 1.000000e+00 : f32
    %216 = vector.broadcast %cst_141 : f32 to vector<2x128xf32>
    %217 = arith.subf %216, %208 : vector<2x128xf32>
    %218 = arith.mulf %217, %215 : vector<2x128xf32>
    %219 = arith.mulf %208, %191 : vector<2x128xf32>
    %220 = arith.addf %218, %219 : vector<2x128xf32>
    %cst_142 = arith.constant dense<0.000000e+00> : vector<2x384xf32>
    %221 = tpu.matmul %220, %189, %cst_142 {dimension_numbers = #tpu.dot_dimension_numbers<[1], [0], [0], [1], [0, 0, 1, 1], [], []>} : vector<2x128xf32>, vector<128x384xf32>, vector<2x384xf32> -> vector<2x384xf32>
    %222 = vector.extract_strided_slice %168 {offsets = [0, 0], sizes = [2, 128], strides = [1, 1]} : vector<2x384xf32> to vector<2x128xf32>
    %223 = vector.extract_strided_slice %221 {offsets = [0, 0], sizes = [2, 128], strides = [1, 1]} : vector<2x384xf32> to vector<2x128xf32>
    %224 = arith.addf %222, %223 : vector<2x128xf32>
    %225 = arith.negf %224 : vector<2x128xf32>
    %226 = math.exp %225 : vector<2x128xf32>
    %cst_143 = arith.constant 1.000000e+00 : f32
    %227 = vector.broadcast %cst_143 : f32 to vector<2x128xf32>
    %228 = arith.addf %227, %226 : vector<2x128xf32>
    %229 = arith.divf %227, %228 : vector<2x128xf32>
    %230 = vector.extract_strided_slice %168 {offsets = [0, 128], sizes = [2, 128], strides = [1, 1]} : vector<2x384xf32> to vector<2x128xf32>
    %231 = vector.extract_strided_slice %221 {offsets = [0, 128], sizes = [2, 128], strides = [1, 1]} : vector<2x384xf32> to vector<2x128xf32>
    %232 = arith.addf %230, %231 : vector<2x128xf32>
    %233 = arith.negf %232 : vector<2x128xf32>
    %234 = math.exp %233 : vector<2x128xf32>
    %cst_144 = arith.constant 1.000000e+00 : f32
    %235 = vector.broadcast %cst_144 : f32 to vector<2x128xf32>
    %236 = arith.addf %235, %234 : vector<2x128xf32>
    %237 = arith.divf %235, %236 : vector<2x128xf32>
    %238 = vector.extract_strided_slice %168 {offsets = [0, 256], sizes = [2, 128], strides = [1, 1]} : vector<2x384xf32> to vector<2x128xf32>
    %239 = vector.extract_strided_slice %221 {offsets = [0, 256], sizes = [2, 128], strides = [1, 1]} : vector<2x384xf32> to vector<2x128xf32>
    %240 = vector.broadcast %190 : vector<1x128xf32> to vector<2x128xf32>
    %241 = arith.addf %239, %240 : vector<2x128xf32>
    %242 = arith.mulf %229, %241 : vector<2x128xf32>
    %243 = arith.addf %238, %242 : vector<2x128xf32>
    %244 = math.tanh %243 : vector<2x128xf32>
    %cst_145 = arith.constant 1.000000e+00 : f32
    %245 = vector.broadcast %cst_145 : f32 to vector<2x128xf32>
    %246 = arith.subf %245, %237 : vector<2x128xf32>
    %247 = arith.mulf %246, %244 : vector<2x128xf32>
    %248 = arith.mulf %237, %220 : vector<2x128xf32>
    %249 = arith.addf %247, %248 : vector<2x128xf32>
    %cst_146 = arith.constant dense<0.000000e+00> : vector<2x384xf32>
    %250 = tpu.matmul %249, %189, %cst_146 {dimension_numbers = #tpu.dot_dimension_numbers<[1], [0], [0], [1], [0, 0, 1, 1], [], []>} : vector<2x128xf32>, vector<128x384xf32>, vector<2x384xf32> -> vector<2x384xf32>
    %251 = vector.extract_strided_slice %173 {offsets = [0, 0], sizes = [2, 128], strides = [1, 1]} : vector<2x384xf32> to vector<2x128xf32>
    %252 = vector.extract_strided_slice %250 {offsets = [0, 0], sizes = [2, 128], strides = [1, 1]} : vector<2x384xf32> to vector<2x128xf32>
    %253 = arith.addf %251, %252 : vector<2x128xf32>
    %254 = arith.negf %253 : vector<2x128xf32>
    %255 = math.exp %254 : vector<2x128xf32>
    %cst_147 = arith.constant 1.000000e+00 : f32
    %256 = vector.broadcast %cst_147 : f32 to vector<2x128xf32>
    %257 = arith.addf %256, %255 : vector<2x128xf32>
    %258 = arith.divf %256, %257 : vector<2x128xf32>
    %259 = vector.extract_strided_slice %173 {offsets = [0, 128], sizes = [2, 128], strides = [1, 1]} : vector<2x384xf32> to vector<2x128xf32>
    %260 = vector.extract_strided_slice %250 {offsets = [0, 128], sizes = [2, 128], strides = [1, 1]} : vector<2x384xf32> to vector<2x128xf32>
    %261 = arith.addf %259, %260 : vector<2x128xf32>
    %262 = arith.negf %261 : vector<2x128xf32>
    %263 = math.exp %262 : vector<2x128xf32>
    %cst_148 = arith.constant 1.000000e+00 : f32
    %264 = vector.broadcast %cst_148 : f32 to vector<2x128xf32>
    %265 = arith.addf %264, %263 : vector<2x128xf32>
    %266 = arith.divf %264, %265 : vector<2x128xf32>
    %267 = vector.extract_strided_slice %173 {offsets = [0, 256], sizes = [2, 128], strides = [1, 1]} : vector<2x384xf32> to vector<2x128xf32>
    %268 = vector.extract_strided_slice %250 {offsets = [0, 256], sizes = [2, 128], strides = [1, 1]} : vector<2x384xf32> to vector<2x128xf32>
    %269 = vector.broadcast %190 : vector<1x128xf32> to vector<2x128xf32>
    %270 = arith.addf %268, %269 : vector<2x128xf32>
    %271 = arith.mulf %258, %270 : vector<2x128xf32>
    %272 = arith.addf %267, %271 : vector<2x128xf32>
    %273 = math.tanh %272 : vector<2x128xf32>
    %cst_149 = arith.constant 1.000000e+00 : f32
    %274 = vector.broadcast %cst_149 : f32 to vector<2x128xf32>
    %275 = arith.subf %274, %266 : vector<2x128xf32>
    %276 = arith.mulf %275, %273 : vector<2x128xf32>
    %277 = arith.mulf %266, %249 : vector<2x128xf32>
    %278 = arith.addf %276, %277 : vector<2x128xf32>
    %cst_150 = arith.constant dense<0.000000e+00> : vector<2x384xf32>
    %279 = tpu.matmul %278, %189, %cst_150 {dimension_numbers = #tpu.dot_dimension_numbers<[1], [0], [0], [1], [0, 0, 1, 1], [], []>} : vector<2x128xf32>, vector<128x384xf32>, vector<2x384xf32> -> vector<2x384xf32>
    %280 = vector.extract_strided_slice %178 {offsets = [0, 0], sizes = [2, 128], strides = [1, 1]} : vector<2x384xf32> to vector<2x128xf32>
    %281 = vector.extract_strided_slice %279 {offsets = [0, 0], sizes = [2, 128], strides = [1, 1]} : vector<2x384xf32> to vector<2x128xf32>
    %282 = arith.addf %280, %281 : vector<2x128xf32>
    %283 = arith.negf %282 : vector<2x128xf32>
    %284 = math.exp %283 : vector<2x128xf32>
    %cst_151 = arith.constant 1.000000e+00 : f32
    %285 = vector.broadcast %cst_151 : f32 to vector<2x128xf32>
    %286 = arith.addf %285, %284 : vector<2x128xf32>
    %287 = arith.divf %285, %286 : vector<2x128xf32>
    %288 = vector.extract_strided_slice %178 {offsets = [0, 128], sizes = [2, 128], strides = [1, 1]} : vector<2x384xf32> to vector<2x128xf32>
    %289 = vector.extract_strided_slice %279 {offsets = [0, 128], sizes = [2, 128], strides = [1, 1]} : vector<2x384xf32> to vector<2x128xf32>
    %290 = arith.addf %288, %289 : vector<2x128xf32>
    %291 = arith.negf %290 : vector<2x128xf32>
    %292 = math.exp %291 : vector<2x128xf32>
    %cst_152 = arith.constant 1.000000e+00 : f32
    %293 = vector.broadcast %cst_152 : f32 to vector<2x128xf32>
    %294 = arith.addf %293, %292 : vector<2x128xf32>
    %295 = arith.divf %293, %294 : vector<2x128xf32>
    %296 = vector.extract_strided_slice %178 {offsets = [0, 256], sizes = [2, 128], strides = [1, 1]} : vector<2x384xf32> to vector<2x128xf32>
    %297 = vector.extract_strided_slice %279 {offsets = [0, 256], sizes = [2, 128], strides = [1, 1]} : vector<2x384xf32> to vector<2x128xf32>
    %298 = vector.broadcast %190 : vector<1x128xf32> to vector<2x128xf32>
    %299 = arith.addf %297, %298 : vector<2x128xf32>
    %300 = arith.mulf %287, %299 : vector<2x128xf32>
    %301 = arith.addf %296, %300 : vector<2x128xf32>
    %302 = math.tanh %301 : vector<2x128xf32>
    %cst_153 = arith.constant 1.000000e+00 : f32
    %303 = vector.broadcast %cst_153 : f32 to vector<2x128xf32>
    %304 = arith.subf %303, %295 : vector<2x128xf32>
    %305 = arith.mulf %304, %302 : vector<2x128xf32>
    %306 = arith.mulf %295, %278 : vector<2x128xf32>
    %307 = arith.addf %305, %306 : vector<2x128xf32>
    %cst_154 = arith.constant dense<0.000000e+00> : vector<2x384xf32>
    %308 = tpu.matmul %307, %189, %cst_154 {dimension_numbers = #tpu.dot_dimension_numbers<[1], [0], [0], [1], [0, 0, 1, 1], [], []>} : vector<2x128xf32>, vector<128x384xf32>, vector<2x384xf32> -> vector<2x384xf32>
    %309 = vector.extract_strided_slice %183 {offsets = [0, 0], sizes = [2, 128], strides = [1, 1]} : vector<2x384xf32> to vector<2x128xf32>
    %310 = vector.extract_strided_slice %308 {offsets = [0, 0], sizes = [2, 128], strides = [1, 1]} : vector<2x384xf32> to vector<2x128xf32>
    %311 = arith.addf %309, %310 : vector<2x128xf32>
    %312 = arith.negf %311 : vector<2x128xf32>
    %313 = math.exp %312 : vector<2x128xf32>
    %cst_155 = arith.constant 1.000000e+00 : f32
    %314 = vector.broadcast %cst_155 : f32 to vector<2x128xf32>
    %315 = arith.addf %314, %313 : vector<2x128xf32>
    %316 = arith.divf %314, %315 : vector<2x128xf32>
    %317 = vector.extract_strided_slice %183 {offsets = [0, 128], sizes = [2, 128], strides = [1, 1]} : vector<2x384xf32> to vector<2x128xf32>
    %318 = vector.extract_strided_slice %308 {offsets = [0, 128], sizes = [2, 128], strides = [1, 1]} : vector<2x384xf32> to vector<2x128xf32>
    %319 = arith.addf %317, %318 : vector<2x128xf32>
    %320 = arith.negf %319 : vector<2x128xf32>
    %321 = math.exp %320 : vector<2x128xf32>
    %cst_156 = arith.constant 1.000000e+00 : f32
    %322 = vector.broadcast %cst_156 : f32 to vector<2x128xf32>
    %323 = arith.addf %322, %321 : vector<2x128xf32>
    %324 = arith.divf %322, %323 : vector<2x128xf32>
    %325 = vector.extract_strided_slice %183 {offsets = [0, 256], sizes = [2, 128], strides = [1, 1]} : vector<2x384xf32> to vector<2x128xf32>
    %326 = vector.extract_strided_slice %308 {offsets = [0, 256], sizes = [2, 128], strides = [1, 1]} : vector<2x384xf32> to vector<2x128xf32>
    %327 = vector.broadcast %190 : vector<1x128xf32> to vector<2x128xf32>
    %328 = arith.addf %326, %327 : vector<2x128xf32>
    %329 = arith.mulf %316, %328 : vector<2x128xf32>
    %330 = arith.addf %325, %329 : vector<2x128xf32>
    %331 = math.tanh %330 : vector<2x128xf32>
    %cst_157 = arith.constant 1.000000e+00 : f32
    %332 = vector.broadcast %cst_157 : f32 to vector<2x128xf32>
    %333 = arith.subf %332, %324 : vector<2x128xf32>
    %334 = arith.mulf %333, %331 : vector<2x128xf32>
    %335 = arith.mulf %324, %307 : vector<2x128xf32>
    %336 = arith.addf %334, %335 : vector<2x128xf32>
    %cst_158 = arith.constant dense<0.000000e+00> : vector<2x384xf32>
    %337 = tpu.matmul %336, %189, %cst_158 {dimension_numbers = #tpu.dot_dimension_numbers<[1], [0], [0], [1], [0, 0, 1, 1], [], []>} : vector<2x128xf32>, vector<128x384xf32>, vector<2x384xf32> -> vector<2x384xf32>
    %338 = vector.extract_strided_slice %188 {offsets = [0, 0], sizes = [2, 128], strides = [1, 1]} : vector<2x384xf32> to vector<2x128xf32>
    %339 = vector.extract_strided_slice %337 {offsets = [0, 0], sizes = [2, 128], strides = [1, 1]} : vector<2x384xf32> to vector<2x128xf32>
    %340 = arith.addf %338, %339 : vector<2x128xf32>
    %341 = arith.negf %340 : vector<2x128xf32>
    %342 = math.exp %341 : vector<2x128xf32>
    %cst_159 = arith.constant 1.000000e+00 : f32
    %343 = vector.broadcast %cst_159 : f32 to vector<2x128xf32>
    %344 = arith.addf %343, %342 : vector<2x128xf32>
    %345 = arith.divf %343, %344 : vector<2x128xf32>
    %346 = vector.extract_strided_slice %188 {offsets = [0, 128], sizes = [2, 128], strides = [1, 1]} : vector<2x384xf32> to vector<2x128xf32>
    %347 = vector.extract_strided_slice %337 {offsets = [0, 128], sizes = [2, 128], strides = [1, 1]} : vector<2x384xf32> to vector<2x128xf32>
    %348 = arith.addf %346, %347 : vector<2x128xf32>
    %349 = arith.negf %348 : vector<2x128xf32>
    %350 = math.exp %349 : vector<2x128xf32>
    %cst_160 = arith.constant 1.000000e+00 : f32
    %351 = vector.broadcast %cst_160 : f32 to vector<2x128xf32>
    %352 = arith.addf %351, %350 : vector<2x128xf32>
    %353 = arith.divf %351, %352 : vector<2x128xf32>
    %354 = vector.extract_strided_slice %188 {offsets = [0, 256], sizes = [2, 128], strides = [1, 1]} : vector<2x384xf32> to vector<2x128xf32>
    %355 = vector.extract_strided_slice %337 {offsets = [0, 256], sizes = [2, 128], strides = [1, 1]} : vector<2x384xf32> to vector<2x128xf32>
    %356 = vector.broadcast %190 : vector<1x128xf32> to vector<2x128xf32>
    %357 = arith.addf %355, %356 : vector<2x128xf32>
    %358 = arith.mulf %345, %357 : vector<2x128xf32>
    %359 = arith.addf %354, %358 : vector<2x128xf32>
    %360 = math.tanh %359 : vector<2x128xf32>
    %cst_161 = arith.constant 1.000000e+00 : f32
    %361 = vector.broadcast %cst_161 : f32 to vector<2x128xf32>
    %362 = arith.subf %361, %353 : vector<2x128xf32>
    %363 = arith.mulf %362, %360 : vector<2x128xf32>
    %364 = arith.mulf %353, %336 : vector<2x128xf32>
    %365 = arith.addf %363, %364 : vector<2x128xf32>
    %366 = vector.shape_cast %158 : vector<1x128xi1> to vector<1x128xi1>
    %367 = vector.broadcast %366 : vector<1x128xi1> to vector<2x128xi1>
    %368 = arith.select %367, %220, %365 : vector<2x128xi1>, vector<2x128xf32>
    %369 = vector.shape_cast %158 : vector<1x128xi1> to vector<1x128xi1>
    %370 = vector.broadcast %369 : vector<1x128xi1> to vector<2x128xi1>
    %371 = arith.select %370, %249, %336 : vector<2x128xi1>, vector<2x128xf32>
    %372 = vector.shape_cast %158 : vector<1x128xi1> to vector<1x128xi1>
    %373 = vector.broadcast %372 : vector<1x128xi1> to vector<2x128xi1>
    %374 = arith.select %373, %278, %307 : vector<2x128xi1>, vector<2x128xf32>
    %375 = vector.shape_cast %158 : vector<1x128xi1> to vector<1x128xi1>
    %376 = vector.broadcast %375 : vector<1x128xi1> to vector<2x128xi1>
    %377 = arith.select %376, %307, %278 : vector<2x128xi1>, vector<2x128xf32>
    %378 = vector.shape_cast %158 : vector<1x128xi1> to vector<1x128xi1>
    %379 = vector.broadcast %378 : vector<1x128xi1> to vector<2x128xi1>
    %380 = arith.select %379, %336, %249 : vector<2x128xi1>, vector<2x128xf32>
    %381 = vector.shape_cast %158 : vector<1x128xi1> to vector<1x128xi1>
    %382 = vector.broadcast %381 : vector<1x128xi1> to vector<2x128xi1>
    %383 = arith.select %382, %365, %220 : vector<2x128xi1>, vector<2x128xf32>
    %384 = tpu.concatenate %368, %371, %374, %377, %380, %383 in 0 : vector<2x128xf32>, vector<2x128xf32>, vector<2x128xf32>, vector<2x128xf32>, vector<2x128xf32>, vector<2x128xf32> -> vector<12x128xf32>
    %c0_162 = arith.constant 0 : index
    %c0_163 = arith.constant 0 : index
    %385 = vector.load %arg13[%c0_162, %c0_163] : memref<128x768xf32, #tpu.memory_space<vmem>>, vector<128x768xf32>
    %cst_164 = arith.constant dense<0.000000e+00> : vector<12x768xf32>
    %386 = tpu.matmul %384, %385, %cst_164 {dimension_numbers = #tpu.dot_dimension_numbers<[1], [0], [0], [1], [0, 0, 1, 1], [], []>} : vector<12x128xf32>, vector<128x768xf32>, vector<12x768xf32> -> vector<12x768xf32>
    %c0_165 = arith.constant 0 : index
    %c0_166 = arith.constant 0 : index
    %387 = vector.load %arg14[%c0_165, %c0_166] : memref<1x768xf32, #tpu.memory_space<vmem>>, vector<1x768xf32>
    %388 = vector.broadcast %387 : vector<1x768xf32> to vector<12x768xf32>
    %389 = arith.addf %386, %388 : vector<12x768xf32>
    %390 = tpu.iota {dimensions = array<i32: 1>} : vector<1x768xi32>
    %c256_i32 = arith.constant 256 : i32
    %c0_i32_167 = arith.constant 0 : i32
    %391 = arith.cmpi eq, %c256_i32, %c0_i32_167 : i32
    %c1_i32_168 = arith.constant 1 : i32
    %392 = arith.select %391, %c1_i32_168, %c256_i32 : i32
    %393 = vector.broadcast %392 : i32 to vector<1x768xi32>
    %394 = arith.remsi %390, %393 : vector<1x768xi32>
    %c0_i32_169 = arith.constant 0 : i32
    %395 = vector.broadcast %c0_i32_169 : i32 to vector<1x768xi32>
    %396 = arith.cmpi ne, %394, %395 : vector<1x768xi32>
    %c0_i32_170 = arith.constant 0 : i32
    %397 = vector.broadcast %c0_i32_170 : i32 to vector<1x768xi32>
    %398 = arith.cmpi slt, %394, %397 : vector<1x768xi32>
    %c0_i32_171 = arith.constant 0 : i32
    %399 = arith.cmpi slt, %392, %c0_i32_171 : i32
    %400 = vector.broadcast %399 : i1 to vector<1x768xi1>
    %401 = vector.broadcast %400 : vector<1x768xi1> to vector<1x768xi1>
    %402 = arith.xori %398, %401 : vector<1x768xi1>
    %403 = arith.andi %402, %396 : vector<1x768xi1>
    %404 = vector.broadcast %392 : i32 to vector<1x768xi32>
    %405 = arith.addi %394, %404 : vector<1x768xi32>
    %406 = arith.select %403, %405, %394 : vector<1x768xi1>, vector<1x768xi32>
    %c128_i32_172 = arith.constant 128 : i32
    %407 = vector.broadcast %c128_i32_172 : i32 to vector<1x768xi32>
    %408 = arith.cmpi slt, %406, %407 : vector<1x768xi32>
    %409 = tpu.iota {dimensions = array<i32: 1>} : vector<1x256xi32>
    %c128_i32_173 = arith.constant 128 : i32
    %410 = vector.broadcast %c128_i32_173 : i32 to vector<1x256xi32>
    %411 = arith.cmpi slt, %409, %410 : vector<1x256xi32>
    %412 = vector.extract_strided_slice %389 {offsets = [0, 0], sizes = [2, 768], strides = [1, 1]} : vector<12x768xf32> to vector<2x768xf32>
    %413 = vector.extract_strided_slice %389 {offsets = [10, 0], sizes = [2, 768], strides = [1, 1]} : vector<12x768xf32> to vector<2x768xf32>
    %414 = vector.shape_cast %408 : vector<1x768xi1> to vector<1x768xi1>
    %415 = vector.broadcast %414 : vector<1x768xi1> to vector<2x768xi1>
    %416 = arith.select %415, %412, %413 : vector<2x768xi1>, vector<2x768xf32>
    %417 = vector.extract_strided_slice %389 {offsets = [2, 0], sizes = [2, 768], strides = [1, 1]} : vector<12x768xf32> to vector<2x768xf32>
    %418 = vector.extract_strided_slice %389 {offsets = [8, 0], sizes = [2, 768], strides = [1, 1]} : vector<12x768xf32> to vector<2x768xf32>
    %419 = vector.shape_cast %408 : vector<1x768xi1> to vector<1x768xi1>
    %420 = vector.broadcast %419 : vector<1x768xi1> to vector<2x768xi1>
    %421 = arith.select %420, %417, %418 : vector<2x768xi1>, vector<2x768xf32>
    %422 = vector.extract_strided_slice %389 {offsets = [4, 0], sizes = [2, 768], strides = [1, 1]} : vector<12x768xf32> to vector<2x768xf32>
    %423 = vector.extract_strided_slice %389 {offsets = [6, 0], sizes = [2, 768], strides = [1, 1]} : vector<12x768xf32> to vector<2x768xf32>
    %424 = vector.shape_cast %408 : vector<1x768xi1> to vector<1x768xi1>
    %425 = vector.broadcast %424 : vector<1x768xi1> to vector<2x768xi1>
    %426 = arith.select %425, %422, %423 : vector<2x768xi1>, vector<2x768xf32>
    %427 = vector.extract_strided_slice %389 {offsets = [6, 0], sizes = [2, 768], strides = [1, 1]} : vector<12x768xf32> to vector<2x768xf32>
    %428 = vector.extract_strided_slice %389 {offsets = [4, 0], sizes = [2, 768], strides = [1, 1]} : vector<12x768xf32> to vector<2x768xf32>
    %429 = vector.shape_cast %408 : vector<1x768xi1> to vector<1x768xi1>
    %430 = vector.broadcast %429 : vector<1x768xi1> to vector<2x768xi1>
    %431 = arith.select %430, %427, %428 : vector<2x768xi1>, vector<2x768xf32>
    %432 = vector.extract_strided_slice %389 {offsets = [8, 0], sizes = [2, 768], strides = [1, 1]} : vector<12x768xf32> to vector<2x768xf32>
    %433 = vector.extract_strided_slice %389 {offsets = [2, 0], sizes = [2, 768], strides = [1, 1]} : vector<12x768xf32> to vector<2x768xf32>
    %434 = vector.shape_cast %408 : vector<1x768xi1> to vector<1x768xi1>
    %435 = vector.broadcast %434 : vector<1x768xi1> to vector<2x768xi1>
    %436 = arith.select %435, %432, %433 : vector<2x768xi1>, vector<2x768xf32>
    %437 = vector.extract_strided_slice %389 {offsets = [10, 0], sizes = [2, 768], strides = [1, 1]} : vector<12x768xf32> to vector<2x768xf32>
    %438 = vector.extract_strided_slice %389 {offsets = [0, 0], sizes = [2, 768], strides = [1, 1]} : vector<12x768xf32> to vector<2x768xf32>
    %439 = vector.shape_cast %408 : vector<1x768xi1> to vector<1x768xi1>
    %440 = vector.broadcast %439 : vector<1x768xi1> to vector<2x768xi1>
    %441 = arith.select %440, %437, %438 : vector<2x768xi1>, vector<2x768xf32>
    %c0_174 = arith.constant 0 : index
    %c0_175 = arith.constant 0 : index
    %442 = vector.load %arg15[%c0_174, %c0_175] : memref<256x768xf32, #tpu.memory_space<vmem>>, vector<256x768xf32>
    %c0_176 = arith.constant 0 : index
    %c0_177 = arith.constant 0 : index
    %443 = vector.load %arg16[%c0_176, %c0_177] : memref<1x256xf32, #tpu.memory_space<vmem>>, vector<1x256xf32>
    %cst_178 = arith.constant 0.000000e+00 : f32
    %444 = vector.broadcast %cst_178 : f32 to vector<2x256xf32>
    %cst_179 = arith.constant 0.000000e+00 : f32
    %445 = vector.broadcast %cst_179 : f32 to vector<2x768xf32>
    %446 = vector.extract_strided_slice %416 {offsets = [0, 0], sizes = [2, 256], strides = [1, 1]} : vector<2x768xf32> to vector<2x256xf32>
    %447 = vector.extract_strided_slice %445 {offsets = [0, 0], sizes = [2, 256], strides = [1, 1]} : vector<2x768xf32> to vector<2x256xf32>
    %448 = arith.addf %446, %447 : vector<2x256xf32>
    %449 = arith.negf %448 : vector<2x256xf32>
    %450 = math.exp %449 : vector<2x256xf32>
    %cst_180 = arith.constant 1.000000e+00 : f32
    %451 = vector.broadcast %cst_180 : f32 to vector<2x256xf32>
    %452 = arith.addf %451, %450 : vector<2x256xf32>
    %453 = arith.divf %451, %452 : vector<2x256xf32>
    %454 = vector.extract_strided_slice %416 {offsets = [0, 256], sizes = [2, 256], strides = [1, 1]} : vector<2x768xf32> to vector<2x256xf32>
    %455 = vector.extract_strided_slice %445 {offsets = [0, 256], sizes = [2, 256], strides = [1, 1]} : vector<2x768xf32> to vector<2x256xf32>
    %456 = arith.addf %454, %455 : vector<2x256xf32>
    %457 = arith.negf %456 : vector<2x256xf32>
    %458 = math.exp %457 : vector<2x256xf32>
    %cst_181 = arith.constant 1.000000e+00 : f32
    %459 = vector.broadcast %cst_181 : f32 to vector<2x256xf32>
    %460 = arith.addf %459, %458 : vector<2x256xf32>
    %461 = arith.divf %459, %460 : vector<2x256xf32>
    %462 = vector.extract_strided_slice %416 {offsets = [0, 512], sizes = [2, 256], strides = [1, 1]} : vector<2x768xf32> to vector<2x256xf32>
    %463 = vector.extract_strided_slice %445 {offsets = [0, 512], sizes = [2, 256], strides = [1, 1]} : vector<2x768xf32> to vector<2x256xf32>
    %464 = vector.broadcast %443 : vector<1x256xf32> to vector<2x256xf32>
    %465 = arith.addf %463, %464 : vector<2x256xf32>
    %466 = arith.mulf %453, %465 : vector<2x256xf32>
    %467 = arith.addf %462, %466 : vector<2x256xf32>
    %468 = math.tanh %467 : vector<2x256xf32>
    %cst_182 = arith.constant 1.000000e+00 : f32
    %469 = vector.broadcast %cst_182 : f32 to vector<2x256xf32>
    %470 = arith.subf %469, %461 : vector<2x256xf32>
    %471 = arith.mulf %470, %468 : vector<2x256xf32>
    %472 = arith.mulf %461, %444 : vector<2x256xf32>
    %473 = arith.addf %471, %472 : vector<2x256xf32>
    %cst_183 = arith.constant dense<0.000000e+00> : vector<2x768xf32>
    %474 = tpu.matmul %473, %442, %cst_183 {dimension_numbers = #tpu.dot_dimension_numbers<[1], [0], [0], [1], [0, 0, 1, 1], [], []>} : vector<2x256xf32>, vector<256x768xf32>, vector<2x768xf32> -> vector<2x768xf32>
    %475 = vector.extract_strided_slice %421 {offsets = [0, 0], sizes = [2, 256], strides = [1, 1]} : vector<2x768xf32> to vector<2x256xf32>
    %476 = vector.extract_strided_slice %474 {offsets = [0, 0], sizes = [2, 256], strides = [1, 1]} : vector<2x768xf32> to vector<2x256xf32>
    %477 = arith.addf %475, %476 : vector<2x256xf32>
    %478 = arith.negf %477 : vector<2x256xf32>
    %479 = math.exp %478 : vector<2x256xf32>
    %cst_184 = arith.constant 1.000000e+00 : f32
    %480 = vector.broadcast %cst_184 : f32 to vector<2x256xf32>
    %481 = arith.addf %480, %479 : vector<2x256xf32>
    %482 = arith.divf %480, %481 : vector<2x256xf32>
    %483 = vector.extract_strided_slice %421 {offsets = [0, 256], sizes = [2, 256], strides = [1, 1]} : vector<2x768xf32> to vector<2x256xf32>
    %484 = vector.extract_strided_slice %474 {offsets = [0, 256], sizes = [2, 256], strides = [1, 1]} : vector<2x768xf32> to vector<2x256xf32>
    %485 = arith.addf %483, %484 : vector<2x256xf32>
    %486 = arith.negf %485 : vector<2x256xf32>
    %487 = math.exp %486 : vector<2x256xf32>
    %cst_185 = arith.constant 1.000000e+00 : f32
    %488 = vector.broadcast %cst_185 : f32 to vector<2x256xf32>
    %489 = arith.addf %488, %487 : vector<2x256xf32>
    %490 = arith.divf %488, %489 : vector<2x256xf32>
    %491 = vector.extract_strided_slice %421 {offsets = [0, 512], sizes = [2, 256], strides = [1, 1]} : vector<2x768xf32> to vector<2x256xf32>
    %492 = vector.extract_strided_slice %474 {offsets = [0, 512], sizes = [2, 256], strides = [1, 1]} : vector<2x768xf32> to vector<2x256xf32>
    %493 = vector.broadcast %443 : vector<1x256xf32> to vector<2x256xf32>
    %494 = arith.addf %492, %493 : vector<2x256xf32>
    %495 = arith.mulf %482, %494 : vector<2x256xf32>
    %496 = arith.addf %491, %495 : vector<2x256xf32>
    %497 = math.tanh %496 : vector<2x256xf32>
    %cst_186 = arith.constant 1.000000e+00 : f32
    %498 = vector.broadcast %cst_186 : f32 to vector<2x256xf32>
    %499 = arith.subf %498, %490 : vector<2x256xf32>
    %500 = arith.mulf %499, %497 : vector<2x256xf32>
    %501 = arith.mulf %490, %473 : vector<2x256xf32>
    %502 = arith.addf %500, %501 : vector<2x256xf32>
    %cst_187 = arith.constant dense<0.000000e+00> : vector<2x768xf32>
    %503 = tpu.matmul %502, %442, %cst_187 {dimension_numbers = #tpu.dot_dimension_numbers<[1], [0], [0], [1], [0, 0, 1, 1], [], []>} : vector<2x256xf32>, vector<256x768xf32>, vector<2x768xf32> -> vector<2x768xf32>
    %504 = vector.extract_strided_slice %426 {offsets = [0, 0], sizes = [2, 256], strides = [1, 1]} : vector<2x768xf32> to vector<2x256xf32>
    %505 = vector.extract_strided_slice %503 {offsets = [0, 0], sizes = [2, 256], strides = [1, 1]} : vector<2x768xf32> to vector<2x256xf32>
    %506 = arith.addf %504, %505 : vector<2x256xf32>
    %507 = arith.negf %506 : vector<2x256xf32>
    %508 = math.exp %507 : vector<2x256xf32>
    %cst_188 = arith.constant 1.000000e+00 : f32
    %509 = vector.broadcast %cst_188 : f32 to vector<2x256xf32>
    %510 = arith.addf %509, %508 : vector<2x256xf32>
    %511 = arith.divf %509, %510 : vector<2x256xf32>
    %512 = vector.extract_strided_slice %426 {offsets = [0, 256], sizes = [2, 256], strides = [1, 1]} : vector<2x768xf32> to vector<2x256xf32>
    %513 = vector.extract_strided_slice %503 {offsets = [0, 256], sizes = [2, 256], strides = [1, 1]} : vector<2x768xf32> to vector<2x256xf32>
    %514 = arith.addf %512, %513 : vector<2x256xf32>
    %515 = arith.negf %514 : vector<2x256xf32>
    %516 = math.exp %515 : vector<2x256xf32>
    %cst_189 = arith.constant 1.000000e+00 : f32
    %517 = vector.broadcast %cst_189 : f32 to vector<2x256xf32>
    %518 = arith.addf %517, %516 : vector<2x256xf32>
    %519 = arith.divf %517, %518 : vector<2x256xf32>
    %520 = vector.extract_strided_slice %426 {offsets = [0, 512], sizes = [2, 256], strides = [1, 1]} : vector<2x768xf32> to vector<2x256xf32>
    %521 = vector.extract_strided_slice %503 {offsets = [0, 512], sizes = [2, 256], strides = [1, 1]} : vector<2x768xf32> to vector<2x256xf32>
    %522 = vector.broadcast %443 : vector<1x256xf32> to vector<2x256xf32>
    %523 = arith.addf %521, %522 : vector<2x256xf32>
    %524 = arith.mulf %511, %523 : vector<2x256xf32>
    %525 = arith.addf %520, %524 : vector<2x256xf32>
    %526 = math.tanh %525 : vector<2x256xf32>
    %cst_190 = arith.constant 1.000000e+00 : f32
    %527 = vector.broadcast %cst_190 : f32 to vector<2x256xf32>
    %528 = arith.subf %527, %519 : vector<2x256xf32>
    %529 = arith.mulf %528, %526 : vector<2x256xf32>
    %530 = arith.mulf %519, %502 : vector<2x256xf32>
    %531 = arith.addf %529, %530 : vector<2x256xf32>
    %cst_191 = arith.constant dense<0.000000e+00> : vector<2x768xf32>
    %532 = tpu.matmul %531, %442, %cst_191 {dimension_numbers = #tpu.dot_dimension_numbers<[1], [0], [0], [1], [0, 0, 1, 1], [], []>} : vector<2x256xf32>, vector<256x768xf32>, vector<2x768xf32> -> vector<2x768xf32>
    %533 = vector.extract_strided_slice %431 {offsets = [0, 0], sizes = [2, 256], strides = [1, 1]} : vector<2x768xf32> to vector<2x256xf32>
    %534 = vector.extract_strided_slice %532 {offsets = [0, 0], sizes = [2, 256], strides = [1, 1]} : vector<2x768xf32> to vector<2x256xf32>
    %535 = arith.addf %533, %534 : vector<2x256xf32>
    %536 = arith.negf %535 : vector<2x256xf32>
    %537 = math.exp %536 : vector<2x256xf32>
    %cst_192 = arith.constant 1.000000e+00 : f32
    %538 = vector.broadcast %cst_192 : f32 to vector<2x256xf32>
    %539 = arith.addf %538, %537 : vector<2x256xf32>
    %540 = arith.divf %538, %539 : vector<2x256xf32>
    %541 = vector.extract_strided_slice %431 {offsets = [0, 256], sizes = [2, 256], strides = [1, 1]} : vector<2x768xf32> to vector<2x256xf32>
    %542 = vector.extract_strided_slice %532 {offsets = [0, 256], sizes = [2, 256], strides = [1, 1]} : vector<2x768xf32> to vector<2x256xf32>
    %543 = arith.addf %541, %542 : vector<2x256xf32>
    %544 = arith.negf %543 : vector<2x256xf32>
    %545 = math.exp %544 : vector<2x256xf32>
    %cst_193 = arith.constant 1.000000e+00 : f32
    %546 = vector.broadcast %cst_193 : f32 to vector<2x256xf32>
    %547 = arith.addf %546, %545 : vector<2x256xf32>
    %548 = arith.divf %546, %547 : vector<2x256xf32>
    %549 = vector.extract_strided_slice %431 {offsets = [0, 512], sizes = [2, 256], strides = [1, 1]} : vector<2x768xf32> to vector<2x256xf32>
    %550 = vector.extract_strided_slice %532 {offsets = [0, 512], sizes = [2, 256], strides = [1, 1]} : vector<2x768xf32> to vector<2x256xf32>
    %551 = vector.broadcast %443 : vector<1x256xf32> to vector<2x256xf32>
    %552 = arith.addf %550, %551 : vector<2x256xf32>
    %553 = arith.mulf %540, %552 : vector<2x256xf32>
    %554 = arith.addf %549, %553 : vector<2x256xf32>
    %555 = math.tanh %554 : vector<2x256xf32>
    %cst_194 = arith.constant 1.000000e+00 : f32
    %556 = vector.broadcast %cst_194 : f32 to vector<2x256xf32>
    %557 = arith.subf %556, %548 : vector<2x256xf32>
    %558 = arith.mulf %557, %555 : vector<2x256xf32>
    %559 = arith.mulf %548, %531 : vector<2x256xf32>
    %560 = arith.addf %558, %559 : vector<2x256xf32>
    %cst_195 = arith.constant dense<0.000000e+00> : vector<2x768xf32>
    %561 = tpu.matmul %560, %442, %cst_195 {dimension_numbers = #tpu.dot_dimension_numbers<[1], [0], [0], [1], [0, 0, 1, 1], [], []>} : vector<2x256xf32>, vector<256x768xf32>, vector<2x768xf32> -> vector<2x768xf32>
    %562 = vector.extract_strided_slice %436 {offsets = [0, 0], sizes = [2, 256], strides = [1, 1]} : vector<2x768xf32> to vector<2x256xf32>
    %563 = vector.extract_strided_slice %561 {offsets = [0, 0], sizes = [2, 256], strides = [1, 1]} : vector<2x768xf32> to vector<2x256xf32>
    %564 = arith.addf %562, %563 : vector<2x256xf32>
    %565 = arith.negf %564 : vector<2x256xf32>
    %566 = math.exp %565 : vector<2x256xf32>
    %cst_196 = arith.constant 1.000000e+00 : f32
    %567 = vector.broadcast %cst_196 : f32 to vector<2x256xf32>
    %568 = arith.addf %567, %566 : vector<2x256xf32>
    %569 = arith.divf %567, %568 : vector<2x256xf32>
    %570 = vector.extract_strided_slice %436 {offsets = [0, 256], sizes = [2, 256], strides = [1, 1]} : vector<2x768xf32> to vector<2x256xf32>
    %571 = vector.extract_strided_slice %561 {offsets = [0, 256], sizes = [2, 256], strides = [1, 1]} : vector<2x768xf32> to vector<2x256xf32>
    %572 = arith.addf %570, %571 : vector<2x256xf32>
    %573 = arith.negf %572 : vector<2x256xf32>
    %574 = math.exp %573 : vector<2x256xf32>
    %cst_197 = arith.constant 1.000000e+00 : f32
    %575 = vector.broadcast %cst_197 : f32 to vector<2x256xf32>
    %576 = arith.addf %575, %574 : vector<2x256xf32>
    %577 = arith.divf %575, %576 : vector<2x256xf32>
    %578 = vector.extract_strided_slice %436 {offsets = [0, 512], sizes = [2, 256], strides = [1, 1]} : vector<2x768xf32> to vector<2x256xf32>
    %579 = vector.extract_strided_slice %561 {offsets = [0, 512], sizes = [2, 256], strides = [1, 1]} : vector<2x768xf32> to vector<2x256xf32>
    %580 = vector.broadcast %443 : vector<1x256xf32> to vector<2x256xf32>
    %581 = arith.addf %579, %580 : vector<2x256xf32>
    %582 = arith.mulf %569, %581 : vector<2x256xf32>
    %583 = arith.addf %578, %582 : vector<2x256xf32>
    %584 = math.tanh %583 : vector<2x256xf32>
    %cst_198 = arith.constant 1.000000e+00 : f32
    %585 = vector.broadcast %cst_198 : f32 to vector<2x256xf32>
    %586 = arith.subf %585, %577 : vector<2x256xf32>
    %587 = arith.mulf %586, %584 : vector<2x256xf32>
    %588 = arith.mulf %577, %560 : vector<2x256xf32>
    %589 = arith.addf %587, %588 : vector<2x256xf32>
    %cst_199 = arith.constant dense<0.000000e+00> : vector<2x768xf32>
    %590 = tpu.matmul %589, %442, %cst_199 {dimension_numbers = #tpu.dot_dimension_numbers<[1], [0], [0], [1], [0, 0, 1, 1], [], []>} : vector<2x256xf32>, vector<256x768xf32>, vector<2x768xf32> -> vector<2x768xf32>
    %591 = vector.extract_strided_slice %441 {offsets = [0, 0], sizes = [2, 256], strides = [1, 1]} : vector<2x768xf32> to vector<2x256xf32>
    %592 = vector.extract_strided_slice %590 {offsets = [0, 0], sizes = [2, 256], strides = [1, 1]} : vector<2x768xf32> to vector<2x256xf32>
    %593 = arith.addf %591, %592 : vector<2x256xf32>
    %594 = arith.negf %593 : vector<2x256xf32>
    %595 = math.exp %594 : vector<2x256xf32>
    %cst_200 = arith.constant 1.000000e+00 : f32
    %596 = vector.broadcast %cst_200 : f32 to vector<2x256xf32>
    %597 = arith.addf %596, %595 : vector<2x256xf32>
    %598 = arith.divf %596, %597 : vector<2x256xf32>
    %599 = vector.extract_strided_slice %441 {offsets = [0, 256], sizes = [2, 256], strides = [1, 1]} : vector<2x768xf32> to vector<2x256xf32>
    %600 = vector.extract_strided_slice %590 {offsets = [0, 256], sizes = [2, 256], strides = [1, 1]} : vector<2x768xf32> to vector<2x256xf32>
    %601 = arith.addf %599, %600 : vector<2x256xf32>
    %602 = arith.negf %601 : vector<2x256xf32>
    %603 = math.exp %602 : vector<2x256xf32>
    %cst_201 = arith.constant 1.000000e+00 : f32
    %604 = vector.broadcast %cst_201 : f32 to vector<2x256xf32>
    %605 = arith.addf %604, %603 : vector<2x256xf32>
    %606 = arith.divf %604, %605 : vector<2x256xf32>
    %607 = vector.extract_strided_slice %441 {offsets = [0, 512], sizes = [2, 256], strides = [1, 1]} : vector<2x768xf32> to vector<2x256xf32>
    %608 = vector.extract_strided_slice %590 {offsets = [0, 512], sizes = [2, 256], strides = [1, 1]} : vector<2x768xf32> to vector<2x256xf32>
    %609 = vector.broadcast %443 : vector<1x256xf32> to vector<2x256xf32>
    %610 = arith.addf %608, %609 : vector<2x256xf32>
    %611 = arith.mulf %598, %610 : vector<2x256xf32>
    %612 = arith.addf %607, %611 : vector<2x256xf32>
    %613 = math.tanh %612 : vector<2x256xf32>
    %cst_202 = arith.constant 1.000000e+00 : f32
    %614 = vector.broadcast %cst_202 : f32 to vector<2x256xf32>
    %615 = arith.subf %614, %606 : vector<2x256xf32>
    %616 = arith.mulf %615, %613 : vector<2x256xf32>
    %617 = arith.mulf %606, %589 : vector<2x256xf32>
    %618 = arith.addf %616, %617 : vector<2x256xf32>
    %619 = vector.shape_cast %411 : vector<1x256xi1> to vector<1x256xi1>
    %620 = vector.broadcast %619 : vector<1x256xi1> to vector<2x256xi1>
    %621 = arith.select %620, %473, %618 : vector<2x256xi1>, vector<2x256xf32>
    %622 = vector.shape_cast %411 : vector<1x256xi1> to vector<1x256xi1>
    %623 = vector.broadcast %622 : vector<1x256xi1> to vector<2x256xi1>
    %624 = arith.select %623, %502, %589 : vector<2x256xi1>, vector<2x256xf32>
    %625 = vector.shape_cast %411 : vector<1x256xi1> to vector<1x256xi1>
    %626 = vector.broadcast %625 : vector<1x256xi1> to vector<2x256xi1>
    %627 = arith.select %626, %531, %560 : vector<2x256xi1>, vector<2x256xf32>
    %628 = vector.shape_cast %411 : vector<1x256xi1> to vector<1x256xi1>
    %629 = vector.broadcast %628 : vector<1x256xi1> to vector<2x256xi1>
    %630 = arith.select %629, %560, %531 : vector<2x256xi1>, vector<2x256xf32>
    %631 = vector.shape_cast %411 : vector<1x256xi1> to vector<1x256xi1>
    %632 = vector.broadcast %631 : vector<1x256xi1> to vector<2x256xi1>
    %633 = arith.select %632, %589, %502 : vector<2x256xi1>, vector<2x256xf32>
    %634 = vector.shape_cast %411 : vector<1x256xi1> to vector<1x256xi1>
    %635 = vector.broadcast %634 : vector<1x256xi1> to vector<2x256xi1>
    %636 = arith.select %635, %618, %473 : vector<2x256xi1>, vector<2x256xf32>
    %637 = tpu.concatenate %621, %624, %627, %630, %633, %636 in 0 : vector<2x256xf32>, vector<2x256xf32>, vector<2x256xf32>, vector<2x256xf32>, vector<2x256xf32>, vector<2x256xf32> -> vector<12x256xf32>
    %c0_203 = arith.constant 0 : index
    %c0_204 = arith.constant 0 : index
    %638 = vector.load %arg17[%c0_203, %c0_204] : memref<12x12xf32, #tpu.memory_space<vmem>>, vector<12x12xf32>
    %cst_205 = arith.constant dense<0.000000e+00> : vector<12x256xf32>
    %639 = tpu.matmul %638, %637, %cst_205 {dimension_numbers = #tpu.dot_dimension_numbers<[1], [0], [0], [1], [0, 0, 1, 1], [], []>} : vector<12x12xf32>, vector<12x256xf32>, vector<12x256xf32> -> vector<12x256xf32>
    %c0_206 = arith.constant 0 : index
    %c0_207 = arith.constant 0 : index
    %640 = vector.load %arg18[%c0_206, %c0_207] : memref<256x256xf32, #tpu.memory_space<vmem>>, vector<256x256xf32>
    %cst_208 = arith.constant dense<0.000000e+00> : vector<12x256xf32>
    %641 = tpu.matmul %639, %640, %cst_208 {dimension_numbers = #tpu.dot_dimension_numbers<[1], [0], [0], [1], [0, 0, 1, 1], [], []>} : vector<12x256xf32>, vector<256x256xf32>, vector<12x256xf32> -> vector<12x256xf32>
    %c0_209 = arith.constant 0 : index
    %c0_210 = arith.constant 0 : index
    %642 = vector.load %arg19[%c0_209, %c0_210] : memref<1x256xf32, #tpu.memory_space<vmem>>, vector<1x256xf32>
    %643 = vector.broadcast %642 : vector<1x256xf32> to vector<12x256xf32>
    %644 = arith.addf %641, %643 : vector<12x256xf32>
    %cst_211 = arith.constant 5.000000e-01 : f32
    %645 = vector.broadcast %cst_211 : f32 to vector<12x256xf32>
    %646 = arith.mulf %645, %644 : vector<12x256xf32>
    %cst_212 = arith.constant 0.707106769 : f32
    %647 = vector.broadcast %cst_212 : f32 to vector<12x256xf32>
    %648 = arith.mulf %644, %647 : vector<12x256xf32>
    %649 = math.erf %648 : vector<12x256xf32>
    %cst_213 = arith.constant 1.000000e+00 : f32
    %650 = vector.broadcast %cst_213 : f32 to vector<12x256xf32>
    %651 = arith.addf %650, %649 : vector<12x256xf32>
    %652 = arith.mulf %646, %651 : vector<12x256xf32>
    %c0_214 = arith.constant 0 : index
    %c0_215 = arith.constant 0 : index
    %653 = vector.load %arg20[%c0_214, %c0_215] : memref<256x128xf32, #tpu.memory_space<vmem>>, vector<256x128xf32>
    %cst_216 = arith.constant dense<0.000000e+00> : vector<12x128xf32>
    %654 = tpu.matmul %652, %653, %cst_216 {dimension_numbers = #tpu.dot_dimension_numbers<[1], [0], [0], [1], [0, 0, 1, 1], [], []>} : vector<12x256xf32>, vector<256x128xf32>, vector<12x128xf32> -> vector<12x128xf32>
    %c0_217 = arith.constant 0 : index
    %c0_218 = arith.constant 0 : index
    %655 = vector.load %arg21[%c0_217, %c0_218] : memref<1x128xf32, #tpu.memory_space<vmem>>, vector<1x128xf32>
    %656 = vector.broadcast %655 : vector<1x128xf32> to vector<12x128xf32>
    %657 = arith.addf %654, %656 : vector<12x128xf32>
    %658 = tpu.iota {dimensions = array<i32: 1>} : vector<12x128xi32>
    %c3_i32 = arith.constant 3 : i32
    %659 = vector.broadcast %c3_i32 : i32 to vector<12x128xi32>
    %660 = arith.cmpi sge, %658, %659 : vector<12x128xi32>
    %c6_i32 = arith.constant 6 : i32
    %661 = vector.broadcast %c6_i32 : i32 to vector<12x128xi32>
    %662 = arith.cmpi slt, %658, %661 : vector<12x128xi32>
    %663 = arith.andi %660, %662 : vector<12x128xi1>
    %cst_219 = arith.constant 5.000000e+00 : f32
    %664 = vector.broadcast %cst_219 : f32 to vector<12x128xf32>
    %665 = arith.subf %657, %664 : vector<12x128xf32>
    %666 = math.exp %665 : vector<12x128xf32>
    %667 = arith.select %663, %666, %657 : vector<12x128xi1>, vector<12x128xf32>
    %c0_220 = arith.constant 0 : index
    %c0_221 = arith.constant 0 : index
    %668 = vector.load %arg22[%c0_220, %c0_221] : memref<12x128xf32, #tpu.memory_space<vmem>>, vector<12x128xf32>
    tpu.vector_store %arg22[%c0_220, %c0_221], %667 {strides = array<i32>} : memref<12x128xf32, #tpu.memory_space<vmem>>, vector<12x128xf32>,
    return
  }
}

</mosaic_0001>

<llo_original>
// kernel: codenet_motion_with_rot_forward.1
$region0: #{codenet_motion_with_rot_forward.1}
  #allocation0 [shape = 'u32[]', space=smem, size = 0x4, offset = 0x4, fixed_abs, tag = 'smem constant byte address 0x4 - core index']
  #allocation1 [shape = 'u32[144,128]{1,0:T(1,128)}', space=vmem, size = 0x12000, scoped, tag = 'internal scratch']
  %s0 = inlined_call_operand.vmem [shape: f32[96,9], index: 0, kind: input, shape index: {}]
  %s1 = inlined_call_operand.hbm [shape: f32[7,32,96], index: 1, kind: input, shape index: {}]
  %s2 = inlined_call_operand.vmem [shape: f32[7,9,64], index: 2, kind: input, shape index: {}]
  %s3 = inlined_call_operand.hbm [shape: f32[1,64], index: 3, kind: input, shape index: {}]
  %s4 = inlined_call_operand.vmem [shape: f32[7,12,32], index: 4, kind: input, shape index: {}]
  %s5 = inlined_call_operand.hbm [shape: f32[7,64,128], index: 5, kind: input, shape index: {}]
  %s6 = inlined_call_operand.hbm [shape: f32[1,128], index: 6, kind: input, shape index: {}]
  %s7 = inlined_call_operand.vmem [shape: f32[128,64], index: 7, kind: input, shape index: {}]
  %s8 = inlined_call_operand.hbm [shape: f32[1,64], index: 8, kind: input, shape index: {}]
  %s9 = inlined_call_operand.hbm [shape: f32[64,384], index: 9, kind: input, shape index: {}]
  %s10 = inlined_call_operand.hbm [shape: f32[1,384], index: 10, kind: input, shape index: {}]
  %s11 = inlined_call_operand.hbm [shape: f32[128,384], index: 11, kind: input, shape index: {}]
  %s12 = inlined_call_operand.hbm [shape: f32[1,128], index: 12, kind: input, shape index: {}]
  %s13 = inlined_call_operand.vmem [shape: f32[128,768], index: 13, kind: input, shape index: {}]
  %s14 = inlined_call_operand.vmem [shape: f32[1,768], index: 14, kind: input, shape index: {}]
  %s15 = inlined_call_operand.hbm [shape: f32[256,768], index: 15, kind: input, shape index: {}]
  %s16 = inlined_call_operand.hbm [shape: f32[1,256], index: 16, kind: input, shape index: {}]
  %s17 = inlined_call_operand.hbm [shape: f32[12,12], index: 17, kind: input, shape index: {}]
  %s18 = inlined_call_operand.hbm [shape: f32[256,256], index: 18, kind: input, shape index: {}]
  %s19 = inlined_call_operand.hbm [shape: f32[1,256], index: 19, kind: input, shape index: {}]
  %s20 = inlined_call_operand.hbm [shape: f32[256,128], index: 20, kind: input, shape index: {}]
  %s21 = inlined_call_operand.hbm [shape: f32[1,128], index: 21, kind: input, shape index: {}]
  %s22 = inlined_call_operand.vmem [shape: f32[12,128], index: 22, kind: output, shape index: {}]
  %s23 = sld [smem:[#allocation0]]
  $region162: #{codenet_motion_with_rot_forward.1} parent=0
    _
  %s25 = ssub.s32 1, %s23
  %s26 = scalar_select 0, %s25, %s23
  $region1: #{codenet_motion_with_rot_forward.1} parent=0
    #allocation2 [shape = 'u8[114688]{0}', space=vmem, size = 0x1c000, scoped, tag = 'input window, operand 1, single buffered']
    #allocation3 [shape = 's32[1]{0}', space=sflag, size = 0x4, scoped, tag = 'scoped memory for codenet_motion_with_rot_forward.1']
    #allocation4 [shape = 'u8[512]{0}', space=vmem, size = 0x400, scoped, tag = 'input window, operand 3, single buffered']
    #allocation5 [shape = 's32[1]{0}', space=sflag, size = 0x4, scoped, tag = 'scoped memory for codenet_motion_with_rot_forward.1']
    #allocation6 [shape = 'u8[229376]{0}', space=vmem, size = 0x38000, scoped, tag = 'input window, operand 5, single buffered']
    #allocation7 [shape = 'u8[512]{0}', space=vmem, size = 0x400, scoped, tag = 'input window, operand 6, single buffered']
    #allocation8 [shape = 's32[1]{0}', space=sflag, size = 0x4, scoped, tag = 'scoped memory for codenet_motion_with_rot_forward.1']
    #allocation9 [shape = 'u8[512]{0}', space=vmem, size = 0x400, scoped, tag = 'input window, operand 8, single buffered']
    #allocation10 [shape = 'u8[98304]{0}', space=vmem, size = 0x18000, scoped, tag = 'input window, operand 9, single buffered']
    #allocation11 [shape = 's32[1]{0}', space=sflag, size = 0x4, scoped, tag = 'scoped memory for codenet_motion_with_rot_forward.1']
    #allocation12 [shape = 'u8[1536]{0}', space=vmem, size = 0x800, scoped, tag = 'input window, operand 10, single buffered']
    #allocation13 [shape = 'u8[196608]{0}', space=vmem, size = 0x30000, scoped, tag = 'input window, operand 11, single buffered']
    #allocation14 [shape = 's32[1]{0}', space=sflag, size = 0x4, scoped, tag = 'scoped memory for codenet_motion_with_rot_forward.1']
    #allocation15 [shape = 'u8[512]{0}', space=vmem, size = 0x400, scoped, tag = 'input window, operand 12, single buffered']
    #allocation16 [shape = 'u8[786432]{0}', space=vmem, size = 0xc0000, scoped, tag = 'input window, operand 15, single buffered']
    #allocation17 [shape = 's32[1]{0}', space=sflag, size = 0x4, scoped, tag = 'scoped memory for codenet_motion_with_rot_forward.1']
    #allocation18 [shape = 'u8[1024]{0}', space=vmem, size = 0x400, scoped, tag = 'input window, operand 16, single buffered']
    #allocation19 [shape = 'u8[8192]{0}', space=vmem, size = 0x2000, scoped, tag = 'input window, operand 17, single buffered']
    #allocation20 [shape = 's32[1]{0}', space=sflag, size = 0x4, scoped, tag = 'scoped memory for codenet_motion_with_rot_forward.1']
    #allocation21 [shape = 'u8[262144]{0}', space=vmem, size = 0x40000, scoped, tag = 'input window, operand 18, single buffered']
    #allocation22 [shape = 'u8[1024]{0}', space=vmem, size = 0x400, scoped, tag = 'input window, operand 19, single buffered']
    #allocation23 [shape = 's32[1]{0}', space=sflag, size = 0x4, scoped, tag = 'scoped memory for codenet_motion_with_rot_forward.1']
    #allocation24 [shape = 'u8[131072]{0}', space=vmem, size = 0x20000, scoped, tag = 'input window, operand 20, single buffered']
    #allocation25 [shape = 'u8[512]{0}', space=vmem, size = 0x400, scoped, tag = 'input window, operand 21, single buffered']
    #allocation26 [shape = 's32[1]{0}', space=sflag, size = 0x4, scoped, tag = 'scoped memory for codenet_motion_with_rot_forward.1']
    %27 = vsyncpa [#allocation3], 0
    %28 = vsyncpa [#allocation5], 0
    %29 = vsyncpa [#allocation8], 0
    %30 = vsyncpa [#allocation11], 0
    %31 = vsyncpa [#allocation14], 0
    %32 = vsyncpa [#allocation17], 0
    %33 = vsyncpa [#allocation20], 0
    %34 = vsyncpa [#allocation23], 0
    %35 = vsyncpa [#allocation26], 0
    // Predicated region
    $region2: #{codenet_motion_with_rot_forward.1} parent=1 // pred_check
      _
    $region3: #{codenet_motion_with_rot_forward.1} parent=1 // pred_check_branch
      %37 = sbr.rel (0) target = $region5
    $region4: #{codenet_motion_with_rot_forward.1} parent=1 // pred_region
      _
    $region5: #{codenet_motion_with_rot_forward.1} parent=1 // pred_fallthru
      _
    // Predicated region
    $region6: #{codenet_motion_with_rot_forward.1} parent=1 // pred_check
      _
    $region7: #{codenet_motion_with_rot_forward.1} parent=1 // pred_check_branch
      %39 = sbr.rel (0) target = $region9
    $region8: #{codenet_motion_with_rot_forward.1} parent=1 // pred_region
      %s41 = ssub.s32 3584, 3584
      %42 = vsyncadd [#allocation3], %s41
      %s43 = sshll.u32 [#allocation2], 4
      %s44 = int_to_ptr.vmem [resolvable:$true] %s43
      %49 = dma.hbm_to_vmem [thread:$0]  %s1, 3584, %s44, [#allocation3], 128, 128, 8
    $region9: #{codenet_motion_with_rot_forward.1} parent=1 // pred_fallthru
      _
    // Predicated region
    $region10: #{codenet_motion_with_rot_forward.1} parent=1 // pred_check
      _
    $region11: #{codenet_motion_with_rot_forward.1} parent=1 // pred_check_branch
      %51 = sbr.rel (0) target = $region13
    $region12: #{codenet_motion_with_rot_forward.1} parent=1 // pred_region
      _
    $region13: #{codenet_motion_with_rot_forward.1} parent=1 // pred_fallthru
      _
    // Predicated region
    $region14: #{codenet_motion_with_rot_forward.1} parent=1 // pred_check
      _
    $region15: #{codenet_motion_with_rot_forward.1} parent=1 // pred_check_branch
      %53 = sbr.rel (0) target = $region17
    $region16: #{codenet_motion_with_rot_forward.1} parent=1 // pred_region
      %s55 = ssub.s32 16, 16
      %56 = vsyncadd [#allocation5], %s55
      %s58 = sshll.u32 [#allocation4], 4
      %s59 = int_to_ptr.vmem [resolvable:$true] %s58
      %61 = dma.hbm_to_vmem [thread:$0]  %s3, 16, %s59, [#allocation5]
    $region17: #{codenet_motion_with_rot_forward.1} parent=1 // pred_fallthru
      _
    // Predicated region
    $region18: #{codenet_motion_with_rot_forward.1} parent=1 // pred_check
      _
    $region19: #{codenet_motion_with_rot_forward.1} parent=1 // pred_check_branch
      %63 = sbr.rel (0) target = $region21
    $region20: #{codenet_motion_with_rot_forward.1} parent=1 // pred_region
      _
    $region21: #{codenet_motion_with_rot_forward.1} parent=1 // pred_fallthru
      _
    // Predicated region
    $region22: #{codenet_motion_with_rot_forward.1} parent=1 // pred_check
      _
    $region23: #{codenet_motion_with_rot_forward.1} parent=1 // pred_check_branch
      %65 = sbr.rel (0) target = $region25
    $region24: #{codenet_motion_with_rot_forward.1} parent=1 // pred_region
      %s67 = ssub.s32 7168, 7168
      %68 = vsyncadd [#allocation5], %s67
      %s69 = sshll.u32 [#allocation6], 4
      %s70 = int_to_ptr.vmem [resolvable:$true] %s69
      %75 = dma.hbm_to_vmem [thread:$0]  %s5, 7168, %s70, [#allocation5], 128, 128, 8
    $region25: #{codenet_motion_with_rot_forward.1} parent=1 // pred_fallthru
      _
    // Predicated region
    $region26: #{codenet_motion_with_rot_forward.1} parent=1 // pred_check
      _
    $region27: #{codenet_motion_with_rot_forward.1} parent=1 // pred_check_branch
      %77 = sbr.rel (0) target = $region29
    $region28: #{codenet_motion_with_rot_forward.1} parent=1 // pred_region
      %s79 = ssub.s32 16, 16
      %80 = vsyncadd [#allocation8], %s79
      %s82 = sshll.u32 [#allocation7], 4
      %s83 = int_to_ptr.vmem [resolvable:$true] %s82
      %85 = dma.hbm_to_vmem [thread:$0]  %s6, 16, %s83, [#allocation8]
    $region29: #{codenet_motion_with_rot_forward.1} parent=1 // pred_fallthru
      _
    // Predicated region
    $region30: #{codenet_motion_with_rot_forward.1} parent=1 // pred_check
      _
    $region31: #{codenet_motion_with_rot_forward.1} parent=1 // pred_check_branch
      %87 = sbr.rel (0) target = $region33
    $region32: #{codenet_motion_with_rot_forward.1} parent=1 // pred_region
      _
    $region33: #{codenet_motion_with_rot_forward.1} parent=1 // pred_fallthru
      _
    // Predicated region
    $region34: #{codenet_motion_with_rot_forward.1} parent=1 // pred_check
      _
    $region35: #{codenet_motion_with_rot_forward.1} parent=1 // pred_check_branch
      %89 = sbr.rel (0) target = $region37
    $region36: #{codenet_motion_with_rot_forward.1} parent=1 // pred_region
      %s91 = ssub.s32 16, 16
      %92 = vsyncadd [#allocation8], %s91
      %s94 = sshll.u32 [#allocation9], 4
      %s95 = int_to_ptr.vmem [resolvable:$true] %s94
      %97 = dma.hbm_to_vmem [thread:$0]  %s8, 16, %s95, [#allocation8]
    $region37: #{codenet_motion_with_rot_forward.1} parent=1 // pred_fallthru
      _
    // Predicated region
    $region38: #{codenet_motion_with_rot_forward.1} parent=1 // pred_check
      _
    $region39: #{codenet_motion_with_rot_forward.1} parent=1 // pred_check_branch
      %99 = sbr.rel (0) target = $region41
    $region40: #{codenet_motion_with_rot_forward.1} parent=1 // pred_region
      %s101 = ssub.s32 3072, 3072
      %102 = vsyncadd [#allocation11], %s101
      %s103 = sshll.u32 [#allocation10], 4
      %s104 = int_to_ptr.vmem [resolvable:$true] %s103
      %109 = dma.hbm_to_vmem [thread:$0]  %s9, 3072, %s104, [#allocation11], 384, 384, 24
    $region41: #{codenet_motion_with_rot_forward.1} parent=1 // pred_fallthru
      _
    // Predicated region
    $region42: #{codenet_motion_with_rot_forward.1} parent=1 // pred_check
      _
    $region43: #{codenet_motion_with_rot_forward.1} parent=1 // pred_check_branch
      %111 = sbr.rel (0) target = $region45
    $region44: #{codenet_motion_with_rot_forward.1} parent=1 // pred_region
      %s113 = ssub.s32 48, 48
      %114 = vsyncadd [#allocation11], %s113
      %s116 = sshll.u32 [#allocation12], 4
      %s117 = int_to_ptr.vmem [resolvable:$true] %s116
      %119 = dma.hbm_to_vmem [thread:$0]  %s10, 48, %s117, [#allocation11]
    $region45: #{codenet_motion_with_rot_forward.1} parent=1 // pred_fallthru
      _
    // Predicated region
    $region46: #{codenet_motion_with_rot_forward.1} parent=1 // pred_check
      _
    $region47: #{codenet_motion_with_rot_forward.1} parent=1 // pred_check_branch
      %121 = sbr.rel (0) target = $region49
    $region48: #{codenet_motion_with_rot_forward.1} parent=1 // pred_region
      %s123 = ssub.s32 6144, 6144
      %124 = vsyncadd [#allocation14], %s123
      %s125 = sshll.u32 [#allocation13], 4
      %s126 = int_to_ptr.vmem [resolvable:$true] %s125
      %131 = dma.hbm_to_vmem [thread:$0]  %s11, 6144, %s126, [#allocation14], 384, 384, 24
    $region49: #{codenet_motion_with_rot_forward.1} parent=1 // pred_fallthru
      _
    // Predicated region
    $region50: #{codenet_motion_with_rot_forward.1} parent=1 // pred_check
      _
    $region51: #{codenet_motion_with_rot_forward.1} parent=1 // pred_check_branch
      %133 = sbr.rel (0) target = $region53
    $region52: #{codenet_motion_with_rot_forward.1} parent=1 // pred_region
      %s135 = ssub.s32 16, 16
      %136 = vsyncadd [#allocation14], %s135
      %s138 = sshll.u32 [#allocation15], 4
      %s139 = int_to_ptr.vmem [resolvable:$true] %s138
      %141 = dma.hbm_to_vmem [thread:$0]  %s12, 16, %s139, [#allocation14]
    $region53: #{codenet_motion_with_rot_forward.1} parent=1 // pred_fallthru
      _
    // Predicated region
    $region54: #{codenet_motion_with_rot_forward.1} parent=1 // pred_check
      _
    $region55: #{codenet_motion_with_rot_forward.1} parent=1 // pred_check_branch
      %143 = sbr.rel (0) target = $region57
    $region56: #{codenet_motion_with_rot_forward.1} parent=1 // pred_region
      _
    $region57: #{codenet_motion_with_rot_forward.1} parent=1 // pred_fallthru
      _
    // Predicated region
    $region58: #{codenet_motion_with_rot_forward.1} parent=1 // pred_check
      _
    $region59: #{codenet_motion_with_rot_forward.1} parent=1 // pred_check_branch
      %145 = sbr.rel (0) target = $region61
    $region60: #{codenet_motion_with_rot_forward.1} parent=1 // pred_region
      _
    $region61: #{codenet_motion_with_rot_forward.1} parent=1 // pred_fallthru
      _
    // Predicated region
    $region62: #{codenet_motion_with_rot_forward.1} parent=1 // pred_check
      _
    $region63: #{codenet_motion_with_rot_forward.1} parent=1 // pred_check_branch
      %147 = sbr.rel (0) target = $region65
    $region64: #{codenet_motion_with_rot_forward.1} parent=1 // pred_region
      %s149 = ssub.s32 24576, 24576
      %150 = vsyncadd [#allocation17], %s149
      %s151 = sshll.u32 [#allocation16], 4
      %s152 = int_to_ptr.vmem [resolvable:$true] %s151
      %157 = dma.hbm_to_vmem [thread:$0]  %s15, 24576, %s152, [#allocation17], 768, 768, 48
    $region65: #{codenet_motion_with_rot_forward.1} parent=1 // pred_fallthru
      _
    // Predicated region
    $region66: #{codenet_motion_with_rot_forward.1} parent=1 // pred_check
      _
    $region67: #{codenet_motion_with_rot_forward.1} parent=1 // pred_check_branch
      %159 = sbr.rel (0) target = $region69
    $region68: #{codenet_motion_with_rot_forward.1} parent=1 // pred_region
      %s161 = ssub.s32 32, 32
      %162 = vsyncadd [#allocation17], %s161
      %s164 = sshll.u32 [#allocation18], 4
      %s165 = int_to_ptr.vmem [resolvable:$true] %s164
      %167 = dma.hbm_to_vmem [thread:$0]  %s16, 32, %s165, [#allocation17]
    $region69: #{codenet_motion_with_rot_forward.1} parent=1 // pred_fallthru
      _
    // Predicated region
    $region70: #{codenet_motion_with_rot_forward.1} parent=1 // pred_check
      _
    $region71: #{codenet_motion_with_rot_forward.1} parent=1 // pred_check_branch
      %169 = sbr.rel (0) target = $region73
    $region72: #{codenet_motion_with_rot_forward.1} parent=1 // pred_region
      %s171 = ssub.s32 256, 256
      %172 = vsyncadd [#allocation20], %s171
      %s173 = sshll.u32 [#allocation19], 4
      %s174 = int_to_ptr.vmem [resolvable:$true] %s173
      %179 = dma.hbm_to_vmem [thread:$0]  %s17, 256, %s174, [#allocation20], 128, 128, 8
    $region73: #{codenet_motion_with_rot_forward.1} parent=1 // pred_fallthru
      _
    // Predicated region
    $region74: #{codenet_motion_with_rot_forward.1} parent=1 // pred_check
      _
    $region75: #{codenet_motion_with_rot_forward.1} parent=1 // pred_check_branch
      %181 = sbr.rel (0) target = $region77
    $region76: #{codenet_motion_with_rot_forward.1} parent=1 // pred_region
      %s183 = ssub.s32 8192, 8192
      %184 = vsyncadd [#allocation20], %s183
      %s185 = sshll.u32 [#allocation21], 4
      %s186 = int_to_ptr.vmem [resolvable:$true] %s185
      %191 = dma.hbm_to_vmem [thread:$0]  %s18, 8192, %s186, [#allocation20], 256, 256, 16
    $region77: #{codenet_motion_with_rot_forward.1} parent=1 // pred_fallthru
      _
    // Predicated region
    $region78: #{codenet_motion_with_rot_forward.1} parent=1 // pred_check
      _
    $region79: #{codenet_motion_with_rot_forward.1} parent=1 // pred_check_branch
      %193 = sbr.rel (0) target = $region81
    $region80: #{codenet_motion_with_rot_forward.1} parent=1 // pred_region
      %s195 = ssub.s32 32, 32
      %196 = vsyncadd [#allocation23], %s195
      %s198 = sshll.u32 [#allocation22], 4
      %s199 = int_to_ptr.vmem [resolvable:$true] %s198
      %201 = dma.hbm_to_vmem [thread:$0]  %s19, 32, %s199, [#allocation23]
    $region81: #{codenet_motion_with_rot_forward.1} parent=1 // pred_fallthru
      _
    // Predicated region
    $region82: #{codenet_motion_with_rot_forward.1} parent=1 // pred_check
      _
    $region83: #{codenet_motion_with_rot_forward.1} parent=1 // pred_check_branch
      %203 = sbr.rel (0) target = $region85
    $region84: #{codenet_motion_with_rot_forward.1} parent=1 // pred_region
      %s205 = ssub.s32 4096, 4096
      %206 = vsyncadd [#allocation23], %s205
      %s207 = sshll.u32 [#allocation24], 4
      %s208 = int_to_ptr.vmem [resolvable:$true] %s207
      %213 = dma.hbm_to_vmem [thread:$0]  %s20, 4096, %s208, [#allocation23], 128, 128, 8
    $region85: #{codenet_motion_with_rot_forward.1} parent=1 // pred_fallthru
      _
    // Predicated region
    $region86: #{codenet_motion_with_rot_forward.1} parent=1 // pred_check
      _
    $region87: #{codenet_motion_with_rot_forward.1} parent=1 // pred_check_branch
      %215 = sbr.rel (0) target = $region89
    $region88: #{codenet_motion_with_rot_forward.1} parent=1 // pred_region
      %s217 = ssub.s32 16, 16
      %218 = vsyncadd [#allocation26], %s217
      %s220 = sshll.u32 [#allocation25], 4
      %s221 = int_to_ptr.vmem [resolvable:$true] %s220
      %223 = dma.hbm_to_vmem [thread:$0]  %s21, 16, %s221, [#allocation26]
    $region89: #{codenet_motion_with_rot_forward.1} parent=1 // pred_fallthru
      _
    // Predicated region
    $region90: #{codenet_motion_with_rot_forward.1} parent=1 // pred_check
      _
    $region91: #{codenet_motion_with_rot_forward.1} parent=1 // pred_check_branch
      %225 = sbr.rel (0) target = $region93
    $region92: #{codenet_motion_with_rot_forward.1} parent=1 // pred_region
      %226 = dma.done [#allocation3], 3584
    $region93: #{codenet_motion_with_rot_forward.1} parent=1 // pred_fallthru
      _
    // Predicated region
    $region94: #{codenet_motion_with_rot_forward.1} parent=1 // pred_check
      _
    $region95: #{codenet_motion_with_rot_forward.1} parent=1 // pred_check_branch
      %228 = sbr.rel (0) target = $region97
    $region96: #{codenet_motion_with_rot_forward.1} parent=1 // pred_region
      %229 = dma.done [#allocation5], 16
    $region97: #{codenet_motion_with_rot_forward.1} parent=1 // pred_fallthru
      _
    // Predicated region
    $region98: #{codenet_motion_with_rot_forward.1} parent=1 // pred_check
      _
    $region99: #{codenet_motion_with_rot_forward.1} parent=1 // pred_check_branch
      %231 = sbr.rel (0) target = $region101
    $region100: #{codenet_motion_with_rot_forward.1} parent=1 // pred_region
      %232 = dma.done [#allocation5], 7168
    $region101: #{codenet_motion_with_rot_forward.1} parent=1 // pred_fallthru
      _
    // Predicated region
    $region102: #{codenet_motion_with_rot_forward.1} parent=1 // pred_check
      _
    $region103: #{codenet_motion_with_rot_forward.1} parent=1 // pred_check_branch
      %234 = sbr.rel (0) target = $region105
    $region104: #{codenet_motion_with_rot_forward.1} parent=1 // pred_region
      %235 = dma.done [#allocation8], 16
    $region105: #{codenet_motion_with_rot_forward.1} parent=1 // pred_fallthru
      _
    // Predicated region
    $region106: #{codenet_motion_with_rot_forward.1} parent=1 // pred_check
      _
    $region107: #{codenet_motion_with_rot_forward.1} parent=1 // pred_check_branch
      %237 = sbr.rel (0) target = $region109
    $region108: #{codenet_motion_with_rot_forward.1} parent=1 // pred_region
      %238 = dma.done [#allocation8], 16
    $region109: #{codenet_motion_with_rot_forward.1} parent=1 // pred_fallthru
      _
    // Predicated region
    $region110: #{codenet_motion_with_rot_forward.1} parent=1 // pred_check
      _
    $region111: #{codenet_motion_with_rot_forward.1} parent=1 // pred_check_branch
      %240 = sbr.rel (0) target = $region113
    $region112: #{codenet_motion_with_rot_forward.1} parent=1 // pred_region
      %241 = dma.done [#allocation11], 3072
    $region113: #{codenet_motion_with_rot_forward.1} parent=1 // pred_fallthru
      _
    // Predicated region
    $region114: #{codenet_motion_with_rot_forward.1} parent=1 // pred_check
      _
    $region115: #{codenet_motion_with_rot_forward.1} parent=1 // pred_check_branch
      %243 = sbr.rel (0) target = $region117
    $region116: #{codenet_motion_with_rot_forward.1} parent=1 // pred_region
      %244 = dma.done [#allocation11], 48
    $region117: #{codenet_motion_with_rot_forward.1} parent=1 // pred_fallthru
      _
    // Predicated region
    $region118: #{codenet_motion_with_rot_forward.1} parent=1 // pred_check
      _
    $region119: #{codenet_motion_with_rot_forward.1} parent=1 // pred_check_branch
      %246 = sbr.rel (0) target = $region121
    $region120: #{codenet_motion_with_rot_forward.1} parent=1 // pred_region
      %247 = dma.done [#allocation14], 6144
    $region121: #{codenet_motion_with_rot_forward.1} parent=1 // pred_fallthru
      _
    // Predicated region
    $region122: #{codenet_motion_with_rot_forward.1} parent=1 // pred_check
      _
    $region123: #{codenet_motion_with_rot_forward.1} parent=1 // pred_check_branch
      %249 = sbr.rel (0) target = $region125
    $region124: #{codenet_motion_with_rot_forward.1} parent=1 // pred_region
      %250 = dma.done [#allocation14], 16
    $region125: #{codenet_motion_with_rot_forward.1} parent=1 // pred_fallthru
      _
    // Predicated region
    $region126: #{codenet_motion_with_rot_forward.1} parent=1 // pred_check
      _
    $region127: #{codenet_motion_with_rot_forward.1} parent=1 // pred_check_branch
      %252 = sbr.rel (0) target = $region129
    $region128: #{codenet_motion_with_rot_forward.1} parent=1 // pred_region
      %253 = dma.done [#allocation17], 24576
    $region129: #{codenet_motion_with_rot_forward.1} parent=1 // pred_fallthru
      _
    // Predicated region
    $region130: #{codenet_motion_with_rot_forward.1} parent=1 // pred_check
      _
    $region131: #{codenet_motion_with_rot_forward.1} parent=1 // pred_check_branch
      %255 = sbr.rel (0) target = $region133
    $region132: #{codenet_motion_with_rot_forward.1} parent=1 // pred_region
      %256 = dma.done [#allocation17], 32
    $region133: #{codenet_motion_with_rot_forward.1} parent=1 // pred_fallthru
      _
    // Predicated region
    $region134: #{codenet_motion_with_rot_forward.1} parent=1 // pred_check
      _
    $region135: #{codenet_motion_with_rot_forward.1} parent=1 // pred_check_branch
      %258 = sbr.rel (0) target = $region137
    $region136: #{codenet_motion_with_rot_forward.1} parent=1 // pred_region
      %259 = dma.done [#allocation20], 256
    $region137: #{codenet_motion_with_rot_forward.1} parent=1 // pred_fallthru
      _
    // Predicated region
    $region138: #{codenet_motion_with_rot_forward.1} parent=1 // pred_check
      _
    $region139: #{codenet_motion_with_rot_forward.1} parent=1 // pred_check_branch
      %261 = sbr.rel (0) target = $region141
    $region140: #{codenet_motion_with_rot_forward.1} parent=1 // pred_region
      %262 = dma.done [#allocation20], 8192
    $region141: #{codenet_motion_with_rot_forward.1} parent=1 // pred_fallthru
      _
    // Predicated region
    $region142: #{codenet_motion_with_rot_forward.1} parent=1 // pred_check
      _
    $region143: #{codenet_motion_with_rot_forward.1} parent=1 // pred_check_branch
      %264 = sbr.rel (0) target = $region145
    $region144: #{codenet_motion_with_rot_forward.1} parent=1 // pred_region
      %265 = dma.done [#allocation23], 32
    $region145: #{codenet_motion_with_rot_forward.1} parent=1 // pred_fallthru
      _
    // Predicated region
    $region146: #{codenet_motion_with_rot_forward.1} parent=1 // pred_check
      _
    $region147: #{codenet_motion_with_rot_forward.1} parent=1 // pred_check_branch
      %267 = sbr.rel (0) target = $region149
    $region148: #{codenet_motion_with_rot_forward.1} parent=1 // pred_region
      %268 = dma.done [#allocation23], 4096
    $region149: #{codenet_motion_with_rot_forward.1} parent=1 // pred_fallthru
      _
    // Predicated region
    $region150: #{codenet_motion_with_rot_forward.1} parent=1 // pred_check
      _
    $region151: #{codenet_motion_with_rot_forward.1} parent=1 // pred_check_branch
      %270 = sbr.rel (0) target = $region153
    $region152: #{codenet_motion_with_rot_forward.1} parent=1 // pred_region
      %271 = dma.done [#allocation26], 16
    $region153: #{codenet_motion_with_rot_forward.1} parent=1 // pred_fallthru
      _
    %v272 = vld [vmem:[%s0] sm:$0xff]
    %v273 = vld [vmem:[%s0 + $0x8] sm:$0xff]
    %v274 = vld [vmem:[%s0 + $0x10] sm:$0xff]
    %v275 = vld [vmem:[%s0 + $0x18] sm:$0xff]
    %v276 = vld [vmem:[%s0 + $0x20] sm:$0xff]
    %v277 = vld [vmem:[%s0 + $0x28] sm:$0xff]
    %v278 = vld [vmem:[%s0 + $0x30] sm:$0xff]
    %v279 = vld [vmem:[%s0 + $0x38] sm:$0xff]
    %v280 = vld [vmem:[%s0 + $0x40] sm:$0xff]
    %v281 = vld [vmem:[%s0 + $0x48] sm:$0xff]
    %v282 = vld [vmem:[%s0 + $0x50] sm:$0xff]
    %v283 = vld [vmem:[%s0 + $0x58] sm:$0xff]
    %v284 = vld [vmem:[#allocation2] sm:$0xff]
    %v285 = vld [vmem:[#allocation2 + $0x8] sm:$0xff]
    %v286 = vld [vmem:[#allocation2 + $0x10] sm:$0xff]
    %v287 = vld [vmem:[#allocation2 + $0x18] sm:$0xff]
    %vm288 = vcmask 785408
    %v290 = vsel %vm288, %v284, 0
    %v293 = vsel %vm288, %v285, 0
    %v296 = vsel %vm288, %v286, 0
    %v299 = vsel %vm288, %v287, 0
    %301 = vmatprep.subr.mxu0 0.0
    %302 = vmatpush1.msra.mxu0 %v272
    %303 = vmatprep.subr.mxu0 0.0
    %304 = vmatpush1.msra.mxu0 %v273
    %305 = vmatprep.subr.mxu0 0.0
    %306 = vmatpush1.msra.mxu0 %v274
    %307 = vmatprep.subr.mxu0 0.0
    %308 = vmatpush1.msra.mxu0 %v275
    %309 = vmatprep.subr.mxu0 0.0
    %310 = vmatpush1.msra.mxu0 %v276
    %311 = vmatprep.subr.mxu0 0.0
    %312 = vmatpush1.msra.mxu0 %v277
    %313 = vmatprep.subr.mxu0 0.0
    %314 = vmatpush1.msra.mxu0 %v278
    %315 = vmatprep.subr.mxu0 0.0
    %316 = vmatpush1.msra.mxu0 %v279
    %317 = vmatprep.subr.mxu0 0.0
    %318 = vmatpush1.msra.mxu0 %v280
    %319 = vmatprep.subr.mxu0 0.0
    %320 = vmatpush1.msra.mxu0 %v281
    %321 = vmatprep.subr.mxu0 0.0
    %322 = vmatpush1.msra.mxu0 %v282
    %323 = vmatprep.subr.mxu0 0.0
    %324 = vmatpush1.msra.mxu0 %v283
    %325 = vmatprep.subr.mxu0 0.0
    %326 = vmatpush1.msra.mxu0 0.0
    %327 = vmatprep.subr.mxu0 0.0
    %328 = vmatpush1.msra.mxu0 0.0
    %329 = vmatprep.subr.mxu0 0.0
    %330 = vmatpush1.msra.mxu0 0.0
    %331 = vmatprep.subr.mxu0 0.0
    %332 = vmatpush1.msra.mxu0 0.0
    %333 = vmatprep.subr.mxu0 0.0
    %334 = vmatpush1.msra.mxu0 0.0
    %335 = vmatprep.subr.mxu0 0.0
    %336 = vmatpush1.msra.mxu0 0.0
    %337 = vmatprep.subr.mxu0 0.0
    %338 = vmatpush1.msra.mxu0 0.0
    %339 = vmatprep.subr.mxu0 0.0
    %340 = vmatpush1.msra.mxu0 0.0
    %341 = vmatprep.subr.mxu0 0.0
    %342 = vmatpush1.msra.mxu0 0.0
    %343 = vmatprep.subr.mxu0 0.0
    %344 = vmatpush1.msra.mxu0 0.0
    %345 = vmatprep.subr.mxu0 0.0
    %346 = vmatpush1.msra.mxu0 0.0
    %347 = vmatprep.subr.mxu0 0.0
    %348 = vmatpush1.msra.mxu0 0.0
    %349 = vmatprep.subr.mxu0 0.0
    %350 = vmatpush1.msra.mxu0 0.0
    %351 = vmatprep.subr.mxu0 0.0
    %352 = vmatpush1.msra.mxu0 0.0
    %353 = vmatprep.subr.mxu0 0.0
    %354 = vmatpush1.msra.mxu0 0.0
    %355 = vmatprep.subr.mxu0 0.0
    %356 = vmatpush1.msra.mxu0 0.0
    %357 = vmatprep.subr.mxu0 0.0
    %358 = vmatpush1.msra.mxu0 0.0
    %359 = vmatprep.subr.mxu0 0.0
    %360 = vmatpush1.msra.mxu0 0.0
    %361 = vmatprep.subr.mxu0 0.0
    %362 = vmatpush1.msra.mxu0 0.0
    %363 = vmatprep.subr.mxu0 0.0
    %364 = vmatpush1.msra.mxu0 0.0
    %365 = vmatprep.mubr.f32.mxu0 0.0
    %366 = vmatmul.mubr.f32.gmra.mrb[0].mxu0 %v290
    %v367 = vpop.f32.mrb[0].mxu0
    %v368 = vadd.f32 0.0, %v367
    %v369 = vpop.f32.mrb[0].mxu0
    %370 = vmatprep.mubr.f32.mxu0 0.0
    %371 = vmatmul.mubr.f32.gmra.mrb[0].mxu0 %v293
    %v372 = vpop.f32.mrb[0].mxu0
    %v373 = vadd.f32 0.0, %v372
    %v374 = vpop.f32.mrb[0].mxu0
    %375 = vmatprep.mubr.f32.mxu0 0.0
    %376 = vmatmul.mubr.f32.gmra.mrb[0].mxu0 %v296
    %v377 = vpop.f32.mrb[0].mxu0
    %v378 = vadd.f32 0.0, %v377
    %v379 = vpop.f32.mrb[0].mxu0
    %380 = vmatprep.mubr.f32.mxu0 0.0
    %381 = vmatmul.mubr.f32.gmra.mrb[0].mxu0 %v299
    %v382 = vpop.f32.mrb[0].mxu0
    %v383 = vadd.f32 0.0, %v382
    %v384 = vpop.f32.mrb[0].mxu0
    %385 = vdwg.mxu0
    %v386 = vld [vmem:[%s2] sm:$0xff]
    %v387 = vld [vmem:[%s2 + $0x8] sm:$0x1]
    %s388 = scalar_lea.vmem [#allocation2], 32
    %v389 = vld [vmem:[%s388] sm:$0xff]
    %v390 = vld [vmem:[%s388 + $0x8] sm:$0xff]
    %v391 = vld [vmem:[%s388 + $0x10] sm:$0xff]
    %v392 = vld [vmem:[%s388 + $0x18] sm:$0xff]
    %v394 = vsel %vm288, %v389, 0
    %v397 = vsel %vm288, %v390, 0
    %v400 = vsel %vm288, %v391, 0
    %v403 = vsel %vm288, %v392, 0
    %405 = vmatprep.subr.mxu0 0.0
    %406 = vmatpush1.msra.mxu0 %v272
    %407 = vmatprep.subr.mxu0 0.0
    %408 = vmatpush1.msra.mxu0 %v273
    %409 = vmatprep.subr.mxu0 0.0
    %410 = vmatpush1.msra.mxu0 %v274
    %411 = vmatprep.subr.mxu0 0.0
    %412 = vmatpush1.msra.mxu0 %v275
    %413 = vmatprep.subr.mxu0 0.0
    %414 = vmatpush1.msra.mxu0 %v276
    %415 = vmatprep.subr.mxu0 0.0
    %416 = vmatpush1.msra.mxu0 %v277
    %417 = vmatprep.subr.mxu0 0.0
    %418 = vmatpush1.msra.mxu0 %v278
    %419 = vmatprep.subr.mxu0 0.0
    %420 = vmatpush1.msra.mxu0 %v279
    %421 = vmatprep.subr.mxu0 0.0
    %422 = vmatpush1.msra.mxu0 %v280
    %423 = vmatprep.subr.mxu0 0.0
    %424 = vmatpush1.msra.mxu0 %v281
    %425 = vmatprep.subr.mxu0 0.0
    %426 = vmatpush1.msra.mxu0 %v282
    %427 = vmatprep.subr.mxu0 0.0
    %428 = vmatpush1.msra.mxu0 %v283
    %429 = vmatprep.subr.mxu0 0.0
    %430 = vmatpush1.msra.mxu0 0.0
    %431 = vmatprep.subr.mxu0 0.0
    %432 = vmatpush1.msra.mxu0 0.0
    %433 = vmatprep.subr.mxu0 0.0
    %434 = vmatpush1.msra.mxu0 0.0
    %435 = vmatprep.subr.mxu0 0.0
    %436 = vmatpush1.msra.mxu0 0.0
    %437 = vmatprep.subr.mxu0 0.0
    %438 = vmatpush1.msra.mxu0 0.0
    %439 = vmatprep.subr.mxu0 0.0
    %440 = vmatpush1.msra.mxu0 0.0
    %441 = vmatprep.subr.mxu0 0.0
    %442 = vmatpush1.msra.mxu0 0.0
    %443 = vmatprep.subr.mxu0 0.0
    %444 = vmatpush1.msra.mxu0 0.0
    %445 = vmatprep.subr.mxu0 0.0
    %446 = vmatpush1.msra.mxu0 0.0
    %447 = vmatprep.subr.mxu0 0.0
    %448 = vmatpush1.msra.mxu0 0.0
    %449 = vmatprep.subr.mxu0 0.0
    %450 = vmatpush1.msra.mxu0 0.0
    %451 = vmatprep.subr.mxu0 0.0
    %452 = vmatpush1.msra.mxu0 0.0
    %453 = vmatprep.subr.mxu0 0.0
    %454 = vmatpush1.msra.mxu0 0.0
    %455 = vmatprep.subr.mxu0 0.0
    %456 = vmatpush1.msra.mxu0 0.0
    %457 = vmatprep.subr.mxu0 0.0
    %458 = vmatpush1.msra.mxu0 0.0
    %459 = vmatprep.subr.mxu0 0.0
    %460 = vmatpush1.msra.mxu0 0.0
    %461 = vmatprep.subr.mxu0 0.0
    %462 = vmatpush1.msra.mxu0 0.0
    %463 = vmatprep.subr.mxu0 0.0
    %464 = vmatpush1.msra.mxu0 0.0
    %465 = vmatprep.subr.mxu0 0.0
    %466 = vmatpush1.msra.mxu0 0.0
    %467 = vmatprep.subr.mxu0 0.0
    %468 = vmatpush1.msra.mxu0 0.0
    %469 = vmatprep.mubr.f32.mxu0 0.0
    %470 = vmatmul.mubr.f32.gmra.mrb[0].mxu0 %v394
    %v471 = vpop.f32.mrb[0].mxu0
    %v472 = vadd.f32 0.0, %v471
    %v473 = vpop.f32.mrb[0].mxu0
    %474 = vmatprep.mubr.f32.mxu0 0.0
    %475 = vmatmul.mubr.f32.gmra.mrb[0].mxu0 %v397
    %v476 = vpop.f32.mrb[0].mxu0
    %v477 = vadd.f32 0.0, %v476
    %v478 = vpop.f32.mrb[0].mxu0
    %479 = vmatprep.mubr.f32.mxu0 0.0
    %480 = vmatmul.mubr.f32.gmra.mrb[0].mxu0 %v400
    %v481 = vpop.f32.mrb[0].mxu0
    %v482 = vadd.f32 0.0, %v481
    %v483 = vpop.f32.mrb[0].mxu0
    %484 = vmatprep.mubr.f32.mxu0 0.0
    %485 = vmatmul.mubr.f32.gmra.mrb[0].mxu0 %v403
    %v486 = vpop.f32.mrb[0].mxu0
    %v487 = vadd.f32 0.0, %v486
    %v488 = vpop.f32.mrb[0].mxu0
    %489 = vdwg.mxu0
    %s490 = scalar_lea.vmem %s2, 16
    %v491 = vld [vmem:[%s490] sm:$0xff]
    %v492 = vld [vmem:[%s490 + $0x8] sm:$0x1]
    %vm493 = vcmask 72704
    %v495 = vsel %vm493, %v472, 0
    %v498 = vsel %vm493, %v477, 0
    %v501 = vsel %vm493, %v482, 0
    %v504 = vsel %vm493, %v487, 0
    %vm506 = vcmask 1040384
    %v508 = vsel %vm506, %v492, 0
    %510 = vmatprep.subr.mxu0 0.0
    %511 = vmatpush1.msra.mxu0 %v491
    %512 = vmatprep.subr.mxu0 0.0
    %513 = vmatpush1.msra.mxu0 %v508
    %514 = vmatprep.subr.mxu0 0.0
    %515 = vmatpush1.msra.mxu0 0.0
    %516 = vmatprep.subr.mxu0 0.0
    %517 = vmatpush1.msra.mxu0 0.0
    %518 = vmatprep.subr.mxu0 0.0
    %519 = vmatpush1.msra.mxu0 0.0
    %520 = vmatprep.subr.mxu0 0.0
    %521 = vmatpush1.msra.mxu0 0.0
    %522 = vmatprep.subr.mxu0 0.0
    %523 = vmatpush1.msra.mxu0 0.0
    %524 = vmatprep.subr.mxu0 0.0
    %525 = vmatpush1.msra.mxu0 0.0
    %526 = vmatprep.subr.mxu0 0.0
    %527 = vmatpush1.msra.mxu0 0.0
    %528 = vmatprep.subr.mxu0 0.0
    %529 = vmatpush1.msra.mxu0 0.0
    %530 = vmatprep.subr.mxu0 0.0
    %531 = vmatpush1.msra.mxu0 0.0
    %532 = vmatprep.subr.mxu0 0.0
    %533 = vmatpush1.msra.mxu0 0.0
    %534 = vmatprep.subr.mxu0 0.0
    %535 = vmatpush1.msra.mxu0 0.0
    %536 = vmatprep.subr.mxu0 0.0
    %537 = vmatpush1.msra.mxu0 0.0
    %538 = vmatprep.subr.mxu0 0.0
    %539 = vmatpush1.msra.mxu0 0.0
    %540 = vmatprep.subr.mxu0 0.0
    %541 = vmatpush1.msra.mxu0 0.0
    %542 = vmatprep.subr.mxu0 0.0
    %543 = vmatpush1.msra.mxu0 0.0
    %544 = vmatprep.subr.mxu0 0.0
    %545 = vmatpush1.msra.mxu0 0.0
    %546 = vmatprep.subr.mxu0 0.0
    %547 = vmatpush1.msra.mxu0 0.0
    %548 = vmatprep.subr.mxu0 0.0
    %549 = vmatpush1.msra.mxu0 0.0
    %550 = vmatprep.subr.mxu0 0.0
    %551 = vmatpush1.msra.mxu0 0.0
    %552 = vmatprep.subr.mxu0 0.0
    %553 = vmatpush1.msra.mxu0 0.0
    %554 = vmatprep.subr.mxu0 0.0
    %555 = vmatpush1.msra.mxu0 0.0
    %556 = vmatprep.subr.mxu0 0.0
    %557 = vmatpush1.msra.mxu0 0.0
    %558 = vmatprep.subr.mxu0 0.0
    %559 = vmatpush1.msra.mxu0 0.0
    %560 = vmatprep.subr.mxu0 0.0
    %561 = vmatpush1.msra.mxu0 0.0
    %562 = vmatprep.subr.mxu0 0.0
    %563 = vmatpush1.msra.mxu0 0.0
    %564 = vmatprep.subr.mxu0 0.0
    %565 = vmatpush1.msra.mxu0 0.0
    %566 = vmatprep.subr.mxu0 0.0
    %567 = vmatpush1.msra.mxu0 0.0
    %568 = vmatprep.subr.mxu0 0.0
    %569 = vmatpush1.msra.mxu0 0.0
    %570 = vmatprep.subr.mxu0 0.0
    %571 = vmatpush1.msra.mxu0 0.0
    %572 = vmatprep.subr.mxu0 0.0
    %573 = vmatpush1.msra.mxu0 0.0
    %574 = vmatprep.mubr.f32.mxu0 0.0
    %575 = vmatmul.mubr.f32.gmra.mrb[0].mxu0 %v495
    %v576 = vpop.f32.mrb[0].mxu0
    %v577 = vadd.f32 0.0, %v576
    %v578 = vpop.f32.mrb[0].mxu0
    %579 = vmatprep.mubr.f32.mxu0 0.0
    %580 = vmatmul.mubr.f32.gmra.mrb[0].mxu0 %v498
    %v581 = vpop.f32.mrb[0].mxu0
    %v582 = vadd.f32 0.0, %v581
    %v583 = vpop.f32.mrb[0].mxu0
    %584 = vmatprep.mubr.f32.mxu0 0.0
    %585 = vmatmul.mubr.f32.gmra.mrb[0].mxu0 %v501
    %v586 = vpop.f32.mrb[0].mxu0
    %v587 = vadd.f32 0.0, %v586
    %v588 = vpop.f32.mrb[0].mxu0
    %589 = vmatprep.mubr.f32.mxu0 0.0
    %590 = vmatmul.mubr.f32.gmra.mrb[0].mxu0 %v504
    %v591 = vpop.f32.mrb[0].mxu0
    %v592 = vadd.f32 0.0, %v591
    %v593 = vpop.f32.mrb[0].mxu0
    %594 = vdwg.mxu0
    %v596 = vsel %vm493, %v368, 0
    %v599 = vsel %vm493, %v373, 0
    %v602 = vsel %vm493, %v378, 0
    %v605 = vsel %vm493, %v383, 0
    %v608 = vsel %vm506, %v387, 0
    %610 = vmatprep.subr.mxu0 0.0
    %611 = vmatpush1.msra.mxu0 %v386
    %612 = vmatprep.subr.mxu0 0.0
    %613 = vmatpush1.msra.mxu0 %v608
    %614 = vmatprep.subr.mxu0 0.0
    %615 = vmatpush1.msra.mxu0 0.0
    %616 = vmatprep.subr.mxu0 0.0
    %617 = vmatpush1.msra.mxu0 0.0
    %618 = vmatprep.subr.mxu0 0.0
    %619 = vmatpush1.msra.mxu0 0.0
    %620 = vmatprep.subr.mxu0 0.0
    %621 = vmatpush1.msra.mxu0 0.0
    %622 = vmatprep.subr.mxu0 0.0
    %623 = vmatpush1.msra.mxu0 0.0
    %624 = vmatprep.subr.mxu0 0.0
    %625 = vmatpush1.msra.mxu0 0.0
    %626 = vmatprep.subr.mxu0 0.0
    %627 = vmatpush1.msra.mxu0 0.0
    %628 = vmatprep.subr.mxu0 0.0
    %629 = vmatpush1.msra.mxu0 0.0
    %630 = vmatprep.subr.mxu0 0.0
    %631 = vmatpush1.msra.mxu0 0.0
    %632 = vmatprep.subr.mxu0 0.0
    %633 = vmatpush1.msra.mxu0 0.0
    %634 = vmatprep.subr.mxu0 0.0
    %635 = vmatpush1.msra.mxu0 0.0
    %636 = vmatprep.subr.mxu0 0.0
    %637 = vmatpush1.msra.mxu0 0.0
    %638 = vmatprep.subr.mxu0 0.0
    %639 = vmatpush1.msra.mxu0 0.0
    %640 = vmatprep.subr.mxu0 0.0
    %641 = vmatpush1.msra.mxu0 0.0
    %642 = vmatprep.subr.mxu0 0.0
    %643 = vmatpush1.msra.mxu0 0.0
    %644 = vmatprep.subr.mxu0 0.0
    %645 = vmatpush1.msra.mxu0 0.0
    %646 = vmatprep.subr.mxu0 0.0
    %647 = vmatpush1.msra.mxu0 0.0
    %648 = vmatprep.subr.mxu0 0.0
    %649 = vmatpush1.msra.mxu0 0.0
    %650 = vmatprep.subr.mxu0 0.0
    %651 = vmatpush1.msra.mxu0 0.0
    %652 = vmatprep.subr.mxu0 0.0
    %653 = vmatpush1.msra.mxu0 0.0
    %654 = vmatprep.subr.mxu0 0.0
    %655 = vmatpush1.msra.mxu0 0.0
    %656 = vmatprep.subr.mxu0 0.0
    %657 = vmatpush1.msra.mxu0 0.0
    %658 = vmatprep.subr.mxu0 0.0
    %659 = vmatpush1.msra.mxu0 0.0
    %660 = vmatprep.subr.mxu0 0.0
    %661 = vmatpush1.msra.mxu0 0.0
    %662 = vmatprep.subr.mxu0 0.0
    %663 = vmatpush1.msra.mxu0 0.0
    %664 = vmatprep.subr.mxu0 0.0
    %665 = vmatpush1.msra.mxu0 0.0
    %666 = vmatprep.subr.mxu0 0.0
    %667 = vmatpush1.msra.mxu0 0.0
    %668 = vmatprep.subr.mxu0 0.0
    %669 = vmatpush1.msra.mxu0 0.0
    %670 = vmatprep.subr.mxu0 0.0
    %671 = vmatpush1.msra.mxu0 0.0
    %672 = vmatprep.subr.mxu0 0.0
    %673 = vmatpush1.msra.mxu0 0.0
    %674 = vmatprep.mubr.f32.mxu0 0.0
    %675 = vmatmul.mubr.f32.gmra.mrb[0].mxu0 %v596
    %v676 = vpop.f32.mrb[0].mxu0
    %v677 = vadd.f32 %v577, %v676
    %v678 = vpop.f32.mrb[0].mxu0
    %679 = vmatprep.mubr.f32.mxu0 0.0
    %680 = vmatmul.mubr.f32.gmra.mrb[0].mxu0 %v599
    %v681 = vpop.f32.mrb[0].mxu0
    %v682 = vadd.f32 %v582, %v681
    %v683 = vpop.f32.mrb[0].mxu0
    %684 = vmatprep.mubr.f32.mxu0 0.0
    %685 = vmatmul.mubr.f32.gmra.mrb[0].mxu0 %v602
    %v686 = vpop.f32.mrb[0].mxu0
    %v687 = vadd.f32 %v587, %v686
    %v688 = vpop.f32.mrb[0].mxu0
    %689 = vmatprep.mubr.f32.mxu0 0.0
    %690 = vmatmul.mubr.f32.gmra.mrb[0].mxu0 %v605
    %v691 = vpop.f32.mrb[0].mxu0
    %v692 = vadd.f32 %v592, %v691
    %v693 = vpop.f32.mrb[0].mxu0
    %694 = vdwg.mxu0
    %s695 = scalar_lea.vmem [#allocation2], 64
    %v696 = vld [vmem:[%s695] sm:$0xff]
    %v697 = vld [vmem:[%s695 + $0x8] sm:$0xff]
    %v698 = vld [vmem:[%s695 + $0x10] sm:$0xff]
    %v699 = vld [vmem:[%s695 + $0x18] sm:$0xff]
    %v701 = vsel %vm288, %v696, 0
    %v704 = vsel %vm288, %v697, 0
    %v707 = vsel %vm288, %v698, 0
    %v710 = vsel %vm288, %v699, 0
    %712 = vmatprep.subr.mxu0 0.0
    %713 = vmatpush1.msra.mxu0 %v272
    %714 = vmatprep.subr.mxu0 0.0
    %715 = vmatpush1.msra.mxu0 %v273
    %716 = vmatprep.subr.mxu0 0.0
    %717 = vmatpush1.msra.mxu0 %v274
    %718 = vmatprep.subr.mxu0 0.0
    %719 = vmatpush1.msra.mxu0 %v275
    %720 = vmatprep.subr.mxu0 0.0
    %721 = vmatpush1.msra.mxu0 %v276
    %722 = vmatprep.subr.mxu0 0.0
    %723 = vmatpush1.msra.mxu0 %v277
    %724 = vmatprep.subr.mxu0 0.0
    %725 = vmatpush1.msra.mxu0 %v278
    %726 = vmatprep.subr.mxu0 0.0
    %727 = vmatpush1.msra.mxu0 %v279
    %728 = vmatprep.subr.mxu0 0.0
    %729 = vmatpush1.msra.mxu0 %v280
    %730 = vmatprep.subr.mxu0 0.0
    %731 = vmatpush1.msra.mxu0 %v281
    %732 = vmatprep.subr.mxu0 0.0
    %733 = vmatpush1.msra.mxu0 %v282
    %734 = vmatprep.subr.mxu0 0.0
    %735 = vmatpush1.msra.mxu0 %v283
    %736 = vmatprep.subr.mxu0 0.0
    %737 = vmatpush1.msra.mxu0 0.0
    %738 = vmatprep.subr.mxu0 0.0
    %739 = vmatpush1.msra.mxu0 0.0
    %740 = vmatprep.subr.mxu0 0.0
    %741 = vmatpush1.msra.mxu0 0.0
    %742 = vmatprep.subr.mxu0 0.0
    %743 = vmatpush1.msra.mxu0 0.0
    %744 = vmatprep.subr.mxu0 0.0
    %745 = vmatpush1.msra.mxu0 0.0
    %746 = vmatprep.subr.mxu0 0.0
    %747 = vmatpush1.msra.mxu0 0.0
    %748 = vmatprep.subr.mxu0 0.0
    %749 = vmatpush1.msra.mxu0 0.0
    %750 = vmatprep.subr.mxu0 0.0
    %751 = vmatpush1.msra.mxu0 0.0
    %752 = vmatprep.subr.mxu0 0.0
    %753 = vmatpush1.msra.mxu0 0.0
    %754 = vmatprep.subr.mxu0 0.0
    %755 = vmatpush1.msra.mxu0 0.0
    %756 = vmatprep.subr.mxu0 0.0
    %757 = vmatpush1.msra.mxu0 0.0
    %758 = vmatprep.subr.mxu0 0.0
    %759 = vmatpush1.msra.mxu0 0.0
    %760 = vmatprep.subr.mxu0 0.0
    %761 = vmatpush1.msra.mxu0 0.0
    %762 = vmatprep.subr.mxu0 0.0
    %763 = vmatpush1.msra.mxu0 0.0
    %764 = vmatprep.subr.mxu0 0.0
    %765 = vmatpush1.msra.mxu0 0.0
    %766 = vmatprep.subr.mxu0 0.0
    %767 = vmatpush1.msra.mxu0 0.0
    %768 = vmatprep.subr.mxu0 0.0
    %769 = vmatpush1.msra.mxu0 0.0
    %770 = vmatprep.subr.mxu0 0.0
    %771 = vmatpush1.msra.mxu0 0.0
    %772 = vmatprep.subr.mxu0 0.0
    %773 = vmatpush1.msra.mxu0 0.0
    %774 = vmatprep.subr.mxu0 0.0
    %775 = vmatpush1.msra.mxu0 0.0
    %776 = vmatprep.mubr.f32.mxu0 0.0
    %777 = vmatmul.mubr.f32.gmra.mrb[0].mxu0 %v701
    %v778 = vpop.f32.mrb[0].mxu0
    %v779 = vadd.f32 0.0, %v778
    %v780 = vpop.f32.mrb[0].mxu0
    %781 = vmatprep.mubr.f32.mxu0 0.0
    %782 = vmatmul.mubr.f32.gmra.mrb[0].mxu0 %v704
    %v783 = vpop.f32.mrb[0].mxu0
    %v784 = vadd.f32 0.0, %v783
    %v785 = vpop.f32.mrb[0].mxu0
    %786 = vmatprep.mubr.f32.mxu0 0.0
    %787 = vmatmul.mubr.f32.gmra.mrb[0].mxu0 %v707
    %v788 = vpop.f32.mrb[0].mxu0
    %v789 = vadd.f32 0.0, %v788
    %v790 = vpop.f32.mrb[0].mxu0
    %791 = vmatprep.mubr.f32.mxu0 0.0
    %792 = vmatmul.mubr.f32.gmra.mrb[0].mxu0 %v710
    %v793 = vpop.f32.mrb[0].mxu0
    %v794 = vadd.f32 0.0, %v793
    %v795 = vpop.f32.mrb[0].mxu0
    %796 = vdwg.mxu0
    %s797 = scalar_lea.vmem %s2, 32
    %v798 = vld [vmem:[%s797] sm:$0xff]
    %v799 = vld [vmem:[%s797 + $0x8] sm:$0x1]
    %v801 = vsel %vm493, %v779, 0
    %v804 = vsel %vm493, %v784, 0
    %v807 = vsel %vm493, %v789, 0
    %v810 = vsel %vm493, %v794, 0
    %v813 = vsel %vm506, %v799, 0
    %815 = vmatprep.subr.mxu0 0.0
    %816 = vmatpush1.msra.mxu0 %v798
    %817 = vmatprep.subr.mxu0 0.0
    %818 = vmatpush1.msra.mxu0 %v813
    %819 = vmatprep.subr.mxu0 0.0
    %820 = vmatpush1.msra.mxu0 0.0
    %821 = vmatprep.subr.mxu0 0.0
    %822 = vmatpush1.msra.mxu0 0.0
    %823 = vmatprep.subr.mxu0 0.0
    %824 = vmatpush1.msra.mxu0 0.0
    %825 = vmatprep.subr.mxu0 0.0
    %826 = vmatpush1.msra.mxu0 0.0
    %827 = vmatprep.subr.mxu0 0.0
    %828 = vmatpush1.msra.mxu0 0.0
    %829 = vmatprep.subr.mxu0 0.0
    %830 = vmatpush1.msra.mxu0 0.0
    %831 = vmatprep.subr.mxu0 0.0
    %832 = vmatpush1.msra.mxu0 0.0
    %833 = vmatprep.subr.mxu0 0.0
    %834 = vmatpush1.msra.mxu0 0.0
    %835 = vmatprep.subr.mxu0 0.0
    %836 = vmatpush1.msra.mxu0 0.0
    %837 = vmatprep.subr.mxu0 0.0
    %838 = vmatpush1.msra.mxu0 0.0
    %839 = vmatprep.subr.mxu0 0.0
    %840 = vmatpush1.msra.mxu0 0.0
    %841 = vmatprep.subr.mxu0 0.0
    %842 = vmatpush1.msra.mxu0 0.0
    %843 = vmatprep.subr.mxu0 0.0
    %844 = vmatpush1.msra.mxu0 0.0
    %845 = vmatprep.subr.mxu0 0.0
    %846 = vmatpush1.msra.mxu0 0.0
    %847 = vmatprep.subr.mxu0 0.0
    %848 = vmatpush1.msra.mxu0 0.0
    %849 = vmatprep.subr.mxu0 0.0
    %850 = vmatpush1.msra.mxu0 0.0
    %851 = vmatprep.subr.mxu0 0.0
    %852 = vmatpush1.msra.mxu0 0.0
    %853 = vmatprep.subr.mxu0 0.0
    %854 = vmatpush1.msra.mxu0 0.0
    %855 = vmatprep.subr.mxu0 0.0
    %856 = vmatpush1.msra.mxu0 0.0
    %857 = vmatprep.subr.mxu0 0.0
    %858 = vmatpush1.msra.mxu0 0.0
    %859 = vmatprep.subr.mxu0 0.0
    %860 = vmatpush1.msra.mxu0 0.0
    %861 = vmatprep.subr.mxu0 0.0
    %862 = vmatpush1.msra.mxu0 0.0
    %863 = vmatprep.subr.mxu0 0.0
    %864 = vmatpush1.msra.mxu0 0.0
    %865 = vmatprep.subr.mxu0 0.0
    %866 = vmatpush1.msra.mxu0 0.0
    %867 = vmatprep.subr.mxu0 0.0
    %868 = vmatpush1.msra.mxu0 0.0
    %869 = vmatprep.subr.mxu0 0.0
    %870 = vmatpush1.msra.mxu0 0.0
    %871 = vmatprep.subr.mxu0 0.0
    %872 = vmatpush1.msra.mxu0 0.0
    %873 = vmatprep.subr.mxu0 0.0
    %874 = vmatpush1.msra.mxu0 0.0
    %875 = vmatprep.subr.mxu0 0.0
    %876 = vmatpush1.msra.mxu0 0.0
    %877 = vmatprep.subr.mxu0 0.0
    %878 = vmatpush1.msra.mxu0 0.0
    %879 = vmatprep.mubr.f32.mxu0 0.0
    %880 = vmatmul.mubr.f32.gmra.mrb[0].mxu0 %v801
    %v881 = vpop.f32.mrb[0].mxu0
    %v882 = vadd.f32 0.0, %v881
    %v883 = vpop.f32.mrb[0].mxu0
    %884 = vmatprep.mubr.f32.mxu0 0.0
    %885 = vmatmul.mubr.f32.gmra.mrb[0].mxu0 %v804
    %v886 = vpop.f32.mrb[0].mxu0
    %v887 = vadd.f32 0.0, %v886
    %v888 = vpop.f32.mrb[0].mxu0
    %889 = vmatprep.mubr.f32.mxu0 0.0
    %890 = vmatmul.mubr.f32.gmra.mrb[0].mxu0 %v807
    %v891 = vpop.f32.mrb[0].mxu0
    %v892 = vadd.f32 0.0, %v891
    %v893 = vpop.f32.mrb[0].mxu0
    %894 = vmatprep.mubr.f32.mxu0 0.0
    %895 = vmatmul.mubr.f32.gmra.mrb[0].mxu0 %v810
    %v896 = vpop.f32.mrb[0].mxu0
    %v897 = vadd.f32 0.0, %v896
    %v898 = vpop.f32.mrb[0].mxu0
    %899 = vdwg.mxu0
    %v900 = vadd.f32 %v677, %v882
    %v901 = vadd.f32 %v682, %v887
    %v902 = vadd.f32 %v687, %v892
    %v903 = vadd.f32 %v692, %v897
    %s904 = scalar_lea.vmem [#allocation2], 96
    %v905 = vld [vmem:[%s904] sm:$0xff]
    %v906 = vld [vmem:[%s904 + $0x8] sm:$0xff]
    %v907 = vld [vmem:[%s904 + $0x10] sm:$0xff]
    %v908 = vld [vmem:[%s904 + $0x18] sm:$0xff]
    %v910 = vsel %vm288, %v905, 0
    %v913 = vsel %vm288, %v906, 0
    %v916 = vsel %vm288, %v907, 0
    %v919 = vsel %vm288, %v908, 0
    %921 = vmatprep.subr.mxu0 0.0
    %922 = vmatpush1.msra.mxu0 %v272
    %923 = vmatprep.subr.mxu0 0.0
    %924 = vmatpush1.msra.mxu0 %v273
    %925 = vmatprep.subr.mxu0 0.0
    %926 = vmatpush1.msra.mxu0 %v274
    %927 = vmatprep.subr.mxu0 0.0
    %928 = vmatpush1.msra.mxu0 %v275
    %929 = vmatprep.subr.mxu0 0.0
    %930 = vmatpush1.msra.mxu0 %v276
    %931 = vmatprep.subr.mxu0 0.0
    %932 = vmatpush1.msra.mxu0 %v277
    %933 = vmatprep.subr.mxu0 0.0
    %934 = vmatpush1.msra.mxu0 %v278
    %935 = vmatprep.subr.mxu0 0.0
    %936 = vmatpush1.msra.mxu0 %v279
    %937 = vmatprep.subr.mxu0 0.0
    %938 = vmatpush1.msra.mxu0 %v280
    %939 = vmatprep.subr.mxu0 0.0
    %940 = vmatpush1.msra.mxu0 %v281
    %941 = vmatprep.subr.mxu0 0.0
    %942 = vmatpush1.msra.mxu0 %v282
    %943 = vmatprep.subr.mxu0 0.0
    %944 = vmatpush1.msra.mxu0 %v283
    %945 = vmatprep.subr.mxu0 0.0
    %946 = vmatpush1.msra.mxu0 0.0
    %947 = vmatprep.subr.mxu0 0.0
    %948 = vmatpush1.msra.mxu0 0.0
    %949 = vmatprep.subr.mxu0 0.0
    %950 = vmatpush1.msra.mxu0 0.0
    %951 = vmatprep.subr.mxu0 0.0
    %952 = vmatpush1.msra.mxu0 0.0
    %953 = vmatprep.subr.mxu0 0.0
    %954 = vmatpush1.msra.mxu0 0.0
    %955 = vmatprep.subr.mxu0 0.0
    %956 = vmatpush1.msra.mxu0 0.0
    %957 = vmatprep.subr.mxu0 0.0
    %958 = vmatpush1.msra.mxu0 0.0
    %959 = vmatprep.subr.mxu0 0.0
    %960 = vmatpush1.msra.mxu0 0.0
    %961 = vmatprep.subr.mxu0 0.0
    %962 = vmatpush1.msra.mxu0 0.0
    %963 = vmatprep.subr.mxu0 0.0
    %964 = vmatpush1.msra.mxu0 0.0
    %965 = vmatprep.subr.mxu0 0.0
    %966 = vmatpush1.msra.mxu0 0.0
    %967 = vmatprep.subr.mxu0 0.0
    %968 = vmatpush1.msra.mxu0 0.0
    %969 = vmatprep.subr.mxu0 0.0
    %970 = vmatpush1.msra.mxu0 0.0
    %971 = vmatprep.subr.mxu0 0.0
    %972 = vmatpush1.msra.mxu0 0.0
    %973 = vmatprep.subr.mxu0 0.0
    %974 = vmatpush1.msra.mxu0 0.0
    %975 = vmatprep.subr.mxu0 0.0
    %976 = vmatpush1.msra.mxu0 0.0
    %977 = vmatprep.subr.mxu0 0.0
    %978 = vmatpush1.msra.mxu0 0.0
    %979 = vmatprep.subr.mxu0 0.0
    %980 = vmatpush1.msra.mxu0 0.0
    %981 = vmatprep.subr.mxu0 0.0
    %982 = vmatpush1.msra.mxu0 0.0
    %983 = vmatprep.subr.mxu0 0.0
    %984 = vmatpush1.msra.mxu0 0.0
    %985 = vmatprep.mubr.f32.mxu0 0.0
    %986 = vmatmul.mubr.f32.gmra.mrb[0].mxu0 %v910
    %v987 = vpop.f32.mrb[0].mxu0
    %v988 = vadd.f32 0.0, %v987
    %v989 = vpop.f32.mrb[0].mxu0
    %990 = vmatprep.mubr.f32.mxu0 0.0
    %991 = vmatmul.mubr.f32.gmra.mrb[0].mxu0 %v913
    %v992 = vpop.f32.mrb[0].mxu0
    %v993 = vadd.f32 0.0, %v992
    %v994 = vpop.f32.mrb[0].mxu0
    %995 = vmatprep.mubr.f32.mxu0 0.0
    %996 = vmatmul.mubr.f32.gmra.mrb[0].mxu0 %v916
    %v997 = vpop.f32.mrb[0].mxu0
    %v998 = vadd.f32 0.0, %v997
    %v999 = vpop.f32.mrb[0].mxu0
    %1000 = vmatprep.mubr.f32.mxu0 0.0
    %1001 = vmatmul.mubr.f32.gmra.mrb[0].mxu0 %v919
    %v1002 = vpop.f32.mrb[0].mxu0
    %v1003 = vadd.f32 0.0, %v1002
    %v1004 = vpop.f32.mrb[0].mxu0
    %1005 = vdwg.mxu0
    %s1006 = scalar_lea.vmem %s2, 48
    %v1007 = vld [vmem:[%s1006] sm:$0xff]
    %v1008 = vld [vmem:[%s1006 + $0x8] sm:$0x1]
    %v1010 = vsel %vm493, %v988, 0
    %v1013 = vsel %vm493, %v993, 0
    %v1016 = vsel %vm493, %v998, 0
    %v1019 = vsel %vm493, %v1003, 0
    %v1022 = vsel %vm506, %v1008, 0
    %1024 = vmatprep.subr.mxu0 0.0
    %1025 = vmatpush1.msra.mxu0 %v1007
    %1026 = vmatprep.subr.mxu0 0.0
    %1027 = vmatpush1.msra.mxu0 %v1022
    %1028 = vmatprep.subr.mxu0 0.0
    %1029 = vmatpush1.msra.mxu0 0.0
    %1030 = vmatprep.subr.mxu0 0.0
    %1031 = vmatpush1.msra.mxu0 0.0
    %1032 = vmatprep.subr.mxu0 0.0
    %1033 = vmatpush1.msra.mxu0 0.0
    %1034 = vmatprep.subr.mxu0 0.0
    %1035 = vmatpush1.msra.mxu0 0.0
    %1036 = vmatprep.subr.mxu0 0.0
    %1037 = vmatpush1.msra.mxu0 0.0
    %1038 = vmatprep.subr.mxu0 0.0
    %1039 = vmatpush1.msra.mxu0 0.0
    %1040 = vmatprep.subr.mxu0 0.0
    %1041 = vmatpush1.msra.mxu0 0.0
    %1042 = vmatprep.subr.mxu0 0.0
    %1043 = vmatpush1.msra.mxu0 0.0
    %1044 = vmatprep.subr.mxu0 0.0
    %1045 = vmatpush1.msra.mxu0 0.0
    %1046 = vmatprep.subr.mxu0 0.0
    %1047 = vmatpush1.msra.mxu0 0.0
    %1048 = vmatprep.subr.mxu0 0.0
    %1049 = vmatpush1.msra.mxu0 0.0
    %1050 = vmatprep.subr.mxu0 0.0
    %1051 = vmatpush1.msra.mxu0 0.0
    %1052 = vmatprep.subr.mxu0 0.0
    %1053 = vmatpush1.msra.mxu0 0.0
    %1054 = vmatprep.subr.mxu0 0.0
    %1055 = vmatpush1.msra.mxu0 0.0
    %1056 = vmatprep.subr.mxu0 0.0
    %1057 = vmatpush1.msra.mxu0 0.0
    %1058 = vmatprep.subr.mxu0 0.0
    %1059 = vmatpush1.msra.mxu0 0.0
    %1060 = vmatprep.subr.mxu0 0.0
    %1061 = vmatpush1.msra.mxu0 0.0
    %1062 = vmatprep.subr.mxu0 0.0
    %1063 = vmatpush1.msra.mxu0 0.0
    %1064 = vmatprep.subr.mxu0 0.0
    %1065 = vmatpush1.msra.mxu0 0.0
    %1066 = vmatprep.subr.mxu0 0.0
    %1067 = vmatpush1.msra.mxu0 0.0
    %1068 = vmatprep.subr.mxu0 0.0
    %1069 = vmatpush1.msra.mxu0 0.0
    %1070 = vmatprep.subr.mxu0 0.0
    %1071 = vmatpush1.msra.mxu0 0.0
    %1072 = vmatprep.subr.mxu0 0.0
    %1073 = vmatpush1.msra.mxu0 0.0
    %1074 = vmatprep.subr.mxu0 0.0
    %1075 = vmatpush1.msra.mxu0 0.0
    %1076 = vmatprep.subr.mxu0 0.0
    %1077 = vmatpush1.msra.mxu0 0.0
    %1078 = vmatprep.subr.mxu0 0.0
    %1079 = vmatpush1.msra.mxu0 0.0
    %1080 = vmatprep.subr.mxu0 0.0
    %1081 = vmatpush1.msra.mxu0 0.0
    %1082 = vmatprep.subr.mxu0 0.0
    %1083 = vmatpush1.msra.mxu0 0.0
    %1084 = vmatprep.subr.mxu0 0.0
    %1085 = vmatpush1.msra.mxu0 0.0
    %1086 = vmatprep.subr.mxu0 0.0
    %1087 = vmatpush1.msra.mxu0 0.0
    %1088 = vmatprep.mubr.f32.mxu0 0.0
    %1089 = vmatmul.mubr.f32.gmra.mrb[0].mxu0 %v1010
    %v1090 = vpop.f32.mrb[0].mxu0
    %v1091 = vadd.f32 0.0, %v1090
    %v1092 = vpop.f32.mrb[0].mxu0
    %1093 = vmatprep.mubr.f32.mxu0 0.0
    %1094 = vmatmul.mubr.f32.gmra.mrb[0].mxu0 %v1013
    %v1095 = vpop.f32.mrb[0].mxu0
    %v1096 = vadd.f32 0.0, %v1095
    %v1097 = vpop.f32.mrb[0].mxu0
    %1098 = vmatprep.mubr.f32.mxu0 0.0
    %1099 = vmatmul.mubr.f32.gmra.mrb[0].mxu0 %v1016
    %v1100 = vpop.f32.mrb[0].mxu0
    %v1101 = vadd.f32 0.0, %v1100
    %v1102 = vpop.f32.mrb[0].mxu0
    %1103 = vmatprep.mubr.f32.mxu0 0.0
    %1104 = vmatmul.mubr.f32.gmra.mrb[0].mxu0 %v1019
    %v1105 = vpop.f32.mrb[0].mxu0
    %v1106 = vadd.f32 0.0, %v1105
    %v1107 = vpop.f32.mrb[0].mxu0
    %1108 = vdwg.mxu0
    %v1109 = vadd.f32 %v900, %v1091
    %v1110 = vadd.f32 %v901, %v1096
    %v1111 = vadd.f32 %v902, %v1101
    %v1112 = vadd.f32 %v903, %v1106
    %s1113 = scalar_lea.vmem [#allocation2], 128
    %v1114 = vld [vmem:[%s1113] sm:$0xff]
    %v1115 = vld [vmem:[%s1113 + $0x8] sm:$0xff]
    %v1116 = vld [vmem:[%s1113 + $0x10] sm:$0xff]
    %v1117 = vld [vmem:[%s1113 + $0x18] sm:$0xff]
    %v1119 = vsel %vm288, %v1114, 0
    %v1122 = vsel %vm288, %v1115, 0
    %v1125 = vsel %vm288, %v1116, 0
    %v1128 = vsel %vm288, %v1117, 0
    %1130 = vmatprep.subr.mxu0 0.0
    %1131 = vmatpush1.msra.mxu0 %v272
    %1132 = vmatprep.subr.mxu0 0.0
    %1133 = vmatpush1.msra.mxu0 %v273
    %1134 = vmatprep.subr.mxu0 0.0
    %1135 = vmatpush1.msra.mxu0 %v274
    %1136 = vmatprep.subr.mxu0 0.0
    %1137 = vmatpush1.msra.mxu0 %v275
    %1138 = vmatprep.subr.mxu0 0.0
    %1139 = vmatpush1.msra.mxu0 %v276
    %1140 = vmatprep.subr.mxu0 0.0
    %1141 = vmatpush1.msra.mxu0 %v277
    %1142 = vmatprep.subr.mxu0 0.0
    %1143 = vmatpush1.msra.mxu0 %v278
    %1144 = vmatprep.subr.mxu0 0.0
    %1145 = vmatpush1.msra.mxu0 %v279
    %1146 = vmatprep.subr.mxu0 0.0
    %1147 = vmatpush1.msra.mxu0 %v280
    %1148 = vmatprep.subr.mxu0 0.0
    %1149 = vmatpush1.msra.mxu0 %v281
    %1150 = vmatprep.subr.mxu0 0.0
    %1151 = vmatpush1.msra.mxu0 %v282
    %1152 = vmatprep.subr.mxu0 0.0
    %1153 = vmatpush1.msra.mxu0 %v283
    %1154 = vmatprep.subr.mxu0 0.0
    %1155 = vmatpush1.msra.mxu0 0.0
    %1156 = vmatprep.subr.mxu0 0.0
    %1157 = vmatpush1.msra.mxu0 0.0
    %1158 = vmatprep.subr.mxu0 0.0
    %1159 = vmatpush1.msra.mxu0 0.0
    %1160 = vmatprep.subr.mxu0 0.0
    %1161 = vmatpush1.msra.mxu0 0.0
    %1162 = vmatprep.subr.mxu0 0.0
    %1163 = vmatpush1.msra.mxu0 0.0
    %1164 = vmatprep.subr.mxu0 0.0
    %1165 = vmatpush1.msra.mxu0 0.0
    %1166 = vmatprep.subr.mxu0 0.0
    %1167 = vmatpush1.msra.mxu0 0.0
    %1168 = vmatprep.subr.mxu0 0.0
    %1169 = vmatpush1.msra.mxu0 0.0
    %1170 = vmatprep.subr.mxu0 0.0
    %1171 = vmatpush1.msra.mxu0 0.0
    %1172 = vmatprep.subr.mxu0 0.0
    %1173 = vmatpush1.msra.mxu0 0.0
    %1174 = vmatprep.subr.mxu0 0.0
    %1175 = vmatpush1.msra.mxu0 0.0
    %1176 = vmatprep.subr.mxu0 0.0
    %1177 = vmatpush1.msra.mxu0 0.0
    %1178 = vmatprep.subr.mxu0 0.0
    %1179 = vmatpush1.msra.mxu0 0.0
    %1180 = vmatprep.subr.mxu0 0.0
    %1181 = vmatpush1.msra.mxu0 0.0
    %1182 = vmatprep.subr.mxu0 0.0
    %1183 = vmatpush1.msra.mxu0 0.0
    %1184 = vmatprep.subr.mxu0 0.0
    %1185 = vmatpush1.msra.mxu0 0.0
    %1186 = vmatprep.subr.mxu0 0.0
    %1187 = vmatpush1.msra.mxu0 0.0
    %1188 = vmatprep.subr.mxu0 0.0
    %1189 = vmatpush1.msra.mxu0 0.0
    %1190 = vmatprep.subr.mxu0 0.0
    %1191 = vmatpush1.msra.mxu0 0.0
    %1192 = vmatprep.subr.mxu0 0.0
    %1193 = vmatpush1.msra.mxu0 0.0
    %1194 = vmatprep.mubr.f32.mxu0 0.0
    %1195 = vmatmul.mubr.f32.gmra.mrb[0].mxu0 %v1119
    %v1196 = vpop.f32.mrb[0].mxu0
    %v1197 = vadd.f32 0.0, %v1196
    %v1198 = vpop.f32.mrb[0].mxu0
    %1199 = vmatprep.mubr.f32.mxu0 0.0
    %1200 = vmatmul.mubr.f32.gmra.mrb[0].mxu0 %v1122
    %v1201 = vpop.f32.mrb[0].mxu0
    %v1202 = vadd.f32 0.0, %v1201
    %v1203 = vpop.f32.mrb[0].mxu0
    %1204 = vmatprep.mubr.f32.mxu0 0.0
    %1205 = vmatmul.mubr.f32.gmra.mrb[0].mxu0 %v1125
    %v1206 = vpop.f32.mrb[0].mxu0
    %v1207 = vadd.f32 0.0, %v1206
    %v1208 = vpop.f32.mrb[0].mxu0
    %1209 = vmatprep.mubr.f32.mxu0 0.0
    %1210 = vmatmul.mubr.f32.gmra.mrb[0].mxu0 %v1128
    %v1211 = vpop.f32.mrb[0].mxu0
    %v1212 = vadd.f32 0.0, %v1211
    %v1213 = vpop.f32.mrb[0].mxu0
    %1214 = vdwg.mxu0
    %s1215 = scalar_lea.vmem %s2, 64
    %v1216 = vld [vmem:[%s1215] sm:$0xff]
    %v1217 = vld [vmem:[%s1215 + $0x8] sm:$0x1]
    %v1219 = vsel %vm493, %v1197, 0
    %v1222 = vsel %vm493, %v1202, 0
    %v1225 = vsel %vm493, %v1207, 0
    %v1228 = vsel %vm493, %v1212, 0
    %v1231 = vsel %vm506, %v1217, 0
    %1233 = vmatprep.subr.mxu0 0.0
    %1234 = vmatpush1.msra.mxu0 %v1216
    %1235 = vmatprep.subr.mxu0 0.0
    %1236 = vmatpush1.msra.mxu0 %v1231
    %1237 = vmatprep.subr.mxu0 0.0
    %1238 = vmatpush1.msra.mxu0 0.0
    %1239 = vmatprep.subr.mxu0 0.0
    %1240 = vmatpush1.msra.mxu0 0.0
    %1241 = vmatprep.subr.mxu0 0.0
    %1242 = vmatpush1.msra.mxu0 0.0
    %1243 = vmatprep.subr.mxu0 0.0
    %1244 = vmatpush1.msra.mxu0 0.0
    %1245 = vmatprep.subr.mxu0 0.0
    %1246 = vmatpush1.msra.mxu0 0.0
    %1247 = vmatprep.subr.mxu0 0.0
    %1248 = vmatpush1.msra.mxu0 0.0
    %1249 = vmatprep.subr.mxu0 0.0
    %1250 = vmatpush1.msra.mxu0 0.0
    %1251 = vmatprep.subr.mxu0 0.0
    %1252 = vmatpush1.msra.mxu0 0.0
    %1253 = vmatprep.subr.mxu0 0.0
    %1254 = vmatpush1.msra.mxu0 0.0
    %1255 = vmatprep.subr.mxu0 0.0
    %1256 = vmatpush1.msra.mxu0 0.0
    %1257 = vmatprep.subr.mxu0 0.0
    %1258 = vmatpush1.msra.mxu0 0.0
    %1259 = vmatprep.subr.mxu0 0.0
    %1260 = vmatpush1.msra.mxu0 0.0
    %1261 = vmatprep.subr.mxu0 0.0
    %1262 = vmatpush1.msra.mxu0 0.0
    %1263 = vmatprep.subr.mxu0 0.0
    %1264 = vmatpush1.msra.mxu0 0.0
    %1265 = vmatprep.subr.mxu0 0.0
    %1266 = vmatpush1.msra.mxu0 0.0
    %1267 = vmatprep.subr.mxu0 0.0
    %1268 = vmatpush1.msra.mxu0 0.0
    %1269 = vmatprep.subr.mxu0 0.0
    %1270 = vmatpush1.msra.mxu0 0.0
    %1271 = vmatprep.subr.mxu0 0.0
    %1272 = vmatpush1.msra.mxu0 0.0
    %1273 = vmatprep.subr.mxu0 0.0
    %1274 = vmatpush1.msra.mxu0 0.0
    %1275 = vmatprep.subr.mxu0 0.0
    %1276 = vmatpush1.msra.mxu0 0.0
    %1277 = vmatprep.subr.mxu0 0.0
    %1278 = vmatpush1.msra.mxu0 0.0
    %1279 = vmatprep.subr.mxu0 0.0
    %1280 = vmatpush1.msra.mxu0 0.0
    %1281 = vmatprep.subr.mxu0 0.0
    %1282 = vmatpush1.msra.mxu0 0.0
    %1283 = vmatprep.subr.mxu0 0.0
    %1284 = vmatpush1.msra.mxu0 0.0
    %1285 = vmatprep.subr.mxu0 0.0
    %1286 = vmatpush1.msra.mxu0 0.0
    %1287 = vmatprep.subr.mxu0 0.0
    %1288 = vmatpush1.msra.mxu0 0.0
    %1289 = vmatprep.subr.mxu0 0.0
    %1290 = vmatpush1.msra.mxu0 0.0
    %1291 = vmatprep.subr.mxu0 0.0
    %1292 = vmatpush1.msra.mxu0 0.0
    %1293 = vmatprep.subr.mxu0 0.0
    %1294 = vmatpush1.msra.mxu0 0.0
    %1295 = vmatprep.subr.mxu0 0.0
    %1296 = vmatpush1.msra.mxu0 0.0
    %1297 = vmatprep.mubr.f32.mxu0 0.0
    %1298 = vmatmul.mubr.f32.gmra.mrb[0].mxu0 %v1219
    %v1299 = vpop.f32.mrb[0].mxu0
    %v1300 = vadd.f32 0.0, %v1299
    %v1301 = vpop.f32.mrb[0].mxu0
    %1302 = vmatprep.mubr.f32.mxu0 0.0
    %1303 = vmatmul.mubr.f32.gmra.mrb[0].mxu0 %v1222
    %v1304 = vpop.f32.mrb[0].mxu0
    %v1305 = vadd.f32 0.0, %v1304
    %v1306 = vpop.f32.mrb[0].mxu0
    %1307 = vmatprep.mubr.f32.mxu0 0.0
    %1308 = vmatmul.mubr.f32.gmra.mrb[0].mxu0 %v1225
    %v1309 = vpop.f32.mrb[0].mxu0
    %v1310 = vadd.f32 0.0, %v1309
    %v1311 = vpop.f32.mrb[0].mxu0
    %1312 = vmatprep.mubr.f32.mxu0 0.0
    %1313 = vmatmul.mubr.f32.gmra.mrb[0].mxu0 %v1228
    %v1314 = vpop.f32.mrb[0].mxu0
    %v1315 = vadd.f32 0.0, %v1314
    %v1316 = vpop.f32.mrb[0].mxu0
    %1317 = vdwg.mxu0
    %v1318 = vadd.f32 %v1109, %v1300
    %v1319 = vadd.f32 %v1110, %v1305
    %v1320 = vadd.f32 %v1111, %v1310
    %v1321 = vadd.f32 %v1112, %v1315
    %s1322 = scalar_lea.vmem [#allocation2], 160
    %v1323 = vld [vmem:[%s1322] sm:$0xff]
    %v1324 = vld [vmem:[%s1322 + $0x8] sm:$0xff]
    %v1325 = vld [vmem:[%s1322 + $0x10] sm:$0xff]
    %v1326 = vld [vmem:[%s1322 + $0x18] sm:$0xff]
    %v1328 = vsel %vm288, %v1323, 0
    %v1331 = vsel %vm288, %v1324, 0
    %v1334 = vsel %vm288, %v1325, 0
    %v1337 = vsel %vm288, %v1326, 0
    %1339 = vmatprep.subr.mxu0 0.0
    %1340 = vmatpush1.msra.mxu0 %v272
    %1341 = vmatprep.subr.mxu0 0.0
    %1342 = vmatpush1.msra.mxu0 %v273
    %1343 = vmatprep.subr.mxu0 0.0
    %1344 = vmatpush1.msra.mxu0 %v274
    %1345 = vmatprep.subr.mxu0 0.0
    %1346 = vmatpush1.msra.mxu0 %v275
    %1347 = vmatprep.subr.mxu0 0.0
    %1348 = vmatpush1.msra.mxu0 %v276
    %1349 = vmatprep.subr.mxu0 0.0
    %1350 = vmatpush1.msra.mxu0 %v277
    %1351 = vmatprep.subr.mxu0 0.0
    %1352 = vmatpush1.msra.mxu0 %v278
    %1353 = vmatprep.subr.mxu0 0.0
    %1354 = vmatpush1.msra.mxu0 %v279
    %1355 = vmatprep.subr.mxu0 0.0
    %1356 = vmatpush1.msra.mxu0 %v280
    %1357 = vmatprep.subr.mxu0 0.0
    %1358 = vmatpush1.msra.mxu0 %v281
    %1359 = vmatprep.subr.mxu0 0.0
    %1360 = vmatpush1.msra.mxu0 %v282
    %1361 = vmatprep.subr.mxu0 0.0
    %1362 = vmatpush1.msra.mxu0 %v283
    %1363 = vmatprep.subr.mxu0 0.0
    %1364 = vmatpush1.msra.mxu0 0.0
    %1365 = vmatprep.subr.mxu0 0.0
    %1366 = vmatpush1.msra.mxu0 0.0
    %1367 = vmatprep.subr.mxu0 0.0
    %1368 = vmatpush1.msra.mxu0 0.0
    %1369 = vmatprep.subr.mxu0 0.0
    %1370 = vmatpush1.msra.mxu0 0.0
    %1371 = vmatprep.subr.mxu0 0.0
    %1372 = vmatpush1.msra.mxu0 0.0
    %1373 = vmatprep.subr.mxu0 0.0
    %1374 = vmatpush1.msra.mxu0 0.0
    %1375 = vmatprep.subr.mxu0 0.0
    %1376 = vmatpush1.msra.mxu0 0.0
    %1377 = vmatprep.subr.mxu0 0.0
    %1378 = vmatpush1.msra.mxu0 0.0
    %1379 = vmatprep.subr.mxu0 0.0
    %1380 = vmatpush1.msra.mxu0 0.0
    %1381 = vmatprep.subr.mxu0 0.0
    %1382 = vmatpush1.msra.mxu0 0.0
    %1383 = vmatprep.subr.mxu0 0.0
    %1384 = vmatpush1.msra.mxu0 0.0
    %1385 = vmatprep.subr.mxu0 0.0
    %1386 = vmatpush1.msra.mxu0 0.0
    %1387 = vmatprep.subr.mxu0 0.0
    %1388 = vmatpush1.msra.mxu0 0.0
    %1389 = vmatprep.subr.mxu0 0.0
    %1390 = vmatpush1.msra.mxu0 0.0
    %1391 = vmatprep.subr.mxu0 0.0
    %1392 = vmatpush1.msra.mxu0 0.0
    %1393 = vmatprep.subr.mxu0 0.0
    %1394 = vmatpush1.msra.mxu0 0.0
    %1395 = vmatprep.subr.mxu0 0.0
    %1396 = vmatpush1.msra.mxu0 0.0
    %1397 = vmatprep.subr.mxu0 0.0
    %1398 = vmatpush1.msra.mxu0 0.0
    %1399 = vmatprep.subr.mxu0 0.0
    %1400 = vmatpush1.msra.mxu0 0.0
    %1401 = vmatprep.subr.mxu0 0.0
    %1402 = vmatpush1.msra.mxu0 0.0
    %1403 = vmatprep.mubr.f32.mxu0 0.0
    %1404 = vmatmul.mubr.f32.gmra.mrb[0].mxu0 %v1328
    %v1405 = vpop.f32.mrb[0].mxu0
    %v1406 = vadd.f32 0.0, %v1405
    %v1407 = vpop.f32.mrb[0].mxu0
    %1408 = vmatprep.mubr.f32.mxu0 0.0
    %1409 = vmatmul.mubr.f32.gmra.mrb[0].mxu0 %v1331
    %v1410 = vpop.f32.mrb[0].mxu0
    %v1411 = vadd.f32 0.0, %v1410
    %v1412 = vpop.f32.mrb[0].mxu0
    %1413 = vmatprep.mubr.f32.mxu0 0.0
    %1414 = vmatmul.mubr.f32.gmra.mrb[0].mxu0 %v1334
    %v1415 = vpop.f32.mrb[0].mxu0
    %v1416 = vadd.f32 0.0, %v1415
    %v1417 = vpop.f32.mrb[0].mxu0
    %1418 = vmatprep.mubr.f32.mxu0 0.0
    %1419 = vmatmul.mubr.f32.gmra.mrb[0].mxu0 %v1337
    %v1420 = vpop.f32.mrb[0].mxu0
    %v1421 = vadd.f32 0.0, %v1420
    %v1422 = vpop.f32.mrb[0].mxu0
    %1423 = vdwg.mxu0
    %s1424 = scalar_lea.vmem %s2, 80
    %v1425 = vld [vmem:[%s1424] sm:$0xff]
    %v1426 = vld [vmem:[%s1424 + $0x8] sm:$0x1]
    %v1428 = vsel %vm493, %v1406, 0
    %v1431 = vsel %vm493, %v1411, 0
    %v1434 = vsel %vm493, %v1416, 0
    %v1437 = vsel %vm493, %v1421, 0
    %v1440 = vsel %vm506, %v1426, 0
    %1442 = vmatprep.subr.mxu0 0.0
    %1443 = vmatpush1.msra.mxu0 %v1425
    %1444 = vmatprep.subr.mxu0 0.0
    %1445 = vmatpush1.msra.mxu0 %v1440
    %1446 = vmatprep.subr.mxu0 0.0
    %1447 = vmatpush1.msra.mxu0 0.0
    %1448 = vmatprep.subr.mxu0 0.0
    %1449 = vmatpush1.msra.mxu0 0.0
    %1450 = vmatprep.subr.mxu0 0.0
    %1451 = vmatpush1.msra.mxu0 0.0
    %1452 = vmatprep.subr.mxu0 0.0
    %1453 = vmatpush1.msra.mxu0 0.0
    %1454 = vmatprep.subr.mxu0 0.0
    %1455 = vmatpush1.msra.mxu0 0.0
    %1456 = vmatprep.subr.mxu0 0.0
    %1457 = vmatpush1.msra.mxu0 0.0
    %1458 = vmatprep.subr.mxu0 0.0
    %1459 = vmatpush1.msra.mxu0 0.0
    %1460 = vmatprep.subr.mxu0 0.0
    %1461 = vmatpush1.msra.mxu0 0.0
    %1462 = vmatprep.subr.mxu0 0.0
    %1463 = vmatpush1.msra.mxu0 0.0
    %1464 = vmatprep.subr.mxu0 0.0
    %1465 = vmatpush1.msra.mxu0 0.0
    %1466 = vmatprep.subr.mxu0 0.0
    %1467 = vmatpush1.msra.mxu0 0.0
    %1468 = vmatprep.subr.mxu0 0.0
    %1469 = vmatpush1.msra.mxu0 0.0
    %1470 = vmatprep.subr.mxu0 0.0
    %1471 = vmatpush1.msra.mxu0 0.0
    %1472 = vmatprep.subr.mxu0 0.0
    %1473 = vmatpush1.msra.mxu0 0.0
    %1474 = vmatprep.subr.mxu0 0.0
    %1475 = vmatpush1.msra.mxu0 0.0
    %1476 = vmatprep.subr.mxu0 0.0
    %1477 = vmatpush1.msra.mxu0 0.0
    %1478 = vmatprep.subr.mxu0 0.0
    %1479 = vmatpush1.msra.mxu0 0.0
    %1480 = vmatprep.subr.mxu0 0.0
    %1481 = vmatpush1.msra.mxu0 0.0
    %1482 = vmatprep.subr.mxu0 0.0
    %1483 = vmatpush1.msra.mxu0 0.0
    %1484 = vmatprep.subr.mxu0 0.0
    %1485 = vmatpush1.msra.mxu0 0.0
    %1486 = vmatprep.subr.mxu0 0.0
    %1487 = vmatpush1.msra.mxu0 0.0
    %1488 = vmatprep.subr.mxu0 0.0
    %1489 = vmatpush1.msra.mxu0 0.0
    %1490 = vmatprep.subr.mxu0 0.0
    %1491 = vmatpush1.msra.mxu0 0.0
    %1492 = vmatprep.subr.mxu0 0.0
    %1493 = vmatpush1.msra.mxu0 0.0
    %1494 = vmatprep.subr.mxu0 0.0
    %1495 = vmatpush1.msra.mxu0 0.0
    %1496 = vmatprep.subr.mxu0 0.0
    %1497 = vmatpush1.msra.mxu0 0.0
    %1498 = vmatprep.subr.mxu0 0.0
    %1499 = vmatpush1.msra.mxu0 0.0
    %1500 = vmatprep.subr.mxu0 0.0
    %1501 = vmatpush1.msra.mxu0 0.0
    %1502 = vmatprep.subr.mxu0 0.0
    %1503 = vmatpush1.msra.mxu0 0.0
    %1504 = vmatprep.subr.mxu0 0.0
    %1505 = vmatpush1.msra.mxu0 0.0
    %1506 = vmatprep.mubr.f32.mxu0 0.0
    %1507 = vmatmul.mubr.f32.gmra.mrb[0].mxu0 %v1428
    %v1508 = vpop.f32.mrb[0].mxu0
    %v1509 = vadd.f32 0.0, %v1508
    %v1510 = vpop.f32.mrb[0].mxu0
    %1511 = vmatprep.mubr.f32.mxu0 0.0
    %1512 = vmatmul.mubr.f32.gmra.mrb[0].mxu0 %v1431
    %v1513 = vpop.f32.mrb[0].mxu0
    %v1514 = vadd.f32 0.0, %v1513
    %v1515 = vpop.f32.mrb[0].mxu0
    %1516 = vmatprep.mubr.f32.mxu0 0.0
    %1517 = vmatmul.mubr.f32.gmra.mrb[0].mxu0 %v1434
    %v1518 = vpop.f32.mrb[0].mxu0
    %v1519 = vadd.f32 0.0, %v1518
    %v1520 = vpop.f32.mrb[0].mxu0
    %1521 = vmatprep.mubr.f32.mxu0 0.0
    %1522 = vmatmul.mubr.f32.gmra.mrb[0].mxu0 %v1437
    %v1523 = vpop.f32.mrb[0].mxu0
    %v1524 = vadd.f32 0.0, %v1523
    %v1525 = vpop.f32.mrb[0].mxu0
    %1526 = vdwg.mxu0
    %v1527 = vadd.f32 %v1318, %v1509
    %v1528 = vadd.f32 %v1319, %v1514
    %v1529 = vadd.f32 %v1320, %v1519
    %v1530 = vadd.f32 %v1321, %v1524
    %s1531 = scalar_lea.vmem [#allocation2], 192
    %v1532 = vld [vmem:[%s1531] sm:$0xff]
    %v1533 = vld [vmem:[%s1531 + $0x8] sm:$0xff]
    %v1534 = vld [vmem:[%s1531 + $0x10] sm:$0xff]
    %v1535 = vld [vmem:[%s1531 + $0x18] sm:$0xff]
    %v1537 = vsel %vm288, %v1532, 0
    %v1540 = vsel %vm288, %v1533, 0
    %v1543 = vsel %vm288, %v1534, 0
    %v1546 = vsel %vm288, %v1535, 0
    %1548 = vmatprep.subr.mxu0 0.0
    %1549 = vmatpush1.msra.mxu0 %v272
    %1550 = vmatprep.subr.mxu0 0.0
    %1551 = vmatpush1.msra.mxu0 %v273
    %1552 = vmatprep.subr.mxu0 0.0
    %1553 = vmatpush1.msra.mxu0 %v274
    %1554 = vmatprep.subr.mxu0 0.0
    %1555 = vmatpush1.msra.mxu0 %v275
    %1556 = vmatprep.subr.mxu0 0.0
    %1557 = vmatpush1.msra.mxu0 %v276
    %1558 = vmatprep.subr.mxu0 0.0
    %1559 = vmatpush1.msra.mxu0 %v277
    %1560 = vmatprep.subr.mxu0 0.0
    %1561 = vmatpush1.msra.mxu0 %v278
    %1562 = vmatprep.subr.mxu0 0.0
    %1563 = vmatpush1.msra.mxu0 %v279
    %1564 = vmatprep.subr.mxu0 0.0
    %1565 = vmatpush1.msra.mxu0 %v280
    %1566 = vmatprep.subr.mxu0 0.0
    %1567 = vmatpush1.msra.mxu0 %v281
    %1568 = vmatprep.subr.mxu0 0.0
    %1569 = vmatpush1.msra.mxu0 %v282
    %1570 = vmatprep.subr.mxu0 0.0
    %1571 = vmatpush1.msra.mxu0 %v283
    %1572 = vmatprep.subr.mxu0 0.0
    %1573 = vmatpush1.msra.mxu0 0.0
    %1574 = vmatprep.subr.mxu0 0.0
    %1575 = vmatpush1.msra.mxu0 0.0
    %1576 = vmatprep.subr.mxu0 0.0
    %1577 = vmatpush1.msra.mxu0 0.0
    %1578 = vmatprep.subr.mxu0 0.0
    %1579 = vmatpush1.msra.mxu0 0.0
    %1580 = vmatprep.subr.mxu0 0.0
    %1581 = vmatpush1.msra.mxu0 0.0
    %1582 = vmatprep.subr.mxu0 0.0
    %1583 = vmatpush1.msra.mxu0 0.0
    %1584 = vmatprep.subr.mxu0 0.0
    %1585 = vmatpush1.msra.mxu0 0.0
    %1586 = vmatprep.subr.mxu0 0.0
    %1587 = vmatpush1.msra.mxu0 0.0
    %1588 = vmatprep.subr.mxu0 0.0
    %1589 = vmatpush1.msra.mxu0 0.0
    %1590 = vmatprep.subr.mxu0 0.0
    %1591 = vmatpush1.msra.mxu0 0.0
    %1592 = vmatprep.subr.mxu0 0.0
    %1593 = vmatpush1.msra.mxu0 0.0
    %1594 = vmatprep.subr.mxu0 0.0
    %1595 = vmatpush1.msra.mxu0 0.0
    %1596 = vmatprep.subr.mxu0 0.0
    %1597 = vmatpush1.msra.mxu0 0.0
    %1598 = vmatprep.subr.mxu0 0.0
    %1599 = vmatpush1.msra.mxu0 0.0
    %1600 = vmatprep.subr.mxu0 0.0
    %1601 = vmatpush1.msra.mxu0 0.0
    %1602 = vmatprep.subr.mxu0 0.0
    %1603 = vmatpush1.msra.mxu0 0.0
    %1604 = vmatprep.subr.mxu0 0.0
    %1605 = vmatpush1.msra.mxu0 0.0
    %1606 = vmatprep.subr.mxu0 0.0
    %1607 = vmatpush1.msra.mxu0 0.0
    %1608 = vmatprep.subr.mxu0 0.0
    %1609 = vmatpush1.msra.mxu0 0.0
    %1610 = vmatprep.subr.mxu0 0.0
    %1611 = vmatpush1.msra.mxu0 0.0
    %1612 = vmatprep.mubr.f32.mxu0 0.0
    %1613 = vmatmul.mubr.f32.gmra.mrb[0].mxu0 %v1537
    %v1614 = vpop.f32.mrb[0].mxu0
    %v1615 = vadd.f32 0.0, %v1614
    %v1616 = vpop.f32.mrb[0].mxu0
    %1617 = vmatprep.mubr.f32.mxu0 0.0
    %1618 = vmatmul.mubr.f32.gmra.mrb[0].mxu0 %v1540
    %v1619 = vpop.f32.mrb[0].mxu0
    %v1620 = vadd.f32 0.0, %v1619
    %v1621 = vpop.f32.mrb[0].mxu0
    %1622 = vmatprep.mubr.f32.mxu0 0.0
    %1623 = vmatmul.mubr.f32.gmra.mrb[0].mxu0 %v1543
    %v1624 = vpop.f32.mrb[0].mxu0
    %v1625 = vadd.f32 0.0, %v1624
    %v1626 = vpop.f32.mrb[0].mxu0
    %1627 = vmatprep.mubr.f32.mxu0 0.0
    %1628 = vmatmul.mubr.f32.gmra.mrb[0].mxu0 %v1546
    %v1629 = vpop.f32.mrb[0].mxu0
    %v1630 = vadd.f32 0.0, %v1629
    %v1631 = vpop.f32.mrb[0].mxu0
    %1632 = vdwg.mxu0
    %s1633 = scalar_lea.vmem %s2, 96
    %v1634 = vld [vmem:[%s1633] sm:$0xff]
    %v1635 = vld [vmem:[%s1633 + $0x8] sm:$0x1]
    %v1637 = vsel %vm493, %v1615, 0
    %v1640 = vsel %vm493, %v1620, 0
    %v1643 = vsel %vm493, %v1625, 0
    %v1646 = vsel %vm493, %v1630, 0
    %v1649 = vsel %vm506, %v1635, 0
    %1651 = vmatprep.subr.mxu0 0.0
    %1652 = vmatpush1.msra.mxu0 %v1634
    %1653 = vmatprep.subr.mxu0 0.0
    %1654 = vmatpush1.msra.mxu0 %v1649
    %1655 = vmatprep.subr.mxu0 0.0
    %1656 = vmatpush1.msra.mxu0 0.0
    %1657 = vmatprep.subr.mxu0 0.0
    %1658 = vmatpush1.msra.mxu0 0.0
    %1659 = vmatprep.subr.mxu0 0.0
    %1660 = vmatpush1.msra.mxu0 0.0
    %1661 = vmatprep.subr.mxu0 0.0
    %1662 = vmatpush1.msra.mxu0 0.0
    %1663 = vmatprep.subr.mxu0 0.0
    %1664 = vmatpush1.msra.mxu0 0.0
    %1665 = vmatprep.subr.mxu0 0.0
    %1666 = vmatpush1.msra.mxu0 0.0
    %1667 = vmatprep.subr.mxu0 0.0
    %1668 = vmatpush1.msra.mxu0 0.0
    %1669 = vmatprep.subr.mxu0 0.0
    %1670 = vmatpush1.msra.mxu0 0.0
    %1671 = vmatprep.subr.mxu0 0.0
    %1672 = vmatpush1.msra.mxu0 0.0
    %1673 = vmatprep.subr.mxu0 0.0
    %1674 = vmatpush1.msra.mxu0 0.0
    %1675 = vmatprep.subr.mxu0 0.0
    %1676 = vmatpush1.msra.mxu0 0.0
    %1677 = vmatprep.subr.mxu0 0.0
    %1678 = vmatpush1.msra.mxu0 0.0
    %1679 = vmatprep.subr.mxu0 0.0
    %1680 = vmatpush1.msra.mxu0 0.0
    %1681 = vmatprep.subr.mxu0 0.0
    %1682 = vmatpush1.msra.mxu0 0.0
    %1683 = vmatprep.subr.mxu0 0.0
    %1684 = vmatpush1.msra.mxu0 0.0
    %1685 = vmatprep.subr.mxu0 0.0
    %1686 = vmatpush1.msra.mxu0 0.0
    %1687 = vmatprep.subr.mxu0 0.0
    %1688 = vmatpush1.msra.mxu0 0.0
    %1689 = vmatprep.subr.mxu0 0.0
    %1690 = vmatpush1.msra.mxu0 0.0
    %1691 = vmatprep.subr.mxu0 0.0
    %1692 = vmatpush1.msra.mxu0 0.0
    %1693 = vmatprep.subr.mxu0 0.0
    %1694 = vmatpush1.msra.mxu0 0.0
    %1695 = vmatprep.subr.mxu0 0.0
    %1696 = vmatpush1.msra.mxu0 0.0
    %1697 = vmatprep.subr.mxu0 0.0
    %1698 = vmatpush1.msra.mxu0 0.0
    %1699 = vmatprep.subr.mxu0 0.0
    %1700 = vmatpush1.msra.mxu0 0.0
    %1701 = vmatprep.subr.mxu0 0.0
    %1702 = vmatpush1.msra.mxu0 0.0
    %1703 = vmatprep.subr.mxu0 0.0
    %1704 = vmatpush1.msra.mxu0 0.0
    %1705 = vmatprep.subr.mxu0 0.0
    %1706 = vmatpush1.msra.mxu0 0.0
    %1707 = vmatprep.subr.mxu0 0.0
    %1708 = vmatpush1.msra.mxu0 0.0
    %1709 = vmatprep.subr.mxu0 0.0
    %1710 = vmatpush1.msra.mxu0 0.0
    %1711 = vmatprep.subr.mxu0 0.0
    %1712 = vmatpush1.msra.mxu0 0.0
    %1713 = vmatprep.subr.mxu0 0.0
    %1714 = vmatpush1.msra.mxu0 0.0
    %1715 = vmatprep.mubr.f32.mxu0 0.0
    %1716 = vmatmul.mubr.f32.gmra.mrb[0].mxu0 %v1637
    %v1717 = vpop.f32.mrb[0].mxu0
    %v1718 = vadd.f32 0.0, %v1717
    %v1719 = vpop.f32.mrb[0].mxu0
    %1720 = vmatprep.mubr.f32.mxu0 0.0
    %1721 = vmatmul.mubr.f32.gmra.mrb[0].mxu0 %v1640
    %v1722 = vpop.f32.mrb[0].mxu0
    %v1723 = vadd.f32 0.0, %v1722
    %v1724 = vpop.f32.mrb[0].mxu0
    %1725 = vmatprep.mubr.f32.mxu0 0.0
    %1726 = vmatmul.mubr.f32.gmra.mrb[0].mxu0 %v1643
    %v1727 = vpop.f32.mrb[0].mxu0
    %v1728 = vadd.f32 0.0, %v1727
    %v1729 = vpop.f32.mrb[0].mxu0
    %1730 = vmatprep.mubr.f32.mxu0 0.0
    %1731 = vmatmul.mubr.f32.gmra.mrb[0].mxu0 %v1646
    %v1732 = vpop.f32.mrb[0].mxu0
    %v1733 = vadd.f32 0.0, %v1732
    %v1734 = vpop.f32.mrb[0].mxu0
    %1735 = vdwg.mxu0
    %v1736 = vadd.f32 %v1527, %v1718
    %v1737 = vadd.f32 %v1528, %v1723
    %v1738 = vadd.f32 %v1529, %v1728
    %v1739 = vadd.f32 %v1530, %v1733
    %v1740 = vld [vmem:[#allocation4] sm:$0x1]
    %v1742 = vlaneseq
    %v1743 = vshrl.u32 %v1742, 7
    %v1744 = vsub.s32 0, %v1743
    %v1745 = vrot.slane %v1740, %v1744
    %v1747 = vadd.f32 %v1736, %v1745
    %v1748 = vadd.f32 %v1737, %v1745
    %v1749 = vadd.f32 %v1738, %v1745
    %v1750 = vadd.f32 %v1739, %v1745
    %v1751 = vmul.f32 %v1747, 0.5
    %v1752 = vmul.f32 %v1748, 0.5
    %v1753 = vmul.f32 %v1749, 0.5
    %v1754 = vmul.f32 %v1750, 0.5
    %v1755 = vmul.f32 %v1747, 0.70710677
    %v1756 = vmul.f32 %v1748, 0.70710677
    %v1757 = vmul.f32 %v1749, 0.70710677
    %v1758 = vmul.f32 %v1750, 0.70710677
    %v1759 = verf.f32.pop %v1755
    %v1760 = verf.f32.pop %v1756
    %v1761 = verf.f32.pop %v1757
    %v1762 = verf.f32.pop %v1758
    %v1763 = vadd.f32 %v1759, 1.0
    %v1764 = vadd.f32 %v1760, 1.0
    %v1765 = vadd.f32 %v1761, 1.0
    %v1766 = vadd.f32 %v1762, 1.0
    %v1767 = vmul.f32 %v1751, %v1763
    %v1768 = vmul.f32 %v1752, %v1764
    %v1769 = vmul.f32 %v1753, %v1765
    %v1770 = vmul.f32 %v1754, %v1766
    %v1771 = vld [vmem:[%s4] sm:$0xff]
    %v1772 = vld [vmem:[%s4 + $0x8] sm:$0xf]
    %vm1773 = vcmask 261120
    %v1775 = vsel %vm1773, %v1771, 0
    %v1778 = vsel %vm1773, %v1772, 0
    %1780 = vmatprep.subr.mxu0 0.0
    %1781 = vmatpush1.msra.mxu0 %v1767
    %1782 = vmatprep.subr.mxu0 0.0
    %1783 = vmatpush1.msra.mxu0 %v1768
    %1784 = vmatprep.subr.mxu0 0.0
    %1785 = vmatpush1.msra.mxu0 %v1769
    %1786 = vmatprep.subr.mxu0 0.0
    %1787 = vmatpush1.msra.mxu0 %v1770
    %1788 = vmatprep.subr.mxu0 0.0
    %1789 = vmatpush1.msra.mxu0 0.0
    %1790 = vmatprep.subr.mxu0 0.0
    %1791 = vmatpush1.msra.mxu0 0.0
    %1792 = vmatprep.subr.mxu0 0.0
    %1793 = vmatpush1.msra.mxu0 0.0
    %1794 = vmatprep.subr.mxu0 0.0
    %1795 = vmatpush1.msra.mxu0 0.0
    %1796 = vmatprep.subr.mxu0 0.0
    %1797 = vmatpush1.msra.mxu0 0.0
    %1798 = vmatprep.subr.mxu0 0.0
    %1799 = vmatpush1.msra.mxu0 0.0
    %1800 = vmatprep.subr.mxu0 0.0
    %1801 = vmatpush1.msra.mxu0 0.0
    %1802 = vmatprep.subr.mxu0 0.0
    %1803 = vmatpush1.msra.mxu0 0.0
    %1804 = vmatprep.subr.mxu0 0.0
    %1805 = vmatpush1.msra.mxu0 0.0
    %1806 = vmatprep.subr.mxu0 0.0
    %1807 = vmatpush1.msra.mxu0 0.0
    %1808 = vmatprep.subr.mxu0 0.0
    %1809 = vmatpush1.msra.mxu0 0.0
    %1810 = vmatprep.subr.mxu0 0.0
    %1811 = vmatpush1.msra.mxu0 0.0
    %1812 = vmatprep.subr.mxu0 0.0
    %1813 = vmatpush1.msra.mxu0 0.0
    %1814 = vmatprep.subr.mxu0 0.0
    %1815 = vmatpush1.msra.mxu0 0.0
    %1816 = vmatprep.subr.mxu0 0.0
    %1817 = vmatpush1.msra.mxu0 0.0
    %1818 = vmatprep.subr.mxu0 0.0
    %1819 = vmatpush1.msra.mxu0 0.0
    %1820 = vmatprep.subr.mxu0 0.0
    %1821 = vmatpush1.msra.mxu0 0.0
    %1822 = vmatprep.subr.mxu0 0.0
    %1823 = vmatpush1.msra.mxu0 0.0
    %1824 = vmatprep.subr.mxu0 0.0
    %1825 = vmatpush1.msra.mxu0 0.0
    %1826 = vmatprep.subr.mxu0 0.0
    %1827 = vmatpush1.msra.mxu0 0.0
    %1828 = vmatprep.subr.mxu0 0.0
    %1829 = vmatpush1.msra.mxu0 0.0
    %1830 = vmatprep.subr.mxu0 0.0
    %1831 = vmatpush1.msra.mxu0 0.0
    %1832 = vmatprep.subr.mxu0 0.0
    %1833 = vmatpush1.msra.mxu0 0.0
    %1834 = vmatprep.subr.mxu0 0.0
    %1835 = vmatpush1.msra.mxu0 0.0
    %1836 = vmatprep.subr.mxu0 0.0
    %1837 = vmatpush1.msra.mxu0 0.0
    %1838 = vmatprep.subr.mxu0 0.0
    %1839 = vmatpush1.msra.mxu0 0.0
    %1840 = vmatprep.subr.mxu0 0.0
    %1841 = vmatpush1.msra.mxu0 0.0
    %1842 = vmatprep.subr.mxu0 0.0
    %1843 = vmatpush1.msra.mxu0 0.0
    %1844 = vmatprep.mubr.f32.mxu0 0.0
    %1845 = vmatmul.mubr.f32.gmra.mrb[0].mxu0 %v1775
    %v1846 = vpop.f32.mrb[0].mxu0
    %v1847 = vadd.f32 0.0, %v1846
    %v1848 = vpop.f32.mrb[0].mxu0
    %1849 = vmatprep.mubr.f32.mxu0 0.0
    %1850 = vmatmul.mubr.f32.gmra.mrb[0].mxu0 %v1778
    %v1851 = vpop.f32.mrb[0].mxu0
    %v1852 = vadd.f32 0.0, %v1851
    %v1853 = vpop.f32.mrb[0].mxu0
    %1854 = vdwg.mxu0
    %v1855 = vld [vmem:[#allocation6] sm:$0xff]
    %v1856 = vld [vmem:[#allocation6 + $0x8] sm:$0xff]
    %v1857 = vld [vmem:[#allocation6 + $0x10] sm:$0xff]
    %v1858 = vld [vmem:[#allocation6 + $0x18] sm:$0xff]
    %v1859 = vld [vmem:[#allocation6 + $0x20] sm:$0xff]
    %v1860 = vld [vmem:[#allocation6 + $0x28] sm:$0xff]
    %v1861 = vld [vmem:[#allocation6 + $0x30] sm:$0xff]
    %v1862 = vld [vmem:[#allocation6 + $0x38] sm:$0xff]
    %s1863 = scalar_lea.vmem %s4, 16
    %v1864 = vld [vmem:[%s1863] sm:$0xff]
    %v1865 = vld [vmem:[%s1863 + $0x8] sm:$0xf]
    %v1867 = vsel %vm1773, %v1864, 0
    %v1870 = vsel %vm1773, %v1865, 0
    %1872 = vmatprep.subr.mxu0 0.0
    %1873 = vmatpush1.msra.mxu0 %v1767
    %1874 = vmatprep.subr.mxu0 0.0
    %1875 = vmatpush1.msra.mxu0 %v1768
    %1876 = vmatprep.subr.mxu0 0.0
    %1877 = vmatpush1.msra.mxu0 %v1769
    %1878 = vmatprep.subr.mxu0 0.0
    %1879 = vmatpush1.msra.mxu0 %v1770
    %1880 = vmatprep.subr.mxu0 0.0
    %1881 = vmatpush1.msra.mxu0 0.0
    %1882 = vmatprep.subr.mxu0 0.0
    %1883 = vmatpush1.msra.mxu0 0.0
    %1884 = vmatprep.subr.mxu0 0.0
    %1885 = vmatpush1.msra.mxu0 0.0
    %1886 = vmatprep.subr.mxu0 0.0
    %1887 = vmatpush1.msra.mxu0 0.0
    %1888 = vmatprep.subr.mxu0 0.0
    %1889 = vmatpush1.msra.mxu0 0.0
    %1890 = vmatprep.subr.mxu0 0.0
    %1891 = vmatpush1.msra.mxu0 0.0
    %1892 = vmatprep.subr.mxu0 0.0
    %1893 = vmatpush1.msra.mxu0 0.0
    %1894 = vmatprep.subr.mxu0 0.0
    %1895 = vmatpush1.msra.mxu0 0.0
    %1896 = vmatprep.subr.mxu0 0.0
    %1897 = vmatpush1.msra.mxu0 0.0
    %1898 = vmatprep.subr.mxu0 0.0
    %1899 = vmatpush1.msra.mxu0 0.0
    %1900 = vmatprep.subr.mxu0 0.0
    %1901 = vmatpush1.msra.mxu0 0.0
    %1902 = vmatprep.subr.mxu0 0.0
    %1903 = vmatpush1.msra.mxu0 0.0
    %1904 = vmatprep.subr.mxu0 0.0
    %1905 = vmatpush1.msra.mxu0 0.0
    %1906 = vmatprep.subr.mxu0 0.0
    %1907 = vmatpush1.msra.mxu0 0.0
    %1908 = vmatprep.subr.mxu0 0.0
    %1909 = vmatpush1.msra.mxu0 0.0
    %1910 = vmatprep.subr.mxu0 0.0
    %1911 = vmatpush1.msra.mxu0 0.0
    %1912 = vmatprep.subr.mxu0 0.0
    %1913 = vmatpush1.msra.mxu0 0.0
    %1914 = vmatprep.subr.mxu0 0.0
    %1915 = vmatpush1.msra.mxu0 0.0
    %1916 = vmatprep.subr.mxu0 0.0
    %1917 = vmatpush1.msra.mxu0 0.0
    %1918 = vmatprep.subr.mxu0 0.0
    %1919 = vmatpush1.msra.mxu0 0.0
    %1920 = vmatprep.subr.mxu0 0.0
    %1921 = vmatpush1.msra.mxu0 0.0
    %1922 = vmatprep.subr.mxu0 0.0
    %1923 = vmatpush1.msra.mxu0 0.0
    %1924 = vmatprep.subr.mxu0 0.0
    %1925 = vmatpush1.msra.mxu0 0.0
    %1926 = vmatprep.subr.mxu0 0.0
    %1927 = vmatpush1.msra.mxu0 0.0
    %1928 = vmatprep.subr.mxu0 0.0
    %1929 = vmatpush1.msra.mxu0 0.0
    %1930 = vmatprep.subr.mxu0 0.0
    %1931 = vmatpush1.msra.mxu0 0.0
    %1932 = vmatprep.subr.mxu0 0.0
    %1933 = vmatpush1.msra.mxu0 0.0
    %1934 = vmatprep.subr.mxu0 0.0
    %1935 = vmatpush1.msra.mxu0 0.0
    %1936 = vmatprep.mubr.f32.mxu0 0.0
    %1937 = vmatmul.mubr.f32.gmra.mrb[0].mxu0 %v1867
    %v1938 = vpop.f32.mrb[0].mxu0
    %v1939 = vadd.f32 0.0, %v1938
    %v1940 = vpop.f32.mrb[0].mxu0
    %1941 = vmatprep.mubr.f32.mxu0 0.0
    %1942 = vmatmul.mubr.f32.gmra.mrb[0].mxu0 %v1870
    %v1943 = vpop.f32.mrb[0].mxu0
    %v1944 = vadd.f32 0.0, %v1943
    %v1945 = vpop.f32.mrb[0].mxu0
    %1946 = vdwg.mxu0
    %s1947 = scalar_lea.vmem [#allocation6], 64
    %v1948 = vld [vmem:[%s1947] sm:$0xff]
    %v1949 = vld [vmem:[%s1947 + $0x8] sm:$0xff]
    %v1950 = vld [vmem:[%s1947 + $0x10] sm:$0xff]
    %v1951 = vld [vmem:[%s1947 + $0x18] sm:$0xff]
    %v1952 = vld [vmem:[%s1947 + $0x20] sm:$0xff]
    %v1953 = vld [vmem:[%s1947 + $0x28] sm:$0xff]
    %v1954 = vld [vmem:[%s1947 + $0x30] sm:$0xff]
    %v1955 = vld [vmem:[%s1947 + $0x38] sm:$0xff]
    %vm1956 = vcmask 523264
    %v1958 = vsel %vm1956, %v1939, 0
    %v1961 = vsel %vm1956, %v1944, 0
    %1963 = vmatprep.subr.mxu0 0.0
    %1964 = vmatpush1.msra.mxu0 %v1948
    %1965 = vmatprep.subr.mxu0 0.0
    %1966 = vmatpush1.msra.mxu0 %v1949
    %1967 = vmatprep.subr.mxu0 0.0
    %1968 = vmatpush1.msra.mxu0 %v1950
    %1969 = vmatprep.subr.mxu0 0.0
    %1970 = vmatpush1.msra.mxu0 %v1951
    %1971 = vmatprep.subr.mxu0 0.0
    %1972 = vmatpush1.msra.mxu0 %v1952
    %1973 = vmatprep.subr.mxu0 0.0
    %1974 = vmatpush1.msra.mxu0 %v1953
    %1975 = vmatprep.subr.mxu0 0.0
    %1976 = vmatpush1.msra.mxu0 %v1954
    %1977 = vmatprep.subr.mxu0 0.0
    %1978 = vmatpush1.msra.mxu0 %v1955
    %1979 = vmatprep.subr.mxu0 0.0
    %1980 = vmatpush1.msra.mxu0 0.0
    %1981 = vmatprep.subr.mxu0 0.0
    %1982 = vmatpush1.msra.mxu0 0.0
    %1983 = vmatprep.subr.mxu0 0.0
    %1984 = vmatpush1.msra.mxu0 0.0
    %1985 = vmatprep.subr.mxu0 0.0
    %1986 = vmatpush1.msra.mxu0 0.0
    %1987 = vmatprep.subr.mxu0 0.0
    %1988 = vmatpush1.msra.mxu0 0.0
    %1989 = vmatprep.subr.mxu0 0.0
    %1990 = vmatpush1.msra.mxu0 0.0
    %1991 = vmatprep.subr.mxu0 0.0
    %1992 = vmatpush1.msra.mxu0 0.0
    %1993 = vmatprep.subr.mxu0 0.0
    %1994 = vmatpush1.msra.mxu0 0.0
    %1995 = vmatprep.subr.mxu0 0.0
    %1996 = vmatpush1.msra.mxu0 0.0
    %1997 = vmatprep.subr.mxu0 0.0
    %1998 = vmatpush1.msra.mxu0 0.0
    %1999 = vmatprep.subr.mxu0 0.0
    %2000 = vmatpush1.msra.mxu0 0.0
    %2001 = vmatprep.subr.mxu0 0.0
    %2002 = vmatpush1.msra.mxu0 0.0
    %2003 = vmatprep.subr.mxu0 0.0
    %2004 = vmatpush1.msra.mxu0 0.0
    %2005 = vmatprep.subr.mxu0 0.0
    %2006 = vmatpush1.msra.mxu0 0.0
    %2007 = vmatprep.subr.mxu0 0.0
    %2008 = vmatpush1.msra.mxu0 0.0
    %2009 = vmatprep.subr.mxu0 0.0
    %2010 = vmatpush1.msra.mxu0 0.0
    %2011 = vmatprep.subr.mxu0 0.0
    %2012 = vmatpush1.msra.mxu0 0.0
    %2013 = vmatprep.subr.mxu0 0.0
    %2014 = vmatpush1.msra.mxu0 0.0
    %2015 = vmatprep.subr.mxu0 0.0
    %2016 = vmatpush1.msra.mxu0 0.0
    %2017 = vmatprep.subr.mxu0 0.0
    %2018 = vmatpush1.msra.mxu0 0.0
    %2019 = vmatprep.subr.mxu0 0.0
    %2020 = vmatpush1.msra.mxu0 0.0
    %2021 = vmatprep.subr.mxu0 0.0
    %2022 = vmatpush1.msra.mxu0 0.0
    %2023 = vmatprep.subr.mxu0 0.0
    %2024 = vmatpush1.msra.mxu0 0.0
    %2025 = vmatprep.subr.mxu0 0.0
    %2026 = vmatpush1.msra.mxu0 0.0
    %2027 = vmatprep.mubr.f32.mxu0 0.0
    %2028 = vmatmul.mubr.f32.gmra.mrb[0].mxu0 %v1958
    %v2029 = vpop.f32.mrb[0].mxu0
    %v2030 = vadd.f32 0.0, %v2029
    %v2031 = vpop.f32.mrb[0].mxu0
    %2032 = vmatprep.mubr.f32.mxu0 0.0
    %2033 = vmatmul.mubr.f32.gmra.mrb[0].mxu0 %v1961
    %v2034 = vpop.f32.mrb[0].mxu0
    %v2035 = vadd.f32 0.0, %v2034
    %v2036 = vpop.f32.mrb[0].mxu0
    %2037 = vdwg.mxu0
    %v2039 = vsel %vm1956, %v1847, 0
    %v2042 = vsel %vm1956, %v1852, 0
    %2044 = vmatprep.subr.mxu0 0.0
    %2045 = vmatpush1.msra.mxu0 %v1855
    %2046 = vmatprep.subr.mxu0 0.0
    %2047 = vmatpush1.msra.mxu0 %v1856
    %2048 = vmatprep.subr.mxu0 0.0
    %2049 = vmatpush1.msra.mxu0 %v1857
    %2050 = vmatprep.subr.mxu0 0.0
    %2051 = vmatpush1.msra.mxu0 %v1858
    %2052 = vmatprep.subr.mxu0 0.0
    %2053 = vmatpush1.msra.mxu0 %v1859
    %2054 = vmatprep.subr.mxu0 0.0
    %2055 = vmatpush1.msra.mxu0 %v1860
    %2056 = vmatprep.subr.mxu0 0.0
    %2057 = vmatpush1.msra.mxu0 %v1861
    %2058 = vmatprep.subr.mxu0 0.0
    %2059 = vmatpush1.msra.mxu0 %v1862
    %2060 = vmatprep.subr.mxu0 0.0
    %2061 = vmatpush1.msra.mxu0 0.0
    %2062 = vmatprep.subr.mxu0 0.0
    %2063 = vmatpush1.msra.mxu0 0.0
    %2064 = vmatprep.subr.mxu0 0.0
    %2065 = vmatpush1.msra.mxu0 0.0
    %2066 = vmatprep.subr.mxu0 0.0
    %2067 = vmatpush1.msra.mxu0 0.0
    %2068 = vmatprep.subr.mxu0 0.0
    %2069 = vmatpush1.msra.mxu0 0.0
    %2070 = vmatprep.subr.mxu0 0.0
    %2071 = vmatpush1.msra.mxu0 0.0
    %2072 = vmatprep.subr.mxu0 0.0
    %2073 = vmatpush1.msra.mxu0 0.0
    %2074 = vmatprep.subr.mxu0 0.0
    %2075 = vmatpush1.msra.mxu0 0.0
    %2076 = vmatprep.subr.mxu0 0.0
    %2077 = vmatpush1.msra.mxu0 0.0
    %2078 = vmatprep.subr.mxu0 0.0
    %2079 = vmatpush1.msra.mxu0 0.0
    %2080 = vmatprep.subr.mxu0 0.0
    %2081 = vmatpush1.msra.mxu0 0.0
    %2082 = vmatprep.subr.mxu0 0.0
    %2083 = vmatpush1.msra.mxu0 0.0
    %2084 = vmatprep.subr.mxu0 0.0
    %2085 = vmatpush1.msra.mxu0 0.0
    %2086 = vmatprep.subr.mxu0 0.0
    %2087 = vmatpush1.msra.mxu0 0.0
    %2088 = vmatprep.subr.mxu0 0.0
    %2089 = vmatpush1.msra.mxu0 0.0
    %2090 = vmatprep.subr.mxu0 0.0
    %2091 = vmatpush1.msra.mxu0 0.0
    %2092 = vmatprep.subr.mxu0 0.0
    %2093 = vmatpush1.msra.mxu0 0.0
    %2094 = vmatprep.subr.mxu0 0.0
    %2095 = vmatpush1.msra.mxu0 0.0
    %2096 = vmatprep.subr.mxu0 0.0
    %2097 = vmatpush1.msra.mxu0 0.0
    %2098 = vmatprep.subr.mxu0 0.0
    %2099 = vmatpush1.msra.mxu0 0.0
    %2100 = vmatprep.subr.mxu0 0.0
    %2101 = vmatpush1.msra.mxu0 0.0
    %2102 = vmatprep.subr.mxu0 0.0
    %2103 = vmatpush1.msra.mxu0 0.0
    %2104 = vmatprep.subr.mxu0 0.0
    %2105 = vmatpush1.msra.mxu0 0.0
    %2106 = vmatprep.subr.mxu0 0.0
    %2107 = vmatpush1.msra.mxu0 0.0
    %2108 = vmatprep.mubr.f32.mxu0 0.0
    %2109 = vmatmul.mubr.f32.gmra.mrb[0].mxu0 %v2039
    %v2110 = vpop.f32.mrb[0].mxu0
    %v2111 = vadd.f32 %v2030, %v2110
    %v2112 = vpop.f32.mrb[0].mxu0
    %2113 = vmatprep.mubr.f32.mxu0 0.0
    %2114 = vmatmul.mubr.f32.gmra.mrb[0].mxu0 %v2042
    %v2115 = vpop.f32.mrb[0].mxu0
    %v2116 = vadd.f32 %v2035, %v2115
    %v2117 = vpop.f32.mrb[0].mxu0
    %2118 = vdwg.mxu0
    %s2119 = scalar_lea.vmem %s4, 32
    %v2120 = vld [vmem:[%s2119] sm:$0xff]
    %v2121 = vld [vmem:[%s2119 + $0x8] sm:$0xf]
    %v2123 = vsel %vm1773, %v2120, 0
    %v2126 = vsel %vm1773, %v2121, 0
    %2128 = vmatprep.subr.mxu0 0.0
    %2129 = vmatpush1.msra.mxu0 %v1767
    %2130 = vmatprep.subr.mxu0 0.0
    %2131 = vmatpush1.msra.mxu0 %v1768
    %2132 = vmatprep.subr.mxu0 0.0
    %2133 = vmatpush1.msra.mxu0 %v1769
    %2134 = vmatprep.subr.mxu0 0.0
    %2135 = vmatpush1.msra.mxu0 %v1770
    %2136 = vmatprep.subr.mxu0 0.0
    %2137 = vmatpush1.msra.mxu0 0.0
    %2138 = vmatprep.subr.mxu0 0.0
    %2139 = vmatpush1.msra.mxu0 0.0
    %2140 = vmatprep.subr.mxu0 0.0
    %2141 = vmatpush1.msra.mxu0 0.0
    %2142 = vmatprep.subr.mxu0 0.0
    %2143 = vmatpush1.msra.mxu0 0.0
    %2144 = vmatprep.subr.mxu0 0.0
    %2145 = vmatpush1.msra.mxu0 0.0
    %2146 = vmatprep.subr.mxu0 0.0
    %2147 = vmatpush1.msra.mxu0 0.0
    %2148 = vmatprep.subr.mxu0 0.0
    %2149 = vmatpush1.msra.mxu0 0.0
    %2150 = vmatprep.subr.mxu0 0.0
    %2151 = vmatpush1.msra.mxu0 0.0
    %2152 = vmatprep.subr.mxu0 0.0
    %2153 = vmatpush1.msra.mxu0 0.0
    %2154 = vmatprep.subr.mxu0 0.0
    %2155 = vmatpush1.msra.mxu0 0.0
    %2156 = vmatprep.subr.mxu0 0.0
    %2157 = vmatpush1.msra.mxu0 0.0
    %2158 = vmatprep.subr.mxu0 0.0
    %2159 = vmatpush1.msra.mxu0 0.0
    %2160 = vmatprep.subr.mxu0 0.0
    %2161 = vmatpush1.msra.mxu0 0.0
    %2162 = vmatprep.subr.mxu0 0.0
    %2163 = vmatpush1.msra.mxu0 0.0
    %2164 = vmatprep.subr.mxu0 0.0
    %2165 = vmatpush1.msra.mxu0 0.0
    %2166 = vmatprep.subr.mxu0 0.0
    %2167 = vmatpush1.msra.mxu0 0.0
    %2168 = vmatprep.subr.mxu0 0.0
    %2169 = vmatpush1.msra.mxu0 0.0
    %2170 = vmatprep.subr.mxu0 0.0
    %2171 = vmatpush1.msra.mxu0 0.0
    %2172 = vmatprep.subr.mxu0 0.0
    %2173 = vmatpush1.msra.mxu0 0.0
    %2174 = vmatprep.subr.mxu0 0.0
    %2175 = vmatpush1.msra.mxu0 0.0
    %2176 = vmatprep.subr.mxu0 0.0
    %2177 = vmatpush1.msra.mxu0 0.0
    %2178 = vmatprep.subr.mxu0 0.0
    %2179 = vmatpush1.msra.mxu0 0.0
    %2180 = vmatprep.subr.mxu0 0.0
    %2181 = vmatpush1.msra.mxu0 0.0
    %2182 = vmatprep.subr.mxu0 0.0
    %2183 = vmatpush1.msra.mxu0 0.0
    %2184 = vmatprep.subr.mxu0 0.0
    %2185 = vmatpush1.msra.mxu0 0.0
    %2186 = vmatprep.subr.mxu0 0.0
    %2187 = vmatpush1.msra.mxu0 0.0
    %2188 = vmatprep.subr.mxu0 0.0
    %2189 = vmatpush1.msra.mxu0 0.0
    %2190 = vmatprep.subr.mxu0 0.0
    %2191 = vmatpush1.msra.mxu0 0.0
    %2192 = vmatprep.mubr.f32.mxu0 0.0
    %2193 = vmatmul.mubr.f32.gmra.mrb[0].mxu0 %v2123
    %v2194 = vpop.f32.mrb[0].mxu0
    %v2195 = vadd.f32 0.0, %v2194
    %v2196 = vpop.f32.mrb[0].mxu0
    %2197 = vmatprep.mubr.f32.mxu0 0.0
    %2198 = vmatmul.mubr.f32.gmra.mrb[0].mxu0 %v2126
    %v2199 = vpop.f32.mrb[0].mxu0
    %v2200 = vadd.f32 0.0, %v2199
    %v2201 = vpop.f32.mrb[0].mxu0
    %2202 = vdwg.mxu0
    %s2203 = scalar_lea.vmem [#allocation6], 128
    %v2204 = vld [vmem:[%s2203] sm:$0xff]
    %v2205 = vld [vmem:[%s2203 + $0x8] sm:$0xff]
    %v2206 = vld [vmem:[%s2203 + $0x10] sm:$0xff]
    %v2207 = vld [vmem:[%s2203 + $0x18] sm:$0xff]
    %v2208 = vld [vmem:[%s2203 + $0x20] sm:$0xff]
    %v2209 = vld [vmem:[%s2203 + $0x28] sm:$0xff]
    %v2210 = vld [vmem:[%s2203 + $0x30] sm:$0xff]
    %v2211 = vld [vmem:[%s2203 + $0x38] sm:$0xff]
    %v2213 = vsel %vm1956, %v2195, 0
    %v2216 = vsel %vm1956, %v2200, 0
    %2218 = vmatprep.subr.mxu0 0.0
    %2219 = vmatpush1.msra.mxu0 %v2204
    %2220 = vmatprep.subr.mxu0 0.0
    %2221 = vmatpush1.msra.mxu0 %v2205
    %2222 = vmatprep.subr.mxu0 0.0
    %2223 = vmatpush1.msra.mxu0 %v2206
    %2224 = vmatprep.subr.mxu0 0.0
    %2225 = vmatpush1.msra.mxu0 %v2207
    %2226 = vmatprep.subr.mxu0 0.0
    %2227 = vmatpush1.msra.mxu0 %v2208
    %2228 = vmatprep.subr.mxu0 0.0
    %2229 = vmatpush1.msra.mxu0 %v2209
    %2230 = vmatprep.subr.mxu0 0.0
    %2231 = vmatpush1.msra.mxu0 %v2210
    %2232 = vmatprep.subr.mxu0 0.0
    %2233 = vmatpush1.msra.mxu0 %v2211
    %2234 = vmatprep.subr.mxu0 0.0
    %2235 = vmatpush1.msra.mxu0 0.0
    %2236 = vmatprep.subr.mxu0 0.0
    %2237 = vmatpush1.msra.mxu0 0.0
    %2238 = vmatprep.subr.mxu0 0.0
    %2239 = vmatpush1.msra.mxu0 0.0
    %2240 = vmatprep.subr.mxu0 0.0
    %2241 = vmatpush1.msra.mxu0 0.0
    %2242 = vmatprep.subr.mxu0 0.0
    %2243 = vmatpush1.msra.mxu0 0.0
    %2244 = vmatprep.subr.mxu0 0.0
    %2245 = vmatpush1.msra.mxu0 0.0
    %2246 = vmatprep.subr.mxu0 0.0
    %2247 = vmatpush1.msra.mxu0 0.0
    %2248 = vmatprep.subr.mxu0 0.0
    %2249 = vmatpush1.msra.mxu0 0.0
    %2250 = vmatprep.subr.mxu0 0.0
    %2251 = vmatpush1.msra.mxu0 0.0
    %2252 = vmatprep.subr.mxu0 0.0
    %2253 = vmatpush1.msra.mxu0 0.0
    %2254 = vmatprep.subr.mxu0 0.0
    %2255 = vmatpush1.msra.mxu0 0.0
    %2256 = vmatprep.subr.mxu0 0.0
    %2257 = vmatpush1.msra.mxu0 0.0
    %2258 = vmatprep.subr.mxu0 0.0
    %2259 = vmatpush1.msra.mxu0 0.0
    %2260 = vmatprep.subr.mxu0 0.0
    %2261 = vmatpush1.msra.mxu0 0.0
    %2262 = vmatprep.subr.mxu0 0.0
    %2263 = vmatpush1.msra.mxu0 0.0
    %2264 = vmatprep.subr.mxu0 0.0
    %2265 = vmatpush1.msra.mxu0 0.0
    %2266 = vmatprep.subr.mxu0 0.0
    %2267 = vmatpush1.msra.mxu0 0.0
    %2268 = vmatprep.subr.mxu0 0.0
    %2269 = vmatpush1.msra.mxu0 0.0
    %2270 = vmatprep.subr.mxu0 0.0
    %2271 = vmatpush1.msra.mxu0 0.0
    %2272 = vmatprep.subr.mxu0 0.0
    %2273 = vmatpush1.msra.mxu0 0.0
    %2274 = vmatprep.subr.mxu0 0.0
    %2275 = vmatpush1.msra.mxu0 0.0
    %2276 = vmatprep.subr.mxu0 0.0
    %2277 = vmatpush1.msra.mxu0 0.0
    %2278 = vmatprep.subr.mxu0 0.0
    %2279 = vmatpush1.msra.mxu0 0.0
    %2280 = vmatprep.subr.mxu0 0.0
    %2281 = vmatpush1.msra.mxu0 0.0
    %2282 = vmatprep.mubr.f32.mxu0 0.0
    %2283 = vmatmul.mubr.f32.gmra.mrb[0].mxu0 %v2213
    %v2284 = vpop.f32.mrb[0].mxu0
    %v2285 = vadd.f32 0.0, %v2284
    %v2286 = vpop.f32.mrb[0].mxu0
    %2287 = vmatprep.mubr.f32.mxu0 0.0
    %2288 = vmatmul.mubr.f32.gmra.mrb[0].mxu0 %v2216
    %v2289 = vpop.f32.mrb[0].mxu0
    %v2290 = vadd.f32 0.0, %v2289
    %v2291 = vpop.f32.mrb[0].mxu0
    %2292 = vdwg.mxu0
    %v2293 = vadd.f32 %v2111, %v2285
    %v2294 = vadd.f32 %v2116, %v2290
    %s2295 = scalar_lea.vmem %s4, 48
    %v2296 = vld [vmem:[%s2295] sm:$0xff]
    %v2297 = vld [vmem:[%s2295 + $0x8] sm:$0xf]
    %v2299 = vsel %vm1773, %v2296, 0
    %v2302 = vsel %vm1773, %v2297, 0
    %2304 = vmatprep.subr.mxu0 0.0
    %2305 = vmatpush1.msra.mxu0 %v1767
    %2306 = vmatprep.subr.mxu0 0.0
    %2307 = vmatpush1.msra.mxu0 %v1768
    %2308 = vmatprep.subr.mxu0 0.0
    %2309 = vmatpush1.msra.mxu0 %v1769
    %2310 = vmatprep.subr.mxu0 0.0
    %2311 = vmatpush1.msra.mxu0 %v1770
    %2312 = vmatprep.subr.mxu0 0.0
    %2313 = vmatpush1.msra.mxu0 0.0
    %2314 = vmatprep.subr.mxu0 0.0
    %2315 = vmatpush1.msra.mxu0 0.0
    %2316 = vmatprep.subr.mxu0 0.0
    %2317 = vmatpush1.msra.mxu0 0.0
    %2318 = vmatprep.subr.mxu0 0.0
    %2319 = vmatpush1.msra.mxu0 0.0
    %2320 = vmatprep.subr.mxu0 0.0
    %2321 = vmatpush1.msra.mxu0 0.0
    %2322 = vmatprep.subr.mxu0 0.0
    %2323 = vmatpush1.msra.mxu0 0.0
    %2324 = vmatprep.subr.mxu0 0.0
    %2325 = vmatpush1.msra.mxu0 0.0
    %2326 = vmatprep.subr.mxu0 0.0
    %2327 = vmatpush1.msra.mxu0 0.0
    %2328 = vmatprep.subr.mxu0 0.0
    %2329 = vmatpush1.msra.mxu0 0.0
    %2330 = vmatprep.subr.mxu0 0.0
    %2331 = vmatpush1.msra.mxu0 0.0
    %2332 = vmatprep.subr.mxu0 0.0
    %2333 = vmatpush1.msra.mxu0 0.0
    %2334 = vmatprep.subr.mxu0 0.0
    %2335 = vmatpush1.msra.mxu0 0.0
    %2336 = vmatprep.subr.mxu0 0.0
    %2337 = vmatpush1.msra.mxu0 0.0
    %2338 = vmatprep.subr.mxu0 0.0
    %2339 = vmatpush1.msra.mxu0 0.0
    %2340 = vmatprep.subr.mxu0 0.0
    %2341 = vmatpush1.msra.mxu0 0.0
    %2342 = vmatprep.subr.mxu0 0.0
    %2343 = vmatpush1.msra.mxu0 0.0
    %2344 = vmatprep.subr.mxu0 0.0
    %2345 = vmatpush1.msra.mxu0 0.0
    %2346 = vmatprep.subr.mxu0 0.0
    %2347 = vmatpush1.msra.mxu0 0.0
    %2348 = vmatprep.subr.mxu0 0.0
    %2349 = vmatpush1.msra.mxu0 0.0
    %2350 = vmatprep.subr.mxu0 0.0
    %2351 = vmatpush1.msra.mxu0 0.0
    %2352 = vmatprep.subr.mxu0 0.0
    %2353 = vmatpush1.msra.mxu0 0.0
    %2354 = vmatprep.subr.mxu0 0.0
    %2355 = vmatpush1.msra.mxu0 0.0
    %2356 = vmatprep.subr.mxu0 0.0
    %2357 = vmatpush1.msra.mxu0 0.0
    %2358 = vmatprep.subr.mxu0 0.0
    %2359 = vmatpush1.msra.mxu0 0.0
    %2360 = vmatprep.subr.mxu0 0.0
    %2361 = vmatpush1.msra.mxu0 0.0
    %2362 = vmatprep.subr.mxu0 0.0
    %2363 = vmatpush1.msra.mxu0 0.0
    %2364 = vmatprep.subr.mxu0 0.0
    %2365 = vmatpush1.msra.mxu0 0.0
    %2366 = vmatprep.subr.mxu0 0.0
    %2367 = vmatpush1.msra.mxu0 0.0
    %2368 = vmatprep.mubr.f32.mxu0 0.0
    %2369 = vmatmul.mubr.f32.gmra.mrb[0].mxu0 %v2299
    %v2370 = vpop.f32.mrb[0].mxu0
    %v2371 = vadd.f32 0.0, %v2370
    %v2372 = vpop.f32.mrb[0].mxu0
    %2373 = vmatprep.mubr.f32.mxu0 0.0
    %2374 = vmatmul.mubr.f32.gmra.mrb[0].mxu0 %v2302
    %v2375 = vpop.f32.mrb[0].mxu0
    %v2376 = vadd.f32 0.0, %v2375
    %v2377 = vpop.f32.mrb[0].mxu0
    %2378 = vdwg.mxu0
    %s2379 = scalar_lea.vmem [#allocation6], 192
    %v2380 = vld [vmem:[%s2379] sm:$0xff]
    %v2381 = vld [vmem:[%s2379 + $0x8] sm:$0xff]
    %v2382 = vld [vmem:[%s2379 + $0x10] sm:$0xff]
    %v2383 = vld [vmem:[%s2379 + $0x18] sm:$0xff]
    %v2384 = vld [vmem:[%s2379 + $0x20] sm:$0xff]
    %v2385 = vld [vmem:[%s2379 + $0x28] sm:$0xff]
    %v2386 = vld [vmem:[%s2379 + $0x30] sm:$0xff]
    %v2387 = vld [vmem:[%s2379 + $0x38] sm:$0xff]
    %v2389 = vsel %vm1956, %v2371, 0
    %v2392 = vsel %vm1956, %v2376, 0
    %2394 = vmatprep.subr.mxu0 0.0
    %2395 = vmatpush1.msra.mxu0 %v2380
    %2396 = vmatprep.subr.mxu0 0.0
    %2397 = vmatpush1.msra.mxu0 %v2381
    %2398 = vmatprep.subr.mxu0 0.0
    %2399 = vmatpush1.msra.mxu0 %v2382
    %2400 = vmatprep.subr.mxu0 0.0
    %2401 = vmatpush1.msra.mxu0 %v2383
    %2402 = vmatprep.subr.mxu0 0.0
    %2403 = vmatpush1.msra.mxu0 %v2384
    %2404 = vmatprep.subr.mxu0 0.0
    %2405 = vmatpush1.msra.mxu0 %v2385
    %2406 = vmatprep.subr.mxu0 0.0
    %2407 = vmatpush1.msra.mxu0 %v2386
    %2408 = vmatprep.subr.mxu0 0.0
    %2409 = vmatpush1.msra.mxu0 %v2387
    %2410 = vmatprep.subr.mxu0 0.0
    %2411 = vmatpush1.msra.mxu0 0.0
    %2412 = vmatprep.subr.mxu0 0.0
    %2413 = vmatpush1.msra.mxu0 0.0
    %2414 = vmatprep.subr.mxu0 0.0
    %2415 = vmatpush1.msra.mxu0 0.0
    %2416 = vmatprep.subr.mxu0 0.0
    %2417 = vmatpush1.msra.mxu0 0.0
    %2418 = vmatprep.subr.mxu0 0.0
    %2419 = vmatpush1.msra.mxu0 0.0
    %2420 = vmatprep.subr.mxu0 0.0
    %2421 = vmatpush1.msra.mxu0 0.0
    %2422 = vmatprep.subr.mxu0 0.0
    %2423 = vmatpush1.msra.mxu0 0.0
    %2424 = vmatprep.subr.mxu0 0.0
    %2425 = vmatpush1.msra.mxu0 0.0
    %2426 = vmatprep.subr.mxu0 0.0
    %2427 = vmatpush1.msra.mxu0 0.0
    %2428 = vmatprep.subr.mxu0 0.0
    %2429 = vmatpush1.msra.mxu0 0.0
    %2430 = vmatprep.subr.mxu0 0.0
    %2431 = vmatpush1.msra.mxu0 0.0
    %2432 = vmatprep.subr.mxu0 0.0
    %2433 = vmatpush1.msra.mxu0 0.0
    %2434 = vmatprep.subr.mxu0 0.0
    %2435 = vmatpush1.msra.mxu0 0.0
    %2436 = vmatprep.subr.mxu0 0.0
    %2437 = vmatpush1.msra.mxu0 0.0
    %2438 = vmatprep.subr.mxu0 0.0
    %2439 = vmatpush1.msra.mxu0 0.0
    %2440 = vmatprep.subr.mxu0 0.0
    %2441 = vmatpush1.msra.mxu0 0.0
    %2442 = vmatprep.subr.mxu0 0.0
    %2443 = vmatpush1.msra.mxu0 0.0
    %2444 = vmatprep.subr.mxu0 0.0
    %2445 = vmatpush1.msra.mxu0 0.0
    %2446 = vmatprep.subr.mxu0 0.0
    %2447 = vmatpush1.msra.mxu0 0.0
    %2448 = vmatprep.subr.mxu0 0.0
    %2449 = vmatpush1.msra.mxu0 0.0
    %2450 = vmatprep.subr.mxu0 0.0
    %2451 = vmatpush1.msra.mxu0 0.0
    %2452 = vmatprep.subr.mxu0 0.0
    %2453 = vmatpush1.msra.mxu0 0.0
    %2454 = vmatprep.subr.mxu0 0.0
    %2455 = vmatpush1.msra.mxu0 0.0
    %2456 = vmatprep.subr.mxu0 0.0
    %2457 = vmatpush1.msra.mxu0 0.0
    %2458 = vmatprep.mubr.f32.mxu0 0.0
    %2459 = vmatmul.mubr.f32.gmra.mrb[0].mxu0 %v2389
    %v2460 = vpop.f32.mrb[0].mxu0
    %v2461 = vadd.f32 0.0, %v2460
    %v2462 = vpop.f32.mrb[0].mxu0
    %2463 = vmatprep.mubr.f32.mxu0 0.0
    %2464 = vmatmul.mubr.f32.gmra.mrb[0].mxu0 %v2392
    %v2465 = vpop.f32.mrb[0].mxu0
    %v2466 = vadd.f32 0.0, %v2465
    %v2467 = vpop.f32.mrb[0].mxu0
    %2468 = vdwg.mxu0
    %v2469 = vadd.f32 %v2293, %v2461
    %v2470 = vadd.f32 %v2294, %v2466
    %s2471 = scalar_lea.vmem %s4, 64
    %v2472 = vld [vmem:[%s2471] sm:$0xff]
    %v2473 = vld [vmem:[%s2471 + $0x8] sm:$0xf]
    %v2475 = vsel %vm1773, %v2472, 0
    %v2478 = vsel %vm1773, %v2473, 0
    %2480 = vmatprep.subr.mxu0 0.0
    %2481 = vmatpush1.msra.mxu0 %v1767
    %2482 = vmatprep.subr.mxu0 0.0
    %2483 = vmatpush1.msra.mxu0 %v1768
    %2484 = vmatprep.subr.mxu0 0.0
    %2485 = vmatpush1.msra.mxu0 %v1769
    %2486 = vmatprep.subr.mxu0 0.0
    %2487 = vmatpush1.msra.mxu0 %v1770
    %2488 = vmatprep.subr.mxu0 0.0
    %2489 = vmatpush1.msra.mxu0 0.0
    %2490 = vmatprep.subr.mxu0 0.0
    %2491 = vmatpush1.msra.mxu0 0.0
    %2492 = vmatprep.subr.mxu0 0.0
    %2493 = vmatpush1.msra.mxu0 0.0
    %2494 = vmatprep.subr.mxu0 0.0
    %2495 = vmatpush1.msra.mxu0 0.0
    %2496 = vmatprep.subr.mxu0 0.0
    %2497 = vmatpush1.msra.mxu0 0.0
    %2498 = vmatprep.subr.mxu0 0.0
    %2499 = vmatpush1.msra.mxu0 0.0
    %2500 = vmatprep.subr.mxu0 0.0
    %2501 = vmatpush1.msra.mxu0 0.0
    %2502 = vmatprep.subr.mxu0 0.0
    %2503 = vmatpush1.msra.mxu0 0.0
    %2504 = vmatprep.subr.mxu0 0.0
    %2505 = vmatpush1.msra.mxu0 0.0
    %2506 = vmatprep.subr.mxu0 0.0
    %2507 = vmatpush1.msra.mxu0 0.0
    %2508 = vmatprep.subr.mxu0 0.0
    %2509 = vmatpush1.msra.mxu0 0.0
    %2510 = vmatprep.subr.mxu0 0.0
    %2511 = vmatpush1.msra.mxu0 0.0
    %2512 = vmatprep.subr.mxu0 0.0
    %2513 = vmatpush1.msra.mxu0 0.0
    %2514 = vmatprep.subr.mxu0 0.0
    %2515 = vmatpush1.msra.mxu0 0.0
    %2516 = vmatprep.subr.mxu0 0.0
    %2517 = vmatpush1.msra.mxu0 0.0
    %2518 = vmatprep.subr.mxu0 0.0
    %2519 = vmatpush1.msra.mxu0 0.0
    %2520 = vmatprep.subr.mxu0 0.0
    %2521 = vmatpush1.msra.mxu0 0.0
    %2522 = vmatprep.subr.mxu0 0.0
    %2523 = vmatpush1.msra.mxu0 0.0
    %2524 = vmatprep.subr.mxu0 0.0
    %2525 = vmatpush1.msra.mxu0 0.0
    %2526 = vmatprep.subr.mxu0 0.0
    %2527 = vmatpush1.msra.mxu0 0.0
    %2528 = vmatprep.subr.mxu0 0.0
    %2529 = vmatpush1.msra.mxu0 0.0
    %2530 = vmatprep.subr.mxu0 0.0
    %2531 = vmatpush1.msra.mxu0 0.0
    %2532 = vmatprep.subr.mxu0 0.0
    %2533 = vmatpush1.msra.mxu0 0.0
    %2534 = vmatprep.subr.mxu0 0.0
    %2535 = vmatpush1.msra.mxu0 0.0
    %2536 = vmatprep.subr.mxu0 0.0
    %2537 = vmatpush1.msra.mxu0 0.0
    %2538 = vmatprep.subr.mxu0 0.0
    %2539 = vmatpush1.msra.mxu0 0.0
    %2540 = vmatprep.subr.mxu0 0.0
    %2541 = vmatpush1.msra.mxu0 0.0
    %2542 = vmatprep.subr.mxu0 0.0
    %2543 = vmatpush1.msra.mxu0 0.0
    %2544 = vmatprep.mubr.f32.mxu0 0.0
    %2545 = vmatmul.mubr.f32.gmra.mrb[0].mxu0 %v2475
    %v2546 = vpop.f32.mrb[0].mxu0
    %v2547 = vadd.f32 0.0, %v2546
    %v2548 = vpop.f32.mrb[0].mxu0
    %2549 = vmatprep.mubr.f32.mxu0 0.0
    %2550 = vmatmul.mubr.f32.gmra.mrb[0].mxu0 %v2478
    %v2551 = vpop.f32.mrb[0].mxu0
    %v2552 = vadd.f32 0.0, %v2551
    %v2553 = vpop.f32.mrb[0].mxu0
    %2554 = vdwg.mxu0
    %s2555 = scalar_lea.vmem [#allocation6], 256
    %v2556 = vld [vmem:[%s2555] sm:$0xff]
    %v2557 = vld [vmem:[%s2555 + $0x8] sm:$0xff]
    %v2558 = vld [vmem:[%s2555 + $0x10] sm:$0xff]
    %v2559 = vld [vmem:[%s2555 + $0x18] sm:$0xff]
    %v2560 = vld [vmem:[%s2555 + $0x20] sm:$0xff]
    %v2561 = vld [vmem:[%s2555 + $0x28] sm:$0xff]
    %v2562 = vld [vmem:[%s2555 + $0x30] sm:$0xff]
    %v2563 = vld [vmem:[%s2555 + $0x38] sm:$0xff]
    %v2565 = vsel %vm1956, %v2547, 0
    %v2568 = vsel %vm1956, %v2552, 0
    %2570 = vmatprep.subr.mxu0 0.0
    %2571 = vmatpush1.msra.mxu0 %v2556
    %2572 = vmatprep.subr.mxu0 0.0
    %2573 = vmatpush1.msra.mxu0 %v2557
    %2574 = vmatprep.subr.mxu0 0.0
    %2575 = vmatpush1.msra.mxu0 %v2558
    %2576 = vmatprep.subr.mxu0 0.0
    %2577 = vmatpush1.msra.mxu0 %v2559
    %2578 = vmatprep.subr.mxu0 0.0
    %2579 = vmatpush1.msra.mxu0 %v2560
    %2580 = vmatprep.subr.mxu0 0.0
    %2581 = vmatpush1.msra.mxu0 %v2561
    %2582 = vmatprep.subr.mxu0 0.0
    %2583 = vmatpush1.msra.mxu0 %v2562
    %2584 = vmatprep.subr.mxu0 0.0
    %2585 = vmatpush1.msra.mxu0 %v2563
    %2586 = vmatprep.subr.mxu0 0.0
    %2587 = vmatpush1.msra.mxu0 0.0
    %2588 = vmatprep.subr.mxu0 0.0
    %2589 = vmatpush1.msra.mxu0 0.0
    %2590 = vmatprep.subr.mxu0 0.0
    %2591 = vmatpush1.msra.mxu0 0.0
    %2592 = vmatprep.subr.mxu0 0.0
    %2593 = vmatpush1.msra.mxu0 0.0
    %2594 = vmatprep.subr.mxu0 0.0
    %2595 = vmatpush1.msra.mxu0 0.0
    %2596 = vmatprep.subr.mxu0 0.0
    %2597 = vmatpush1.msra.mxu0 0.0
    %2598 = vmatprep.subr.mxu0 0.0
    %2599 = vmatpush1.msra.mxu0 0.0
    %2600 = vmatprep.subr.mxu0 0.0
    %2601 = vmatpush1.msra.mxu0 0.0
    %2602 = vmatprep.subr.mxu0 0.0
    %2603 = vmatpush1.msra.mxu0 0.0
    %2604 = vmatprep.subr.mxu0 0.0
    %2605 = vmatpush1.msra.mxu0 0.0
    %2606 = vmatprep.subr.mxu0 0.0
    %2607 = vmatpush1.msra.mxu0 0.0
    %2608 = vmatprep.subr.mxu0 0.0
    %2609 = vmatpush1.msra.mxu0 0.0
    %2610 = vmatprep.subr.mxu0 0.0
    %2611 = vmatpush1.msra.mxu0 0.0
    %2612 = vmatprep.subr.mxu0 0.0
    %2613 = vmatpush1.msra.mxu0 0.0
    %2614 = vmatprep.subr.mxu0 0.0
    %2615 = vmatpush1.msra.mxu0 0.0
    %2616 = vmatprep.subr.mxu0 0.0
    %2617 = vmatpush1.msra.mxu0 0.0
    %2618 = vmatprep.subr.mxu0 0.0
    %2619 = vmatpush1.msra.mxu0 0.0
    %2620 = vmatprep.subr.mxu0 0.0
    %2621 = vmatpush1.msra.mxu0 0.0
    %2622 = vmatprep.subr.mxu0 0.0
    %2623 = vmatpush1.msra.mxu0 0.0
    %2624 = vmatprep.subr.mxu0 0.0
    %2625 = vmatpush1.msra.mxu0 0.0
    %2626 = vmatprep.subr.mxu0 0.0
    %2627 = vmatpush1.msra.mxu0 0.0
    %2628 = vmatprep.subr.mxu0 0.0
    %2629 = vmatpush1.msra.mxu0 0.0
    %2630 = vmatprep.subr.mxu0 0.0
    %2631 = vmatpush1.msra.mxu0 0.0
    %2632 = vmatprep.subr.mxu0 0.0
    %2633 = vmatpush1.msra.mxu0 0.0
    %2634 = vmatprep.mubr.f32.mxu0 0.0
    %2635 = vmatmul.mubr.f32.gmra.mrb[0].mxu0 %v2565
    %v2636 = vpop.f32.mrb[0].mxu0
    %v2637 = vadd.f32 0.0, %v2636
    %v2638 = vpop.f32.mrb[0].mxu0
    %2639 = vmatprep.mubr.f32.mxu0 0.0
    %2640 = vmatmul.mubr.f32.gmra.mrb[0].mxu0 %v2568
    %v2641 = vpop.f32.mrb[0].mxu0
    %v2642 = vadd.f32 0.0, %v2641
    %v2643 = vpop.f32.mrb[0].mxu0
    %2644 = vdwg.mxu0
    %v2645 = vadd.f32 %v2469, %v2637
    %v2646 = vadd.f32 %v2470, %v2642
    %s2647 = scalar_lea.vmem %s4, 80
    %v2648 = vld [vmem:[%s2647] sm:$0xff]
    %v2649 = vld [vmem:[%s2647 + $0x8] sm:$0xf]
    %v2651 = vsel %vm1773, %v2648, 0
    %v2654 = vsel %vm1773, %v2649, 0
    %2656 = vmatprep.subr.mxu0 0.0
    %2657 = vmatpush1.msra.mxu0 %v1767
    %2658 = vmatprep.subr.mxu0 0.0
    %2659 = vmatpush1.msra.mxu0 %v1768
    %2660 = vmatprep.subr.mxu0 0.0
    %2661 = vmatpush1.msra.mxu0 %v1769
    %2662 = vmatprep.subr.mxu0 0.0
    %2663 = vmatpush1.msra.mxu0 %v1770
    %2664 = vmatprep.subr.mxu0 0.0
    %2665 = vmatpush1.msra.mxu0 0.0
    %2666 = vmatprep.subr.mxu0 0.0
    %2667 = vmatpush1.msra.mxu0 0.0
    %2668 = vmatprep.subr.mxu0 0.0
    %2669 = vmatpush1.msra.mxu0 0.0
    %2670 = vmatprep.subr.mxu0 0.0
    %2671 = vmatpush1.msra.mxu0 0.0
    %2672 = vmatprep.subr.mxu0 0.0
    %2673 = vmatpush1.msra.mxu0 0.0
    %2674 = vmatprep.subr.mxu0 0.0
    %2675 = vmatpush1.msra.mxu0 0.0
    %2676 = vmatprep.subr.mxu0 0.0
    %2677 = vmatpush1.msra.mxu0 0.0
    %2678 = vmatprep.subr.mxu0 0.0
    %2679 = vmatpush1.msra.mxu0 0.0
    %2680 = vmatprep.subr.mxu0 0.0
    %2681 = vmatpush1.msra.mxu0 0.0
    %2682 = vmatprep.subr.mxu0 0.0
    %2683 = vmatpush1.msra.mxu0 0.0
    %2684 = vmatprep.subr.mxu0 0.0
    %2685 = vmatpush1.msra.mxu0 0.0
    %2686 = vmatprep.subr.mxu0 0.0
    %2687 = vmatpush1.msra.mxu0 0.0
    %2688 = vmatprep.subr.mxu0 0.0
    %2689 = vmatpush1.msra.mxu0 0.0
    %2690 = vmatprep.subr.mxu0 0.0
    %2691 = vmatpush1.msra.mxu0 0.0
    %2692 = vmatprep.subr.mxu0 0.0
    %2693 = vmatpush1.msra.mxu0 0.0
    %2694 = vmatprep.subr.mxu0 0.0
    %2695 = vmatpush1.msra.mxu0 0.0
    %2696 = vmatprep.subr.mxu0 0.0
    %2697 = vmatpush1.msra.mxu0 0.0
    %2698 = vmatprep.subr.mxu0 0.0
    %2699 = vmatpush1.msra.mxu0 0.0
    %2700 = vmatprep.subr.mxu0 0.0
    %2701 = vmatpush1.msra.mxu0 0.0
    %2702 = vmatprep.subr.mxu0 0.0
    %2703 = vmatpush1.msra.mxu0 0.0
    %2704 = vmatprep.subr.mxu0 0.0
    %2705 = vmatpush1.msra.mxu0 0.0
    %2706 = vmatprep.subr.mxu0 0.0
    %2707 = vmatpush1.msra.mxu0 0.0
    %2708 = vmatprep.subr.mxu0 0.0
    %2709 = vmatpush1.msra.mxu0 0.0
    %2710 = vmatprep.subr.mxu0 0.0
    %2711 = vmatpush1.msra.mxu0 0.0
    %2712 = vmatprep.subr.mxu0 0.0
    %2713 = vmatpush1.msra.mxu0 0.0
    %2714 = vmatprep.subr.mxu0 0.0
    %2715 = vmatpush1.msra.mxu0 0.0
    %2716 = vmatprep.subr.mxu0 0.0
    %2717 = vmatpush1.msra.mxu0 0.0
    %2718 = vmatprep.subr.mxu0 0.0
    %2719 = vmatpush1.msra.mxu0 0.0
    %2720 = vmatprep.mubr.f32.mxu0 0.0
    %2721 = vmatmul.mubr.f32.gmra.mrb[0].mxu0 %v2651
    %v2722 = vpop.f32.mrb[0].mxu0
    %v2723 = vadd.f32 0.0, %v2722
    %v2724 = vpop.f32.mrb[0].mxu0
    %2725 = vmatprep.mubr.f32.mxu0 0.0
    %2726 = vmatmul.mubr.f32.gmra.mrb[0].mxu0 %v2654
    %v2727 = vpop.f32.mrb[0].mxu0
    %v2728 = vadd.f32 0.0, %v2727
    %v2729 = vpop.f32.mrb[0].mxu0
    %2730 = vdwg.mxu0
    %s2731 = scalar_lea.vmem [#allocation6], 320
    %v2732 = vld [vmem:[%s2731] sm:$0xff]
    %v2733 = vld [vmem:[%s2731 + $0x8] sm:$0xff]
    %v2734 = vld [vmem:[%s2731 + $0x10] sm:$0xff]
    %v2735 = vld [vmem:[%s2731 + $0x18] sm:$0xff]
    %v2736 = vld [vmem:[%s2731 + $0x20] sm:$0xff]
    %v2737 = vld [vmem:[%s2731 + $0x28] sm:$0xff]
    %v2738 = vld [vmem:[%s2731 + $0x30] sm:$0xff]
    %v2739 = vld [vmem:[%s2731 + $0x38] sm:$0xff]
    %v2741 = vsel %vm1956, %v2723, 0
    %v2744 = vsel %vm1956, %v2728, 0
    %2746 = vmatprep.subr.mxu0 0.0
    %2747 = vmatpush1.msra.mxu0 %v2732
    %2748 = vmatprep.subr.mxu0 0.0
    %2749 = vmatpush1.msra.mxu0 %v2733
    %2750 = vmatprep.subr.mxu0 0.0
    %2751 = vmatpush1.msra.mxu0 %v2734
    %2752 = vmatprep.subr.mxu0 0.0
    %2753 = vmatpush1.msra.mxu0 %v2735
    %2754 = vmatprep.subr.mxu0 0.0
    %2755 = vmatpush1.msra.mxu0 %v2736
    %2756 = vmatprep.subr.mxu0 0.0
    %2757 = vmatpush1.msra.mxu0 %v2737
    %2758 = vmatprep.subr.mxu0 0.0
    %2759 = vmatpush1.msra.mxu0 %v2738
    %2760 = vmatprep.subr.mxu0 0.0
    %2761 = vmatpush1.msra.mxu0 %v2739
    %2762 = vmatprep.subr.mxu0 0.0
    %2763 = vmatpush1.msra.mxu0 0.0
    %2764 = vmatprep.subr.mxu0 0.0
    %2765 = vmatpush1.msra.mxu0 0.0
    %2766 = vmatprep.subr.mxu0 0.0
    %2767 = vmatpush1.msra.mxu0 0.0
    %2768 = vmatprep.subr.mxu0 0.0
    %2769 = vmatpush1.msra.mxu0 0.0
    %2770 = vmatprep.subr.mxu0 0.0
    %2771 = vmatpush1.msra.mxu0 0.0
    %2772 = vmatprep.subr.mxu0 0.0
    %2773 = vmatpush1.msra.mxu0 0.0
    %2774 = vmatprep.subr.mxu0 0.0
    %2775 = vmatpush1.msra.mxu0 0.0
    %2776 = vmatprep.subr.mxu0 0.0
    %2777 = vmatpush1.msra.mxu0 0.0
    %2778 = vmatprep.subr.mxu0 0.0
    %2779 = vmatpush1.msra.mxu0 0.0
    %2780 = vmatprep.subr.mxu0 0.0
    %2781 = vmatpush1.msra.mxu0 0.0
    %2782 = vmatprep.subr.mxu0 0.0
    %2783 = vmatpush1.msra.mxu0 0.0
    %2784 = vmatprep.subr.mxu0 0.0
    %2785 = vmatpush1.msra.mxu0 0.0
    %2786 = vmatprep.subr.mxu0 0.0
    %2787 = vmatpush1.msra.mxu0 0.0
    %2788 = vmatprep.subr.mxu0 0.0
    %2789 = vmatpush1.msra.mxu0 0.0
    %2790 = vmatprep.subr.mxu0 0.0
    %2791 = vmatpush1.msra.mxu0 0.0
    %2792 = vmatprep.subr.mxu0 0.0
    %2793 = vmatpush1.msra.mxu0 0.0
    %2794 = vmatprep.subr.mxu0 0.0
    %2795 = vmatpush1.msra.mxu0 0.0
    %2796 = vmatprep.subr.mxu0 0.0
    %2797 = vmatpush1.msra.mxu0 0.0
    %2798 = vmatprep.subr.mxu0 0.0
    %2799 = vmatpush1.msra.mxu0 0.0
    %2800 = vmatprep.subr.mxu0 0.0
    %2801 = vmatpush1.msra.mxu0 0.0
    %2802 = vmatprep.subr.mxu0 0.0
    %2803 = vmatpush1.msra.mxu0 0.0
    %2804 = vmatprep.subr.mxu0 0.0
    %2805 = vmatpush1.msra.mxu0 0.0
    %2806 = vmatprep.subr.mxu0 0.0
    %2807 = vmatpush1.msra.mxu0 0.0
    %2808 = vmatprep.subr.mxu0 0.0
    %2809 = vmatpush1.msra.mxu0 0.0
    %2810 = vmatprep.mubr.f32.mxu0 0.0
    %2811 = vmatmul.mubr.f32.gmra.mrb[0].mxu0 %v2741
    %v2812 = vpop.f32.mrb[0].mxu0
    %v2813 = vadd.f32 0.0, %v2812
    %v2814 = vpop.f32.mrb[0].mxu0
    %2815 = vmatprep.mubr.f32.mxu0 0.0
    %2816 = vmatmul.mubr.f32.gmra.mrb[0].mxu0 %v2744
    %v2817 = vpop.f32.mrb[0].mxu0
    %v2818 = vadd.f32 0.0, %v2817
    %v2819 = vpop.f32.mrb[0].mxu0
    %2820 = vdwg.mxu0
    %v2821 = vadd.f32 %v2645, %v2813
    %v2822 = vadd.f32 %v2646, %v2818
    %s2823 = scalar_lea.vmem %s4, 96
    %v2824 = vld [vmem:[%s2823] sm:$0xff]
    %v2825 = vld [vmem:[%s2823 + $0x8] sm:$0xf]
    %v2827 = vsel %vm1773, %v2824, 0
    %v2830 = vsel %vm1773, %v2825, 0
    %2832 = vmatprep.subr.mxu0 0.0
    %2833 = vmatpush1.msra.mxu0 %v1767
    %2834 = vmatprep.subr.mxu0 0.0
    %2835 = vmatpush1.msra.mxu0 %v1768
    %2836 = vmatprep.subr.mxu0 0.0
    %2837 = vmatpush1.msra.mxu0 %v1769
    %2838 = vmatprep.subr.mxu0 0.0
    %2839 = vmatpush1.msra.mxu0 %v1770
    %2840 = vmatprep.subr.mxu0 0.0
    %2841 = vmatpush1.msra.mxu0 0.0
    %2842 = vmatprep.subr.mxu0 0.0
    %2843 = vmatpush1.msra.mxu0 0.0
    %2844 = vmatprep.subr.mxu0 0.0
    %2845 = vmatpush1.msra.mxu0 0.0
    %2846 = vmatprep.subr.mxu0 0.0
    %2847 = vmatpush1.msra.mxu0 0.0
    %2848 = vmatprep.subr.mxu0 0.0
    %2849 = vmatpush1.msra.mxu0 0.0
    %2850 = vmatprep.subr.mxu0 0.0
    %2851 = vmatpush1.msra.mxu0 0.0
    %2852 = vmatprep.subr.mxu0 0.0
    %2853 = vmatpush1.msra.mxu0 0.0
    %2854 = vmatprep.subr.mxu0 0.0
    %2855 = vmatpush1.msra.mxu0 0.0
    %2856 = vmatprep.subr.mxu0 0.0
    %2857 = vmatpush1.msra.mxu0 0.0
    %2858 = vmatprep.subr.mxu0 0.0
    %2859 = vmatpush1.msra.mxu0 0.0
    %2860 = vmatprep.subr.mxu0 0.0
    %2861 = vmatpush1.msra.mxu0 0.0
    %2862 = vmatprep.subr.mxu0 0.0
    %2863 = vmatpush1.msra.mxu0 0.0
    %2864 = vmatprep.subr.mxu0 0.0
    %2865 = vmatpush1.msra.mxu0 0.0
    %2866 = vmatprep.subr.mxu0 0.0
    %2867 = vmatpush1.msra.mxu0 0.0
    %2868 = vmatprep.subr.mxu0 0.0
    %2869 = vmatpush1.msra.mxu0 0.0
    %2870 = vmatprep.subr.mxu0 0.0
    %2871 = vmatpush1.msra.mxu0 0.0
    %2872 = vmatprep.subr.mxu0 0.0
    %2873 = vmatpush1.msra.mxu0 0.0
    %2874 = vmatprep.subr.mxu0 0.0
    %2875 = vmatpush1.msra.mxu0 0.0
    %2876 = vmatprep.subr.mxu0 0.0
    %2877 = vmatpush1.msra.mxu0 0.0
    %2878 = vmatprep.subr.mxu0 0.0
    %2879 = vmatpush1.msra.mxu0 0.0
    %2880 = vmatprep.subr.mxu0 0.0
    %2881 = vmatpush1.msra.mxu0 0.0
    %2882 = vmatprep.subr.mxu0 0.0
    %2883 = vmatpush1.msra.mxu0 0.0
    %2884 = vmatprep.subr.mxu0 0.0
    %2885 = vmatpush1.msra.mxu0 0.0
    %2886 = vmatprep.subr.mxu0 0.0
    %2887 = vmatpush1.msra.mxu0 0.0
    %2888 = vmatprep.subr.mxu0 0.0
    %2889 = vmatpush1.msra.mxu0 0.0
    %2890 = vmatprep.subr.mxu0 0.0
    %2891 = vmatpush1.msra.mxu0 0.0
    %2892 = vmatprep.subr.mxu0 0.0
    %2893 = vmatpush1.msra.mxu0 0.0
    %2894 = vmatprep.subr.mxu0 0.0
    %2895 = vmatpush1.msra.mxu0 0.0
    %2896 = vmatprep.mubr.f32.mxu0 0.0
    %2897 = vmatmul.mubr.f32.gmra.mrb[0].mxu0 %v2827
    %v2898 = vpop.f32.mrb[0].mxu0
    %v2899 = vadd.f32 0.0, %v2898
    %v2900 = vpop.f32.mrb[0].mxu0
    %2901 = vmatprep.mubr.f32.mxu0 0.0
    %2902 = vmatmul.mubr.f32.gmra.mrb[0].mxu0 %v2830
    %v2903 = vpop.f32.mrb[0].mxu0
    %v2904 = vadd.f32 0.0, %v2903
    %v2905 = vpop.f32.mrb[0].mxu0
    %2906 = vdwg.mxu0
    %s2907 = scalar_lea.vmem [#allocation6], 384
    %v2908 = vld [vmem:[%s2907] sm:$0xff]
    %v2909 = vld [vmem:[%s2907 + $0x8] sm:$0xff]
    %v2910 = vld [vmem:[%s2907 + $0x10] sm:$0xff]
    %v2911 = vld [vmem:[%s2907 + $0x18] sm:$0xff]
    %v2912 = vld [vmem:[%s2907 + $0x20] sm:$0xff]
    %v2913 = vld [vmem:[%s2907 + $0x28] sm:$0xff]
    %v2914 = vld [vmem:[%s2907 + $0x30] sm:$0xff]
    %v2915 = vld [vmem:[%s2907 + $0x38] sm:$0xff]
    %v2917 = vsel %vm1956, %v2899, 0
    %v2920 = vsel %vm1956, %v2904, 0
    %2922 = vmatprep.subr.mxu0 0.0
    %2923 = vmatpush1.msra.mxu0 %v2908
    %2924 = vmatprep.subr.mxu0 0.0
    %2925 = vmatpush1.msra.mxu0 %v2909
    %2926 = vmatprep.subr.mxu0 0.0
    %2927 = vmatpush1.msra.mxu0 %v2910
    %2928 = vmatprep.subr.mxu0 0.0
    %2929 = vmatpush1.msra.mxu0 %v2911
    %2930 = vmatprep.subr.mxu0 0.0
    %2931 = vmatpush1.msra.mxu0 %v2912
    %2932 = vmatprep.subr.mxu0 0.0
    %2933 = vmatpush1.msra.mxu0 %v2913
    %2934 = vmatprep.subr.mxu0 0.0
    %2935 = vmatpush1.msra.mxu0 %v2914
    %2936 = vmatprep.subr.mxu0 0.0
    %2937 = vmatpush1.msra.mxu0 %v2915
    %2938 = vmatprep.subr.mxu0 0.0
    %2939 = vmatpush1.msra.mxu0 0.0
    %2940 = vmatprep.subr.mxu0 0.0
    %2941 = vmatpush1.msra.mxu0 0.0
    %2942 = vmatprep.subr.mxu0 0.0
    %2943 = vmatpush1.msra.mxu0 0.0
    %2944 = vmatprep.subr.mxu0 0.0
    %2945 = vmatpush1.msra.mxu0 0.0
    %2946 = vmatprep.subr.mxu0 0.0
    %2947 = vmatpush1.msra.mxu0 0.0
    %2948 = vmatprep.subr.mxu0 0.0
    %2949 = vmatpush1.msra.mxu0 0.0
    %2950 = vmatprep.subr.mxu0 0.0
    %2951 = vmatpush1.msra.mxu0 0.0
    %2952 = vmatprep.subr.mxu0 0.0
    %2953 = vmatpush1.msra.mxu0 0.0
    %2954 = vmatprep.subr.mxu0 0.0
    %2955 = vmatpush1.msra.mxu0 0.0
    %2956 = vmatprep.subr.mxu0 0.0
    %2957 = vmatpush1.msra.mxu0 0.0
    %2958 = vmatprep.subr.mxu0 0.0
    %2959 = vmatpush1.msra.mxu0 0.0
    %2960 = vmatprep.subr.mxu0 0.0
    %2961 = vmatpush1.msra.mxu0 0.0
    %2962 = vmatprep.subr.mxu0 0.0
    %2963 = vmatpush1.msra.mxu0 0.0
    %2964 = vmatprep.subr.mxu0 0.0
    %2965 = vmatpush1.msra.mxu0 0.0
    %2966 = vmatprep.subr.mxu0 0.0
    %2967 = vmatpush1.msra.mxu0 0.0
    %2968 = vmatprep.subr.mxu0 0.0
    %2969 = vmatpush1.msra.mxu0 0.0
    %2970 = vmatprep.subr.mxu0 0.0
    %2971 = vmatpush1.msra.mxu0 0.0
    %2972 = vmatprep.subr.mxu0 0.0
    %2973 = vmatpush1.msra.mxu0 0.0
    %2974 = vmatprep.subr.mxu0 0.0
    %2975 = vmatpush1.msra.mxu0 0.0
    %2976 = vmatprep.subr.mxu0 0.0
    %2977 = vmatpush1.msra.mxu0 0.0
    %2978 = vmatprep.subr.mxu0 0.0
    %2979 = vmatpush1.msra.mxu0 0.0
    %2980 = vmatprep.subr.mxu0 0.0
    %2981 = vmatpush1.msra.mxu0 0.0
    %2982 = vmatprep.subr.mxu0 0.0
    %2983 = vmatpush1.msra.mxu0 0.0
    %2984 = vmatprep.subr.mxu0 0.0
    %2985 = vmatpush1.msra.mxu0 0.0
    %2986 = vmatprep.mubr.f32.mxu0 0.0
    %2987 = vmatmul.mubr.f32.gmra.mrb[0].mxu0 %v2917
    %v2988 = vpop.f32.mrb[0].mxu0
    %v2989 = vadd.f32 0.0, %v2988
    %v2990 = vpop.f32.mrb[0].mxu0
    %2991 = vmatprep.mubr.f32.mxu0 0.0
    %2992 = vmatmul.mubr.f32.gmra.mrb[0].mxu0 %v2920
    %v2993 = vpop.f32.mrb[0].mxu0
    %v2994 = vadd.f32 0.0, %v2993
    %v2995 = vpop.f32.mrb[0].mxu0
    %2996 = vdwg.mxu0
    %v2997 = vadd.f32 %v2821, %v2989
    %v2998 = vadd.f32 %v2822, %v2994
    %v2999 = vld [vmem:[#allocation7] sm:$0x1]
    %v3001 = vlaneseq
    %v3002 = vshrl.u32 %v3001, 7
    %v3003 = vsub.s32 0, %v3002
    %v3004 = vrot.slane %v2999, %v3003
    %v3006 = vadd.f32 %v2997, %v3004
    %v3007 = vadd.f32 %v2998, %v3004
    %v3008 = vmul.f32 %v3006, 0.5
    %v3009 = vmul.f32 %v3007, 0.5
    %v3010 = vmul.f32 %v3006, 0.70710677
    %v3011 = vmul.f32 %v3007, 0.70710677
    %v3012 = verf.f32.pop %v3010
    %v3013 = verf.f32.pop %v3011
    %v3014 = vadd.f32 %v3012, 1.0
    %v3015 = vadd.f32 %v3013, 1.0
    %v3016 = vmul.f32 %v3008, %v3014
    %v3017 = vmul.f32 %v3009, %v3015
    %v3018 = vld [vmem:[%s7] sm:$0xff]
    %v3019 = vld [vmem:[%s7 + $0x8] sm:$0xff]
    %v3020 = vld [vmem:[%s7 + $0x10] sm:$0xff]
    %v3021 = vld [vmem:[%s7 + $0x18] sm:$0xff]
    %v3022 = vld [vmem:[%s7 + $0x20] sm:$0xff]
    %v3023 = vld [vmem:[%s7 + $0x28] sm:$0xff]
    %v3024 = vld [vmem:[%s7 + $0x30] sm:$0xff]
    %v3025 = vld [vmem:[%s7 + $0x38] sm:$0xff]
    %v3026 = vld [vmem:[%s7 + $0x40] sm:$0xff]
    %v3027 = vld [vmem:[%s7 + $0x48] sm:$0xff]
    %v3028 = vld [vmem:[%s7 + $0x50] sm:$0xff]
    %v3029 = vld [vmem:[%s7 + $0x58] sm:$0xff]
    %v3030 = vld [vmem:[%s7 + $0x60] sm:$0xff]
    %v3031 = vld [vmem:[%s7 + $0x68] sm:$0xff]
    %v3032 = vld [vmem:[%s7 + $0x70] sm:$0xff]
    %v3033 = vld [vmem:[%s7 + $0x78] sm:$0xff]
    %v3034 = vld [vmem:[#allocation9] sm:$0x1]
    %v3036 = vlaneseq
    %v3037 = vshrl.u32 %v3036, 7
    %v3038 = vsub.s32 0, %v3037
    %v3039 = vrot.slane %v3034, %v3038
    %3041 = vmatprep.subr.mxu0 0.0
    %3042 = vmatpush1.msra.mxu0 %v3018
    %3043 = vmatprep.subr.mxu0 0.0
    %3044 = vmatpush1.msra.mxu0 %v3019
    %3045 = vmatprep.subr.mxu0 0.0
    %3046 = vmatpush1.msra.mxu0 %v3020
    %3047 = vmatprep.subr.mxu0 0.0
    %3048 = vmatpush1.msra.mxu0 %v3021
    %3049 = vmatprep.subr.mxu0 0.0
    %3050 = vmatpush1.msra.mxu0 %v3022
    %3051 = vmatprep.subr.mxu0 0.0
    %3052 = vmatpush1.msra.mxu0 %v3023
    %3053 = vmatprep.subr.mxu0 0.0
    %3054 = vmatpush1.msra.mxu0 %v3024
    %3055 = vmatprep.subr.mxu0 0.0
    %3056 = vmatpush1.msra.mxu0 %v3025
    %3057 = vmatprep.subr.mxu0 0.0
    %3058 = vmatpush1.msra.mxu0 %v3026
    %3059 = vmatprep.subr.mxu0 0.0
    %3060 = vmatpush1.msra.mxu0 %v3027
    %3061 = vmatprep.subr.mxu0 0.0
    %3062 = vmatpush1.msra.mxu0 %v3028
    %3063 = vmatprep.subr.mxu0 0.0
    %3064 = vmatpush1.msra.mxu0 %v3029
    %3065 = vmatprep.subr.mxu0 0.0
    %3066 = vmatpush1.msra.mxu0 %v3030
    %3067 = vmatprep.subr.mxu0 0.0
    %3068 = vmatpush1.msra.mxu0 %v3031
    %3069 = vmatprep.subr.mxu0 0.0
    %3070 = vmatpush1.msra.mxu0 %v3032
    %3071 = vmatprep.subr.mxu0 0.0
    %3072 = vmatpush1.msra.mxu0 %v3033
    %3073 = vmatprep.subr.mxu0 0.0
    %3074 = vmatpush1.msra.mxu0 0.0
    %3075 = vmatprep.subr.mxu0 0.0
    %3076 = vmatpush1.msra.mxu0 0.0
    %3077 = vmatprep.subr.mxu0 0.0
    %3078 = vmatpush1.msra.mxu0 0.0
    %3079 = vmatprep.subr.mxu0 0.0
    %3080 = vmatpush1.msra.mxu0 0.0
    %3081 = vmatprep.subr.mxu0 0.0
    %3082 = vmatpush1.msra.mxu0 0.0
    %3083 = vmatprep.subr.mxu0 0.0
    %3084 = vmatpush1.msra.mxu0 0.0
    %3085 = vmatprep.subr.mxu0 0.0
    %3086 = vmatpush1.msra.mxu0 0.0
    %3087 = vmatprep.subr.mxu0 0.0
    %3088 = vmatpush1.msra.mxu0 0.0
    %3089 = vmatprep.subr.mxu0 0.0
    %3090 = vmatpush1.msra.mxu0 0.0
    %3091 = vmatprep.subr.mxu0 0.0
    %3092 = vmatpush1.msra.mxu0 0.0
    %3093 = vmatprep.subr.mxu0 0.0
    %3094 = vmatpush1.msra.mxu0 0.0
    %3095 = vmatprep.subr.mxu0 0.0
    %3096 = vmatpush1.msra.mxu0 0.0
    %3097 = vmatprep.subr.mxu0 0.0
    %3098 = vmatpush1.msra.mxu0 0.0
    %3099 = vmatprep.subr.mxu0 0.0
    %3100 = vmatpush1.msra.mxu0 0.0
    %3101 = vmatprep.subr.mxu0 0.0
    %3102 = vmatpush1.msra.mxu0 0.0
    %3103 = vmatprep.subr.mxu0 0.0
    %3104 = vmatpush1.msra.mxu0 0.0
    %3105 = vmatprep.mubr.f32.mxu0 0.0
    %3106 = vmatmul.mubr.f32.gmra.mrb[0].mxu0 %v3016
    %v3107 = vpop.f32.mrb[0].mxu0
    %v3108 = vadd.f32 %v3039, %v3107
    %v3109 = vpop.f32.mrb[0].mxu0
    %3110 = vmatprep.mubr.f32.mxu0 0.0
    %3111 = vmatmul.mubr.f32.gmra.mrb[0].mxu0 %v3017
    %v3112 = vpop.f32.mrb[0].mxu0
    %v3113 = vadd.f32 %v3039, %v3112
    %v3114 = vpop.f32.mrb[0].mxu0
    %3115 = vdwg.mxu0
    %v3116 = vmul.f32 %v3108, 0.5
    %v3117 = vmul.f32 %v3113, 0.5
    %v3118 = vmul.f32 %v3108, 0.70710677
    %v3119 = vmul.f32 %v3113, 0.70710677
    %v3120 = verf.f32.pop %v3118
    %v3121 = verf.f32.pop %v3119
    %v3122 = vadd.f32 %v3120, 1.0
    %v3123 = vadd.f32 %v3121, 1.0
    %v3124 = vmul.f32 %v3116, %v3122
    %v3125 = vmul.f32 %v3117, %v3123
    %v3126 = vld [vmem:[#allocation10] sm:$0xff]
    %v3127 = vld [vmem:[#allocation10 + $0x8] sm:$0xff]
    %v3128 = vld [vmem:[#allocation10 + $0x10] sm:$0xff]
    %v3129 = vld [vmem:[#allocation10 + $0x18] sm:$0xff]
    %v3130 = vld [vmem:[#allocation10 + $0x20] sm:$0xff]
    %v3131 = vld [vmem:[#allocation10 + $0x28] sm:$0xff]
    %v3132 = vld [vmem:[#allocation10 + $0x30] sm:$0xff]
    %v3133 = vld [vmem:[#allocation10 + $0x38] sm:$0xff]
    %v3134 = vld [vmem:[#allocation10 + $0x40] sm:$0xff]
    %v3135 = vld [vmem:[#allocation10 + $0x48] sm:$0xff]
    %v3136 = vld [vmem:[#allocation10 + $0x50] sm:$0xff]
    %v3137 = vld [vmem:[#allocation10 + $0x58] sm:$0xff]
    %v3138 = vld [vmem:[#allocation10 + $0x60] sm:$0xff]
    %v3139 = vld [vmem:[#allocation10 + $0x68] sm:$0xff]
    %v3140 = vld [vmem:[#allocation10 + $0x70] sm:$0xff]
    %v3141 = vld [vmem:[#allocation10 + $0x78] sm:$0xff]
    %v3142 = vld [vmem:[#allocation10 + $0x80] sm:$0xff]
    %v3143 = vld [vmem:[#allocation10 + $0x88] sm:$0xff]
    %v3144 = vld [vmem:[#allocation10 + $0x90] sm:$0xff]
    %v3145 = vld [vmem:[#allocation10 + $0x98] sm:$0xff]
    %v3146 = vld [vmem:[#allocation10 + $0xa0] sm:$0xff]
    %v3147 = vld [vmem:[#allocation10 + $0xa8] sm:$0xff]
    %v3148 = vld [vmem:[#allocation10 + $0xb0] sm:$0xff]
    %v3149 = vld [vmem:[#allocation10 + $0xb8] sm:$0xff]
    %v3150 = vld [vmem:[#allocation12] sm:$0x7]
    %v3152 = vlaneseq
    %v3153 = vshrl.u32 %v3152, 7
    %v3154 = vsub.s32 0, %v3153
    %v3155 = vrot.slane %v3150, %v3154
    %v3156 = vlaneseq
    %v3157 = vshrl.u32 %v3156, 7
    %v3158 = vsub.s32 1, %v3157
    %v3159 = vrot.slane %v3150, %v3158
    %v3160 = vlaneseq
    %v3161 = vshrl.u32 %v3160, 7
    %v3162 = vsub.s32 2, %v3161
    %v3163 = vrot.slane %v3150, %v3162
    %v3168 = vsel %vm1956, %v3124, 0
    %v3171 = vsel %vm1956, %v3125, 0
    %3173 = vmatprep.subr.mxu0 %v3127
    %3174 = vmatpush1.msra.mxu0 %v3126
    %3175 = vmatprep.subr.mxu0 %v3130
    %3176 = vmatpush1.msra.mxu0 %v3129
    %3177 = vmatprep.subr.mxu0 %v3133
    %3178 = vmatpush1.msra.mxu0 %v3132
    %3179 = vmatprep.subr.mxu0 %v3136
    %3180 = vmatpush1.msra.mxu0 %v3135
    %3181 = vmatprep.subr.mxu0 %v3139
    %3182 = vmatpush1.msra.mxu0 %v3138
    %3183 = vmatprep.subr.mxu0 %v3142
    %3184 = vmatpush1.msra.mxu0 %v3141
    %3185 = vmatprep.subr.mxu0 %v3145
    %3186 = vmatpush1.msra.mxu0 %v3144
    %3187 = vmatprep.subr.mxu0 %v3148
    %3188 = vmatpush1.msra.mxu0 %v3147
    %3189 = vmatprep.subr.mxu0 0.0
    %3190 = vmatpush1.msra.mxu0 0.0
    %3191 = vmatprep.subr.mxu0 0.0
    %3192 = vmatpush1.msra.mxu0 0.0
    %3193 = vmatprep.subr.mxu0 0.0
    %3194 = vmatpush1.msra.mxu0 0.0
    %3195 = vmatprep.subr.mxu0 0.0
    %3196 = vmatpush1.msra.mxu0 0.0
    %3197 = vmatprep.subr.mxu0 0.0
    %3198 = vmatpush1.msra.mxu0 0.0
    %3199 = vmatprep.subr.mxu0 0.0
    %3200 = vmatpush1.msra.mxu0 0.0
    %3201 = vmatprep.subr.mxu0 0.0
    %3202 = vmatpush1.msra.mxu0 0.0
    %3203 = vmatprep.subr.mxu0 0.0
    %3204 = vmatpush1.msra.mxu0 0.0
    %3205 = vmatprep.subr.mxu0 0.0
    %3206 = vmatpush1.msra.mxu0 0.0
    %3207 = vmatprep.subr.mxu0 0.0
    %3208 = vmatpush1.msra.mxu0 0.0
    %3209 = vmatprep.subr.mxu0 0.0
    %3210 = vmatpush1.msra.mxu0 0.0
    %3211 = vmatprep.subr.mxu0 0.0
    %3212 = vmatpush1.msra.mxu0 0.0
    %3213 = vmatprep.subr.mxu0 0.0
    %3214 = vmatpush1.msra.mxu0 0.0
    %3215 = vmatprep.subr.mxu0 0.0
    %3216 = vmatpush1.msra.mxu0 0.0
    %3217 = vmatprep.subr.mxu0 0.0
    %3218 = vmatpush1.msra.mxu0 0.0
    %3219 = vmatprep.subr.mxu0 0.0
    %3220 = vmatpush1.msra.mxu0 0.0
    %3221 = vmatprep.subr.mxu0 0.0
    %3222 = vmatpush1.msra.mxu0 0.0
    %3223 = vmatprep.subr.mxu0 0.0
    %3224 = vmatpush1.msra.mxu0 0.0
    %3225 = vmatprep.subr.mxu0 0.0
    %3226 = vmatpush1.msra.mxu0 0.0
    %3227 = vmatprep.subr.mxu0 0.0
    %3228 = vmatpush1.msra.mxu0 0.0
    %3229 = vmatprep.subr.mxu0 0.0
    %3230 = vmatpush1.msra.mxu0 0.0
    %3231 = vmatprep.subr.mxu0 0.0
    %3232 = vmatpush1.msra.mxu0 0.0
    %3233 = vmatprep.subr.mxu0 0.0
    %3234 = vmatpush1.msra.mxu0 0.0
    %3235 = vmatprep.subr.mxu0 0.0
    %3236 = vmatpush1.msra.mxu0 0.0
    %3237 = vmatprep.mubr.f32.mxu0 0.0
    %3238 = vmatmul.mubr.f32.gmra.mrb[0].mxu0 %v3168
    %v3239 = vpop.f32.mrb[0].mxu0
    %v3240 = vadd.f32 %v3155, %v3239
    %v3241 = vpop.f32.mrb[0].mxu0
    %v3242 = vadd.f32 %v3159, %v3241
    %3243 = vmatprep.mubr.f32.mxu0 0.0
    %3244 = vmatmul.mubr.f32.gmra.mrb[0].mxu0 %v3171
    %v3245 = vpop.f32.mrb[0].mxu0
    %v3246 = vadd.f32 %v3155, %v3245
    %v3247 = vpop.f32.mrb[0].mxu0
    %v3248 = vadd.f32 %v3159, %v3247
    %3249 = vdwg.mxu0
    %3250 = vmatprep.subr.mxu0 0.0
    %3251 = vmatpush1.msra.mxu0 %v3128
    %3252 = vmatprep.subr.mxu0 0.0
    %3253 = vmatpush1.msra.mxu0 %v3131
    %3254 = vmatprep.subr.mxu0 0.0
    %3255 = vmatpush1.msra.mxu0 %v3134
    %3256 = vmatprep.subr.mxu0 0.0
    %3257 = vmatpush1.msra.mxu0 %v3137
    %3258 = vmatprep.subr.mxu0 0.0
    %3259 = vmatpush1.msra.mxu0 %v3140
    %3260 = vmatprep.subr.mxu0 0.0
    %3261 = vmatpush1.msra.mxu0 %v3143
    %3262 = vmatprep.subr.mxu0 0.0
    %3263 = vmatpush1.msra.mxu0 %v3146
    %3264 = vmatprep.subr.mxu0 0.0
    %3265 = vmatpush1.msra.mxu0 %v3149
    %3266 = vmatprep.subr.mxu0 0.0
    %3267 = vmatpush1.msra.mxu0 0.0
    %3268 = vmatprep.subr.mxu0 0.0
    %3269 = vmatpush1.msra.mxu0 0.0
    %3270 = vmatprep.subr.mxu0 0.0
    %3271 = vmatpush1.msra.mxu0 0.0
    %3272 = vmatprep.subr.mxu0 0.0
    %3273 = vmatpush1.msra.mxu0 0.0
    %3274 = vmatprep.subr.mxu0 0.0
    %3275 = vmatpush1.msra.mxu0 0.0
    %3276 = vmatprep.subr.mxu0 0.0
    %3277 = vmatpush1.msra.mxu0 0.0
    %3278 = vmatprep.subr.mxu0 0.0
    %3279 = vmatpush1.msra.mxu0 0.0
    %3280 = vmatprep.subr.mxu0 0.0
    %3281 = vmatpush1.msra.mxu0 0.0
    %3282 = vmatprep.subr.mxu0 0.0
    %3283 = vmatpush1.msra.mxu0 0.0
    %3284 = vmatprep.subr.mxu0 0.0
    %3285 = vmatpush1.msra.mxu0 0.0
    %3286 = vmatprep.subr.mxu0 0.0
    %3287 = vmatpush1.msra.mxu0 0.0
    %3288 = vmatprep.subr.mxu0 0.0
    %3289 = vmatpush1.msra.mxu0 0.0
    %3290 = vmatprep.subr.mxu0 0.0
    %3291 = vmatpush1.msra.mxu0 0.0
    %3292 = vmatprep.subr.mxu0 0.0
    %3293 = vmatpush1.msra.mxu0 0.0
    %3294 = vmatprep.subr.mxu0 0.0
    %3295 = vmatpush1.msra.mxu0 0.0
    %3296 = vmatprep.subr.mxu0 0.0
    %3297 = vmatpush1.msra.mxu0 0.0
    %3298 = vmatprep.subr.mxu0 0.0
    %3299 = vmatpush1.msra.mxu0 0.0
    %3300 = vmatprep.subr.mxu0 0.0
    %3301 = vmatpush1.msra.mxu0 0.0
    %3302 = vmatprep.subr.mxu0 0.0
    %3303 = vmatpush1.msra.mxu0 0.0
    %3304 = vmatprep.subr.mxu0 0.0
    %3305 = vmatpush1.msra.mxu0 0.0
    %3306 = vmatprep.subr.mxu0 0.0
    %3307 = vmatpush1.msra.mxu0 0.0
    %3308 = vmatprep.subr.mxu0 0.0
    %3309 = vmatpush1.msra.mxu0 0.0
    %3310 = vmatprep.subr.mxu0 0.0
    %3311 = vmatpush1.msra.mxu0 0.0
    %3312 = vmatprep.subr.mxu0 0.0
    %3313 = vmatpush1.msra.mxu0 0.0
    %3314 = vmatprep.mubr.f32.mxu0 0.0
    %3315 = vmatmul.mubr.f32.gmra.mrb[0].mxu0 %v3168
    %v3316 = vpop.f32.mrb[0].mxu0
    %v3317 = vadd.f32 %v3163, %v3316
    %v3318 = vpop.f32.mrb[0].mxu0
    %3319 = vmatprep.mubr.f32.mxu0 0.0
    %3320 = vmatmul.mubr.f32.gmra.mrb[0].mxu0 %v3171
    %v3321 = vpop.f32.mrb[0].mxu0
    %v3322 = vadd.f32 %v3163, %v3321
    %v3323 = vpop.f32.mrb[0].mxu0
    %3324 = vdwg.mxu0
    %v3325 = vlaneseq
    %v3326 = vand.u32 %v3325, 127
    %v3327 = vadd.s32 %v3326, 128
    %v3328 = vadd.s32 %v3326, 256
    %vm3329 = vcmp.lt.s32.totalorder %v3326, 0
    %v3330 = vsub.s32 0, %v3326
    %v3331 = vsel %vm3329, %v3330, %v3326
    %v3332 = vshrl.u32 %v3331, 7
    %v3333 = vand.u32 %v3331, 127
    %v3334 = vsub.s32 0, %v3333
    %v3335 = vsel %vm3329, %v3334, %v3333
    %vm3336 = vcmp.lt.s32.totalorder %v3327, 0
    %v3337 = vsub.s32 0, %v3327
    %v3338 = vsel %vm3336, %v3337, %v3327
    %v3339 = vshrl.u32 %v3338, 7
    %v3340 = vand.u32 %v3338, 127
    %v3341 = vsub.s32 0, %v3340
    %v3342 = vsel %vm3336, %v3341, %v3340
    %vm3343 = vcmp.lt.s32.totalorder %v3328, 0
    %v3344 = vsub.s32 0, %v3328
    %v3345 = vsel %vm3343, %v3344, %v3328
    %v3346 = vshrl.u32 %v3345, 7
    %v3347 = vand.u32 %v3345, 127
    %v3348 = vsub.s32 0, %v3347
    %v3349 = vsel %vm3343, %v3348, %v3347
    %vm3350 = vcmp.ne.s32.totalorder %v3335, 0
    %vm3351 = vcmp.ne.s32.totalorder %v3342, 0
    %vm3352 = vcmp.ne.s32.totalorder %v3349, 0
    %vm3353 = vcmp.lt.s32.totalorder %v3335, 0
    %vm3354 = vcmp.lt.s32.totalorder %v3342, 0
    %vm3355 = vcmp.lt.s32.totalorder %v3349, 0
    %vm3356 = vmand %vm3353, %vm3350
    %vm3357 = vmand %vm3354, %vm3351
    %vm3358 = vmand %vm3355, %vm3352
    %v3359 = vadd.s32 %v3335, 128
    %v3360 = vadd.s32 %v3342, 128
    %v3361 = vadd.s32 %v3349, 128
    %v3362 = vsel %vm3356, %v3359, %v3335
    %v3363 = vsel %vm3357, %v3360, %v3342
    %v3364 = vsel %vm3358, %v3361, %v3349
    %vm3365 = vcmp.lt.s32.totalorder %v3362, 64
    %vm3366 = vcmp.lt.s32.totalorder %v3363, 64
    %vm3367 = vcmp.lt.s32.totalorder %v3364, 64
    %vm3368 = vcmp.lt.s32.totalorder %v3326, 64
    %v3369 = vsel %vm3365, 1, 0
    %v3370 = vsel %vm3366, 1, 0
    %v3371 = vsel %vm3367, 1, 0
    %vm3372 = vcmp.eq.s32.totalorder %v3369, 1
    %vm3373 = vcmp.eq.s32.totalorder %v3370, 1
    %vm3374 = vcmp.eq.s32.totalorder %v3371, 1
    %v3378 = vrot.slane %v3246, 2
    %v3379 = vrot.slane %v3248, 2
    %v3380 = vrot.slane %v3322, 2
    %v3384 = vsel %vm3372, %v3240, %v3378
    %v3385 = vsel %vm3373, %v3242, %v3379
    %v3386 = vsel %vm3374, %v3317, %v3380
    %v3387 = vrot.slane %v3246, 6
    %v3388 = vrot.slane %v3248, 6
    %v3389 = vrot.slane %v3322, 6
    %v3393 = vsel %vm3372, %v3240, %v3387
    %v3394 = vsel %vm3373, %v3242, %v3388
    %v3395 = vsel %vm3374, %v3317, %v3389
    %v3399 = vrot.slane %v3240, 2
    %v3400 = vrot.slane %v3242, 2
    %v3401 = vrot.slane %v3317, 2
    %v3405 = vsel %vm3372, %v3240, %v3399
    %v3406 = vsel %vm3373, %v3242, %v3400
    %v3407 = vsel %vm3374, %v3317, %v3401
    %v3408 = vrot.slane %v3240, 6
    %v3409 = vrot.slane %v3242, 6
    %v3410 = vrot.slane %v3317, 6
    %v3414 = vsel %vm3372, %v3240, %v3408
    %v3415 = vsel %vm3373, %v3242, %v3409
    %v3416 = vsel %vm3374, %v3317, %v3410
    %v3417 = vsel %vm3372, %v3246, %v3399
    %v3418 = vsel %vm3373, %v3248, %v3400
    %v3419 = vsel %vm3374, %v3322, %v3401
    %v3420 = vsel %vm3372, %v3246, %v3408
    %v3421 = vsel %vm3373, %v3248, %v3409
    %v3422 = vsel %vm3374, %v3322, %v3410
    %v3423 = vld [vmem:[#allocation13] sm:$0xff]
    %v3424 = vld [vmem:[#allocation13 + $0x8] sm:$0xff]
    %v3425 = vld [vmem:[#allocation13 + $0x10] sm:$0xff]
    %v3426 = vld [vmem:[#allocation13 + $0x18] sm:$0xff]
    %v3427 = vld [vmem:[#allocation13 + $0x20] sm:$0xff]
    %v3428 = vld [vmem:[#allocation13 + $0x28] sm:$0xff]
    %v3429 = vld [vmem:[#allocation13 + $0x30] sm:$0xff]
    %v3430 = vld [vmem:[#allocation13 + $0x38] sm:$0xff]
    %v3431 = vld [vmem:[#allocation13 + $0x40] sm:$0xff]
    %v3432 = vld [vmem:[#allocation13 + $0x48] sm:$0xff]
    %v3433 = vld [vmem:[#allocation13 + $0x50] sm:$0xff]
    %v3434 = vld [vmem:[#allocation13 + $0x58] sm:$0xff]
    %v3435 = vld [vmem:[#allocation13 + $0x60] sm:$0xff]
    %v3436 = vld [vmem:[#allocation13 + $0x68] sm:$0xff]
    %v3437 = vld [vmem:[#allocation13 + $0x70] sm:$0xff]
    %v3438 = vld [vmem:[#allocation13 + $0x78] sm:$0xff]
    %v3439 = vld [vmem:[#allocation13 + $0x80] sm:$0xff]
    %v3440 = vld [vmem:[#allocation13 + $0x88] sm:$0xff]
    %v3441 = vld [vmem:[#allocation13 + $0x90] sm:$0xff]
    %v3442 = vld [vmem:[#allocation13 + $0x98] sm:$0xff]
    %v3443 = vld [vmem:[#allocation13 + $0xa0] sm:$0xff]
    %v3444 = vld [vmem:[#allocation13 + $0xa8] sm:$0xff]
    %v3445 = vld [vmem:[#allocation13 + $0xb0] sm:$0xff]
    %v3446 = vld [vmem:[#allocation13 + $0xb8] sm:$0xff]
    %v3447 = vld [vmem:[#allocation13 + $0xc0] sm:$0xff]
    %v3448 = vld [vmem:[#allocation13 + $0xc8] sm:$0xff]
    %v3449 = vld [vmem:[#allocation13 + $0xd0] sm:$0xff]
    %v3450 = vld [vmem:[#allocation13 + $0xd8] sm:$0xff]
    %v3451 = vld [vmem:[#allocation13 + $0xe0] sm:$0xff]
    %v3452 = vld [vmem:[#allocation13 + $0xe8] sm:$0xff]
    %v3453 = vld [vmem:[#allocation13 + $0xf0] sm:$0xff]
    %v3454 = vld [vmem:[#allocation13 + $0xf8] sm:$0xff]
    %v3455 = vld [vmem:[#allocation13 + $0x100] sm:$0xff]
    %v3456 = vld [vmem:[#allocation13 + $0x108] sm:$0xff]
    %v3457 = vld [vmem:[#allocation13 + $0x110] sm:$0xff]
    %v3458 = vld [vmem:[#allocation13 + $0x118] sm:$0xff]
    %v3459 = vld [vmem:[#allocation13 + $0x120] sm:$0xff]
    %v3460 = vld [vmem:[#allocation13 + $0x128] sm:$0xff]
    %v3461 = vld [vmem:[#allocation13 + $0x130] sm:$0xff]
    %v3462 = vld [vmem:[#allocation13 + $0x138] sm:$0xff]
    %v3463 = vld [vmem:[#allocation13 + $0x140] sm:$0xff]
    %v3464 = vld [vmem:[#allocation13 + $0x148] sm:$0xff]
    %v3465 = vld [vmem:[#allocation13 + $0x150] sm:$0xff]
    %v3466 = vld [vmem:[#allocation13 + $0x158] sm:$0xff]
    %v3467 = vld [vmem:[#allocation13 + $0x160] sm:$0xff]
    %v3468 = vld [vmem:[#allocation13 + $0x168] sm:$0xff]
    %v3469 = vld [vmem:[#allocation13 + $0x170] sm:$0xff]
    %v3470 = vld [vmem:[#allocation13 + $0x178] sm:$0xff]
    %v3471 = vld [vmem:[#allocation15] sm:$0x1]
    %v3472 = vadd.f32 %v3384, 0.0
    %v3473 = vxor.u32 %v3472, 2147483648
    %v3474 = vmul.f32 %v3473, 1.442695
    %v3475 = vpow.pop %v3474
    %v3476 = vadd.f32 %v3475, 1.0
    %v3477 = vrcp.pop %v3476
    %v3478 = vmul.f32 1.0, %v3477
    %v3479 = vadd.f32 %v3385, 0.0
    %v3480 = vxor.u32 %v3479, 2147483648
    %v3481 = vmul.f32 %v3480, 1.442695
    %v3482 = vpow.pop %v3481
    %v3483 = vadd.f32 %v3482, 1.0
    %v3484 = vrcp.pop %v3483
    %v3485 = vmul.f32 1.0, %v3484
    %v3487 = vlaneseq
    %v3488 = vshrl.u32 %v3487, 7
    %v3489 = vsub.s32 0, %v3488
    %v3490 = vrot.slane %v3471, %v3489
    %v3492 = vadd.f32 %v3490, 0.0
    %v3493 = vmul.f32 %v3478, %v3492
    %v3494 = vadd.f32 %v3386, %v3493
    %v3495 = vtanh.pop %v3494
    %v3496 = vsub.f32 1.0, %v3485
    %v3497 = vmul.f32 %v3496, %v3495
    %v3498 = vmul.f32 %v3485, 0.0
    %v3499 = vadd.f32 %v3497, %v3498
    %3500 = vmatprep.subr.mxu0 %v3424
    %3501 = vmatpush1.msra.mxu0 %v3423
    %3502 = vmatprep.subr.mxu0 %v3427
    %3503 = vmatpush1.msra.mxu0 %v3426
    %3504 = vmatprep.subr.mxu0 %v3430
    %3505 = vmatpush1.msra.mxu0 %v3429
    %3506 = vmatprep.subr.mxu0 %v3433
    %3507 = vmatpush1.msra.mxu0 %v3432
    %3508 = vmatprep.subr.mxu0 %v3436
    %3509 = vmatpush1.msra.mxu0 %v3435
    %3510 = vmatprep.subr.mxu0 %v3439
    %3511 = vmatpush1.msra.mxu0 %v3438
    %3512 = vmatprep.subr.mxu0 %v3442
    %3513 = vmatpush1.msra.mxu0 %v3441
    %3514 = vmatprep.subr.mxu0 %v3445
    %3515 = vmatpush1.msra.mxu0 %v3444
    %3516 = vmatprep.subr.mxu0 %v3448
    %3517 = vmatpush1.msra.mxu0 %v3447
    %3518 = vmatprep.subr.mxu0 %v3451
    %3519 = vmatpush1.msra.mxu0 %v3450
    %3520 = vmatprep.subr.mxu0 %v3454
    %3521 = vmatpush1.msra.mxu0 %v3453
    %3522 = vmatprep.subr.mxu0 %v3457
    %3523 = vmatpush1.msra.mxu0 %v3456
    %3524 = vmatprep.subr.mxu0 %v3460
    %3525 = vmatpush1.msra.mxu0 %v3459
    %3526 = vmatprep.subr.mxu0 %v3463
    %3527 = vmatpush1.msra.mxu0 %v3462
    %3528 = vmatprep.subr.mxu0 %v3466
    %3529 = vmatpush1.msra.mxu0 %v3465
    %3530 = vmatprep.subr.mxu0 %v3469
    %3531 = vmatpush1.msra.mxu0 %v3468
    %3532 = vmatprep.subr.mxu0 0.0
    %3533 = vmatpush1.msra.mxu0 0.0
    %3534 = vmatprep.subr.mxu0 0.0
    %3535 = vmatpush1.msra.mxu0 0.0
    %3536 = vmatprep.subr.mxu0 0.0
    %3537 = vmatpush1.msra.mxu0 0.0
    %3538 = vmatprep.subr.mxu0 0.0
    %3539 = vmatpush1.msra.mxu0 0.0
    %3540 = vmatprep.subr.mxu0 0.0
    %3541 = vmatpush1.msra.mxu0 0.0
    %3542 = vmatprep.subr.mxu0 0.0
    %3543 = vmatpush1.msra.mxu0 0.0
    %3544 = vmatprep.subr.mxu0 0.0
    %3545 = vmatpush1.msra.mxu0 0.0
    %3546 = vmatprep.subr.mxu0 0.0
    %3547 = vmatpush1.msra.mxu0 0.0
    %3548 = vmatprep.subr.mxu0 0.0
    %3549 = vmatpush1.msra.mxu0 0.0
    %3550 = vmatprep.subr.mxu0 0.0
    %3551 = vmatpush1.msra.mxu0 0.0
    %3552 = vmatprep.subr.mxu0 0.0
    %3553 = vmatpush1.msra.mxu0 0.0
    %3554 = vmatprep.subr.mxu0 0.0
    %3555 = vmatpush1.msra.mxu0 0.0
    %3556 = vmatprep.subr.mxu0 0.0
    %3557 = vmatpush1.msra.mxu0 0.0
    %3558 = vmatprep.subr.mxu0 0.0
    %3559 = vmatpush1.msra.mxu0 0.0
    %3560 = vmatprep.subr.mxu0 0.0
    %3561 = vmatpush1.msra.mxu0 0.0
    %3562 = vmatprep.subr.mxu0 0.0
    %3563 = vmatpush1.msra.mxu0 0.0
    %3564 = vmatprep.mubr.f32.mxu0 0.0
    %3565 = vmatmul.mubr.f32.gmra.mrb[0].mxu0 %v3499
    %v3566 = vpop.f32.mrb[0].mxu0
    %v3567 = vadd.f32 0.0, %v3566
    %v3568 = vpop.f32.mrb[0].mxu0
    %v3569 = vadd.f32 0.0, %v3568
    %3570 = vdwg.mxu0
    %3571 = vmatprep.subr.mxu0 0.0
    %3572 = vmatpush1.msra.mxu0 %v3425
    %3573 = vmatprep.subr.mxu0 0.0
    %3574 = vmatpush1.msra.mxu0 %v3428
    %3575 = vmatprep.subr.mxu0 0.0
    %3576 = vmatpush1.msra.mxu0 %v3431
    %3577 = vmatprep.subr.mxu0 0.0
    %3578 = vmatpush1.msra.mxu0 %v3434
    %3579 = vmatprep.subr.mxu0 0.0
    %3580 = vmatpush1.msra.mxu0 %v3437
    %3581 = vmatprep.subr.mxu0 0.0
    %3582 = vmatpush1.msra.mxu0 %v3440
    %3583 = vmatprep.subr.mxu0 0.0
    %3584 = vmatpush1.msra.mxu0 %v3443
    %3585 = vmatprep.subr.mxu0 0.0
    %3586 = vmatpush1.msra.mxu0 %v3446
    %3587 = vmatprep.subr.mxu0 0.0
    %3588 = vmatpush1.msra.mxu0 %v3449
    %3589 = vmatprep.subr.mxu0 0.0
    %3590 = vmatpush1.msra.mxu0 %v3452
    %3591 = vmatprep.subr.mxu0 0.0
    %3592 = vmatpush1.msra.mxu0 %v3455
    %3593 = vmatprep.subr.mxu0 0.0
    %3594 = vmatpush1.msra.mxu0 %v3458
    %3595 = vmatprep.subr.mxu0 0.0
    %3596 = vmatpush1.msra.mxu0 %v3461
    %3597 = vmatprep.subr.mxu0 0.0
    %3598 = vmatpush1.msra.mxu0 %v3464
    %3599 = vmatprep.subr.mxu0 0.0
    %3600 = vmatpush1.msra.mxu0 %v3467
    %3601 = vmatprep.subr.mxu0 0.0
    %3602 = vmatpush1.msra.mxu0 %v3470
    %3603 = vmatprep.subr.mxu0 0.0
    %3604 = vmatpush1.msra.mxu0 0.0
    %3605 = vmatprep.subr.mxu0 0.0
    %3606 = vmatpush1.msra.mxu0 0.0
    %3607 = vmatprep.subr.mxu0 0.0
    %3608 = vmatpush1.msra.mxu0 0.0
    %3609 = vmatprep.subr.mxu0 0.0
    %3610 = vmatpush1.msra.mxu0 0.0
    %3611 = vmatprep.subr.mxu0 0.0
    %3612 = vmatpush1.msra.mxu0 0.0
    %3613 = vmatprep.subr.mxu0 0.0
    %3614 = vmatpush1.msra.mxu0 0.0
    %3615 = vmatprep.subr.mxu0 0.0
    %3616 = vmatpush1.msra.mxu0 0.0
    %3617 = vmatprep.subr.mxu0 0.0
    %3618 = vmatpush1.msra.mxu0 0.0
    %3619 = vmatprep.subr.mxu0 0.0
    %3620 = vmatpush1.msra.mxu0 0.0
    %3621 = vmatprep.subr.mxu0 0.0
    %3622 = vmatpush1.msra.mxu0 0.0
    %3623 = vmatprep.subr.mxu0 0.0
    %3624 = vmatpush1.msra.mxu0 0.0
    %3625 = vmatprep.subr.mxu0 0.0
    %3626 = vmatpush1.msra.mxu0 0.0
    %3627 = vmatprep.subr.mxu0 0.0
    %3628 = vmatpush1.msra.mxu0 0.0
    %3629 = vmatprep.subr.mxu0 0.0
    %3630 = vmatpush1.msra.mxu0 0.0
    %3631 = vmatprep.subr.mxu0 0.0
    %3632 = vmatpush1.msra.mxu0 0.0
    %3633 = vmatprep.subr.mxu0 0.0
    %3634 = vmatpush1.msra.mxu0 0.0
    %3635 = vmatprep.mubr.f32.mxu0 0.0
    %3636 = vmatmul.mubr.f32.gmra.mrb[0].mxu0 %v3499
    %v3637 = vpop.f32.mrb[0].mxu0
    %v3638 = vadd.f32 0.0, %v3637
    %v3639 = vpop.f32.mrb[0].mxu0
    %3640 = vdwg.mxu0
    %v3642 = vrot.slane %v3567, 6
    %v3644 = vadd.f32 %v3393, %v3642
    %v3645 = vxor.u32 %v3644, 2147483648
    %v3646 = vmul.f32 %v3645, 1.442695
    %v3647 = vpow.pop %v3646
    %v3648 = vadd.f32 %v3647, 1.0
    %v3649 = vrcp.pop %v3648
    %v3650 = vmul.f32 1.0, %v3649
    %v3652 = vrot.slane %v3569, 6
    %v3654 = vadd.f32 %v3394, %v3652
    %v3655 = vxor.u32 %v3654, 2147483648
    %v3656 = vmul.f32 %v3655, 1.442695
    %v3657 = vpow.pop %v3656
    %v3658 = vadd.f32 %v3657, 1.0
    %v3659 = vrcp.pop %v3658
    %v3660 = vmul.f32 1.0, %v3659
    %v3661 = vadd.f32 %v3638, %v3490
    %v3663 = vrot.slane %v3661, 6
    %v3665 = vmul.f32 %v3650, %v3663
    %v3666 = vadd.f32 %v3395, %v3665
    %v3667 = vtanh.pop %v3666
    %v3668 = vsub.f32 1.0, %v3660
    %v3669 = vmul.f32 %v3668, %v3667
    %v3671 = vrot.slane %v3499, 6
    %v3673 = vmul.f32 %v3660, %v3671
    %v3674 = vadd.f32 %v3669, %v3673
    %v3676 = vrot.slane %v3674, 2
    %3678 = vmatprep.subr.mxu0 %v3424
    %3679 = vmatpush1.msra.mxu0 %v3423
    %3680 = vmatprep.subr.mxu0 %v3427
    %3681 = vmatpush1.msra.mxu0 %v3426
    %3682 = vmatprep.subr.mxu0 %v3430
    %3683 = vmatpush1.msra.mxu0 %v3429
    %3684 = vmatprep.subr.mxu0 %v3433
    %3685 = vmatpush1.msra.mxu0 %v3432
    %3686 = vmatprep.subr.mxu0 %v3436
    %3687 = vmatpush1.msra.mxu0 %v3435
    %3688 = vmatprep.subr.mxu0 %v3439
    %3689 = vmatpush1.msra.mxu0 %v3438
    %3690 = vmatprep.subr.mxu0 %v3442
    %3691 = vmatpush1.msra.mxu0 %v3441
    %3692 = vmatprep.subr.mxu0 %v3445
    %3693 = vmatpush1.msra.mxu0 %v3444
    %3694 = vmatprep.subr.mxu0 %v3448
    %3695 = vmatpush1.msra.mxu0 %v3447
    %3696 = vmatprep.subr.mxu0 %v3451
    %3697 = vmatpush1.msra.mxu0 %v3450
    %3698 = vmatprep.subr.mxu0 %v3454
    %3699 = vmatpush1.msra.mxu0 %v3453
    %3700 = vmatprep.subr.mxu0 %v3457
    %3701 = vmatpush1.msra.mxu0 %v3456
    %3702 = vmatprep.subr.mxu0 %v3460
    %3703 = vmatpush1.msra.mxu0 %v3459
    %3704 = vmatprep.subr.mxu0 %v3463
    %3705 = vmatpush1.msra.mxu0 %v3462
    %3706 = vmatprep.subr.mxu0 %v3466
    %3707 = vmatpush1.msra.mxu0 %v3465
    %3708 = vmatprep.subr.mxu0 %v3469
    %3709 = vmatpush1.msra.mxu0 %v3468
    %3710 = vmatprep.subr.mxu0 0.0
    %3711 = vmatpush1.msra.mxu0 0.0
    %3712 = vmatprep.subr.mxu0 0.0
    %3713 = vmatpush1.msra.mxu0 0.0
    %3714 = vmatprep.subr.mxu0 0.0
    %3715 = vmatpush1.msra.mxu0 0.0
    %3716 = vmatprep.subr.mxu0 0.0
    %3717 = vmatpush1.msra.mxu0 0.0
    %3718 = vmatprep.subr.mxu0 0.0
    %3719 = vmatpush1.msra.mxu0 0.0
    %3720 = vmatprep.subr.mxu0 0.0
    %3721 = vmatpush1.msra.mxu0 0.0
    %3722 = vmatprep.subr.mxu0 0.0
    %3723 = vmatpush1.msra.mxu0 0.0
    %3724 = vmatprep.subr.mxu0 0.0
    %3725 = vmatpush1.msra.mxu0 0.0
    %3726 = vmatprep.subr.mxu0 0.0
    %3727 = vmatpush1.msra.mxu0 0.0
    %3728 = vmatprep.subr.mxu0 0.0
    %3729 = vmatpush1.msra.mxu0 0.0
    %3730 = vmatprep.subr.mxu0 0.0
    %3731 = vmatpush1.msra.mxu0 0.0
    %3732 = vmatprep.subr.mxu0 0.0
    %3733 = vmatpush1.msra.mxu0 0.0
    %3734 = vmatprep.subr.mxu0 0.0
    %3735 = vmatpush1.msra.mxu0 0.0
    %3736 = vmatprep.subr.mxu0 0.0
    %3737 = vmatpush1.msra.mxu0 0.0
    %3738 = vmatprep.subr.mxu0 0.0
    %3739 = vmatpush1.msra.mxu0 0.0
    %3740 = vmatprep.subr.mxu0 0.0
    %3741 = vmatpush1.msra.mxu0 0.0
    %3742 = vmatprep.mubr.f32.mxu0 0.0
    %3743 = vmatmul.mubr.f32.gmra.mrb[0].mxu0 %v3676
    %v3744 = vpop.f32.mrb[0].mxu0
    %v3745 = vadd.f32 0.0, %v3744
    %v3746 = vpop.f32.mrb[0].mxu0
    %v3747 = vadd.f32 0.0, %v3746
    %3748 = vdwg.mxu0
    %3749 = vmatprep.subr.mxu0 0.0
    %3750 = vmatpush1.msra.mxu0 %v3425
    %3751 = vmatprep.subr.mxu0 0.0
    %3752 = vmatpush1.msra.mxu0 %v3428
    %3753 = vmatprep.subr.mxu0 0.0
    %3754 = vmatpush1.msra.mxu0 %v3431
    %3755 = vmatprep.subr.mxu0 0.0
    %3756 = vmatpush1.msra.mxu0 %v3434
    %3757 = vmatprep.subr.mxu0 0.0
    %3758 = vmatpush1.msra.mxu0 %v3437
    %3759 = vmatprep.subr.mxu0 0.0
    %3760 = vmatpush1.msra.mxu0 %v3440
    %3761 = vmatprep.subr.mxu0 0.0
    %3762 = vmatpush1.msra.mxu0 %v3443
    %3763 = vmatprep.subr.mxu0 0.0
    %3764 = vmatpush1.msra.mxu0 %v3446
    %3765 = vmatprep.subr.mxu0 0.0
    %3766 = vmatpush1.msra.mxu0 %v3449
    %3767 = vmatprep.subr.mxu0 0.0
    %3768 = vmatpush1.msra.mxu0 %v3452
    %3769 = vmatprep.subr.mxu0 0.0
    %3770 = vmatpush1.msra.mxu0 %v3455
    %3771 = vmatprep.subr.mxu0 0.0
    %3772 = vmatpush1.msra.mxu0 %v3458
    %3773 = vmatprep.subr.mxu0 0.0
    %3774 = vmatpush1.msra.mxu0 %v3461
    %3775 = vmatprep.subr.mxu0 0.0
    %3776 = vmatpush1.msra.mxu0 %v3464
    %3777 = vmatprep.subr.mxu0 0.0
    %3778 = vmatpush1.msra.mxu0 %v3467
    %3779 = vmatprep.subr.mxu0 0.0
    %3780 = vmatpush1.msra.mxu0 %v3470
    %3781 = vmatprep.subr.mxu0 0.0
    %3782 = vmatpush1.msra.mxu0 0.0
    %3783 = vmatprep.subr.mxu0 0.0
    %3784 = vmatpush1.msra.mxu0 0.0
    %3785 = vmatprep.subr.mxu0 0.0
    %3786 = vmatpush1.msra.mxu0 0.0
    %3787 = vmatprep.subr.mxu0 0.0
    %3788 = vmatpush1.msra.mxu0 0.0
    %3789 = vmatprep.subr.mxu0 0.0
    %3790 = vmatpush1.msra.mxu0 0.0
    %3791 = vmatprep.subr.mxu0 0.0
    %3792 = vmatpush1.msra.mxu0 0.0
    %3793 = vmatprep.subr.mxu0 0.0
    %3794 = vmatpush1.msra.mxu0 0.0
    %3795 = vmatprep.subr.mxu0 0.0
    %3796 = vmatpush1.msra.mxu0 0.0
    %3797 = vmatprep.subr.mxu0 0.0
    %3798 = vmatpush1.msra.mxu0 0.0
    %3799 = vmatprep.subr.mxu0 0.0
    %3800 = vmatpush1.msra.mxu0 0.0
    %3801 = vmatprep.subr.mxu0 0.0
    %3802 = vmatpush1.msra.mxu0 0.0
    %3803 = vmatprep.subr.mxu0 0.0
    %3804 = vmatpush1.msra.mxu0 0.0
    %3805 = vmatprep.subr.mxu0 0.0
    %3806 = vmatpush1.msra.mxu0 0.0
    %3807 = vmatprep.subr.mxu0 0.0
    %3808 = vmatpush1.msra.mxu0 0.0
    %3809 = vmatprep.subr.mxu0 0.0
    %3810 = vmatpush1.msra.mxu0 0.0
    %3811 = vmatprep.subr.mxu0 0.0
    %3812 = vmatpush1.msra.mxu0 0.0
    %3813 = vmatprep.mubr.f32.mxu0 0.0
    %3814 = vmatmul.mubr.f32.gmra.mrb[0].mxu0 %v3676
    %v3815 = vpop.f32.mrb[0].mxu0
    %v3816 = vadd.f32 0.0, %v3815
    %v3817 = vpop.f32.mrb[0].mxu0
    %3818 = vdwg.mxu0
    %v3820 = vrot.slane %v3745, 4
    %v3822 = vadd.f32 %v3405, %v3820
    %v3823 = vxor.u32 %v3822, 2147483648
    %v3824 = vmul.f32 %v3823, 1.442695
    %v3825 = vpow.pop %v3824
    %v3826 = vadd.f32 %v3825, 1.0
    %v3827 = vrcp.pop %v3826
    %v3828 = vmul.f32 1.0, %v3827
    %v3830 = vrot.slane %v3747, 4
    %v3832 = vadd.f32 %v3406, %v3830
    %v3833 = vxor.u32 %v3832, 2147483648
    %v3834 = vmul.f32 %v3833, 1.442695
    %v3835 = vpow.pop %v3834
    %v3836 = vadd.f32 %v3835, 1.0
    %v3837 = vrcp.pop %v3836
    %v3838 = vmul.f32 1.0, %v3837
    %v3839 = vadd.f32 %v3816, %v3490
    %v3841 = vrot.slane %v3839, 4
    %v3843 = vmul.f32 %v3828, %v3841
    %v3844 = vadd.f32 %v3407, %v3843
    %v3845 = vtanh.pop %v3844
    %v3846 = vsub.f32 1.0, %v3838
    %v3847 = vmul.f32 %v3846, %v3845
    %v3848 = vrot.slane %v3674, 6
    %v3850 = vmul.f32 %v3838, %v3848
    %v3851 = vadd.f32 %v3847, %v3850
    %v3853 = vrot.slane %v3851, 4
    %3855 = vmatprep.subr.mxu0 %v3424
    %3856 = vmatpush1.msra.mxu0 %v3423
    %3857 = vmatprep.subr.mxu0 %v3427
    %3858 = vmatpush1.msra.mxu0 %v3426
    %3859 = vmatprep.subr.mxu0 %v3430
    %3860 = vmatpush1.msra.mxu0 %v3429
    %3861 = vmatprep.subr.mxu0 %v3433
    %3862 = vmatpush1.msra.mxu0 %v3432
    %3863 = vmatprep.subr.mxu0 %v3436
    %3864 = vmatpush1.msra.mxu0 %v3435
    %3865 = vmatprep.subr.mxu0 %v3439
    %3866 = vmatpush1.msra.mxu0 %v3438
    %3867 = vmatprep.subr.mxu0 %v3442
    %3868 = vmatpush1.msra.mxu0 %v3441
    %3869 = vmatprep.subr.mxu0 %v3445
    %3870 = vmatpush1.msra.mxu0 %v3444
    %3871 = vmatprep.subr.mxu0 %v3448
    %3872 = vmatpush1.msra.mxu0 %v3447
    %3873 = vmatprep.subr.mxu0 %v3451
    %3874 = vmatpush1.msra.mxu0 %v3450
    %3875 = vmatprep.subr.mxu0 %v3454
    %3876 = vmatpush1.msra.mxu0 %v3453
    %3877 = vmatprep.subr.mxu0 %v3457
    %3878 = vmatpush1.msra.mxu0 %v3456
    %3879 = vmatprep.subr.mxu0 %v3460
    %3880 = vmatpush1.msra.mxu0 %v3459
    %3881 = vmatprep.subr.mxu0 %v3463
    %3882 = vmatpush1.msra.mxu0 %v3462
    %3883 = vmatprep.subr.mxu0 %v3466
    %3884 = vmatpush1.msra.mxu0 %v3465
    %3885 = vmatprep.subr.mxu0 %v3469
    %3886 = vmatpush1.msra.mxu0 %v3468
    %3887 = vmatprep.subr.mxu0 0.0
    %3888 = vmatpush1.msra.mxu0 0.0
    %3889 = vmatprep.subr.mxu0 0.0
    %3890 = vmatpush1.msra.mxu0 0.0
    %3891 = vmatprep.subr.mxu0 0.0
    %3892 = vmatpush1.msra.mxu0 0.0
    %3893 = vmatprep.subr.mxu0 0.0
    %3894 = vmatpush1.msra.mxu0 0.0
    %3895 = vmatprep.subr.mxu0 0.0
    %3896 = vmatpush1.msra.mxu0 0.0
    %3897 = vmatprep.subr.mxu0 0.0
    %3898 = vmatpush1.msra.mxu0 0.0
    %3899 = vmatprep.subr.mxu0 0.0
    %3900 = vmatpush1.msra.mxu0 0.0
    %3901 = vmatprep.subr.mxu0 0.0
    %3902 = vmatpush1.msra.mxu0 0.0
    %3903 = vmatprep.subr.mxu0 0.0
    %3904 = vmatpush1.msra.mxu0 0.0
    %3905 = vmatprep.subr.mxu0 0.0
    %3906 = vmatpush1.msra.mxu0 0.0
    %3907 = vmatprep.subr.mxu0 0.0
    %3908 = vmatpush1.msra.mxu0 0.0
    %3909 = vmatprep.subr.mxu0 0.0
    %3910 = vmatpush1.msra.mxu0 0.0
    %3911 = vmatprep.subr.mxu0 0.0
    %3912 = vmatpush1.msra.mxu0 0.0
    %3913 = vmatprep.subr.mxu0 0.0
    %3914 = vmatpush1.msra.mxu0 0.0
    %3915 = vmatprep.subr.mxu0 0.0
    %3916 = vmatpush1.msra.mxu0 0.0
    %3917 = vmatprep.subr.mxu0 0.0
    %3918 = vmatpush1.msra.mxu0 0.0
    %3919 = vmatprep.mubr.f32.mxu0 0.0
    %3920 = vmatmul.mubr.f32.gmra.mrb[0].mxu0 %v3853
    %v3921 = vpop.f32.mrb[0].mxu0
    %v3922 = vadd.f32 0.0, %v3921
    %v3923 = vpop.f32.mrb[0].mxu0
    %v3924 = vadd.f32 0.0, %v3923
    %3925 = vdwg.mxu0
    %3926 = vmatprep.subr.mxu0 0.0
    %3927 = vmatpush1.msra.mxu0 %v3425
    %3928 = vmatprep.subr.mxu0 0.0
    %3929 = vmatpush1.msra.mxu0 %v3428
    %3930 = vmatprep.subr.mxu0 0.0
    %3931 = vmatpush1.msra.mxu0 %v3431
    %3932 = vmatprep.subr.mxu0 0.0
    %3933 = vmatpush1.msra.mxu0 %v3434
    %3934 = vmatprep.subr.mxu0 0.0
    %3935 = vmatpush1.msra.mxu0 %v3437
    %3936 = vmatprep.subr.mxu0 0.0
    %3937 = vmatpush1.msra.mxu0 %v3440
    %3938 = vmatprep.subr.mxu0 0.0
    %3939 = vmatpush1.msra.mxu0 %v3443
    %3940 = vmatprep.subr.mxu0 0.0
    %3941 = vmatpush1.msra.mxu0 %v3446
    %3942 = vmatprep.subr.mxu0 0.0
    %3943 = vmatpush1.msra.mxu0 %v3449
    %3944 = vmatprep.subr.mxu0 0.0
    %3945 = vmatpush1.msra.mxu0 %v3452
    %3946 = vmatprep.subr.mxu0 0.0
    %3947 = vmatpush1.msra.mxu0 %v3455
    %3948 = vmatprep.subr.mxu0 0.0
    %3949 = vmatpush1.msra.mxu0 %v3458
    %3950 = vmatprep.subr.mxu0 0.0
    %3951 = vmatpush1.msra.mxu0 %v3461
    %3952 = vmatprep.subr.mxu0 0.0
    %3953 = vmatpush1.msra.mxu0 %v3464
    %3954 = vmatprep.subr.mxu0 0.0
    %3955 = vmatpush1.msra.mxu0 %v3467
    %3956 = vmatprep.subr.mxu0 0.0
    %3957 = vmatpush1.msra.mxu0 %v3470
    %3958 = vmatprep.subr.mxu0 0.0
    %3959 = vmatpush1.msra.mxu0 0.0
    %3960 = vmatprep.subr.mxu0 0.0
    %3961 = vmatpush1.msra.mxu0 0.0
    %3962 = vmatprep.subr.mxu0 0.0
    %3963 = vmatpush1.msra.mxu0 0.0
    %3964 = vmatprep.subr.mxu0 0.0
    %3965 = vmatpush1.msra.mxu0 0.0
    %3966 = vmatprep.subr.mxu0 0.0
    %3967 = vmatpush1.msra.mxu0 0.0
    %3968 = vmatprep.subr.mxu0 0.0
    %3969 = vmatpush1.msra.mxu0 0.0
    %3970 = vmatprep.subr.mxu0 0.0
    %3971 = vmatpush1.msra.mxu0 0.0
    %3972 = vmatprep.subr.mxu0 0.0
    %3973 = vmatpush1.msra.mxu0 0.0
    %3974 = vmatprep.subr.mxu0 0.0
    %3975 = vmatpush1.msra.mxu0 0.0
    %3976 = vmatprep.subr.mxu0 0.0
    %3977 = vmatpush1.msra.mxu0 0.0
    %3978 = vmatprep.subr.mxu0 0.0
    %3979 = vmatpush1.msra.mxu0 0.0
    %3980 = vmatprep.subr.mxu0 0.0
    %3981 = vmatpush1.msra.mxu0 0.0
    %3982 = vmatprep.subr.mxu0 0.0
    %3983 = vmatpush1.msra.mxu0 0.0
    %3984 = vmatprep.subr.mxu0 0.0
    %3985 = vmatpush1.msra.mxu0 0.0
    %3986 = vmatprep.subr.mxu0 0.0
    %3987 = vmatpush1.msra.mxu0 0.0
    %3988 = vmatprep.subr.mxu0 0.0
    %3989 = vmatpush1.msra.mxu0 0.0
    %3990 = vmatprep.mubr.f32.mxu0 0.0
    %3991 = vmatmul.mubr.f32.gmra.mrb[0].mxu0 %v3853
    %v3992 = vpop.f32.mrb[0].mxu0
    %v3993 = vadd.f32 0.0, %v3992
    %v3994 = vpop.f32.mrb[0].mxu0
    %3995 = vdwg.mxu0
    %v3997 = vrot.slane %v3922, 2
    %v3999 = vadd.f32 %v3414, %v3997
    %v4000 = vxor.u32 %v3999, 2147483648
    %v4001 = vmul.f32 %v4000, 1.442695
    %v4002 = vpow.pop %v4001
    %v4003 = vadd.f32 %v4002, 1.0
    %v4004 = vrcp.pop %v4003
    %v4005 = vmul.f32 1.0, %v4004
    %v4007 = vrot.slane %v3924, 2
    %v4009 = vadd.f32 %v3415, %v4007
    %v4010 = vxor.u32 %v4009, 2147483648
    %v4011 = vmul.f32 %v4010, 1.442695
    %v4012 = vpow.pop %v4011
    %v4013 = vadd.f32 %v4012, 1.0
    %v4014 = vrcp.pop %v4013
    %v4015 = vmul.f32 1.0, %v4014
    %v4016 = vadd.f32 %v3993, %v3490
    %v4018 = vrot.slane %v4016, 2
    %v4020 = vmul.f32 %v4005, %v4018
    %v4021 = vadd.f32 %v3416, %v4020
    %v4022 = vtanh.pop %v4021
    %v4023 = vsub.f32 1.0, %v4015
    %v4024 = vmul.f32 %v4023, %v4022
    %v4025 = vrot.slane %v3851, 6
    %v4027 = vmul.f32 %v4015, %v4025
    %v4028 = vadd.f32 %v4024, %v4027
    %v4030 = vrot.slane %v4028, 6
    %4032 = vmatprep.subr.mxu0 %v3424
    %4033 = vmatpush1.msra.mxu0 %v3423
    %4034 = vmatprep.subr.mxu0 %v3427
    %4035 = vmatpush1.msra.mxu0 %v3426
    %4036 = vmatprep.subr.mxu0 %v3430
    %4037 = vmatpush1.msra.mxu0 %v3429
    %4038 = vmatprep.subr.mxu0 %v3433
    %4039 = vmatpush1.msra.mxu0 %v3432
    %4040 = vmatprep.subr.mxu0 %v3436
    %4041 = vmatpush1.msra.mxu0 %v3435
    %4042 = vmatprep.subr.mxu0 %v3439
    %4043 = vmatpush1.msra.mxu0 %v3438
    %4044 = vmatprep.subr.mxu0 %v3442
    %4045 = vmatpush1.msra.mxu0 %v3441
    %4046 = vmatprep.subr.mxu0 %v3445
    %4047 = vmatpush1.msra.mxu0 %v3444
    %4048 = vmatprep.subr.mxu0 %v3448
    %4049 = vmatpush1.msra.mxu0 %v3447
    %4050 = vmatprep.subr.mxu0 %v3451
    %4051 = vmatpush1.msra.mxu0 %v3450
    %4052 = vmatprep.subr.mxu0 %v3454
    %4053 = vmatpush1.msra.mxu0 %v3453
    %4054 = vmatprep.subr.mxu0 %v3457
    %4055 = vmatpush1.msra.mxu0 %v3456
    %4056 = vmatprep.subr.mxu0 %v3460
    %4057 = vmatpush1.msra.mxu0 %v3459
    %4058 = vmatprep.subr.mxu0 %v3463
    %4059 = vmatpush1.msra.mxu0 %v3462
    %4060 = vmatprep.subr.mxu0 %v3466
    %4061 = vmatpush1.msra.mxu0 %v3465
    %4062 = vmatprep.subr.mxu0 %v3469
    %4063 = vmatpush1.msra.mxu0 %v3468
    %4064 = vmatprep.subr.mxu0 0.0
    %4065 = vmatpush1.msra.mxu0 0.0
    %4066 = vmatprep.subr.mxu0 0.0
    %4067 = vmatpush1.msra.mxu0 0.0
    %4068 = vmatprep.subr.mxu0 0.0
    %4069 = vmatpush1.msra.mxu0 0.0
    %4070 = vmatprep.subr.mxu0 0.0
    %4071 = vmatpush1.msra.mxu0 0.0
    %4072 = vmatprep.subr.mxu0 0.0
    %4073 = vmatpush1.msra.mxu0 0.0
    %4074 = vmatprep.subr.mxu0 0.0
    %4075 = vmatpush1.msra.mxu0 0.0
    %4076 = vmatprep.subr.mxu0 0.0
    %4077 = vmatpush1.msra.mxu0 0.0
    %4078 = vmatprep.subr.mxu0 0.0
    %4079 = vmatpush1.msra.mxu0 0.0
    %4080 = vmatprep.subr.mxu0 0.0
    %4081 = vmatpush1.msra.mxu0 0.0
    %4082 = vmatprep.subr.mxu0 0.0
    %4083 = vmatpush1.msra.mxu0 0.0
    %4084 = vmatprep.subr.mxu0 0.0
    %4085 = vmatpush1.msra.mxu0 0.0
    %4086 = vmatprep.subr.mxu0 0.0
    %4087 = vmatpush1.msra.mxu0 0.0
    %4088 = vmatprep.subr.mxu0 0.0
    %4089 = vmatpush1.msra.mxu0 0.0
    %4090 = vmatprep.subr.mxu0 0.0
    %4091 = vmatpush1.msra.mxu0 0.0
    %4092 = vmatprep.subr.mxu0 0.0
    %4093 = vmatpush1.msra.mxu0 0.0
    %4094 = vmatprep.subr.mxu0 0.0
    %4095 = vmatpush1.msra.mxu0 0.0
    %4096 = vmatprep.mubr.f32.mxu0 0.0
    %4097 = vmatmul.mubr.f32.gmra.mrb[0].mxu0 %v4030
    %v4098 = vpop.f32.mrb[0].mxu0
    %v4099 = vadd.f32 0.0, %v4098
    %v4100 = vpop.f32.mrb[0].mxu0
    %v4101 = vadd.f32 0.0, %v4100
    %4102 = vdwg.mxu0
    %4103 = vmatprep.subr.mxu0 0.0
    %4104 = vmatpush1.msra.mxu0 %v3425
    %4105 = vmatprep.subr.mxu0 0.0
    %4106 = vmatpush1.msra.mxu0 %v3428
    %4107 = vmatprep.subr.mxu0 0.0
    %4108 = vmatpush1.msra.mxu0 %v3431
    %4109 = vmatprep.subr.mxu0 0.0
    %4110 = vmatpush1.msra.mxu0 %v3434
    %4111 = vmatprep.subr.mxu0 0.0
    %4112 = vmatpush1.msra.mxu0 %v3437
    %4113 = vmatprep.subr.mxu0 0.0
    %4114 = vmatpush1.msra.mxu0 %v3440
    %4115 = vmatprep.subr.mxu0 0.0
    %4116 = vmatpush1.msra.mxu0 %v3443
    %4117 = vmatprep.subr.mxu0 0.0
    %4118 = vmatpush1.msra.mxu0 %v3446
    %4119 = vmatprep.subr.mxu0 0.0
    %4120 = vmatpush1.msra.mxu0 %v3449
    %4121 = vmatprep.subr.mxu0 0.0
    %4122 = vmatpush1.msra.mxu0 %v3452
    %4123 = vmatprep.subr.mxu0 0.0
    %4124 = vmatpush1.msra.mxu0 %v3455
    %4125 = vmatprep.subr.mxu0 0.0
    %4126 = vmatpush1.msra.mxu0 %v3458
    %4127 = vmatprep.subr.mxu0 0.0
    %4128 = vmatpush1.msra.mxu0 %v3461
    %4129 = vmatprep.subr.mxu0 0.0
    %4130 = vmatpush1.msra.mxu0 %v3464
    %4131 = vmatprep.subr.mxu0 0.0
    %4132 = vmatpush1.msra.mxu0 %v3467
    %4133 = vmatprep.subr.mxu0 0.0
    %4134 = vmatpush1.msra.mxu0 %v3470
    %4135 = vmatprep.subr.mxu0 0.0
    %4136 = vmatpush1.msra.mxu0 0.0
    %4137 = vmatprep.subr.mxu0 0.0
    %4138 = vmatpush1.msra.mxu0 0.0
    %4139 = vmatprep.subr.mxu0 0.0
    %4140 = vmatpush1.msra.mxu0 0.0
    %4141 = vmatprep.subr.mxu0 0.0
    %4142 = vmatpush1.msra.mxu0 0.0
    %4143 = vmatprep.subr.mxu0 0.0
    %4144 = vmatpush1.msra.mxu0 0.0
    %4145 = vmatprep.subr.mxu0 0.0
    %4146 = vmatpush1.msra.mxu0 0.0
    %4147 = vmatprep.subr.mxu0 0.0
    %4148 = vmatpush1.msra.mxu0 0.0
    %4149 = vmatprep.subr.mxu0 0.0
    %4150 = vmatpush1.msra.mxu0 0.0
    %4151 = vmatprep.subr.mxu0 0.0
    %4152 = vmatpush1.msra.mxu0 0.0
    %4153 = vmatprep.subr.mxu0 0.0
    %4154 = vmatpush1.msra.mxu0 0.0
    %4155 = vmatprep.subr.mxu0 0.0
    %4156 = vmatpush1.msra.mxu0 0.0
    %4157 = vmatprep.subr.mxu0 0.0
    %4158 = vmatpush1.msra.mxu0 0.0
    %4159 = vmatprep.subr.mxu0 0.0
    %4160 = vmatpush1.msra.mxu0 0.0
    %4161 = vmatprep.subr.mxu0 0.0
    %4162 = vmatpush1.msra.mxu0 0.0
    %4163 = vmatprep.subr.mxu0 0.0
    %4164 = vmatpush1.msra.mxu0 0.0
    %4165 = vmatprep.subr.mxu0 0.0
    %4166 = vmatpush1.msra.mxu0 0.0
    %4167 = vmatprep.mubr.f32.mxu0 0.0
    %4168 = vmatmul.mubr.f32.gmra.mrb[0].mxu0 %v4030
    %v4169 = vpop.f32.mrb[0].mxu0
    %v4170 = vadd.f32 0.0, %v4169
    %v4171 = vpop.f32.mrb[0].mxu0
    %4172 = vdwg.mxu0
    %v4173 = vadd.f32 %v3417, %v4099
    %v4174 = vxor.u32 %v4173, 2147483648
    %v4175 = vmul.f32 %v4174, 1.442695
    %v4176 = vpow.pop %v4175
    %v4177 = vadd.f32 %v4176, 1.0
    %v4178 = vrcp.pop %v4177
    %v4179 = vmul.f32 1.0, %v4178
    %v4180 = vadd.f32 %v3418, %v4101
    %v4181 = vxor.u32 %v4180, 2147483648
    %v4182 = vmul.f32 %v4181, 1.442695
    %v4183 = vpow.pop %v4182
    %v4184 = vadd.f32 %v4183, 1.0
    %v4185 = vrcp.pop %v4184
    %v4186 = vmul.f32 1.0, %v4185
    %v4187 = vadd.f32 %v4170, %v3490
    %v4188 = vmul.f32 %v4179, %v4187
    %v4189 = vadd.f32 %v3419, %v4188
    %v4190 = vtanh.pop %v4189
    %v4191 = vsub.f32 1.0, %v4186
    %v4192 = vmul.f32 %v4191, %v4190
    %v4193 = vmul.f32 %v4186, %v4030
    %v4194 = vadd.f32 %v4192, %v4193
    %4195 = vmatprep.subr.mxu0 %v3424
    %4196 = vmatpush1.msra.mxu0 %v3423
    %4197 = vmatprep.subr.mxu0 %v3427
    %4198 = vmatpush1.msra.mxu0 %v3426
    %4199 = vmatprep.subr.mxu0 %v3430
    %4200 = vmatpush1.msra.mxu0 %v3429
    %4201 = vmatprep.subr.mxu0 %v3433
    %4202 = vmatpush1.msra.mxu0 %v3432
    %4203 = vmatprep.subr.mxu0 %v3436
    %4204 = vmatpush1.msra.mxu0 %v3435
    %4205 = vmatprep.subr.mxu0 %v3439
    %4206 = vmatpush1.msra.mxu0 %v3438
    %4207 = vmatprep.subr.mxu0 %v3442
    %4208 = vmatpush1.msra.mxu0 %v3441
    %4209 = vmatprep.subr.mxu0 %v3445
    %4210 = vmatpush1.msra.mxu0 %v3444
    %4211 = vmatprep.subr.mxu0 %v3448
    %4212 = vmatpush1.msra.mxu0 %v3447
    %4213 = vmatprep.subr.mxu0 %v3451
    %4214 = vmatpush1.msra.mxu0 %v3450
    %4215 = vmatprep.subr.mxu0 %v3454
    %4216 = vmatpush1.msra.mxu0 %v3453
    %4217 = vmatprep.subr.mxu0 %v3457
    %4218 = vmatpush1.msra.mxu0 %v3456
    %4219 = vmatprep.subr.mxu0 %v3460
    %4220 = vmatpush1.msra.mxu0 %v3459
    %4221 = vmatprep.subr.mxu0 %v3463
    %4222 = vmatpush1.msra.mxu0 %v3462
    %4223 = vmatprep.subr.mxu0 %v3466
    %4224 = vmatpush1.msra.mxu0 %v3465
    %4225 = vmatprep.subr.mxu0 %v3469
    %4226 = vmatpush1.msra.mxu0 %v3468
    %4227 = vmatprep.subr.mxu0 0.0
    %4228 = vmatpush1.msra.mxu0 0.0
    %4229 = vmatprep.subr.mxu0 0.0
    %4230 = vmatpush1.msra.mxu0 0.0
    %4231 = vmatprep.subr.mxu0 0.0
    %4232 = vmatpush1.msra.mxu0 0.0
    %4233 = vmatprep.subr.mxu0 0.0
    %4234 = vmatpush1.msra.mxu0 0.0
    %4235 = vmatprep.subr.mxu0 0.0
    %4236 = vmatpush1.msra.mxu0 0.0
    %4237 = vmatprep.subr.mxu0 0.0
    %4238 = vmatpush1.msra.mxu0 0.0
    %4239 = vmatprep.subr.mxu0 0.0
    %4240 = vmatpush1.msra.mxu0 0.0
    %4241 = vmatprep.subr.mxu0 0.0
    %4242 = vmatpush1.msra.mxu0 0.0
    %4243 = vmatprep.subr.mxu0 0.0
    %4244 = vmatpush1.msra.mxu0 0.0
    %4245 = vmatprep.subr.mxu0 0.0
    %4246 = vmatpush1.msra.mxu0 0.0
    %4247 = vmatprep.subr.mxu0 0.0
    %4248 = vmatpush1.msra.mxu0 0.0
    %4249 = vmatprep.subr.mxu0 0.0
    %4250 = vmatpush1.msra.mxu0 0.0
    %4251 = vmatprep.subr.mxu0 0.0
    %4252 = vmatpush1.msra.mxu0 0.0
    %4253 = vmatprep.subr.mxu0 0.0
    %4254 = vmatpush1.msra.mxu0 0.0
    %4255 = vmatprep.subr.mxu0 0.0
    %4256 = vmatpush1.msra.mxu0 0.0
    %4257 = vmatprep.subr.mxu0 0.0
    %4258 = vmatpush1.msra.mxu0 0.0
    %4259 = vmatprep.mubr.f32.mxu0 0.0
    %4260 = vmatmul.mubr.f32.gmra.mrb[0].mxu0 %v4194
    %v4261 = vpop.f32.mrb[0].mxu0
    %v4262 = vadd.f32 0.0, %v4261
    %v4263 = vpop.f32.mrb[0].mxu0
    %v4264 = vadd.f32 0.0, %v4263
    %4265 = vdwg.mxu0
    %4266 = vmatprep.subr.mxu0 0.0
    %4267 = vmatpush1.msra.mxu0 %v3425
    %4268 = vmatprep.subr.mxu0 0.0
    %4269 = vmatpush1.msra.mxu0 %v3428
    %4270 = vmatprep.subr.mxu0 0.0
    %4271 = vmatpush1.msra.mxu0 %v3431
    %4272 = vmatprep.subr.mxu0 0.0
    %4273 = vmatpush1.msra.mxu0 %v3434
    %4274 = vmatprep.subr.mxu0 0.0
    %4275 = vmatpush1.msra.mxu0 %v3437
    %4276 = vmatprep.subr.mxu0 0.0
    %4277 = vmatpush1.msra.mxu0 %v3440
    %4278 = vmatprep.subr.mxu0 0.0
    %4279 = vmatpush1.msra.mxu0 %v3443
    %4280 = vmatprep.subr.mxu0 0.0
    %4281 = vmatpush1.msra.mxu0 %v3446
    %4282 = vmatprep.subr.mxu0 0.0
    %4283 = vmatpush1.msra.mxu0 %v3449
    %4284 = vmatprep.subr.mxu0 0.0
    %4285 = vmatpush1.msra.mxu0 %v3452
    %4286 = vmatprep.subr.mxu0 0.0
    %4287 = vmatpush1.msra.mxu0 %v3455
    %4288 = vmatprep.subr.mxu0 0.0
    %4289 = vmatpush1.msra.mxu0 %v3458
    %4290 = vmatprep.subr.mxu0 0.0
    %4291 = vmatpush1.msra.mxu0 %v3461
    %4292 = vmatprep.subr.mxu0 0.0
    %4293 = vmatpush1.msra.mxu0 %v3464
    %4294 = vmatprep.subr.mxu0 0.0
    %4295 = vmatpush1.msra.mxu0 %v3467
    %4296 = vmatprep.subr.mxu0 0.0
    %4297 = vmatpush1.msra.mxu0 %v3470
    %4298 = vmatprep.subr.mxu0 0.0
    %4299 = vmatpush1.msra.mxu0 0.0
    %4300 = vmatprep.subr.mxu0 0.0
    %4301 = vmatpush1.msra.mxu0 0.0
    %4302 = vmatprep.subr.mxu0 0.0
    %4303 = vmatpush1.msra.mxu0 0.0
    %4304 = vmatprep.subr.mxu0 0.0
    %4305 = vmatpush1.msra.mxu0 0.0
    %4306 = vmatprep.subr.mxu0 0.0
    %4307 = vmatpush1.msra.mxu0 0.0
    %4308 = vmatprep.subr.mxu0 0.0
    %4309 = vmatpush1.msra.mxu0 0.0
    %4310 = vmatprep.subr.mxu0 0.0
    %4311 = vmatpush1.msra.mxu0 0.0
    %4312 = vmatprep.subr.mxu0 0.0
    %4313 = vmatpush1.msra.mxu0 0.0
    %4314 = vmatprep.subr.mxu0 0.0
    %4315 = vmatpush1.msra.mxu0 0.0
    %4316 = vmatprep.subr.mxu0 0.0
    %4317 = vmatpush1.msra.mxu0 0.0
    %4318 = vmatprep.subr.mxu0 0.0
    %4319 = vmatpush1.msra.mxu0 0.0
    %4320 = vmatprep.subr.mxu0 0.0
    %4321 = vmatpush1.msra.mxu0 0.0
    %4322 = vmatprep.subr.mxu0 0.0
    %4323 = vmatpush1.msra.mxu0 0.0
    %4324 = vmatprep.subr.mxu0 0.0
    %4325 = vmatpush1.msra.mxu0 0.0
    %4326 = vmatprep.subr.mxu0 0.0
    %4327 = vmatpush1.msra.mxu0 0.0
    %4328 = vmatprep.subr.mxu0 0.0
    %4329 = vmatpush1.msra.mxu0 0.0
    %4330 = vmatprep.mubr.f32.mxu0 0.0
    %4331 = vmatmul.mubr.f32.gmra.mrb[0].mxu0 %v4194
    %v4332 = vpop.f32.mrb[0].mxu0
    %v4333 = vadd.f32 0.0, %v4332
    %v4334 = vpop.f32.mrb[0].mxu0
    %4335 = vdwg.mxu0
    %v4337 = vrot.slane %v4262, 6
    %v4339 = vadd.f32 %v3420, %v4337
    %v4340 = vxor.u32 %v4339, 2147483648
    %v4341 = vmul.f32 %v4340, 1.442695
    %v4342 = vpow.pop %v4341
    %v4343 = vadd.f32 %v4342, 1.0
    %v4344 = vrcp.pop %v4343
    %v4345 = vmul.f32 1.0, %v4344
    %v4347 = vrot.slane %v4264, 6
    %v4349 = vadd.f32 %v3421, %v4347
    %v4350 = vxor.u32 %v4349, 2147483648
    %v4351 = vmul.f32 %v4350, 1.442695
    %v4352 = vpow.pop %v4351
    %v4353 = vadd.f32 %v4352, 1.0
    %v4354 = vrcp.pop %v4353
    %v4355 = vmul.f32 1.0, %v4354
    %v4356 = vadd.f32 %v4333, %v3490
    %v4358 = vrot.slane %v4356, 6
    %v4360 = vmul.f32 %v4345, %v4358
    %v4361 = vadd.f32 %v3422, %v4360
    %v4362 = vtanh.pop %v4361
    %v4363 = vsub.f32 1.0, %v4355
    %v4364 = vmul.f32 %v4363, %v4362
    %v4366 = vrot.slane %v4194, 6
    %v4368 = vmul.f32 %v4355, %v4366
    %v4369 = vadd.f32 %v4364, %v4368
    %v4370 = vsel %vm3368, 1, 0
    %vm4371 = vcmp.eq.s32.totalorder %v4370, 1
    %v4373 = vrot.slane %v4369, 2
    %v4375 = vsel %vm4371, %v3499, %v4373
    %v4376 = vsel %vm4371, %v3674, %v4366
    %v4377 = vrot.slane %v4028, 2
    %v4379 = vsel %vm4371, %v3851, %v4377
    %v4380 = vsel %vm4371, %v4028, %v4025
    %v4381 = vsel %vm4371, %v4194, %v3676
    %v4382 = vsel %vm4371, %v4369, %v3671
    %vm4383 = vcmask 1041408
    %v4384 = vsel %vm4383, %v4375, %v4376
    %vm4385 = vcmask 1043456
    %v4386 = vsel %vm4385, %v4384, %v4379
    %vm4387 = vcmask 1045504
    %v4388 = vsel %vm4387, %v4386, %v4380
    %v4389 = vsel %vm4383, %v4381, %v4382
    %v4390 = vld [vmem:[%s13] sm:$0xff]
    %v4391 = vld [vmem:[%s13 + $0x8] sm:$0xff]
    %v4392 = vld [vmem:[%s13 + $0x10] sm:$0xff]
    %v4393 = vld [vmem:[%s13 + $0x18] sm:$0xff]
    %v4394 = vld [vmem:[%s13 + $0x20] sm:$0xff]
    %v4395 = vld [vmem:[%s13 + $0x28] sm:$0xff]
    %v4396 = vld [vmem:[%s13 + $0x30] sm:$0xff]
    %v4397 = vld [vmem:[%s13 + $0x38] sm:$0xff]
    %v4398 = vld [vmem:[%s13 + $0x40] sm:$0xff]
    %v4399 = vld [vmem:[%s13 + $0x48] sm:$0xff]
    %v4400 = vld [vmem:[%s13 + $0x50] sm:$0xff]
    %v4401 = vld [vmem:[%s13 + $0x58] sm:$0xff]
    %v4402 = vld [vmem:[%s13 + $0x60] sm:$0xff]
    %v4403 = vld [vmem:[%s13 + $0x68] sm:$0xff]
    %v4404 = vld [vmem:[%s13 + $0x70] sm:$0xff]
    %v4405 = vld [vmem:[%s13 + $0x78] sm:$0xff]
    %v4406 = vld [vmem:[%s13 + $0x80] sm:$0xff]
    %v4407 = vld [vmem:[%s13 + $0x88] sm:$0xff]
    %v4408 = vld [vmem:[%s13 + $0x90] sm:$0xff]
    %v4409 = vld [vmem:[%s13 + $0x98] sm:$0xff]
    %v4410 = vld [vmem:[%s13 + $0xa0] sm:$0xff]
    %v4411 = vld [vmem:[%s13 + $0xa8] sm:$0xff]
    %v4412 = vld [vmem:[%s13 + $0xb0] sm:$0xff]
    %v4413 = vld [vmem:[%s13 + $0xb8] sm:$0xff]
    %v4414 = vld [vmem:[%s13 + $0xc0] sm:$0xff]
    %v4415 = vld [vmem:[%s13 + $0xc8] sm:$0xff]
    %v4416 = vld [vmem:[%s13 + $0xd0] sm:$0xff]
    %v4417 = vld [vmem:[%s13 + $0xd8] sm:$0xff]
    %v4418 = vld [vmem:[%s13 + $0xe0] sm:$0xff]
    %v4419 = vld [vmem:[%s13 + $0xe8] sm:$0xff]
    %v4420 = vld [vmem:[%s13 + $0xf0] sm:$0xff]
    %v4421 = vld [vmem:[%s13 + $0xf8] sm:$0xff]
    %v4422 = vld [vmem:[%s13 + $0x100] sm:$0xff]
    %v4423 = vld [vmem:[%s13 + $0x108] sm:$0xff]
    %v4424 = vld [vmem:[%s13 + $0x110] sm:$0xff]
    %v4425 = vld [vmem:[%s13 + $0x118] sm:$0xff]
    %v4426 = vld [vmem:[%s13 + $0x120] sm:$0xff]
    %v4427 = vld [vmem:[%s13 + $0x128] sm:$0xff]
    %v4428 = vld [vmem:[%s13 + $0x130] sm:$0xff]
    %v4429 = vld [vmem:[%s13 + $0x138] sm:$0xff]
    %v4430 = vld [vmem:[%s13 + $0x140] sm:$0xff]
    %v4431 = vld [vmem:[%s13 + $0x148] sm:$0xff]
    %v4432 = vld [vmem:[%s13 + $0x150] sm:$0xff]
    %v4433 = vld [vmem:[%s13 + $0x158] sm:$0xff]
    %v4434 = vld [vmem:[%s13 + $0x160] sm:$0xff]
    %v4435 = vld [vmem:[%s13 + $0x168] sm:$0xff]
    %v4436 = vld [vmem:[%s13 + $0x170] sm:$0xff]
    %v4437 = vld [vmem:[%s13 + $0x178] sm:$0xff]
    %v4438 = vld [vmem:[%s13 + $0x180] sm:$0xff]
    %v4439 = vld [vmem:[%s13 + $0x188] sm:$0xff]
    %v4440 = vld [vmem:[%s13 + $0x190] sm:$0xff]
    %v4441 = vld [vmem:[%s13 + $0x198] sm:$0xff]
    %v4442 = vld [vmem:[%s13 + $0x1a0] sm:$0xff]
    %v4443 = vld [vmem:[%s13 + $0x1a8] sm:$0xff]
    %v4444 = vld [vmem:[%s13 + $0x1b0] sm:$0xff]
    %v4445 = vld [vmem:[%s13 + $0x1b8] sm:$0xff]
    %v4446 = vld [vmem:[%s13 + $0x1c0] sm:$0xff]
    %v4447 = vld [vmem:[%s13 + $0x1c8] sm:$0xff]
    %v4448 = vld [vmem:[%s13 + $0x1d0] sm:$0xff]
    %v4449 = vld [vmem:[%s13 + $0x1d8] sm:$0xff]
    %v4450 = vld [vmem:[%s13 + $0x1e0] sm:$0xff]
    %v4451 = vld [vmem:[%s13 + $0x1e8] sm:$0xff]
    %v4452 = vld [vmem:[%s13 + $0x1f0] sm:$0xff]
    %v4453 = vld [vmem:[%s13 + $0x1f8] sm:$0xff]
    %v4454 = vld [vmem:[%s13 + $0x200] sm:$0xff]
    %v4455 = vld [vmem:[%s13 + $0x208] sm:$0xff]
    %v4456 = vld [vmem:[%s13 + $0x210] sm:$0xff]
    %v4457 = vld [vmem:[%s13 + $0x218] sm:$0xff]
    %v4458 = vld [vmem:[%s13 + $0x220] sm:$0xff]
    %v4459 = vld [vmem:[%s13 + $0x228] sm:$0xff]
    %v4460 = vld [vmem:[%s13 + $0x230] sm:$0xff]
    %v4461 = vld [vmem:[%s13 + $0x238] sm:$0xff]
    %v4462 = vld [vmem:[%s13 + $0x240] sm:$0xff]
    %v4463 = vld [vmem:[%s13 + $0x248] sm:$0xff]
    %v4464 = vld [vmem:[%s13 + $0x250] sm:$0xff]
    %v4465 = vld [vmem:[%s13 + $0x258] sm:$0xff]
    %v4466 = vld [vmem:[%s13 + $0x260] sm:$0xff]
    %v4467 = vld [vmem:[%s13 + $0x268] sm:$0xff]
    %v4468 = vld [vmem:[%s13 + $0x270] sm:$0xff]
    %v4469 = vld [vmem:[%s13 + $0x278] sm:$0xff]
    %v4470 = vld [vmem:[%s13 + $0x280] sm:$0xff]
    %v4471 = vld [vmem:[%s13 + $0x288] sm:$0xff]
    %v4472 = vld [vmem:[%s13 + $0x290] sm:$0xff]
    %v4473 = vld [vmem:[%s13 + $0x298] sm:$0xff]
    %v4474 = vld [vmem:[%s13 + $0x2a0] sm:$0xff]
    %v4475 = vld [vmem:[%s13 + $0x2a8] sm:$0xff]
    %v4476 = vld [vmem:[%s13 + $0x2b0] sm:$0xff]
    %v4477 = vld [vmem:[%s13 + $0x2b8] sm:$0xff]
    %v4478 = vld [vmem:[%s13 + $0x2c0] sm:$0xff]
    %v4479 = vld [vmem:[%s13 + $0x2c8] sm:$0xff]
    %v4480 = vld [vmem:[%s13 + $0x2d0] sm:$0xff]
    %v4481 = vld [vmem:[%s13 + $0x2d8] sm:$0xff]
    %v4482 = vld [vmem:[%s13 + $0x2e0] sm:$0xff]
    %v4483 = vld [vmem:[%s13 + $0x2e8] sm:$0xff]
    %v4484 = vld [vmem:[%s13 + $0x2f0] sm:$0xff]
    %v4485 = vld [vmem:[%s13 + $0x2f8] sm:$0xff]
    %v4486 = vld [vmem:[%s14] sm:$0x3f]
    %v4488 = vlaneseq
    %v4489 = vshrl.u32 %v4488, 7
    %v4490 = vsub.s32 0, %v4489
    %v4491 = vrot.slane %v4486, %v4490
    %v4492 = vlaneseq
    %v4493 = vshrl.u32 %v4492, 7
    %v4494 = vsub.s32 1, %v4493
    %v4495 = vrot.slane %v4486, %v4494
    %v4496 = vlaneseq
    %v4497 = vshrl.u32 %v4496, 7
    %v4498 = vsub.s32 2, %v4497
    %v4499 = vrot.slane %v4486, %v4498
    %v4500 = vlaneseq
    %v4501 = vshrl.u32 %v4500, 7
    %v4502 = vsub.s32 3, %v4501
    %v4503 = vrot.slane %v4486, %v4502
    %v4504 = vlaneseq
    %v4505 = vshrl.u32 %v4504, 7
    %v4506 = vsub.s32 4, %v4505
    %v4507 = vrot.slane %v4486, %v4506
    %v4508 = vlaneseq
    %v4509 = vshrl.u32 %v4508, 7
    %v4510 = vsub.s32 5, %v4509
    %v4511 = vrot.slane %v4486, %v4510
    %4518 = vmatprep.subr.mxu0 %v4391
    %4519 = vmatpush1.msra.mxu0 %v4390
    %4520 = vmatprep.subr.mxu0 %v4397
    %4521 = vmatpush1.msra.mxu0 %v4396
    %4522 = vmatprep.subr.mxu0 %v4403
    %4523 = vmatpush1.msra.mxu0 %v4402
    %4524 = vmatprep.subr.mxu0 %v4409
    %4525 = vmatpush1.msra.mxu0 %v4408
    %4526 = vmatprep.subr.mxu0 %v4415
    %4527 = vmatpush1.msra.mxu0 %v4414
    %4528 = vmatprep.subr.mxu0 %v4421
    %4529 = vmatpush1.msra.mxu0 %v4420
    %4530 = vmatprep.subr.mxu0 %v4427
    %4531 = vmatpush1.msra.mxu0 %v4426
    %4532 = vmatprep.subr.mxu0 %v4433
    %4533 = vmatpush1.msra.mxu0 %v4432
    %4534 = vmatprep.subr.mxu0 %v4439
    %4535 = vmatpush1.msra.mxu0 %v4438
    %4536 = vmatprep.subr.mxu0 %v4445
    %4537 = vmatpush1.msra.mxu0 %v4444
    %4538 = vmatprep.subr.mxu0 %v4451
    %4539 = vmatpush1.msra.mxu0 %v4450
    %4540 = vmatprep.subr.mxu0 %v4457
    %4541 = vmatpush1.msra.mxu0 %v4456
    %4542 = vmatprep.subr.mxu0 %v4463
    %4543 = vmatpush1.msra.mxu0 %v4462
    %4544 = vmatprep.subr.mxu0 %v4469
    %4545 = vmatpush1.msra.mxu0 %v4468
    %4546 = vmatprep.subr.mxu0 %v4475
    %4547 = vmatpush1.msra.mxu0 %v4474
    %4548 = vmatprep.subr.mxu0 %v4481
    %4549 = vmatpush1.msra.mxu0 %v4480
    %4550 = vmatprep.subr.mxu0 0.0
    %4551 = vmatpush1.msra.mxu0 0.0
    %4552 = vmatprep.subr.mxu0 0.0
    %4553 = vmatpush1.msra.mxu0 0.0
    %4554 = vmatprep.subr.mxu0 0.0
    %4555 = vmatpush1.msra.mxu0 0.0
    %4556 = vmatprep.subr.mxu0 0.0
    %4557 = vmatpush1.msra.mxu0 0.0
    %4558 = vmatprep.subr.mxu0 0.0
    %4559 = vmatpush1.msra.mxu0 0.0
    %4560 = vmatprep.subr.mxu0 0.0
    %4561 = vmatpush1.msra.mxu0 0.0
    %4562 = vmatprep.subr.mxu0 0.0
    %4563 = vmatpush1.msra.mxu0 0.0
    %4564 = vmatprep.subr.mxu0 0.0
    %4565 = vmatpush1.msra.mxu0 0.0
    %4566 = vmatprep.subr.mxu0 0.0
    %4567 = vmatpush1.msra.mxu0 0.0
    %4568 = vmatprep.subr.mxu0 0.0
    %4569 = vmatpush1.msra.mxu0 0.0
    %4570 = vmatprep.subr.mxu0 0.0
    %4571 = vmatpush1.msra.mxu0 0.0
    %4572 = vmatprep.subr.mxu0 0.0
    %4573 = vmatpush1.msra.mxu0 0.0
    %4574 = vmatprep.subr.mxu0 0.0
    %4575 = vmatpush1.msra.mxu0 0.0
    %4576 = vmatprep.subr.mxu0 0.0
    %4577 = vmatpush1.msra.mxu0 0.0
    %4578 = vmatprep.subr.mxu0 0.0
    %4579 = vmatpush1.msra.mxu0 0.0
    %4580 = vmatprep.subr.mxu0 0.0
    %4581 = vmatpush1.msra.mxu0 0.0
    %4582 = vmatprep.mubr.f32.mxu0 0.0
    %4583 = vmatmul.mubr.f32.gmra.mrb[0].mxu0 %v4388
    %v4584 = vpop.f32.mrb[0].mxu0
    %v4585 = vadd.f32 %v4491, %v4584
    %v4586 = vpop.f32.mrb[0].mxu0
    %v4587 = vadd.f32 %v4495, %v4586
    %4588 = vmatprep.mubr.f32.mxu0 0.0
    %4589 = vmatmul.mubr.f32.gmra.mrb[0].mxu0 %v4389
    %v4590 = vpop.f32.mrb[0].mxu0
    %v4591 = vadd.f32 %v4491, %v4590
    %v4592 = vpop.f32.mrb[0].mxu0
    %v4593 = vadd.f32 %v4495, %v4592
    %4594 = vdwg.mxu0
    %4595 = vmatprep.subr.mxu0 %v4393
    %4596 = vmatpush1.msra.mxu0 %v4392
    %4597 = vmatprep.subr.mxu0 %v4399
    %4598 = vmatpush1.msra.mxu0 %v4398
    %4599 = vmatprep.subr.mxu0 %v4405
    %4600 = vmatpush1.msra.mxu0 %v4404
    %4601 = vmatprep.subr.mxu0 %v4411
    %4602 = vmatpush1.msra.mxu0 %v4410
    %4603 = vmatprep.subr.mxu0 %v4417
    %4604 = vmatpush1.msra.mxu0 %v4416
    %4605 = vmatprep.subr.mxu0 %v4423
    %4606 = vmatpush1.msra.mxu0 %v4422
    %4607 = vmatprep.subr.mxu0 %v4429
    %4608 = vmatpush1.msra.mxu0 %v4428
    %4609 = vmatprep.subr.mxu0 %v4435
    %4610 = vmatpush1.msra.mxu0 %v4434
    %4611 = vmatprep.subr.mxu0 %v4441
    %4612 = vmatpush1.msra.mxu0 %v4440
    %4613 = vmatprep.subr.mxu0 %v4447
    %4614 = vmatpush1.msra.mxu0 %v4446
    %4615 = vmatprep.subr.mxu0 %v4453
    %4616 = vmatpush1.msra.mxu0 %v4452
    %4617 = vmatprep.subr.mxu0 %v4459
    %4618 = vmatpush1.msra.mxu0 %v4458
    %4619 = vmatprep.subr.mxu0 %v4465
    %4620 = vmatpush1.msra.mxu0 %v4464
    %4621 = vmatprep.subr.mxu0 %v4471
    %4622 = vmatpush1.msra.mxu0 %v4470
    %4623 = vmatprep.subr.mxu0 %v4477
    %4624 = vmatpush1.msra.mxu0 %v4476
    %4625 = vmatprep.subr.mxu0 %v4483
    %4626 = vmatpush1.msra.mxu0 %v4482
    %4627 = vmatprep.subr.mxu0 0.0
    %4628 = vmatpush1.msra.mxu0 0.0
    %4629 = vmatprep.subr.mxu0 0.0
    %4630 = vmatpush1.msra.mxu0 0.0
    %4631 = vmatprep.subr.mxu0 0.0
    %4632 = vmatpush1.msra.mxu0 0.0
    %4633 = vmatprep.subr.mxu0 0.0
    %4634 = vmatpush1.msra.mxu0 0.0
    %4635 = vmatprep.subr.mxu0 0.0
    %4636 = vmatpush1.msra.mxu0 0.0
    %4637 = vmatprep.subr.mxu0 0.0
    %4638 = vmatpush1.msra.mxu0 0.0
    %4639 = vmatprep.subr.mxu0 0.0
    %4640 = vmatpush1.msra.mxu0 0.0
    %4641 = vmatprep.subr.mxu0 0.0
    %4642 = vmatpush1.msra.mxu0 0.0
    %4643 = vmatprep.subr.mxu0 0.0
    %4644 = vmatpush1.msra.mxu0 0.0
    %4645 = vmatprep.subr.mxu0 0.0
    %4646 = vmatpush1.msra.mxu0 0.0
    %4647 = vmatprep.subr.mxu0 0.0
    %4648 = vmatpush1.msra.mxu0 0.0
    %4649 = vmatprep.subr.mxu0 0.0
    %4650 = vmatpush1.msra.mxu0 0.0
    %4651 = vmatprep.subr.mxu0 0.0
    %4652 = vmatpush1.msra.mxu0 0.0
    %4653 = vmatprep.subr.mxu0 0.0
    %4654 = vmatpush1.msra.mxu0 0.0
    %4655 = vmatprep.subr.mxu0 0.0
    %4656 = vmatpush1.msra.mxu0 0.0
    %4657 = vmatprep.subr.mxu0 0.0
    %4658 = vmatpush1.msra.mxu0 0.0
    %4659 = vmatprep.mubr.f32.mxu0 0.0
    %4660 = vmatmul.mubr.f32.gmra.mrb[0].mxu0 %v4388
    %v4661 = vpop.f32.mrb[0].mxu0
    %v4662 = vadd.f32 %v4499, %v4661
    %v4663 = vpop.f32.mrb[0].mxu0
    %v4664 = vadd.f32 %v4503, %v4663
    %4665 = vmatprep.mubr.f32.mxu0 0.0
    %4666 = vmatmul.mubr.f32.gmra.mrb[0].mxu0 %v4389
    %v4667 = vpop.f32.mrb[0].mxu0
    %v4668 = vadd.f32 %v4499, %v4667
    %v4669 = vpop.f32.mrb[0].mxu0
    %v4670 = vadd.f32 %v4503, %v4669
    %4671 = vdwg.mxu0
    %4672 = vmatprep.subr.mxu0 %v4395
    %4673 = vmatpush1.msra.mxu0 %v4394
    %4674 = vmatprep.subr.mxu0 %v4401
    %4675 = vmatpush1.msra.mxu0 %v4400
    %4676 = vmatprep.subr.mxu0 %v4407
    %4677 = vmatpush1.msra.mxu0 %v4406
    %4678 = vmatprep.subr.mxu0 %v4413
    %4679 = vmatpush1.msra.mxu0 %v4412
    %4680 = vmatprep.subr.mxu0 %v4419
    %4681 = vmatpush1.msra.mxu0 %v4418
    %4682 = vmatprep.subr.mxu0 %v4425
    %4683 = vmatpush1.msra.mxu0 %v4424
    %4684 = vmatprep.subr.mxu0 %v4431
    %4685 = vmatpush1.msra.mxu0 %v4430
    %4686 = vmatprep.subr.mxu0 %v4437
    %4687 = vmatpush1.msra.mxu0 %v4436
    %4688 = vmatprep.subr.mxu0 %v4443
    %4689 = vmatpush1.msra.mxu0 %v4442
    %4690 = vmatprep.subr.mxu0 %v4449
    %4691 = vmatpush1.msra.mxu0 %v4448
    %4692 = vmatprep.subr.mxu0 %v4455
    %4693 = vmatpush1.msra.mxu0 %v4454
    %4694 = vmatprep.subr.mxu0 %v4461
    %4695 = vmatpush1.msra.mxu0 %v4460
    %4696 = vmatprep.subr.mxu0 %v4467
    %4697 = vmatpush1.msra.mxu0 %v4466
    %4698 = vmatprep.subr.mxu0 %v4473
    %4699 = vmatpush1.msra.mxu0 %v4472
    %4700 = vmatprep.subr.mxu0 %v4479
    %4701 = vmatpush1.msra.mxu0 %v4478
    %4702 = vmatprep.subr.mxu0 %v4485
    %4703 = vmatpush1.msra.mxu0 %v4484
    %4704 = vmatprep.subr.mxu0 0.0
    %4705 = vmatpush1.msra.mxu0 0.0
    %4706 = vmatprep.subr.mxu0 0.0
    %4707 = vmatpush1.msra.mxu0 0.0
    %4708 = vmatprep.subr.mxu0 0.0
    %4709 = vmatpush1.msra.mxu0 0.0
    %4710 = vmatprep.subr.mxu0 0.0
    %4711 = vmatpush1.msra.mxu0 0.0
    %4712 = vmatprep.subr.mxu0 0.0
    %4713 = vmatpush1.msra.mxu0 0.0
    %4714 = vmatprep.subr.mxu0 0.0
    %4715 = vmatpush1.msra.mxu0 0.0
    %4716 = vmatprep.subr.mxu0 0.0
    %4717 = vmatpush1.msra.mxu0 0.0
    %4718 = vmatprep.subr.mxu0 0.0
    %4719 = vmatpush1.msra.mxu0 0.0
    %4720 = vmatprep.subr.mxu0 0.0
    %4721 = vmatpush1.msra.mxu0 0.0
    %4722 = vmatprep.subr.mxu0 0.0
    %4723 = vmatpush1.msra.mxu0 0.0
    %4724 = vmatprep.subr.mxu0 0.0
    %4725 = vmatpush1.msra.mxu0 0.0
    %4726 = vmatprep.subr.mxu0 0.0
    %4727 = vmatpush1.msra.mxu0 0.0
    %4728 = vmatprep.subr.mxu0 0.0
    %4729 = vmatpush1.msra.mxu0 0.0
    %4730 = vmatprep.subr.mxu0 0.0
    %4731 = vmatpush1.msra.mxu0 0.0
    %4732 = vmatprep.subr.mxu0 0.0
    %4733 = vmatpush1.msra.mxu0 0.0
    %4734 = vmatprep.subr.mxu0 0.0
    %4735 = vmatpush1.msra.mxu0 0.0
    %4736 = vmatprep.mubr.f32.mxu0 0.0
    %4737 = vmatmul.mubr.f32.gmra.mrb[0].mxu0 %v4388
    %v4738 = vpop.f32.mrb[0].mxu0
    %v4739 = vadd.f32 %v4507, %v4738
    %v4740 = vpop.f32.mrb[0].mxu0
    %v4741 = vadd.f32 %v4511, %v4740
    %4742 = vmatprep.mubr.f32.mxu0 0.0
    %4743 = vmatmul.mubr.f32.gmra.mrb[0].mxu0 %v4389
    %v4744 = vpop.f32.mrb[0].mxu0
    %v4745 = vadd.f32 %v4507, %v4744
    %v4746 = vpop.f32.mrb[0].mxu0
    %v4747 = vadd.f32 %v4511, %v4746
    %4748 = vdwg.mxu0
    %v4749 = vadd.s32 %v3326, 384
    %v4750 = vadd.s32 %v3326, 512
    %v4751 = vadd.s32 %v3326, 640
    %vm4752 = vcmp.lt.s32.totalorder %v3326, 0
    %v4753 = vsub.s32 0, %v3326
    %v4754 = vsel %vm4752, %v4753, %v3326
    %v4755 = vshrl.u32 %v4754, 8
    %v4756 = vand.u32 %v4754, 255
    %v4757 = vsub.s32 0, %v4756
    %v4758 = vsel %vm4752, %v4757, %v4756
    %vm4759 = vcmp.lt.s32.totalorder %v3327, 0
    %v4760 = vsub.s32 0, %v3327
    %v4761 = vsel %vm4759, %v4760, %v3327
    %v4762 = vshrl.u32 %v4761, 8
    %v4763 = vand.u32 %v4761, 255
    %v4764 = vsub.s32 0, %v4763
    %v4765 = vsel %vm4759, %v4764, %v4763
    %vm4766 = vcmp.lt.s32.totalorder %v3328, 0
    %v4767 = vsub.s32 0, %v3328
    %v4768 = vsel %vm4766, %v4767, %v3328
    %v4769 = vshrl.u32 %v4768, 8
    %v4770 = vand.u32 %v4768, 255
    %v4771 = vsub.s32 0, %v4770
    %v4772 = vsel %vm4766, %v4771, %v4770
    %vm4773 = vcmp.lt.s32.totalorder %v4749, 0
    %v4774 = vsub.s32 0, %v4749
    %v4775 = vsel %vm4773, %v4774, %v4749
    %v4776 = vshrl.u32 %v4775, 8
    %v4777 = vand.u32 %v4775, 255
    %v4778 = vsub.s32 0, %v4777
    %v4779 = vsel %vm4773, %v4778, %v4777
    %vm4780 = vcmp.lt.s32.totalorder %v4750, 0
    %v4781 = vsub.s32 0, %v4750
    %v4782 = vsel %vm4780, %v4781, %v4750
    %v4783 = vshrl.u32 %v4782, 8
    %v4784 = vand.u32 %v4782, 255
    %v4785 = vsub.s32 0, %v4784
    %v4786 = vsel %vm4780, %v4785, %v4784
    %vm4787 = vcmp.lt.s32.totalorder %v4751, 0
    %v4788 = vsub.s32 0, %v4751
    %v4789 = vsel %vm4787, %v4788, %v4751
    %v4790 = vshrl.u32 %v4789, 8
    %v4791 = vand.u32 %v4789, 255
    %v4792 = vsub.s32 0, %v4791
    %v4793 = vsel %vm4787, %v4792, %v4791
    %vm4794 = vcmp.ne.s32.totalorder %v4758, 0
    %vm4795 = vcmp.ne.s32.totalorder %v4765, 0
    %vm4796 = vcmp.ne.s32.totalorder %v4772, 0
    %vm4797 = vcmp.ne.s32.totalorder %v4779, 0
    %vm4798 = vcmp.ne.s32.totalorder %v4786, 0
    %vm4799 = vcmp.ne.s32.totalorder %v4793, 0
    %vm4800 = vcmp.lt.s32.totalorder %v4758, 0
    %vm4801 = vcmp.lt.s32.totalorder %v4765, 0
    %vm4802 = vcmp.lt.s32.totalorder %v4772, 0
    %vm4803 = vcmp.lt.s32.totalorder %v4779, 0
    %vm4804 = vcmp.lt.s32.totalorder %v4786, 0
    %vm4805 = vcmp.lt.s32.totalorder %v4793, 0
    %vm4806 = vmand %vm4800, %vm4794
    %vm4807 = vmand %vm4801, %vm4795
    %vm4808 = vmand %vm4802, %vm4796
    %vm4809 = vmand %vm4803, %vm4797
    %vm4810 = vmand %vm4804, %vm4798
    %vm4811 = vmand %vm4805, %vm4799
    %v4812 = vadd.s32 %v4758, 256
    %v4813 = vadd.s32 %v4765, 256
    %v4814 = vadd.s32 %v4772, 256
    %v4815 = vadd.s32 %v4779, 256
    %v4816 = vadd.s32 %v4786, 256
    %v4817 = vadd.s32 %v4793, 256
    %v4818 = vsel %vm4806, %v4812, %v4758
    %v4819 = vsel %vm4807, %v4813, %v4765
    %v4820 = vsel %vm4808, %v4814, %v4772
    %v4821 = vsel %vm4809, %v4815, %v4779
    %v4822 = vsel %vm4810, %v4816, %v4786
    %v4823 = vsel %vm4811, %v4817, %v4793
    %vm4824 = vcmp.lt.s32.totalorder %v4818, 128
    %vm4825 = vcmp.lt.s32.totalorder %v4819, 128
    %vm4826 = vcmp.lt.s32.totalorder %v4820, 128
    %vm4827 = vcmp.lt.s32.totalorder %v4821, 128
    %vm4828 = vcmp.lt.s32.totalorder %v4822, 128
    %vm4829 = vcmp.lt.s32.totalorder %v4823, 128
    %vm4830 = vcmp.lt.s32.totalorder %v3326, 128
    %vm4831 = vcmp.lt.s32.totalorder %v3327, 128
    %v4832 = vsel %vm4824, 1, 0
    %v4833 = vsel %vm4825, 1, 0
    %v4834 = vsel %vm4826, 1, 0
    %v4835 = vsel %vm4827, 1, 0
    %v4836 = vsel %vm4828, 1, 0
    %v4837 = vsel %vm4829, 1, 0
    %vm4838 = vcmp.eq.s32.totalorder %v4832, 1
    %vm4839 = vcmp.eq.s32.totalorder %v4833, 1
    %vm4840 = vcmp.eq.s32.totalorder %v4834, 1
    %vm4841 = vcmp.eq.s32.totalorder %v4835, 1
    %vm4842 = vcmp.eq.s32.totalorder %v4836, 1
    %vm4843 = vcmp.eq.s32.totalorder %v4837, 1
    %v4850 = vrot.slane %v4591, 2
    %v4851 = vrot.slane %v4593, 2
    %v4852 = vrot.slane %v4668, 2
    %v4853 = vrot.slane %v4670, 2
    %v4854 = vrot.slane %v4745, 2
    %v4855 = vrot.slane %v4747, 2
    %v4862 = vsel %vm4838, %v4585, %v4850
    %v4863 = vsel %vm4839, %v4587, %v4851
    %v4864 = vsel %vm4840, %v4662, %v4852
    %v4865 = vsel %vm4841, %v4664, %v4853
    %v4866 = vsel %vm4842, %v4739, %v4854
    %v4867 = vsel %vm4843, %v4741, %v4855
    %v4868 = vrot.slane %v4591, 6
    %v4869 = vrot.slane %v4593, 6
    %v4870 = vrot.slane %v4668, 6
    %v4871 = vrot.slane %v4670, 6
    %v4872 = vrot.slane %v4745, 6
    %v4873 = vrot.slane %v4747, 6
    %v4880 = vsel %vm4838, %v4585, %v4868
    %v4881 = vsel %vm4839, %v4587, %v4869
    %v4882 = vsel %vm4840, %v4662, %v4870
    %v4883 = vsel %vm4841, %v4664, %v4871
    %v4884 = vsel %vm4842, %v4739, %v4872
    %v4885 = vsel %vm4843, %v4741, %v4873
    %v4892 = vrot.slane %v4585, 2
    %v4893 = vrot.slane %v4587, 2
    %v4894 = vrot.slane %v4662, 2
    %v4895 = vrot.slane %v4664, 2
    %v4896 = vrot.slane %v4739, 2
    %v4897 = vrot.slane %v4741, 2
    %v4904 = vsel %vm4838, %v4585, %v4892
    %v4905 = vsel %vm4839, %v4587, %v4893
    %v4906 = vsel %vm4840, %v4662, %v4894
    %v4907 = vsel %vm4841, %v4664, %v4895
    %v4908 = vsel %vm4842, %v4739, %v4896
    %v4909 = vsel %vm4843, %v4741, %v4897
    %v4910 = vrot.slane %v4585, 6
    %v4911 = vrot.slane %v4587, 6
    %v4912 = vrot.slane %v4662, 6
    %v4913 = vrot.slane %v4664, 6
    %v4914 = vrot.slane %v4739, 6
    %v4915 = vrot.slane %v4741, 6
    %v4922 = vsel %vm4838, %v4585, %v4910
    %v4923 = vsel %vm4839, %v4587, %v4911
    %v4924 = vsel %vm4840, %v4662, %v4912
    %v4925 = vsel %vm4841, %v4664, %v4913
    %v4926 = vsel %vm4842, %v4739, %v4914
    %v4927 = vsel %vm4843, %v4741, %v4915
    %v4928 = vsel %vm4838, %v4591, %v4892
    %v4929 = vsel %vm4839, %v4593, %v4893
    %v4930 = vsel %vm4840, %v4668, %v4894
    %v4931 = vsel %vm4841, %v4670, %v4895
    %v4932 = vsel %vm4842, %v4745, %v4896
    %v4933 = vsel %vm4843, %v4747, %v4897
    %v4934 = vsel %vm4838, %v4591, %v4910
    %v4935 = vsel %vm4839, %v4593, %v4911
    %v4936 = vsel %vm4840, %v4668, %v4912
    %v4937 = vsel %vm4841, %v4670, %v4913
    %v4938 = vsel %vm4842, %v4745, %v4914
    %v4939 = vsel %vm4843, %v4747, %v4915
    %v4940 = vld [vmem:[#allocation16] sm:$0xff]
    %v4941 = vld [vmem:[#allocation16 + $0x8] sm:$0xff]
    %v4942 = vld [vmem:[#allocation16 + $0x10] sm:$0xff]
    %v4943 = vld [vmem:[#allocation16 + $0x18] sm:$0xff]
    %v4944 = vld [vmem:[#allocation16 + $0x20] sm:$0xff]
    %v4945 = vld [vmem:[#allocation16 + $0x28] sm:$0xff]
    %v4946 = vld [vmem:[#allocation16 + $0x30] sm:$0xff]
    %v4947 = vld [vmem:[#allocation16 + $0x38] sm:$0xff]
    %v4948 = vld [vmem:[#allocation16 + $0x40] sm:$0xff]
    %v4949 = vld [vmem:[#allocation16 + $0x48] sm:$0xff]
    %v4950 = vld [vmem:[#allocation16 + $0x50] sm:$0xff]
    %v4951 = vld [vmem:[#allocation16 + $0x58] sm:$0xff]
    %v4952 = vld [vmem:[#allocation16 + $0x60] sm:$0xff]
    %v4953 = vld [vmem:[#allocation16 + $0x68] sm:$0xff]
    %v4954 = vld [vmem:[#allocation16 + $0x70] sm:$0xff]
    %v4955 = vld [vmem:[#allocation16 + $0x78] sm:$0xff]
    %v4956 = vld [vmem:[#allocation16 + $0x80] sm:$0xff]
    %v4957 = vld [vmem:[#allocation16 + $0x88] sm:$0xff]
    %v4958 = vld [vmem:[#allocation16 + $0x90] sm:$0xff]
    %v4959 = vld [vmem:[#allocation16 + $0x98] sm:$0xff]
    %v4960 = vld [vmem:[#allocation16 + $0xa0] sm:$0xff]
    %v4961 = vld [vmem:[#allocation16 + $0xa8] sm:$0xff]
    %v4962 = vld [vmem:[#allocation16 + $0xb0] sm:$0xff]
    %v4963 = vld [vmem:[#allocation16 + $0xb8] sm:$0xff]
    %v4964 = vld [vmem:[#allocation16 + $0xc0] sm:$0xff]
    %v4965 = vld [vmem:[#allocation16 + $0xc8] sm:$0xff]
    %v4966 = vld [vmem:[#allocation16 + $0xd0] sm:$0xff]
    %v4967 = vld [vmem:[#allocation16 + $0xd8] sm:$0xff]
    %v4968 = vld [vmem:[#allocation16 + $0xe0] sm:$0xff]
    %v4969 = vld [vmem:[#allocation16 + $0xe8] sm:$0xff]
    %v4970 = vld [vmem:[#allocation16 + $0xf0] sm:$0xff]
    %v4971 = vld [vmem:[#allocation16 + $0xf8] sm:$0xff]
    %v4972 = vld [vmem:[#allocation16 + $0x100] sm:$0xff]
    %v4973 = vld [vmem:[#allocation16 + $0x108] sm:$0xff]
    %v4974 = vld [vmem:[#allocation16 + $0x110] sm:$0xff]
    %v4975 = vld [vmem:[#allocation16 + $0x118] sm:$0xff]
    %v4976 = vld [vmem:[#allocation16 + $0x120] sm:$0xff]
    %v4977 = vld [vmem:[#allocation16 + $0x128] sm:$0xff]
    %v4978 = vld [vmem:[#allocation16 + $0x130] sm:$0xff]
    %v4979 = vld [vmem:[#allocation16 + $0x138] sm:$0xff]
    %v4980 = vld [vmem:[#allocation16 + $0x140] sm:$0xff]
    %v4981 = vld [vmem:[#allocation16 + $0x148] sm:$0xff]
    %v4982 = vld [vmem:[#allocation16 + $0x150] sm:$0xff]
    %v4983 = vld [vmem:[#allocation16 + $0x158] sm:$0xff]
    %v4984 = vld [vmem:[#allocation16 + $0x160] sm:$0xff]
    %v4985 = vld [vmem:[#allocation16 + $0x168] sm:$0xff]
    %v4986 = vld [vmem:[#allocation16 + $0x170] sm:$0xff]
    %v4987 = vld [vmem:[#allocation16 + $0x178] sm:$0xff]
    %v4988 = vld [vmem:[#allocation16 + $0x180] sm:$0xff]
    %v4989 = vld [vmem:[#allocation16 + $0x188] sm:$0xff]
    %v4990 = vld [vmem:[#allocation16 + $0x190] sm:$0xff]
    %v4991 = vld [vmem:[#allocation16 + $0x198] sm:$0xff]
    %v4992 = vld [vmem:[#allocation16 + $0x1a0] sm:$0xff]
    %v4993 = vld [vmem:[#allocation16 + $0x1a8] sm:$0xff]
    %v4994 = vld [vmem:[#allocation16 + $0x1b0] sm:$0xff]
    %v4995 = vld [vmem:[#allocation16 + $0x1b8] sm:$0xff]
    %v4996 = vld [vmem:[#allocation16 + $0x1c0] sm:$0xff]
    %v4997 = vld [vmem:[#allocation16 + $0x1c8] sm:$0xff]
    %v4998 = vld [vmem:[#allocation16 + $0x1d0] sm:$0xff]
    %v4999 = vld [vmem:[#allocation16 + $0x1d8] sm:$0xff]
    %v5000 = vld [vmem:[#allocation16 + $0x1e0] sm:$0xff]
    %v5001 = vld [vmem:[#allocation16 + $0x1e8] sm:$0xff]
    %v5002 = vld [vmem:[#allocation16 + $0x1f0] sm:$0xff]
    %v5003 = vld [vmem:[#allocation16 + $0x1f8] sm:$0xff]
    %v5004 = vld [vmem:[#allocation16 + $0x200] sm:$0xff]
    %v5005 = vld [vmem:[#allocation16 + $0x208] sm:$0xff]
    %v5006 = vld [vmem:[#allocation16 + $0x210] sm:$0xff]
    %v5007 = vld [vmem:[#allocation16 + $0x218] sm:$0xff]
    %v5008 = vld [vmem:[#allocation16 + $0x220] sm:$0xff]
    %v5009 = vld [vmem:[#allocation16 + $0x228] sm:$0xff]
    %v5010 = vld [vmem:[#allocation16 + $0x230] sm:$0xff]
    %v5011 = vld [vmem:[#allocation16 + $0x238] sm:$0xff]
    %v5012 = vld [vmem:[#allocation16 + $0x240] sm:$0xff]
    %v5013 = vld [vmem:[#allocation16 + $0x248] sm:$0xff]
    %v5014 = vld [vmem:[#allocation16 + $0x250] sm:$0xff]
    %v5015 = vld [vmem:[#allocation16 + $0x258] sm:$0xff]
    %v5016 = vld [vmem:[#allocation16 + $0x260] sm:$0xff]
    %v5017 = vld [vmem:[#allocation16 + $0x268] sm:$0xff]
    %v5018 = vld [vmem:[#allocation16 + $0x270] sm:$0xff]
    %v5019 = vld [vmem:[#allocation16 + $0x278] sm:$0xff]
    %v5020 = vld [vmem:[#allocation16 + $0x280] sm:$0xff]
    %v5021 = vld [vmem:[#allocation16 + $0x288] sm:$0xff]
    %v5022 = vld [vmem:[#allocation16 + $0x290] sm:$0xff]
    %v5023 = vld [vmem:[#allocation16 + $0x298] sm:$0xff]
    %v5024 = vld [vmem:[#allocation16 + $0x2a0] sm:$0xff]
    %v5025 = vld [vmem:[#allocation16 + $0x2a8] sm:$0xff]
    %v5026 = vld [vmem:[#allocation16 + $0x2b0] sm:$0xff]
    %v5027 = vld [vmem:[#allocation16 + $0x2b8] sm:$0xff]
    %v5028 = vld [vmem:[#allocation16 + $0x2c0] sm:$0xff]
    %v5029 = vld [vmem:[#allocation16 + $0x2c8] sm:$0xff]
    %v5030 = vld [vmem:[#allocation16 + $0x2d0] sm:$0xff]
    %v5031 = vld [vmem:[#allocation16 + $0x2d8] sm:$0xff]
    %v5032 = vld [vmem:[#allocation16 + $0x2e0] sm:$0xff]
    %v5033 = vld [vmem:[#allocation16 + $0x2e8] sm:$0xff]
    %v5034 = vld [vmem:[#allocation16 + $0x2f0] sm:$0xff]
    %v5035 = vld [vmem:[#allocation16 + $0x2f8] sm:$0xff]
    %v5036 = vld [vmem:[#allocation16 + $0x300] sm:$0xff]
    %v5037 = vld [vmem:[#allocation16 + $0x308] sm:$0xff]
    %v5038 = vld [vmem:[#allocation16 + $0x310] sm:$0xff]
    %v5039 = vld [vmem:[#allocation16 + $0x318] sm:$0xff]
    %v5040 = vld [vmem:[#allocation16 + $0x320] sm:$0xff]
    %v5041 = vld [vmem:[#allocation16 + $0x328] sm:$0xff]
    %v5042 = vld [vmem:[#allocation16 + $0x330] sm:$0xff]
    %v5043 = vld [vmem:[#allocation16 + $0x338] sm:$0xff]
    %v5044 = vld [vmem:[#allocation16 + $0x340] sm:$0xff]
    %v5045 = vld [vmem:[#allocation16 + $0x348] sm:$0xff]
    %v5046 = vld [vmem:[#allocation16 + $0x350] sm:$0xff]
    %v5047 = vld [vmem:[#allocation16 + $0x358] sm:$0xff]
    %v5048 = vld [vmem:[#allocation16 + $0x360] sm:$0xff]
    %v5049 = vld [vmem:[#allocation16 + $0x368] sm:$0xff]
    %v5050 = vld [vmem:[#allocation16 + $0x370] sm:$0xff]
    %v5051 = vld [vmem:[#allocation16 + $0x378] sm:$0xff]
    %v5052 = vld [vmem:[#allocation16 + $0x380] sm:$0xff]
    %v5053 = vld [vmem:[#allocation16 + $0x388] sm:$0xff]
    %v5054 = vld [vmem:[#allocation16 + $0x390] sm:$0xff]
    %v5055 = vld [vmem:[#allocation16 + $0x398] sm:$0xff]
    %v5056 = vld [vmem:[#allocation16 + $0x3a0] sm:$0xff]
    %v5057 = vld [vmem:[#allocation16 + $0x3a8] sm:$0xff]
    %v5058 = vld [vmem:[#allocation16 + $0x3b0] sm:$0xff]
    %v5059 = vld [vmem:[#allocation16 + $0x3b8] sm:$0xff]
    %v5060 = vld [vmem:[#allocation16 + $0x3c0] sm:$0xff]
    %v5061 = vld [vmem:[#allocation16 + $0x3c8] sm:$0xff]
    %v5062 = vld [vmem:[#allocation16 + $0x3d0] sm:$0xff]
    %v5063 = vld [vmem:[#allocation16 + $0x3d8] sm:$0xff]
    %v5064 = vld [vmem:[#allocation16 + $0x3e0] sm:$0xff]
    %v5065 = vld [vmem:[#allocation16 + $0x3e8] sm:$0xff]
    %v5066 = vld [vmem:[#allocation16 + $0x3f0] sm:$0xff]
    %v5067 = vld [vmem:[#allocation16 + $0x3f8] sm:$0xff]
    %v5068 = vld [vmem:[#allocation16 + $0x400] sm:$0xff]
    %v5069 = vld [vmem:[#allocation16 + $0x408] sm:$0xff]
    %v5070 = vld [vmem:[#allocation16 + $0x410] sm:$0xff]
    %v5071 = vld [vmem:[#allocation16 + $0x418] sm:$0xff]
    %v5072 = vld [vmem:[#allocation16 + $0x420] sm:$0xff]
    %v5073 = vld [vmem:[#allocation16 + $0x428] sm:$0xff]
    %v5074 = vld [vmem:[#allocation16 + $0x430] sm:$0xff]
    %v5075 = vld [vmem:[#allocation16 + $0x438] sm:$0xff]
    %v5076 = vld [vmem:[#allocation16 + $0x440] sm:$0xff]
    %v5077 = vld [vmem:[#allocation16 + $0x448] sm:$0xff]
    %v5078 = vld [vmem:[#allocation16 + $0x450] sm:$0xff]
    %v5079 = vld [vmem:[#allocation16 + $0x458] sm:$0xff]
    %v5080 = vld [vmem:[#allocation16 + $0x460] sm:$0xff]
    %v5081 = vld [vmem:[#allocation16 + $0x468] sm:$0xff]
    %v5082 = vld [vmem:[#allocation16 + $0x470] sm:$0xff]
    %v5083 = vld [vmem:[#allocation16 + $0x478] sm:$0xff]
    %v5084 = vld [vmem:[#allocation16 + $0x480] sm:$0xff]
    %v5085 = vld [vmem:[#allocation16 + $0x488] sm:$0xff]
    %v5086 = vld [vmem:[#allocation16 + $0x490] sm:$0xff]
    %v5087 = vld [vmem:[#allocation16 + $0x498] sm:$0xff]
    %v5088 = vld [vmem:[#allocation16 + $0x4a0] sm:$0xff]
    %v5089 = vld [vmem:[#allocation16 + $0x4a8] sm:$0xff]
    %v5090 = vld [vmem:[#allocation16 + $0x4b0] sm:$0xff]
    %v5091 = vld [vmem:[#allocation16 + $0x4b8] sm:$0xff]
    %v5092 = vld [vmem:[#allocation16 + $0x4c0] sm:$0xff]
    %v5093 = vld [vmem:[#allocation16 + $0x4c8] sm:$0xff]
    %v5094 = vld [vmem:[#allocation16 + $0x4d0] sm:$0xff]
    %v5095 = vld [vmem:[#allocation16 + $0x4d8] sm:$0xff]
    %v5096 = vld [vmem:[#allocation16 + $0x4e0] sm:$0xff]
    %v5097 = vld [vmem:[#allocation16 + $0x4e8] sm:$0xff]
    %v5098 = vld [vmem:[#allocation16 + $0x4f0] sm:$0xff]
    %v5099 = vld [vmem:[#allocation16 + $0x4f8] sm:$0xff]
    %v5100 = vld [vmem:[#allocation16 + $0x500] sm:$0xff]
    %v5101 = vld [vmem:[#allocation16 + $0x508] sm:$0xff]
    %v5102 = vld [vmem:[#allocation16 + $0x510] sm:$0xff]
    %v5103 = vld [vmem:[#allocation16 + $0x518] sm:$0xff]
    %v5104 = vld [vmem:[#allocation16 + $0x520] sm:$0xff]
    %v5105 = vld [vmem:[#allocation16 + $0x528] sm:$0xff]
    %v5106 = vld [vmem:[#allocation16 + $0x530] sm:$0xff]
    %v5107 = vld [vmem:[#allocation16 + $0x538] sm:$0xff]
    %v5108 = vld [vmem:[#allocation16 + $0x540] sm:$0xff]
    %v5109 = vld [vmem:[#allocation16 + $0x548] sm:$0xff]
    %v5110 = vld [vmem:[#allocation16 + $0x550] sm:$0xff]
    %v5111 = vld [vmem:[#allocation16 + $0x558] sm:$0xff]
    %v5112 = vld [vmem:[#allocation16 + $0x560] sm:$0xff]
    %v5113 = vld [vmem:[#allocation16 + $0x568] sm:$0xff]
    %v5114 = vld [vmem:[#allocation16 + $0x570] sm:$0xff]
    %v5115 = vld [vmem:[#allocation16 + $0x578] sm:$0xff]
    %v5116 = vld [vmem:[#allocation16 + $0x580] sm:$0xff]
    %v5117 = vld [vmem:[#allocation16 + $0x588] sm:$0xff]
    %v5118 = vld [vmem:[#allocation16 + $0x590] sm:$0xff]
    %v5119 = vld [vmem:[#allocation16 + $0x598] sm:$0xff]
    %v5120 = vld [vmem:[#allocation16 + $0x5a0] sm:$0xff]
    %v5121 = vld [vmem:[#allocation16 + $0x5a8] sm:$0xff]
    %v5122 = vld [vmem:[#allocation16 + $0x5b0] sm:$0xff]
    %v5123 = vld [vmem:[#allocation16 + $0x5b8] sm:$0xff]
    %v5124 = vld [vmem:[#allocation16 + $0x5c0] sm:$0xff]
    %v5125 = vld [vmem:[#allocation16 + $0x5c8] sm:$0xff]
    %v5126 = vld [vmem:[#allocation16 + $0x5d0] sm:$0xff]
    %v5127 = vld [vmem:[#allocation16 + $0x5d8] sm:$0xff]
    %v5128 = vld [vmem:[#allocation16 + $0x5e0] sm:$0xff]
    %v5129 = vld [vmem:[#allocation16 + $0x5e8] sm:$0xff]
    %v5130 = vld [vmem:[#allocation16 + $0x5f0] sm:$0xff]
    %v5131 = vld [vmem:[#allocation16 + $0x5f8] sm:$0xff]
    %v5132 = vld [vmem:[#allocation18] sm:$0x3]
    %v5133 = vadd.f32 %v4862, 0.0
    %v5134 = vadd.f32 %v4863, 0.0
    %v5135 = vxor.u32 %v5133, 2147483648
    %v5136 = vxor.u32 %v5134, 2147483648
    %v5137 = vmul.f32 %v5135, 1.442695
    %v5138 = vpow.pop %v5137
    %v5139 = vmul.f32 %v5136, 1.442695
    %v5140 = vpow.pop %v5139
    %v5141 = vadd.f32 %v5138, 1.0
    %v5142 = vadd.f32 %v5140, 1.0
    %v5143 = vrcp.pop %v5141
    %v5144 = vmul.f32 1.0, %v5143
    %v5145 = vrcp.pop %v5142
    %v5146 = vmul.f32 1.0, %v5145
    %v5147 = vadd.f32 %v4864, 0.0
    %v5148 = vadd.f32 %v4865, 0.0
    %v5149 = vxor.u32 %v5147, 2147483648
    %v5150 = vxor.u32 %v5148, 2147483648
    %v5151 = vmul.f32 %v5149, 1.442695
    %v5152 = vpow.pop %v5151
    %v5153 = vmul.f32 %v5150, 1.442695
    %v5154 = vpow.pop %v5153
    %v5155 = vadd.f32 %v5152, 1.0
    %v5156 = vadd.f32 %v5154, 1.0
    %v5157 = vrcp.pop %v5155
    %v5158 = vmul.f32 1.0, %v5157
    %v5159 = vrcp.pop %v5156
    %v5160 = vmul.f32 1.0, %v5159
    %v5162 = vlaneseq
    %v5163 = vshrl.u32 %v5162, 7
    %v5164 = vsub.s32 0, %v5163
    %v5165 = vrot.slane %v5132, %v5164
    %v5166 = vlaneseq
    %v5167 = vshrl.u32 %v5166, 7
    %v5168 = vsub.s32 1, %v5167
    %v5169 = vrot.slane %v5132, %v5168
    %v5172 = vadd.f32 %v5165, 0.0
    %v5173 = vadd.f32 %v5169, 0.0
    %v5174 = vmul.f32 %v5144, %v5172
    %v5175 = vmul.f32 %v5146, %v5173
    %v5176 = vadd.f32 %v4866, %v5174
    %v5177 = vadd.f32 %v4867, %v5175
    %v5178 = vtanh.pop %v5176
    %v5179 = vtanh.pop %v5177
    %v5180 = vsub.f32 1.0, %v5158
    %v5181 = vsub.f32 1.0, %v5160
    %v5182 = vmul.f32 %v5180, %v5178
    %v5183 = vmul.f32 %v5181, %v5179
    %v5184 = vmul.f32 %v5158, 0.0
    %v5185 = vmul.f32 %v5160, 0.0
    %v5186 = vadd.f32 %v5182, %v5184
    %v5187 = vadd.f32 %v5183, %v5185
    %5188 = vmatprep.subr.mxu0 %v4941
    %5189 = vmatpush1.msra.mxu0 %v4940
    %5190 = vmatprep.subr.mxu0 %v4947
    %5191 = vmatpush1.msra.mxu0 %v4946
    %5192 = vmatprep.subr.mxu0 %v4953
    %5193 = vmatpush1.msra.mxu0 %v4952
    %5194 = vmatprep.subr.mxu0 %v4959
    %5195 = vmatpush1.msra.mxu0 %v4958
    %5196 = vmatprep.subr.mxu0 %v4965
    %5197 = vmatpush1.msra.mxu0 %v4964
    %5198 = vmatprep.subr.mxu0 %v4971
    %5199 = vmatpush1.msra.mxu0 %v4970
    %5200 = vmatprep.subr.mxu0 %v4977
    %5201 = vmatpush1.msra.mxu0 %v4976
    %5202 = vmatprep.subr.mxu0 %v4983
    %5203 = vmatpush1.msra.mxu0 %v4982
    %5204 = vmatprep.subr.mxu0 %v4989
    %5205 = vmatpush1.msra.mxu0 %v4988
    %5206 = vmatprep.subr.mxu0 %v4995
    %5207 = vmatpush1.msra.mxu0 %v4994
    %5208 = vmatprep.subr.mxu0 %v5001
    %5209 = vmatpush1.msra.mxu0 %v5000
    %5210 = vmatprep.subr.mxu0 %v5007
    %5211 = vmatpush1.msra.mxu0 %v5006
    %5212 = vmatprep.subr.mxu0 %v5013
    %5213 = vmatpush1.msra.mxu0 %v5012
    %5214 = vmatprep.subr.mxu0 %v5019
    %5215 = vmatpush1.msra.mxu0 %v5018
    %5216 = vmatprep.subr.mxu0 %v5025
    %5217 = vmatpush1.msra.mxu0 %v5024
    %5218 = vmatprep.subr.mxu0 %v5031
    %5219 = vmatpush1.msra.mxu0 %v5030
    %5220 = vmatprep.subr.mxu0 %v5037
    %5221 = vmatpush1.msra.mxu0 %v5036
    %5222 = vmatprep.subr.mxu0 %v5043
    %5223 = vmatpush1.msra.mxu0 %v5042
    %5224 = vmatprep.subr.mxu0 %v5049
    %5225 = vmatpush1.msra.mxu0 %v5048
    %5226 = vmatprep.subr.mxu0 %v5055
    %5227 = vmatpush1.msra.mxu0 %v5054
    %5228 = vmatprep.subr.mxu0 %v5061
    %5229 = vmatpush1.msra.mxu0 %v5060
    %5230 = vmatprep.subr.mxu0 %v5067
    %5231 = vmatpush1.msra.mxu0 %v5066
    %5232 = vmatprep.subr.mxu0 %v5073
    %5233 = vmatpush1.msra.mxu0 %v5072
    %5234 = vmatprep.subr.mxu0 %v5079
    %5235 = vmatpush1.msra.mxu0 %v5078
    %5236 = vmatprep.subr.mxu0 %v5085
    %5237 = vmatpush1.msra.mxu0 %v5084
    %5238 = vmatprep.subr.mxu0 %v5091
    %5239 = vmatpush1.msra.mxu0 %v5090
    %5240 = vmatprep.subr.mxu0 %v5097
    %5241 = vmatpush1.msra.mxu0 %v5096
    %5242 = vmatprep.subr.mxu0 %v5103
    %5243 = vmatpush1.msra.mxu0 %v5102
    %5244 = vmatprep.subr.mxu0 %v5109
    %5245 = vmatpush1.msra.mxu0 %v5108
    %5246 = vmatprep.subr.mxu0 %v5115
    %5247 = vmatpush1.msra.mxu0 %v5114
    %5248 = vmatprep.subr.mxu0 %v5121
    %5249 = vmatpush1.msra.mxu0 %v5120
    %5250 = vmatprep.subr.mxu0 %v5127
    %5251 = vmatpush1.msra.mxu0 %v5126
    %5252 = vmatprep.mubr.f32.mxu0 %v5187
    %5253 = vmatmul.mubr.f32.gmra.mrb[0].mxu0 %v5186
    %v5254 = vpop.f32.mrb[0].mxu0
    %v5255 = vadd.f32 0.0, %v5254
    %v5256 = vpop.f32.mrb[0].mxu0
    %v5257 = vadd.f32 0.0, %v5256
    %5258 = vdwg.mxu0
    %5259 = vmatprep.subr.mxu0 %v4943
    %5260 = vmatpush1.msra.mxu0 %v4942
    %5261 = vmatprep.subr.mxu0 %v4949
    %5262 = vmatpush1.msra.mxu0 %v4948
    %5263 = vmatprep.subr.mxu0 %v4955
    %5264 = vmatpush1.msra.mxu0 %v4954
    %5265 = vmatprep.subr.mxu0 %v4961
    %5266 = vmatpush1.msra.mxu0 %v4960
    %5267 = vmatprep.subr.mxu0 %v4967
    %5268 = vmatpush1.msra.mxu0 %v4966
    %5269 = vmatprep.subr.mxu0 %v4973
    %5270 = vmatpush1.msra.mxu0 %v4972
    %5271 = vmatprep.subr.mxu0 %v4979
    %5272 = vmatpush1.msra.mxu0 %v4978
    %5273 = vmatprep.subr.mxu0 %v4985
    %5274 = vmatpush1.msra.mxu0 %v4984
    %5275 = vmatprep.subr.mxu0 %v4991
    %5276 = vmatpush1.msra.mxu0 %v4990
    %5277 = vmatprep.subr.mxu0 %v4997
    %5278 = vmatpush1.msra.mxu0 %v4996
    %5279 = vmatprep.subr.mxu0 %v5003
    %5280 = vmatpush1.msra.mxu0 %v5002
    %5281 = vmatprep.subr.mxu0 %v5009
    %5282 = vmatpush1.msra.mxu0 %v5008
    %5283 = vmatprep.subr.mxu0 %v5015
    %5284 = vmatpush1.msra.mxu0 %v5014
    %5285 = vmatprep.subr.mxu0 %v5021
    %5286 = vmatpush1.msra.mxu0 %v5020
    %5287 = vmatprep.subr.mxu0 %v5027
    %5288 = vmatpush1.msra.mxu0 %v5026
    %5289 = vmatprep.subr.mxu0 %v5033
    %5290 = vmatpush1.msra.mxu0 %v5032
    %5291 = vmatprep.subr.mxu0 %v5039
    %5292 = vmatpush1.msra.mxu0 %v5038
    %5293 = vmatprep.subr.mxu0 %v5045
    %5294 = vmatpush1.msra.mxu0 %v5044
    %5295 = vmatprep.subr.mxu0 %v5051
    %5296 = vmatpush1.msra.mxu0 %v5050
    %5297 = vmatprep.subr.mxu0 %v5057
    %5298 = vmatpush1.msra.mxu0 %v5056
    %5299 = vmatprep.subr.mxu0 %v5063
    %5300 = vmatpush1.msra.mxu0 %v5062
    %5301 = vmatprep.subr.mxu0 %v5069
    %5302 = vmatpush1.msra.mxu0 %v5068
    %5303 = vmatprep.subr.mxu0 %v5075
    %5304 = vmatpush1.msra.mxu0 %v5074
    %5305 = vmatprep.subr.mxu0 %v5081
    %5306 = vmatpush1.msra.mxu0 %v5080
    %5307 = vmatprep.subr.mxu0 %v5087
    %5308 = vmatpush1.msra.mxu0 %v5086
    %5309 = vmatprep.subr.mxu0 %v5093
    %5310 = vmatpush1.msra.mxu0 %v5092
    %5311 = vmatprep.subr.mxu0 %v5099
    %5312 = vmatpush1.msra.mxu0 %v5098
    %5313 = vmatprep.subr.mxu0 %v5105
    %5314 = vmatpush1.msra.mxu0 %v5104
    %5315 = vmatprep.subr.mxu0 %v5111
    %5316 = vmatpush1.msra.mxu0 %v5110
    %5317 = vmatprep.subr.mxu0 %v5117
    %5318 = vmatpush1.msra.mxu0 %v5116
    %5319 = vmatprep.subr.mxu0 %v5123
    %5320 = vmatpush1.msra.mxu0 %v5122
    %5321 = vmatprep.subr.mxu0 %v5129
    %5322 = vmatpush1.msra.mxu0 %v5128
    %5323 = vmatprep.mubr.f32.mxu0 %v5187
    %5324 = vmatmul.mubr.f32.gmra.mrb[0].mxu0 %v5186
    %v5325 = vpop.f32.mrb[0].mxu0
    %v5326 = vadd.f32 0.0, %v5325
    %v5327 = vpop.f32.mrb[0].mxu0
    %v5328 = vadd.f32 0.0, %v5327
    %5329 = vdwg.mxu0
    %5330 = vmatprep.subr.mxu0 %v4945
    %5331 = vmatpush1.msra.mxu0 %v4944
    %5332 = vmatprep.subr.mxu0 %v4951
    %5333 = vmatpush1.msra.mxu0 %v4950
    %5334 = vmatprep.subr.mxu0 %v4957
    %5335 = vmatpush1.msra.mxu0 %v4956
    %5336 = vmatprep.subr.mxu0 %v4963
    %5337 = vmatpush1.msra.mxu0 %v4962
    %5338 = vmatprep.subr.mxu0 %v4969
    %5339 = vmatpush1.msra.mxu0 %v4968
    %5340 = vmatprep.subr.mxu0 %v4975
    %5341 = vmatpush1.msra.mxu0 %v4974
    %5342 = vmatprep.subr.mxu0 %v4981
    %5343 = vmatpush1.msra.mxu0 %v4980
    %5344 = vmatprep.subr.mxu0 %v4987
    %5345 = vmatpush1.msra.mxu0 %v4986
    %5346 = vmatprep.subr.mxu0 %v4993
    %5347 = vmatpush1.msra.mxu0 %v4992
    %5348 = vmatprep.subr.mxu0 %v4999
    %5349 = vmatpush1.msra.mxu0 %v4998
    %5350 = vmatprep.subr.mxu0 %v5005
    %5351 = vmatpush1.msra.mxu0 %v5004
    %5352 = vmatprep.subr.mxu0 %v5011
    %5353 = vmatpush1.msra.mxu0 %v5010
    %5354 = vmatprep.subr.mxu0 %v5017
    %5355 = vmatpush1.msra.mxu0 %v5016
    %5356 = vmatprep.subr.mxu0 %v5023
    %5357 = vmatpush1.msra.mxu0 %v5022
    %5358 = vmatprep.subr.mxu0 %v5029
    %5359 = vmatpush1.msra.mxu0 %v5028
    %5360 = vmatprep.subr.mxu0 %v5035
    %5361 = vmatpush1.msra.mxu0 %v5034
    %5362 = vmatprep.subr.mxu0 %v5041
    %5363 = vmatpush1.msra.mxu0 %v5040
    %5364 = vmatprep.subr.mxu0 %v5047
    %5365 = vmatpush1.msra.mxu0 %v5046
    %5366 = vmatprep.subr.mxu0 %v5053
    %5367 = vmatpush1.msra.mxu0 %v5052
    %5368 = vmatprep.subr.mxu0 %v5059
    %5369 = vmatpush1.msra.mxu0 %v5058
    %5370 = vmatprep.subr.mxu0 %v5065
    %5371 = vmatpush1.msra.mxu0 %v5064
    %5372 = vmatprep.subr.mxu0 %v5071
    %5373 = vmatpush1.msra.mxu0 %v5070
    %5374 = vmatprep.subr.mxu0 %v5077
    %5375 = vmatpush1.msra.mxu0 %v5076
    %5376 = vmatprep.subr.mxu0 %v5083
    %5377 = vmatpush1.msra.mxu0 %v5082
    %5378 = vmatprep.subr.mxu0 %v5089
    %5379 = vmatpush1.msra.mxu0 %v5088
    %5380 = vmatprep.subr.mxu0 %v5095
    %5381 = vmatpush1.msra.mxu0 %v5094
    %5382 = vmatprep.subr.mxu0 %v5101
    %5383 = vmatpush1.msra.mxu0 %v5100
    %5384 = vmatprep.subr.mxu0 %v5107
    %5385 = vmatpush1.msra.mxu0 %v5106
    %5386 = vmatprep.subr.mxu0 %v5113
    %5387 = vmatpush1.msra.mxu0 %v5112
    %5388 = vmatprep.subr.mxu0 %v5119
    %5389 = vmatpush1.msra.mxu0 %v5118
    %5390 = vmatprep.subr.mxu0 %v5125
    %5391 = vmatpush1.msra.mxu0 %v5124
    %5392 = vmatprep.subr.mxu0 %v5131
    %5393 = vmatpush1.msra.mxu0 %v5130
    %5394 = vmatprep.mubr.f32.mxu0 %v5187
    %5395 = vmatmul.mubr.f32.gmra.mrb[0].mxu0 %v5186
    %v5396 = vpop.f32.mrb[0].mxu0
    %v5397 = vadd.f32 0.0, %v5396
    %v5398 = vpop.f32.mrb[0].mxu0
    %v5399 = vadd.f32 0.0, %v5398
    %5400 = vdwg.mxu0
    %v5403 = vrot.slane %v5255, 6
    %v5404 = vrot.slane %v5257, 6
    %v5407 = vadd.f32 %v4880, %v5403
    %v5408 = vadd.f32 %v4881, %v5404
    %v5409 = vxor.u32 %v5407, 2147483648
    %v5410 = vxor.u32 %v5408, 2147483648
    %v5411 = vmul.f32 %v5409, 1.442695
    %v5412 = vpow.pop %v5411
    %v5413 = vmul.f32 %v5410, 1.442695
    %v5414 = vpow.pop %v5413
    %v5415 = vadd.f32 %v5412, 1.0
    %v5416 = vadd.f32 %v5414, 1.0
    %v5417 = vrcp.pop %v5415
    %v5418 = vmul.f32 1.0, %v5417
    %v5419 = vrcp.pop %v5416
    %v5420 = vmul.f32 1.0, %v5419
    %v5423 = vrot.slane %v5326, 6
    %v5424 = vrot.slane %v5328, 6
    %v5427 = vadd.f32 %v4882, %v5423
    %v5428 = vadd.f32 %v4883, %v5424
    %v5429 = vxor.u32 %v5427, 2147483648
    %v5430 = vxor.u32 %v5428, 2147483648
    %v5431 = vmul.f32 %v5429, 1.442695
    %v5432 = vpow.pop %v5431
    %v5433 = vmul.f32 %v5430, 1.442695
    %v5434 = vpow.pop %v5433
    %v5435 = vadd.f32 %v5432, 1.0
    %v5436 = vadd.f32 %v5434, 1.0
    %v5437 = vrcp.pop %v5435
    %v5438 = vmul.f32 1.0, %v5437
    %v5439 = vrcp.pop %v5436
    %v5440 = vmul.f32 1.0, %v5439
    %v5441 = vadd.f32 %v5397, %v5165
    %v5442 = vadd.f32 %v5399, %v5169
    %v5445 = vrot.slane %v5441, 6
    %v5446 = vrot.slane %v5442, 6
    %v5449 = vmul.f32 %v5418, %v5445
    %v5450 = vmul.f32 %v5420, %v5446
    %v5451 = vadd.f32 %v4884, %v5449
    %v5452 = vadd.f32 %v4885, %v5450
    %v5453 = vtanh.pop %v5451
    %v5454 = vtanh.pop %v5452
    %v5455 = vsub.f32 1.0, %v5438
    %v5456 = vsub.f32 1.0, %v5440
    %v5457 = vmul.f32 %v5455, %v5453
    %v5458 = vmul.f32 %v5456, %v5454
    %v5461 = vrot.slane %v5186, 6
    %v5462 = vrot.slane %v5187, 6
    %v5465 = vmul.f32 %v5438, %v5461
    %v5466 = vmul.f32 %v5440, %v5462
    %v5467 = vadd.f32 %v5457, %v5465
    %v5468 = vadd.f32 %v5458, %v5466
    %v5471 = vrot.slane %v5467, 2
    %v5472 = vrot.slane %v5468, 2
    %5475 = vmatprep.subr.mxu0 %v4941
    %5476 = vmatpush1.msra.mxu0 %v4940
    %5477 = vmatprep.subr.mxu0 %v4947
    %5478 = vmatpush1.msra.mxu0 %v4946
    %5479 = vmatprep.subr.mxu0 %v4953
    %5480 = vmatpush1.msra.mxu0 %v4952
    %5481 = vmatprep.subr.mxu0 %v4959
    %5482 = vmatpush1.msra.mxu0 %v4958
    %5483 = vmatprep.subr.mxu0 %v4965
    %5484 = vmatpush1.msra.mxu0 %v4964
    %5485 = vmatprep.subr.mxu0 %v4971
    %5486 = vmatpush1.msra.mxu0 %v4970
    %5487 = vmatprep.subr.mxu0 %v4977
    %5488 = vmatpush1.msra.mxu0 %v4976
    %5489 = vmatprep.subr.mxu0 %v4983
    %5490 = vmatpush1.msra.mxu0 %v4982
    %5491 = vmatprep.subr.mxu0 %v4989
    %5492 = vmatpush1.msra.mxu0 %v4988
    %5493 = vmatprep.subr.mxu0 %v4995
    %5494 = vmatpush1.msra.mxu0 %v4994
    %5495 = vmatprep.subr.mxu0 %v5001
    %5496 = vmatpush1.msra.mxu0 %v5000
    %5497 = vmatprep.subr.mxu0 %v5007
    %5498 = vmatpush1.msra.mxu0 %v5006
    %5499 = vmatprep.subr.mxu0 %v5013
    %5500 = vmatpush1.msra.mxu0 %v5012
    %5501 = vmatprep.subr.mxu0 %v5019
    %5502 = vmatpush1.msra.mxu0 %v5018
    %5503 = vmatprep.subr.mxu0 %v5025
    %5504 = vmatpush1.msra.mxu0 %v5024
    %5505 = vmatprep.subr.mxu0 %v5031
    %5506 = vmatpush1.msra.mxu0 %v5030
    %5507 = vmatprep.subr.mxu0 %v5037
    %5508 = vmatpush1.msra.mxu0 %v5036
    %5509 = vmatprep.subr.mxu0 %v5043
    %5510 = vmatpush1.msra.mxu0 %v5042
    %5511 = vmatprep.subr.mxu0 %v5049
    %5512 = vmatpush1.msra.mxu0 %v5048
    %5513 = vmatprep.subr.mxu0 %v5055
    %5514 = vmatpush1.msra.mxu0 %v5054
    %5515 = vmatprep.subr.mxu0 %v5061
    %5516 = vmatpush1.msra.mxu0 %v5060
    %5517 = vmatprep.subr.mxu0 %v5067
    %5518 = vmatpush1.msra.mxu0 %v5066
    %5519 = vmatprep.subr.mxu0 %v5073
    %5520 = vmatpush1.msra.mxu0 %v5072
    %5521 = vmatprep.subr.mxu0 %v5079
    %5522 = vmatpush1.msra.mxu0 %v5078
    %5523 = vmatprep.subr.mxu0 %v5085
    %5524 = vmatpush1.msra.mxu0 %v5084
    %5525 = vmatprep.subr.mxu0 %v5091
    %5526 = vmatpush1.msra.mxu0 %v5090
    %5527 = vmatprep.subr.mxu0 %v5097
    %5528 = vmatpush1.msra.mxu0 %v5096
    %5529 = vmatprep.subr.mxu0 %v5103
    %5530 = vmatpush1.msra.mxu0 %v5102
    %5531 = vmatprep.subr.mxu0 %v5109
    %5532 = vmatpush1.msra.mxu0 %v5108
    %5533 = vmatprep.subr.mxu0 %v5115
    %5534 = vmatpush1.msra.mxu0 %v5114
    %5535 = vmatprep.subr.mxu0 %v5121
    %5536 = vmatpush1.msra.mxu0 %v5120
    %5537 = vmatprep.subr.mxu0 %v5127
    %5538 = vmatpush1.msra.mxu0 %v5126
    %5539 = vmatprep.mubr.f32.mxu0 %v5472
    %5540 = vmatmul.mubr.f32.gmra.mrb[0].mxu0 %v5471
    %v5541 = vpop.f32.mrb[0].mxu0
    %v5542 = vadd.f32 0.0, %v5541
    %v5543 = vpop.f32.mrb[0].mxu0
    %v5544 = vadd.f32 0.0, %v5543
    %5545 = vdwg.mxu0
    %5546 = vmatprep.subr.mxu0 %v4943
    %5547 = vmatpush1.msra.mxu0 %v4942
    %5548 = vmatprep.subr.mxu0 %v4949
    %5549 = vmatpush1.msra.mxu0 %v4948
    %5550 = vmatprep.subr.mxu0 %v4955
    %5551 = vmatpush1.msra.mxu0 %v4954
    %5552 = vmatprep.subr.mxu0 %v4961
    %5553 = vmatpush1.msra.mxu0 %v4960
    %5554 = vmatprep.subr.mxu0 %v4967
    %5555 = vmatpush1.msra.mxu0 %v4966
    %5556 = vmatprep.subr.mxu0 %v4973
    %5557 = vmatpush1.msra.mxu0 %v4972
    %5558 = vmatprep.subr.mxu0 %v4979
    %5559 = vmatpush1.msra.mxu0 %v4978
    %5560 = vmatprep.subr.mxu0 %v4985
    %5561 = vmatpush1.msra.mxu0 %v4984
    %5562 = vmatprep.subr.mxu0 %v4991
    %5563 = vmatpush1.msra.mxu0 %v4990
    %5564 = vmatprep.subr.mxu0 %v4997
    %5565 = vmatpush1.msra.mxu0 %v4996
    %5566 = vmatprep.subr.mxu0 %v5003
    %5567 = vmatpush1.msra.mxu0 %v5002
    %5568 = vmatprep.subr.mxu0 %v5009
    %5569 = vmatpush1.msra.mxu0 %v5008
    %5570 = vmatprep.subr.mxu0 %v5015
    %5571 = vmatpush1.msra.mxu0 %v5014
    %5572 = vmatprep.subr.mxu0 %v5021
    %5573 = vmatpush1.msra.mxu0 %v5020
    %5574 = vmatprep.subr.mxu0 %v5027
    %5575 = vmatpush1.msra.mxu0 %v5026
    %5576 = vmatprep.subr.mxu0 %v5033
    %5577 = vmatpush1.msra.mxu0 %v5032
    %5578 = vmatprep.subr.mxu0 %v5039
    %5579 = vmatpush1.msra.mxu0 %v5038
    %5580 = vmatprep.subr.mxu0 %v5045
    %5581 = vmatpush1.msra.mxu0 %v5044
    %5582 = vmatprep.subr.mxu0 %v5051
    %5583 = vmatpush1.msra.mxu0 %v5050
    %5584 = vmatprep.subr.mxu0 %v5057
    %5585 = vmatpush1.msra.mxu0 %v5056
    %5586 = vmatprep.subr.mxu0 %v5063
    %5587 = vmatpush1.msra.mxu0 %v5062
    %5588 = vmatprep.subr.mxu0 %v5069
    %5589 = vmatpush1.msra.mxu0 %v5068
    %5590 = vmatprep.subr.mxu0 %v5075
    %5591 = vmatpush1.msra.mxu0 %v5074
    %5592 = vmatprep.subr.mxu0 %v5081
    %5593 = vmatpush1.msra.mxu0 %v5080
    %5594 = vmatprep.subr.mxu0 %v5087
    %5595 = vmatpush1.msra.mxu0 %v5086
    %5596 = vmatprep.subr.mxu0 %v5093
    %5597 = vmatpush1.msra.mxu0 %v5092
    %5598 = vmatprep.subr.mxu0 %v5099
    %5599 = vmatpush1.msra.mxu0 %v5098
    %5600 = vmatprep.subr.mxu0 %v5105
    %5601 = vmatpush1.msra.mxu0 %v5104
    %5602 = vmatprep.subr.mxu0 %v5111
    %5603 = vmatpush1.msra.mxu0 %v5110
    %5604 = vmatprep.subr.mxu0 %v5117
    %5605 = vmatpush1.msra.mxu0 %v5116
    %5606 = vmatprep.subr.mxu0 %v5123
    %5607 = vmatpush1.msra.mxu0 %v5122
    %5608 = vmatprep.subr.mxu0 %v5129
    %5609 = vmatpush1.msra.mxu0 %v5128
    %5610 = vmatprep.mubr.f32.mxu0 %v5472
    %5611 = vmatmul.mubr.f32.gmra.mrb[0].mxu0 %v5471
    %v5612 = vpop.f32.mrb[0].mxu0
    %v5613 = vadd.f32 0.0, %v5612
    %v5614 = vpop.f32.mrb[0].mxu0
    %v5615 = vadd.f32 0.0, %v5614
    %5616 = vdwg.mxu0
    %5617 = vmatprep.subr.mxu0 %v4945
    %5618 = vmatpush1.msra.mxu0 %v4944
    %5619 = vmatprep.subr.mxu0 %v4951
    %5620 = vmatpush1.msra.mxu0 %v4950
    %5621 = vmatprep.subr.mxu0 %v4957
    %5622 = vmatpush1.msra.mxu0 %v4956
    %5623 = vmatprep.subr.mxu0 %v4963
    %5624 = vmatpush1.msra.mxu0 %v4962
    %5625 = vmatprep.subr.mxu0 %v4969
    %5626 = vmatpush1.msra.mxu0 %v4968
    %5627 = vmatprep.subr.mxu0 %v4975
    %5628 = vmatpush1.msra.mxu0 %v4974
    %5629 = vmatprep.subr.mxu0 %v4981
    %5630 = vmatpush1.msra.mxu0 %v4980
    %5631 = vmatprep.subr.mxu0 %v4987
    %5632 = vmatpush1.msra.mxu0 %v4986
    %5633 = vmatprep.subr.mxu0 %v4993
    %5634 = vmatpush1.msra.mxu0 %v4992
    %5635 = vmatprep.subr.mxu0 %v4999
    %5636 = vmatpush1.msra.mxu0 %v4998
    %5637 = vmatprep.subr.mxu0 %v5005
    %5638 = vmatpush1.msra.mxu0 %v5004
    %5639 = vmatprep.subr.mxu0 %v5011
    %5640 = vmatpush1.msra.mxu0 %v5010
    %5641 = vmatprep.subr.mxu0 %v5017
    %5642 = vmatpush1.msra.mxu0 %v5016
    %5643 = vmatprep.subr.mxu0 %v5023
    %5644 = vmatpush1.msra.mxu0 %v5022
    %5645 = vmatprep.subr.mxu0 %v5029
    %5646 = vmatpush1.msra.mxu0 %v5028
    %5647 = vmatprep.subr.mxu0 %v5035
    %5648 = vmatpush1.msra.mxu0 %v5034
    %5649 = vmatprep.subr.mxu0 %v5041
    %5650 = vmatpush1.msra.mxu0 %v5040
    %5651 = vmatprep.subr.mxu0 %v5047
    %5652 = vmatpush1.msra.mxu0 %v5046
    %5653 = vmatprep.subr.mxu0 %v5053
    %5654 = vmatpush1.msra.mxu0 %v5052
    %5655 = vmatprep.subr.mxu0 %v5059
    %5656 = vmatpush1.msra.mxu0 %v5058
    %5657 = vmatprep.subr.mxu0 %v5065
    %5658 = vmatpush1.msra.mxu0 %v5064
    %5659 = vmatprep.subr.mxu0 %v5071
    %5660 = vmatpush1.msra.mxu0 %v5070
    %5661 = vmatprep.subr.mxu0 %v5077
    %5662 = vmatpush1.msra.mxu0 %v5076
    %5663 = vmatprep.subr.mxu0 %v5083
    %5664 = vmatpush1.msra.mxu0 %v5082
    %5665 = vmatprep.subr.mxu0 %v5089
    %5666 = vmatpush1.msra.mxu0 %v5088
    %5667 = vmatprep.subr.mxu0 %v5095
    %5668 = vmatpush1.msra.mxu0 %v5094
    %5669 = vmatprep.subr.mxu0 %v5101
    %5670 = vmatpush1.msra.mxu0 %v5100
    %5671 = vmatprep.subr.mxu0 %v5107
    %5672 = vmatpush1.msra.mxu0 %v5106
    %5673 = vmatprep.subr.mxu0 %v5113
    %5674 = vmatpush1.msra.mxu0 %v5112
    %5675 = vmatprep.subr.mxu0 %v5119
    %5676 = vmatpush1.msra.mxu0 %v5118
    %5677 = vmatprep.subr.mxu0 %v5125
    %5678 = vmatpush1.msra.mxu0 %v5124
    %5679 = vmatprep.subr.mxu0 %v5131
    %5680 = vmatpush1.msra.mxu0 %v5130
    %5681 = vmatprep.mubr.f32.mxu0 %v5472
    %5682 = vmatmul.mubr.f32.gmra.mrb[0].mxu0 %v5471
    %v5683 = vpop.f32.mrb[0].mxu0
    %v5684 = vadd.f32 0.0, %v5683
    %v5685 = vpop.f32.mrb[0].mxu0
    %v5686 = vadd.f32 0.0, %v5685
    %5687 = vdwg.mxu0
    %v5690 = vrot.slane %v5542, 4
    %v5691 = vrot.slane %v5544, 4
    %v5694 = vadd.f32 %v4904, %v5690
    %v5695 = vadd.f32 %v4905, %v5691
    %v5696 = vxor.u32 %v5694, 2147483648
    %v5697 = vxor.u32 %v5695, 2147483648
    %v5698 = vmul.f32 %v5696, 1.442695
    %v5699 = vpow.pop %v5698
    %v5700 = vmul.f32 %v5697, 1.442695
    %v5701 = vpow.pop %v5700
    %v5702 = vadd.f32 %v5699, 1.0
    %v5703 = vadd.f32 %v5701, 1.0
    %v5704 = vrcp.pop %v5702
    %v5705 = vmul.f32 1.0, %v5704
    %v5706 = vrcp.pop %v5703
    %v5707 = vmul.f32 1.0, %v5706
    %v5710 = vrot.slane %v5613, 4
    %v5711 = vrot.slane %v5615, 4
    %v5714 = vadd.f32 %v4906, %v5710
    %v5715 = vadd.f32 %v4907, %v5711
    %v5716 = vxor.u32 %v5714, 2147483648
    %v5717 = vxor.u32 %v5715, 2147483648
    %v5718 = vmul.f32 %v5716, 1.442695
    %v5719 = vpow.pop %v5718
    %v5720 = vmul.f32 %v5717, 1.442695
    %v5721 = vpow.pop %v5720
    %v5722 = vadd.f32 %v5719, 1.0
    %v5723 = vadd.f32 %v5721, 1.0
    %v5724 = vrcp.pop %v5722
    %v5725 = vmul.f32 1.0, %v5724
    %v5726 = vrcp.pop %v5723
    %v5727 = vmul.f32 1.0, %v5726
    %v5728 = vadd.f32 %v5684, %v5165
    %v5729 = vadd.f32 %v5686, %v5169
    %v5732 = vrot.slane %v5728, 4
    %v5733 = vrot.slane %v5729, 4
    %v5736 = vmul.f32 %v5705, %v5732
    %v5737 = vmul.f32 %v5707, %v5733
    %v5738 = vadd.f32 %v4908, %v5736
    %v5739 = vadd.f32 %v4909, %v5737
    %v5740 = vtanh.pop %v5738
    %v5741 = vtanh.pop %v5739
    %v5742 = vsub.f32 1.0, %v5725
    %v5743 = vsub.f32 1.0, %v5727
    %v5744 = vmul.f32 %v5742, %v5740
    %v5745 = vmul.f32 %v5743, %v5741
    %v5746 = vrot.slane %v5467, 6
    %v5747 = vrot.slane %v5468, 6
    %v5750 = vmul.f32 %v5725, %v5746
    %v5751 = vmul.f32 %v5727, %v5747
    %v5752 = vadd.f32 %v5744, %v5750
    %v5753 = vadd.f32 %v5745, %v5751
    %v5756 = vrot.slane %v5752, 4
    %v5757 = vrot.slane %v5753, 4
    %5760 = vmatprep.subr.mxu0 %v4941
    %5761 = vmatpush1.msra.mxu0 %v4940
    %5762 = vmatprep.subr.mxu0 %v4947
    %5763 = vmatpush1.msra.mxu0 %v4946
    %5764 = vmatprep.subr.mxu0 %v4953
    %5765 = vmatpush1.msra.mxu0 %v4952
    %5766 = vmatprep.subr.mxu0 %v4959
    %5767 = vmatpush1.msra.mxu0 %v4958
    %5768 = vmatprep.subr.mxu0 %v4965
    %5769 = vmatpush1.msra.mxu0 %v4964
    %5770 = vmatprep.subr.mxu0 %v4971
    %5771 = vmatpush1.msra.mxu0 %v4970
    %5772 = vmatprep.subr.mxu0 %v4977
    %5773 = vmatpush1.msra.mxu0 %v4976
    %5774 = vmatprep.subr.mxu0 %v4983
    %5775 = vmatpush1.msra.mxu0 %v4982
    %5776 = vmatprep.subr.mxu0 %v4989
    %5777 = vmatpush1.msra.mxu0 %v4988
    %5778 = vmatprep.subr.mxu0 %v4995
    %5779 = vmatpush1.msra.mxu0 %v4994
    %5780 = vmatprep.subr.mxu0 %v5001
    %5781 = vmatpush1.msra.mxu0 %v5000
    %5782 = vmatprep.subr.mxu0 %v5007
    %5783 = vmatpush1.msra.mxu0 %v5006
    %5784 = vmatprep.subr.mxu0 %v5013
    %5785 = vmatpush1.msra.mxu0 %v5012
    %5786 = vmatprep.subr.mxu0 %v5019
    %5787 = vmatpush1.msra.mxu0 %v5018
    %5788 = vmatprep.subr.mxu0 %v5025
    %5789 = vmatpush1.msra.mxu0 %v5024
    %5790 = vmatprep.subr.mxu0 %v5031
    %5791 = vmatpush1.msra.mxu0 %v5030
    %5792 = vmatprep.subr.mxu0 %v5037
    %5793 = vmatpush1.msra.mxu0 %v5036
    %5794 = vmatprep.subr.mxu0 %v5043
    %5795 = vmatpush1.msra.mxu0 %v5042
    %5796 = vmatprep.subr.mxu0 %v5049
    %5797 = vmatpush1.msra.mxu0 %v5048
    %5798 = vmatprep.subr.mxu0 %v5055
    %5799 = vmatpush1.msra.mxu0 %v5054
    %5800 = vmatprep.subr.mxu0 %v5061
    %5801 = vmatpush1.msra.mxu0 %v5060
    %5802 = vmatprep.subr.mxu0 %v5067
    %5803 = vmatpush1.msra.mxu0 %v5066
    %5804 = vmatprep.subr.mxu0 %v5073
    %5805 = vmatpush1.msra.mxu0 %v5072
    %5806 = vmatprep.subr.mxu0 %v5079
    %5807 = vmatpush1.msra.mxu0 %v5078
    %5808 = vmatprep.subr.mxu0 %v5085
    %5809 = vmatpush1.msra.mxu0 %v5084
    %5810 = vmatprep.subr.mxu0 %v5091
    %5811 = vmatpush1.msra.mxu0 %v5090
    %5812 = vmatprep.subr.mxu0 %v5097
    %5813 = vmatpush1.msra.mxu0 %v5096
    %5814 = vmatprep.subr.mxu0 %v5103
    %5815 = vmatpush1.msra.mxu0 %v5102
    %5816 = vmatprep.subr.mxu0 %v5109
    %5817 = vmatpush1.msra.mxu0 %v5108
    %5818 = vmatprep.subr.mxu0 %v5115
    %5819 = vmatpush1.msra.mxu0 %v5114
    %5820 = vmatprep.subr.mxu0 %v5121
    %5821 = vmatpush1.msra.mxu0 %v5120
    %5822 = vmatprep.subr.mxu0 %v5127
    %5823 = vmatpush1.msra.mxu0 %v5126
    %5824 = vmatprep.mubr.f32.mxu0 %v5757
    %5825 = vmatmul.mubr.f32.gmra.mrb[0].mxu0 %v5756
    %v5826 = vpop.f32.mrb[0].mxu0
    %v5827 = vadd.f32 0.0, %v5826
    %v5828 = vpop.f32.mrb[0].mxu0
    %v5829 = vadd.f32 0.0, %v5828
    %5830 = vdwg.mxu0
    %5831 = vmatprep.subr.mxu0 %v4943
    %5832 = vmatpush1.msra.mxu0 %v4942
    %5833 = vmatprep.subr.mxu0 %v4949
    %5834 = vmatpush1.msra.mxu0 %v4948
    %5835 = vmatprep.subr.mxu0 %v4955
    %5836 = vmatpush1.msra.mxu0 %v4954
    %5837 = vmatprep.subr.mxu0 %v4961
    %5838 = vmatpush1.msra.mxu0 %v4960
    %5839 = vmatprep.subr.mxu0 %v4967
    %5840 = vmatpush1.msra.mxu0 %v4966
    %5841 = vmatprep.subr.mxu0 %v4973
    %5842 = vmatpush1.msra.mxu0 %v4972
    %5843 = vmatprep.subr.mxu0 %v4979
    %5844 = vmatpush1.msra.mxu0 %v4978
    %5845 = vmatprep.subr.mxu0 %v4985
    %5846 = vmatpush1.msra.mxu0 %v4984
    %5847 = vmatprep.subr.mxu0 %v4991
    %5848 = vmatpush1.msra.mxu0 %v4990
    %5849 = vmatprep.subr.mxu0 %v4997
    %5850 = vmatpush1.msra.mxu0 %v4996
    %5851 = vmatprep.subr.mxu0 %v5003
    %5852 = vmatpush1.msra.mxu0 %v5002
    %5853 = vmatprep.subr.mxu0 %v5009
    %5854 = vmatpush1.msra.mxu0 %v5008
    %5855 = vmatprep.subr.mxu0 %v5015
    %5856 = vmatpush1.msra.mxu0 %v5014
    %5857 = vmatprep.subr.mxu0 %v5021
    %5858 = vmatpush1.msra.mxu0 %v5020
    %5859 = vmatprep.subr.mxu0 %v5027
    %5860 = vmatpush1.msra.mxu0 %v5026
    %5861 = vmatprep.subr.mxu0 %v5033
    %5862 = vmatpush1.msra.mxu0 %v5032
    %5863 = vmatprep.subr.mxu0 %v5039
    %5864 = vmatpush1.msra.mxu0 %v5038
    %5865 = vmatprep.subr.mxu0 %v5045
    %5866 = vmatpush1.msra.mxu0 %v5044
    %5867 = vmatprep.subr.mxu0 %v5051
    %5868 = vmatpush1.msra.mxu0 %v5050
    %5869 = vmatprep.subr.mxu0 %v5057
    %5870 = vmatpush1.msra.mxu0 %v5056
    %5871 = vmatprep.subr.mxu0 %v5063
    %5872 = vmatpush1.msra.mxu0 %v5062
    %5873 = vmatprep.subr.mxu0 %v5069
    %5874 = vmatpush1.msra.mxu0 %v5068
    %5875 = vmatprep.subr.mxu0 %v5075
    %5876 = vmatpush1.msra.mxu0 %v5074
    %5877 = vmatprep.subr.mxu0 %v5081
    %5878 = vmatpush1.msra.mxu0 %v5080
    %5879 = vmatprep.subr.mxu0 %v5087
    %5880 = vmatpush1.msra.mxu0 %v5086
    %5881 = vmatprep.subr.mxu0 %v5093
    %5882 = vmatpush1.msra.mxu0 %v5092
    %5883 = vmatprep.subr.mxu0 %v5099
    %5884 = vmatpush1.msra.mxu0 %v5098
    %5885 = vmatprep.subr.mxu0 %v5105
    %5886 = vmatpush1.msra.mxu0 %v5104
    %5887 = vmatprep.subr.mxu0 %v5111
    %5888 = vmatpush1.msra.mxu0 %v5110
    %5889 = vmatprep.subr.mxu0 %v5117
    %5890 = vmatpush1.msra.mxu0 %v5116
    %5891 = vmatprep.subr.mxu0 %v5123
    %5892 = vmatpush1.msra.mxu0 %v5122
    %5893 = vmatprep.subr.mxu0 %v5129
    %5894 = vmatpush1.msra.mxu0 %v5128
    %5895 = vmatprep.mubr.f32.mxu0 %v5757
    %5896 = vmatmul.mubr.f32.gmra.mrb[0].mxu0 %v5756
    %v5897 = vpop.f32.mrb[0].mxu0
    %v5898 = vadd.f32 0.0, %v5897
    %v5899 = vpop.f32.mrb[0].mxu0
    %v5900 = vadd.f32 0.0, %v5899
    %5901 = vdwg.mxu0
    %5902 = vmatprep.subr.mxu0 %v4945
    %5903 = vmatpush1.msra.mxu0 %v4944
    %5904 = vmatprep.subr.mxu0 %v4951
    %5905 = vmatpush1.msra.mxu0 %v4950
    %5906 = vmatprep.subr.mxu0 %v4957
    %5907 = vmatpush1.msra.mxu0 %v4956
    %5908 = vmatprep.subr.mxu0 %v4963
    %5909 = vmatpush1.msra.mxu0 %v4962
    %5910 = vmatprep.subr.mxu0 %v4969
    %5911 = vmatpush1.msra.mxu0 %v4968
    %5912 = vmatprep.subr.mxu0 %v4975
    %5913 = vmatpush1.msra.mxu0 %v4974
    %5914 = vmatprep.subr.mxu0 %v4981
    %5915 = vmatpush1.msra.mxu0 %v4980
    %5916 = vmatprep.subr.mxu0 %v4987
    %5917 = vmatpush1.msra.mxu0 %v4986
    %5918 = vmatprep.subr.mxu0 %v4993
    %5919 = vmatpush1.msra.mxu0 %v4992
    %5920 = vmatprep.subr.mxu0 %v4999
    %5921 = vmatpush1.msra.mxu0 %v4998
    %5922 = vmatprep.subr.mxu0 %v5005
    %5923 = vmatpush1.msra.mxu0 %v5004
    %5924 = vmatprep.subr.mxu0 %v5011
    %5925 = vmatpush1.msra.mxu0 %v5010
    %5926 = vmatprep.subr.mxu0 %v5017
    %5927 = vmatpush1.msra.mxu0 %v5016
    %5928 = vmatprep.subr.mxu0 %v5023
    %5929 = vmatpush1.msra.mxu0 %v5022
    %5930 = vmatprep.subr.mxu0 %v5029
    %5931 = vmatpush1.msra.mxu0 %v5028
    %5932 = vmatprep.subr.mxu0 %v5035
    %5933 = vmatpush1.msra.mxu0 %v5034
    %5934 = vmatprep.subr.mxu0 %v5041
    %5935 = vmatpush1.msra.mxu0 %v5040
    %5936 = vmatprep.subr.mxu0 %v5047
    %5937 = vmatpush1.msra.mxu0 %v5046
    %5938 = vmatprep.subr.mxu0 %v5053
    %5939 = vmatpush1.msra.mxu0 %v5052
    %5940 = vmatprep.subr.mxu0 %v5059
    %5941 = vmatpush1.msra.mxu0 %v5058
    %5942 = vmatprep.subr.mxu0 %v5065
    %5943 = vmatpush1.msra.mxu0 %v5064
    %5944 = vmatprep.subr.mxu0 %v5071
    %5945 = vmatpush1.msra.mxu0 %v5070
    %5946 = vmatprep.subr.mxu0 %v5077
    %5947 = vmatpush1.msra.mxu0 %v5076
    %5948 = vmatprep.subr.mxu0 %v5083
    %5949 = vmatpush1.msra.mxu0 %v5082
    %5950 = vmatprep.subr.mxu0 %v5089
    %5951 = vmatpush1.msra.mxu0 %v5088
    %5952 = vmatprep.subr.mxu0 %v5095
    %5953 = vmatpush1.msra.mxu0 %v5094
    %5954 = vmatprep.subr.mxu0 %v5101
    %5955 = vmatpush1.msra.mxu0 %v5100
    %5956 = vmatprep.subr.mxu0 %v5107
    %5957 = vmatpush1.msra.mxu0 %v5106
    %5958 = vmatprep.subr.mxu0 %v5113
    %5959 = vmatpush1.msra.mxu0 %v5112
    %5960 = vmatprep.subr.mxu0 %v5119
    %5961 = vmatpush1.msra.mxu0 %v5118
    %5962 = vmatprep.subr.mxu0 %v5125
    %5963 = vmatpush1.msra.mxu0 %v5124
    %5964 = vmatprep.subr.mxu0 %v5131
    %5965 = vmatpush1.msra.mxu0 %v5130
    %5966 = vmatprep.mubr.f32.mxu0 %v5757
    %5967 = vmatmul.mubr.f32.gmra.mrb[0].mxu0 %v5756
    %v5968 = vpop.f32.mrb[0].mxu0
    %v5969 = vadd.f32 0.0, %v5968
    %v5970 = vpop.f32.mrb[0].mxu0
    %v5971 = vadd.f32 0.0, %v5970
    %5972 = vdwg.mxu0
    %v5975 = vrot.slane %v5827, 2
    %v5976 = vrot.slane %v5829, 2
    %v5979 = vadd.f32 %v4922, %v5975
    %v5980 = vadd.f32 %v4923, %v5976
    %v5981 = vxor.u32 %v5979, 2147483648
    %v5982 = vxor.u32 %v5980, 2147483648
    %v5983 = vmul.f32 %v5981, 1.442695
    %v5984 = vpow.pop %v5983
    %v5985 = vmul.f32 %v5982, 1.442695
    %v5986 = vpow.pop %v5985
    %v5987 = vadd.f32 %v5984, 1.0
    %v5988 = vadd.f32 %v5986, 1.0
    %v5989 = vrcp.pop %v5987
    %v5990 = vmul.f32 1.0, %v5989
    %v5991 = vrcp.pop %v5988
    %v5992 = vmul.f32 1.0, %v5991
    %v5995 = vrot.slane %v5898, 2
    %v5996 = vrot.slane %v5900, 2
    %v5999 = vadd.f32 %v4924, %v5995
    %v6000 = vadd.f32 %v4925, %v5996
    %v6001 = vxor.u32 %v5999, 2147483648
    %v6002 = vxor.u32 %v6000, 2147483648
    %v6003 = vmul.f32 %v6001, 1.442695
    %v6004 = vpow.pop %v6003
    %v6005 = vmul.f32 %v6002, 1.442695
    %v6006 = vpow.pop %v6005
    %v6007 = vadd.f32 %v6004, 1.0
    %v6008 = vadd.f32 %v6006, 1.0
    %v6009 = vrcp.pop %v6007
    %v6010 = vmul.f32 1.0, %v6009
    %v6011 = vrcp.pop %v6008
    %v6012 = vmul.f32 1.0, %v6011
    %v6013 = vadd.f32 %v5969, %v5165
    %v6014 = vadd.f32 %v5971, %v5169
    %v6017 = vrot.slane %v6013, 2
    %v6018 = vrot.slane %v6014, 2
    %v6021 = vmul.f32 %v5990, %v6017
    %v6022 = vmul.f32 %v5992, %v6018
    %v6023 = vadd.f32 %v4926, %v6021
    %v6024 = vadd.f32 %v4927, %v6022
    %v6025 = vtanh.pop %v6023
    %v6026 = vtanh.pop %v6024
    %v6027 = vsub.f32 1.0, %v6010
    %v6028 = vsub.f32 1.0, %v6012
    %v6029 = vmul.f32 %v6027, %v6025
    %v6030 = vmul.f32 %v6028, %v6026
    %v6031 = vrot.slane %v5752, 6
    %v6032 = vrot.slane %v5753, 6
    %v6035 = vmul.f32 %v6010, %v6031
    %v6036 = vmul.f32 %v6012, %v6032
    %v6037 = vadd.f32 %v6029, %v6035
    %v6038 = vadd.f32 %v6030, %v6036
    %v6041 = vrot.slane %v6037, 6
    %v6042 = vrot.slane %v6038, 6
    %6045 = vmatprep.subr.mxu0 %v4941
    %6046 = vmatpush1.msra.mxu0 %v4940
    %6047 = vmatprep.subr.mxu0 %v4947
    %6048 = vmatpush1.msra.mxu0 %v4946
    %6049 = vmatprep.subr.mxu0 %v4953
    %6050 = vmatpush1.msra.mxu0 %v4952
    %6051 = vmatprep.subr.mxu0 %v4959
    %6052 = vmatpush1.msra.mxu0 %v4958
    %6053 = vmatprep.subr.mxu0 %v4965
    %6054 = vmatpush1.msra.mxu0 %v4964
    %6055 = vmatprep.subr.mxu0 %v4971
    %6056 = vmatpush1.msra.mxu0 %v4970
    %6057 = vmatprep.subr.mxu0 %v4977
    %6058 = vmatpush1.msra.mxu0 %v4976
    %6059 = vmatprep.subr.mxu0 %v4983
    %6060 = vmatpush1.msra.mxu0 %v4982
    %6061 = vmatprep.subr.mxu0 %v4989
    %6062 = vmatpush1.msra.mxu0 %v4988
    %6063 = vmatprep.subr.mxu0 %v4995
    %6064 = vmatpush1.msra.mxu0 %v4994
    %6065 = vmatprep.subr.mxu0 %v5001
    %6066 = vmatpush1.msra.mxu0 %v5000
    %6067 = vmatprep.subr.mxu0 %v5007
    %6068 = vmatpush1.msra.mxu0 %v5006
    %6069 = vmatprep.subr.mxu0 %v5013
    %6070 = vmatpush1.msra.mxu0 %v5012
    %6071 = vmatprep.subr.mxu0 %v5019
    %6072 = vmatpush1.msra.mxu0 %v5018
    %6073 = vmatprep.subr.mxu0 %v5025
    %6074 = vmatpush1.msra.mxu0 %v5024
    %6075 = vmatprep.subr.mxu0 %v5031
    %6076 = vmatpush1.msra.mxu0 %v5030
    %6077 = vmatprep.subr.mxu0 %v5037
    %6078 = vmatpush1.msra.mxu0 %v5036
    %6079 = vmatprep.subr.mxu0 %v5043
    %6080 = vmatpush1.msra.mxu0 %v5042
    %6081 = vmatprep.subr.mxu0 %v5049
    %6082 = vmatpush1.msra.mxu0 %v5048
    %6083 = vmatprep.subr.mxu0 %v5055
    %6084 = vmatpush1.msra.mxu0 %v5054
    %6085 = vmatprep.subr.mxu0 %v5061
    %6086 = vmatpush1.msra.mxu0 %v5060
    %6087 = vmatprep.subr.mxu0 %v5067
    %6088 = vmatpush1.msra.mxu0 %v5066
    %6089 = vmatprep.subr.mxu0 %v5073
    %6090 = vmatpush1.msra.mxu0 %v5072
    %6091 = vmatprep.subr.mxu0 %v5079
    %6092 = vmatpush1.msra.mxu0 %v5078
    %6093 = vmatprep.subr.mxu0 %v5085
    %6094 = vmatpush1.msra.mxu0 %v5084
    %6095 = vmatprep.subr.mxu0 %v5091
    %6096 = vmatpush1.msra.mxu0 %v5090
    %6097 = vmatprep.subr.mxu0 %v5097
    %6098 = vmatpush1.msra.mxu0 %v5096
    %6099 = vmatprep.subr.mxu0 %v5103
    %6100 = vmatpush1.msra.mxu0 %v5102
    %6101 = vmatprep.subr.mxu0 %v5109
    %6102 = vmatpush1.msra.mxu0 %v5108
    %6103 = vmatprep.subr.mxu0 %v5115
    %6104 = vmatpush1.msra.mxu0 %v5114
    %6105 = vmatprep.subr.mxu0 %v5121
    %6106 = vmatpush1.msra.mxu0 %v5120
    %6107 = vmatprep.subr.mxu0 %v5127
    %6108 = vmatpush1.msra.mxu0 %v5126
    %6109 = vmatprep.mubr.f32.mxu0 %v6042
    %6110 = vmatmul.mubr.f32.gmra.mrb[0].mxu0 %v6041
    %v6111 = vpop.f32.mrb[0].mxu0
    %v6112 = vadd.f32 0.0, %v6111
    %v6113 = vpop.f32.mrb[0].mxu0
    %v6114 = vadd.f32 0.0, %v6113
    %6115 = vdwg.mxu0
    %6116 = vmatprep.subr.mxu0 %v4943
    %6117 = vmatpush1.msra.mxu0 %v4942
    %6118 = vmatprep.subr.mxu0 %v4949
    %6119 = vmatpush1.msra.mxu0 %v4948
    %6120 = vmatprep.subr.mxu0 %v4955
    %6121 = vmatpush1.msra.mxu0 %v4954
    %6122 = vmatprep.subr.mxu0 %v4961
    %6123 = vmatpush1.msra.mxu0 %v4960
    %6124 = vmatprep.subr.mxu0 %v4967
    %6125 = vmatpush1.msra.mxu0 %v4966
    %6126 = vmatprep.subr.mxu0 %v4973
    %6127 = vmatpush1.msra.mxu0 %v4972
    %6128 = vmatprep.subr.mxu0 %v4979
    %6129 = vmatpush1.msra.mxu0 %v4978
    %6130 = vmatprep.subr.mxu0 %v4985
    %6131 = vmatpush1.msra.mxu0 %v4984
    %6132 = vmatprep.subr.mxu0 %v4991
    %6133 = vmatpush1.msra.mxu0 %v4990
    %6134 = vmatprep.subr.mxu0 %v4997
    %6135 = vmatpush1.msra.mxu0 %v4996
    %6136 = vmatprep.subr.mxu0 %v5003
    %6137 = vmatpush1.msra.mxu0 %v5002
    %6138 = vmatprep.subr.mxu0 %v5009
    %6139 = vmatpush1.msra.mxu0 %v5008
    %6140 = vmatprep.subr.mxu0 %v5015
    %6141 = vmatpush1.msra.mxu0 %v5014
    %6142 = vmatprep.subr.mxu0 %v5021
    %6143 = vmatpush1.msra.mxu0 %v5020
    %6144 = vmatprep.subr.mxu0 %v5027
    %6145 = vmatpush1.msra.mxu0 %v5026
    %6146 = vmatprep.subr.mxu0 %v5033
    %6147 = vmatpush1.msra.mxu0 %v5032
    %6148 = vmatprep.subr.mxu0 %v5039
    %6149 = vmatpush1.msra.mxu0 %v5038
    %6150 = vmatprep.subr.mxu0 %v5045
    %6151 = vmatpush1.msra.mxu0 %v5044
    %6152 = vmatprep.subr.mxu0 %v5051
    %6153 = vmatpush1.msra.mxu0 %v5050
    %6154 = vmatprep.subr.mxu0 %v5057
    %6155 = vmatpush1.msra.mxu0 %v5056
    %6156 = vmatprep.subr.mxu0 %v5063
    %6157 = vmatpush1.msra.mxu0 %v5062
    %6158 = vmatprep.subr.mxu0 %v5069
    %6159 = vmatpush1.msra.mxu0 %v5068
    %6160 = vmatprep.subr.mxu0 %v5075
    %6161 = vmatpush1.msra.mxu0 %v5074
    %6162 = vmatprep.subr.mxu0 %v5081
    %6163 = vmatpush1.msra.mxu0 %v5080
    %6164 = vmatprep.subr.mxu0 %v5087
    %6165 = vmatpush1.msra.mxu0 %v5086
    %6166 = vmatprep.subr.mxu0 %v5093
    %6167 = vmatpush1.msra.mxu0 %v5092
    %6168 = vmatprep.subr.mxu0 %v5099
    %6169 = vmatpush1.msra.mxu0 %v5098
    %6170 = vmatprep.subr.mxu0 %v5105
    %6171 = vmatpush1.msra.mxu0 %v5104
    %6172 = vmatprep.subr.mxu0 %v5111
    %6173 = vmatpush1.msra.mxu0 %v5110
    %6174 = vmatprep.subr.mxu0 %v5117
    %6175 = vmatpush1.msra.mxu0 %v5116
    %6176 = vmatprep.subr.mxu0 %v5123
    %6177 = vmatpush1.msra.mxu0 %v5122
    %6178 = vmatprep.subr.mxu0 %v5129
    %6179 = vmatpush1.msra.mxu0 %v5128
    %6180 = vmatprep.mubr.f32.mxu0 %v6042
    %6181 = vmatmul.mubr.f32.gmra.mrb[0].mxu0 %v6041
    %v6182 = vpop.f32.mrb[0].mxu0
    %v6183 = vadd.f32 0.0, %v6182
    %v6184 = vpop.f32.mrb[0].mxu0
    %v6185 = vadd.f32 0.0, %v6184
    %6186 = vdwg.mxu0
    %6187 = vmatprep.subr.mxu0 %v4945
    %6188 = vmatpush1.msra.mxu0 %v4944
    %6189 = vmatprep.subr.mxu0 %v4951
    %6190 = vmatpush1.msra.mxu0 %v4950
    %6191 = vmatprep.subr.mxu0 %v4957
    %6192 = vmatpush1.msra.mxu0 %v4956
    %6193 = vmatprep.subr.mxu0 %v4963
    %6194 = vmatpush1.msra.mxu0 %v4962
    %6195 = vmatprep.subr.mxu0 %v4969
    %6196 = vmatpush1.msra.mxu0 %v4968
    %6197 = vmatprep.subr.mxu0 %v4975
    %6198 = vmatpush1.msra.mxu0 %v4974
    %6199 = vmatprep.subr.mxu0 %v4981
    %6200 = vmatpush1.msra.mxu0 %v4980
    %6201 = vmatprep.subr.mxu0 %v4987
    %6202 = vmatpush1.msra.mxu0 %v4986
    %6203 = vmatprep.subr.mxu0 %v4993
    %6204 = vmatpush1.msra.mxu0 %v4992
    %6205 = vmatprep.subr.mxu0 %v4999
    %6206 = vmatpush1.msra.mxu0 %v4998
    %6207 = vmatprep.subr.mxu0 %v5005
    %6208 = vmatpush1.msra.mxu0 %v5004
    %6209 = vmatprep.subr.mxu0 %v5011
    %6210 = vmatpush1.msra.mxu0 %v5010
    %6211 = vmatprep.subr.mxu0 %v5017
    %6212 = vmatpush1.msra.mxu0 %v5016
    %6213 = vmatprep.subr.mxu0 %v5023
    %6214 = vmatpush1.msra.mxu0 %v5022
    %6215 = vmatprep.subr.mxu0 %v5029
    %6216 = vmatpush1.msra.mxu0 %v5028
    %6217 = vmatprep.subr.mxu0 %v5035
    %6218 = vmatpush1.msra.mxu0 %v5034
    %6219 = vmatprep.subr.mxu0 %v5041
    %6220 = vmatpush1.msra.mxu0 %v5040
    %6221 = vmatprep.subr.mxu0 %v5047
    %6222 = vmatpush1.msra.mxu0 %v5046
    %6223 = vmatprep.subr.mxu0 %v5053
    %6224 = vmatpush1.msra.mxu0 %v5052
    %6225 = vmatprep.subr.mxu0 %v5059
    %6226 = vmatpush1.msra.mxu0 %v5058
    %6227 = vmatprep.subr.mxu0 %v5065
    %6228 = vmatpush1.msra.mxu0 %v5064
    %6229 = vmatprep.subr.mxu0 %v5071
    %6230 = vmatpush1.msra.mxu0 %v5070
    %6231 = vmatprep.subr.mxu0 %v5077
    %6232 = vmatpush1.msra.mxu0 %v5076
    %6233 = vmatprep.subr.mxu0 %v5083
    %6234 = vmatpush1.msra.mxu0 %v5082
    %6235 = vmatprep.subr.mxu0 %v5089
    %6236 = vmatpush1.msra.mxu0 %v5088
    %6237 = vmatprep.subr.mxu0 %v5095
    %6238 = vmatpush1.msra.mxu0 %v5094
    %6239 = vmatprep.subr.mxu0 %v5101
    %6240 = vmatpush1.msra.mxu0 %v5100
    %6241 = vmatprep.subr.mxu0 %v5107
    %6242 = vmatpush1.msra.mxu0 %v5106
    %6243 = vmatprep.subr.mxu0 %v5113
    %6244 = vmatpush1.msra.mxu0 %v5112
    %6245 = vmatprep.subr.mxu0 %v5119
    %6246 = vmatpush1.msra.mxu0 %v5118
    %6247 = vmatprep.subr.mxu0 %v5125
    %6248 = vmatpush1.msra.mxu0 %v5124
    %6249 = vmatprep.subr.mxu0 %v5131
    %6250 = vmatpush1.msra.mxu0 %v5130
    %6251 = vmatprep.mubr.f32.mxu0 %v6042
    %6252 = vmatmul.mubr.f32.gmra.mrb[0].mxu0 %v6041
    %v6253 = vpop.f32.mrb[0].mxu0
    %v6254 = vadd.f32 0.0, %v6253
    %v6255 = vpop.f32.mrb[0].mxu0
    %v6256 = vadd.f32 0.0, %v6255
    %6257 = vdwg.mxu0
    %v6258 = vadd.f32 %v4928, %v6112
    %v6259 = vadd.f32 %v4929, %v6114
    %v6260 = vxor.u32 %v6258, 2147483648
    %v6261 = vxor.u32 %v6259, 2147483648
    %v6262 = vmul.f32 %v6260, 1.442695
    %v6263 = vpow.pop %v6262
    %v6264 = vmul.f32 %v6261, 1.442695
    %v6265 = vpow.pop %v6264
    %v6266 = vadd.f32 %v6263, 1.0
    %v6267 = vadd.f32 %v6265, 1.0
    %v6268 = vrcp.pop %v6266
    %v6269 = vmul.f32 1.0, %v6268
    %v6270 = vrcp.pop %v6267
    %v6271 = vmul.f32 1.0, %v6270
    %v6272 = vadd.f32 %v4930, %v6183
    %v6273 = vadd.f32 %v4931, %v6185
    %v6274 = vxor.u32 %v6272, 2147483648
    %v6275 = vxor.u32 %v6273, 2147483648
    %v6276 = vmul.f32 %v6274, 1.442695
    %v6277 = vpow.pop %v6276
    %v6278 = vmul.f32 %v6275, 1.442695
    %v6279 = vpow.pop %v6278
    %v6280 = vadd.f32 %v6277, 1.0
    %v6281 = vadd.f32 %v6279, 1.0
    %v6282 = vrcp.pop %v6280
    %v6283 = vmul.f32 1.0, %v6282
    %v6284 = vrcp.pop %v6281
    %v6285 = vmul.f32 1.0, %v6284
    %v6286 = vadd.f32 %v6254, %v5165
    %v6287 = vadd.f32 %v6256, %v5169
    %v6288 = vmul.f32 %v6269, %v6286
    %v6289 = vmul.f32 %v6271, %v6287
    %v6290 = vadd.f32 %v4932, %v6288
    %v6291 = vadd.f32 %v4933, %v6289
    %v6292 = vtanh.pop %v6290
    %v6293 = vtanh.pop %v6291
    %v6294 = vsub.f32 1.0, %v6283
    %v6295 = vsub.f32 1.0, %v6285
    %v6296 = vmul.f32 %v6294, %v6292
    %v6297 = vmul.f32 %v6295, %v6293
    %v6298 = vmul.f32 %v6283, %v6041
    %v6299 = vmul.f32 %v6285, %v6042
    %v6300 = vadd.f32 %v6296, %v6298
    %v6301 = vadd.f32 %v6297, %v6299
    %6302 = vmatprep.subr.mxu0 %v4941
    %6303 = vmatpush1.msra.mxu0 %v4940
    %6304 = vmatprep.subr.mxu0 %v4947
    %6305 = vmatpush1.msra.mxu0 %v4946
    %6306 = vmatprep.subr.mxu0 %v4953
    %6307 = vmatpush1.msra.mxu0 %v4952
    %6308 = vmatprep.subr.mxu0 %v4959
    %6309 = vmatpush1.msra.mxu0 %v4958
    %6310 = vmatprep.subr.mxu0 %v4965
    %6311 = vmatpush1.msra.mxu0 %v4964
    %6312 = vmatprep.subr.mxu0 %v4971
    %6313 = vmatpush1.msra.mxu0 %v4970
    %6314 = vmatprep.subr.mxu0 %v4977
    %6315 = vmatpush1.msra.mxu0 %v4976
    %6316 = vmatprep.subr.mxu0 %v4983
    %6317 = vmatpush1.msra.mxu0 %v4982
    %6318 = vmatprep.subr.mxu0 %v4989
    %6319 = vmatpush1.msra.mxu0 %v4988
    %6320 = vmatprep.subr.mxu0 %v4995
    %6321 = vmatpush1.msra.mxu0 %v4994
    %6322 = vmatprep.subr.mxu0 %v5001
    %6323 = vmatpush1.msra.mxu0 %v5000
    %6324 = vmatprep.subr.mxu0 %v5007
    %6325 = vmatpush1.msra.mxu0 %v5006
    %6326 = vmatprep.subr.mxu0 %v5013
    %6327 = vmatpush1.msra.mxu0 %v5012
    %6328 = vmatprep.subr.mxu0 %v5019
    %6329 = vmatpush1.msra.mxu0 %v5018
    %6330 = vmatprep.subr.mxu0 %v5025
    %6331 = vmatpush1.msra.mxu0 %v5024
    %6332 = vmatprep.subr.mxu0 %v5031
    %6333 = vmatpush1.msra.mxu0 %v5030
    %6334 = vmatprep.subr.mxu0 %v5037
    %6335 = vmatpush1.msra.mxu0 %v5036
    %6336 = vmatprep.subr.mxu0 %v5043
    %6337 = vmatpush1.msra.mxu0 %v5042
    %6338 = vmatprep.subr.mxu0 %v5049
    %6339 = vmatpush1.msra.mxu0 %v5048
    %6340 = vmatprep.subr.mxu0 %v5055
    %6341 = vmatpush1.msra.mxu0 %v5054
    %6342 = vmatprep.subr.mxu0 %v5061
    %6343 = vmatpush1.msra.mxu0 %v5060
    %6344 = vmatprep.subr.mxu0 %v5067
    %6345 = vmatpush1.msra.mxu0 %v5066
    %6346 = vmatprep.subr.mxu0 %v5073
    %6347 = vmatpush1.msra.mxu0 %v5072
    %6348 = vmatprep.subr.mxu0 %v5079
    %6349 = vmatpush1.msra.mxu0 %v5078
    %6350 = vmatprep.subr.mxu0 %v5085
    %6351 = vmatpush1.msra.mxu0 %v5084
    %6352 = vmatprep.subr.mxu0 %v5091
    %6353 = vmatpush1.msra.mxu0 %v5090
    %6354 = vmatprep.subr.mxu0 %v5097
    %6355 = vmatpush1.msra.mxu0 %v5096
    %6356 = vmatprep.subr.mxu0 %v5103
    %6357 = vmatpush1.msra.mxu0 %v5102
    %6358 = vmatprep.subr.mxu0 %v5109
    %6359 = vmatpush1.msra.mxu0 %v5108
    %6360 = vmatprep.subr.mxu0 %v5115
    %6361 = vmatpush1.msra.mxu0 %v5114
    %6362 = vmatprep.subr.mxu0 %v5121
    %6363 = vmatpush1.msra.mxu0 %v5120
    %6364 = vmatprep.subr.mxu0 %v5127
    %6365 = vmatpush1.msra.mxu0 %v5126
    %6366 = vmatprep.mubr.f32.mxu0 %v6301
    %6367 = vmatmul.mubr.f32.gmra.mrb[0].mxu0 %v6300
    %v6368 = vpop.f32.mrb[0].mxu0
    %v6369 = vadd.f32 0.0, %v6368
    %v6370 = vpop.f32.mrb[0].mxu0
    %v6371 = vadd.f32 0.0, %v6370
    %6372 = vdwg.mxu0
    %6373 = vmatprep.subr.mxu0 %v4943
    %6374 = vmatpush1.msra.mxu0 %v4942
    %6375 = vmatprep.subr.mxu0 %v4949
    %6376 = vmatpush1.msra.mxu0 %v4948
    %6377 = vmatprep.subr.mxu0 %v4955
    %6378 = vmatpush1.msra.mxu0 %v4954
    %6379 = vmatprep.subr.mxu0 %v4961
    %6380 = vmatpush1.msra.mxu0 %v4960
    %6381 = vmatprep.subr.mxu0 %v4967
    %6382 = vmatpush1.msra.mxu0 %v4966
    %6383 = vmatprep.subr.mxu0 %v4973
    %6384 = vmatpush1.msra.mxu0 %v4972
    %6385 = vmatprep.subr.mxu0 %v4979
    %6386 = vmatpush1.msra.mxu0 %v4978
    %6387 = vmatprep.subr.mxu0 %v4985
    %6388 = vmatpush1.msra.mxu0 %v4984
    %6389 = vmatprep.subr.mxu0 %v4991
    %6390 = vmatpush1.msra.mxu0 %v4990
    %6391 = vmatprep.subr.mxu0 %v4997
    %6392 = vmatpush1.msra.mxu0 %v4996
    %6393 = vmatprep.subr.mxu0 %v5003
    %6394 = vmatpush1.msra.mxu0 %v5002
    %6395 = vmatprep.subr.mxu0 %v5009
    %6396 = vmatpush1.msra.mxu0 %v5008
    %6397 = vmatprep.subr.mxu0 %v5015
    %6398 = vmatpush1.msra.mxu0 %v5014
    %6399 = vmatprep.subr.mxu0 %v5021
    %6400 = vmatpush1.msra.mxu0 %v5020
    %6401 = vmatprep.subr.mxu0 %v5027
    %6402 = vmatpush1.msra.mxu0 %v5026
    %6403 = vmatprep.subr.mxu0 %v5033
    %6404 = vmatpush1.msra.mxu0 %v5032
    %6405 = vmatprep.subr.mxu0 %v5039
    %6406 = vmatpush1.msra.mxu0 %v5038
    %6407 = vmatprep.subr.mxu0 %v5045
    %6408 = vmatpush1.msra.mxu0 %v5044
    %6409 = vmatprep.subr.mxu0 %v5051
    %6410 = vmatpush1.msra.mxu0 %v5050
    %6411 = vmatprep.subr.mxu0 %v5057
    %6412 = vmatpush1.msra.mxu0 %v5056
    %6413 = vmatprep.subr.mxu0 %v5063
    %6414 = vmatpush1.msra.mxu0 %v5062
    %6415 = vmatprep.subr.mxu0 %v5069
    %6416 = vmatpush1.msra.mxu0 %v5068
    %6417 = vmatprep.subr.mxu0 %v5075
    %6418 = vmatpush1.msra.mxu0 %v5074
    %6419 = vmatprep.subr.mxu0 %v5081
    %6420 = vmatpush1.msra.mxu0 %v5080
    %6421 = vmatprep.subr.mxu0 %v5087
    %6422 = vmatpush1.msra.mxu0 %v5086
    %6423 = vmatprep.subr.mxu0 %v5093
    %6424 = vmatpush1.msra.mxu0 %v5092
    %6425 = vmatprep.subr.mxu0 %v5099
    %6426 = vmatpush1.msra.mxu0 %v5098
    %6427 = vmatprep.subr.mxu0 %v5105
    %6428 = vmatpush1.msra.mxu0 %v5104
    %6429 = vmatprep.subr.mxu0 %v5111
    %6430 = vmatpush1.msra.mxu0 %v5110
    %6431 = vmatprep.subr.mxu0 %v5117
    %6432 = vmatpush1.msra.mxu0 %v5116
    %6433 = vmatprep.subr.mxu0 %v5123
    %6434 = vmatpush1.msra.mxu0 %v5122
    %6435 = vmatprep.subr.mxu0 %v5129
    %6436 = vmatpush1.msra.mxu0 %v5128
    %6437 = vmatprep.mubr.f32.mxu0 %v6301
    %6438 = vmatmul.mubr.f32.gmra.mrb[0].mxu0 %v6300
    %v6439 = vpop.f32.mrb[0].mxu0
    %v6440 = vadd.f32 0.0, %v6439
    %v6441 = vpop.f32.mrb[0].mxu0
    %v6442 = vadd.f32 0.0, %v6441
    %6443 = vdwg.mxu0
    %6444 = vmatprep.subr.mxu0 %v4945
    %6445 = vmatpush1.msra.mxu0 %v4944
    %6446 = vmatprep.subr.mxu0 %v4951
    %6447 = vmatpush1.msra.mxu0 %v4950
    %6448 = vmatprep.subr.mxu0 %v4957
    %6449 = vmatpush1.msra.mxu0 %v4956
    %6450 = vmatprep.subr.mxu0 %v4963
    %6451 = vmatpush1.msra.mxu0 %v4962
    %6452 = vmatprep.subr.mxu0 %v4969
    %6453 = vmatpush1.msra.mxu0 %v4968
    %6454 = vmatprep.subr.mxu0 %v4975
    %6455 = vmatpush1.msra.mxu0 %v4974
    %6456 = vmatprep.subr.mxu0 %v4981
    %6457 = vmatpush1.msra.mxu0 %v4980
    %6458 = vmatprep.subr.mxu0 %v4987
    %6459 = vmatpush1.msra.mxu0 %v4986
    %6460 = vmatprep.subr.mxu0 %v4993
    %6461 = vmatpush1.msra.mxu0 %v4992
    %6462 = vmatprep.subr.mxu0 %v4999
    %6463 = vmatpush1.msra.mxu0 %v4998
    %6464 = vmatprep.subr.mxu0 %v5005
    %6465 = vmatpush1.msra.mxu0 %v5004
    %6466 = vmatprep.subr.mxu0 %v5011
    %6467 = vmatpush1.msra.mxu0 %v5010
    %6468 = vmatprep.subr.mxu0 %v5017
    %6469 = vmatpush1.msra.mxu0 %v5016
    %6470 = vmatprep.subr.mxu0 %v5023
    %6471 = vmatpush1.msra.mxu0 %v5022
    %6472 = vmatprep.subr.mxu0 %v5029
    %6473 = vmatpush1.msra.mxu0 %v5028
    %6474 = vmatprep.subr.mxu0 %v5035
    %6475 = vmatpush1.msra.mxu0 %v5034
    %6476 = vmatprep.subr.mxu0 %v5041
    %6477 = vmatpush1.msra.mxu0 %v5040
    %6478 = vmatprep.subr.mxu0 %v5047
    %6479 = vmatpush1.msra.mxu0 %v5046
    %6480 = vmatprep.subr.mxu0 %v5053
    %6481 = vmatpush1.msra.mxu0 %v5052
    %6482 = vmatprep.subr.mxu0 %v5059
    %6483 = vmatpush1.msra.mxu0 %v5058
    %6484 = vmatprep.subr.mxu0 %v5065
    %6485 = vmatpush1.msra.mxu0 %v5064
    %6486 = vmatprep.subr.mxu0 %v5071
    %6487 = vmatpush1.msra.mxu0 %v5070
    %6488 = vmatprep.subr.mxu0 %v5077
    %6489 = vmatpush1.msra.mxu0 %v5076
    %6490 = vmatprep.subr.mxu0 %v5083
    %6491 = vmatpush1.msra.mxu0 %v5082
    %6492 = vmatprep.subr.mxu0 %v5089
    %6493 = vmatpush1.msra.mxu0 %v5088
    %6494 = vmatprep.subr.mxu0 %v5095
    %6495 = vmatpush1.msra.mxu0 %v5094
    %6496 = vmatprep.subr.mxu0 %v5101
    %6497 = vmatpush1.msra.mxu0 %v5100
    %6498 = vmatprep.subr.mxu0 %v5107
    %6499 = vmatpush1.msra.mxu0 %v5106
    %6500 = vmatprep.subr.mxu0 %v5113
    %6501 = vmatpush1.msra.mxu0 %v5112
    %6502 = vmatprep.subr.mxu0 %v5119
    %6503 = vmatpush1.msra.mxu0 %v5118
    %6504 = vmatprep.subr.mxu0 %v5125
    %6505 = vmatpush1.msra.mxu0 %v5124
    %6506 = vmatprep.subr.mxu0 %v5131
    %6507 = vmatpush1.msra.mxu0 %v5130
    %6508 = vmatprep.mubr.f32.mxu0 %v6301
    %6509 = vmatmul.mubr.f32.gmra.mrb[0].mxu0 %v6300
    %v6510 = vpop.f32.mrb[0].mxu0
    %v6511 = vadd.f32 0.0, %v6510
    %v6512 = vpop.f32.mrb[0].mxu0
    %v6513 = vadd.f32 0.0, %v6512
    %6514 = vdwg.mxu0
    %v6517 = vrot.slane %v6369, 6
    %v6518 = vrot.slane %v6371, 6
    %v6521 = vadd.f32 %v4934, %v6517
    %v6522 = vadd.f32 %v4935, %v6518
    %v6523 = vxor.u32 %v6521, 2147483648
    %v6524 = vxor.u32 %v6522, 2147483648
    %v6525 = vmul.f32 %v6523, 1.442695
    %v6526 = vpow.pop %v6525
    %v6527 = vmul.f32 %v6524, 1.442695
    %v6528 = vpow.pop %v6527
    %v6529 = vadd.f32 %v6526, 1.0
    %v6530 = vadd.f32 %v6528, 1.0
    %v6531 = vrcp.pop %v6529
    %v6532 = vmul.f32 1.0, %v6531
    %v6533 = vrcp.pop %v6530
    %v6534 = vmul.f32 1.0, %v6533
    %v6537 = vrot.slane %v6440, 6
    %v6538 = vrot.slane %v6442, 6
    %v6541 = vadd.f32 %v4936, %v6537
    %v6542 = vadd.f32 %v4937, %v6538
    %v6543 = vxor.u32 %v6541, 2147483648
    %v6544 = vxor.u32 %v6542, 2147483648
    %v6545 = vmul.f32 %v6543, 1.442695
    %v6546 = vpow.pop %v6545
    %v6547 = vmul.f32 %v6544, 1.442695
    %v6548 = vpow.pop %v6547
    %v6549 = vadd.f32 %v6546, 1.0
    %v6550 = vadd.f32 %v6548, 1.0
    %v6551 = vrcp.pop %v6549
    %v6552 = vmul.f32 1.0, %v6551
    %v6553 = vrcp.pop %v6550
    %v6554 = vmul.f32 1.0, %v6553
    %v6555 = vadd.f32 %v6511, %v5165
    %v6556 = vadd.f32 %v6513, %v5169
    %v6559 = vrot.slane %v6555, 6
    %v6560 = vrot.slane %v6556, 6
    %v6563 = vmul.f32 %v6532, %v6559
    %v6564 = vmul.f32 %v6534, %v6560
    %v6565 = vadd.f32 %v4938, %v6563
    %v6566 = vadd.f32 %v4939, %v6564
    %v6567 = vtanh.pop %v6565
    %v6568 = vtanh.pop %v6566
    %v6569 = vsub.f32 1.0, %v6552
    %v6570 = vsub.f32 1.0, %v6554
    %v6571 = vmul.f32 %v6569, %v6567
    %v6572 = vmul.f32 %v6570, %v6568
    %v6575 = vrot.slane %v6300, 6
    %v6576 = vrot.slane %v6301, 6
    %v6579 = vmul.f32 %v6552, %v6575
    %v6580 = vmul.f32 %v6554, %v6576
    %v6581 = vadd.f32 %v6571, %v6579
    %v6582 = vadd.f32 %v6572, %v6580
    %v6583 = vsel %vm4830, 1, 0
    %v6584 = vsel %vm4831, 1, 0
    %vm6585 = vcmp.eq.s32.totalorder %v6583, 1
    %vm6586 = vcmp.eq.s32.totalorder %v6584, 1
    %v6589 = vrot.slane %v6581, 2
    %v6590 = vrot.slane %v6582, 2
    %v6593 = vsel %vm6585, %v5186, %v6589
    %v6594 = vsel %vm6586, %v5187, %v6590
    %v6595 = vsel %vm6585, %v5467, %v6575
    %v6596 = vsel %vm6586, %v5468, %v6576
    %v6597 = vrot.slane %v6037, 2
    %v6598 = vrot.slane %v6038, 2
    %v6601 = vsel %vm6585, %v5752, %v6597
    %v6602 = vsel %vm6586, %v5753, %v6598
    %v6603 = vsel %vm6585, %v6037, %v6031
    %v6604 = vsel %vm6586, %v6038, %v6032
    %v6605 = vsel %vm6585, %v6300, %v5471
    %v6606 = vsel %vm6586, %v6301, %v5472
    %v6607 = vsel %vm6585, %v6581, %v5461
    %v6608 = vsel %vm6586, %v6582, %v5462
    %v6609 = vsel %vm4383, %v6593, %v6595
    %v6610 = vsel %vm4383, %v6594, %v6596
    %v6611 = vsel %vm4385, %v6609, %v6601
    %v6612 = vsel %vm4385, %v6610, %v6602
    %v6613 = vsel %vm4387, %v6611, %v6603
    %v6614 = vsel %vm4387, %v6612, %v6604
    %v6615 = vsel %vm4383, %v6605, %v6607
    %v6616 = vsel %vm4383, %v6606, %v6608
    %v6617 = vld [vmem:[#allocation19] sm:$0xff]
    %v6618 = vld [vmem:[#allocation19 + $0x8] sm:$0xf]
    %vm6619 = vcmask 97280
    %v6621 = vsel %vm6619, %v6617, 0
    %v6624 = vsel %vm6619, %v6618, 0
    %v6627 = vsel %vm4385, %v6615, 0
    %v6630 = vsel %vm4385, %v6616, 0
    %6632 = vmatprep.subr.mxu0 %v6614
    %6633 = vmatpush1.msra.mxu0 %v6613
    %6634 = vmatprep.subr.mxu0 %v6630
    %6635 = vmatpush1.msra.mxu0 %v6627
    %6636 = vmatprep.subr.mxu0 0.0
    %6637 = vmatpush1.msra.mxu0 0.0
    %6638 = vmatprep.subr.mxu0 0.0
    %6639 = vmatpush1.msra.mxu0 0.0
    %6640 = vmatprep.subr.mxu0 0.0
    %6641 = vmatpush1.msra.mxu0 0.0
    %6642 = vmatprep.subr.mxu0 0.0
    %6643 = vmatpush1.msra.mxu0 0.0
    %6644 = vmatprep.subr.mxu0 0.0
    %6645 = vmatpush1.msra.mxu0 0.0
    %6646 = vmatprep.subr.mxu0 0.0
    %6647 = vmatpush1.msra.mxu0 0.0
    %6648 = vmatprep.subr.mxu0 0.0
    %6649 = vmatpush1.msra.mxu0 0.0
    %6650 = vmatprep.subr.mxu0 0.0
    %6651 = vmatpush1.msra.mxu0 0.0
    %6652 = vmatprep.subr.mxu0 0.0
    %6653 = vmatpush1.msra.mxu0 0.0
    %6654 = vmatprep.subr.mxu0 0.0
    %6655 = vmatpush1.msra.mxu0 0.0
    %6656 = vmatprep.subr.mxu0 0.0
    %6657 = vmatpush1.msra.mxu0 0.0
    %6658 = vmatprep.subr.mxu0 0.0
    %6659 = vmatpush1.msra.mxu0 0.0
    %6660 = vmatprep.subr.mxu0 0.0
    %6661 = vmatpush1.msra.mxu0 0.0
    %6662 = vmatprep.subr.mxu0 0.0
    %6663 = vmatpush1.msra.mxu0 0.0
    %6664 = vmatprep.subr.mxu0 0.0
    %6665 = vmatpush1.msra.mxu0 0.0
    %6666 = vmatprep.subr.mxu0 0.0
    %6667 = vmatpush1.msra.mxu0 0.0
    %6668 = vmatprep.subr.mxu0 0.0
    %6669 = vmatpush1.msra.mxu0 0.0
    %6670 = vmatprep.subr.mxu0 0.0
    %6671 = vmatpush1.msra.mxu0 0.0
    %6672 = vmatprep.subr.mxu0 0.0
    %6673 = vmatpush1.msra.mxu0 0.0
    %6674 = vmatprep.subr.mxu0 0.0
    %6675 = vmatpush1.msra.mxu0 0.0
    %6676 = vmatprep.subr.mxu0 0.0
    %6677 = vmatpush1.msra.mxu0 0.0
    %6678 = vmatprep.subr.mxu0 0.0
    %6679 = vmatpush1.msra.mxu0 0.0
    %6680 = vmatprep.subr.mxu0 0.0
    %6681 = vmatpush1.msra.mxu0 0.0
    %6682 = vmatprep.subr.mxu0 0.0
    %6683 = vmatpush1.msra.mxu0 0.0
    %6684 = vmatprep.subr.mxu0 0.0
    %6685 = vmatpush1.msra.mxu0 0.0
    %6686 = vmatprep.subr.mxu0 0.0
    %6687 = vmatpush1.msra.mxu0 0.0
    %6688 = vmatprep.subr.mxu0 0.0
    %6689 = vmatpush1.msra.mxu0 0.0
    %6690 = vmatprep.subr.mxu0 0.0
    %6691 = vmatpush1.msra.mxu0 0.0
    %6692 = vmatprep.subr.mxu0 0.0
    %6693 = vmatpush1.msra.mxu0 0.0
    %6694 = vmatprep.subr.mxu0 0.0
    %6695 = vmatpush1.msra.mxu0 0.0
    %6696 = vmatprep.mubr.f32.mxu0 0.0
    %6697 = vmatmul.mubr.f32.gmra.mrb[0].mxu0 %v6621
    %v6698 = vpop.f32.mrb[0].mxu0
    %v6699 = vadd.f32 0.0, %v6698
    %v6700 = vpop.f32.mrb[0].mxu0
    %v6701 = vadd.f32 0.0, %v6700
    %6702 = vmatprep.mubr.f32.mxu0 0.0
    %6703 = vmatmul.mubr.f32.gmra.mrb[0].mxu0 %v6624
    %v6704 = vpop.f32.mrb[0].mxu0
    %v6705 = vadd.f32 0.0, %v6704
    %v6706 = vpop.f32.mrb[0].mxu0
    %v6707 = vadd.f32 0.0, %v6706
    %6708 = vdwg.mxu0
    %v6709 = vld [vmem:[#allocation21] sm:$0xff]
    %v6710 = vld [vmem:[#allocation21 + $0x8] sm:$0xff]
    %v6711 = vld [vmem:[#allocation21 + $0x10] sm:$0xff]
    %v6712 = vld [vmem:[#allocation21 + $0x18] sm:$0xff]
    %v6713 = vld [vmem:[#allocation21 + $0x20] sm:$0xff]
    %v6714 = vld [vmem:[#allocation21 + $0x28] sm:$0xff]
    %v6715 = vld [vmem:[#allocation21 + $0x30] sm:$0xff]
    %v6716 = vld [vmem:[#allocation21 + $0x38] sm:$0xff]
    %v6717 = vld [vmem:[#allocation21 + $0x40] sm:$0xff]
    %v6718 = vld [vmem:[#allocation21 + $0x48] sm:$0xff]
    %v6719 = vld [vmem:[#allocation21 + $0x50] sm:$0xff]
    %v6720 = vld [vmem:[#allocation21 + $0x58] sm:$0xff]
    %v6721 = vld [vmem:[#allocation21 + $0x60] sm:$0xff]
    %v6722 = vld [vmem:[#allocation21 + $0x68] sm:$0xff]
    %v6723 = vld [vmem:[#allocation21 + $0x70] sm:$0xff]
    %v6724 = vld [vmem:[#allocation21 + $0x78] sm:$0xff]
    %v6725 = vld [vmem:[#allocation21 + $0x80] sm:$0xff]
    %v6726 = vld [vmem:[#allocation21 + $0x88] sm:$0xff]
    %v6727 = vld [vmem:[#allocation21 + $0x90] sm:$0xff]
    %v6728 = vld [vmem:[#allocation21 + $0x98] sm:$0xff]
    %v6729 = vld [vmem:[#allocation21 + $0xa0] sm:$0xff]
    %v6730 = vld [vmem:[#allocation21 + $0xa8] sm:$0xff]
    %v6731 = vld [vmem:[#allocation21 + $0xb0] sm:$0xff]
    %v6732 = vld [vmem:[#allocation21 + $0xb8] sm:$0xff]
    %v6733 = vld [vmem:[#allocation21 + $0xc0] sm:$0xff]
    %v6734 = vld [vmem:[#allocation21 + $0xc8] sm:$0xff]
    %v6735 = vld [vmem:[#allocation21 + $0xd0] sm:$0xff]
    %v6736 = vld [vmem:[#allocation21 + $0xd8] sm:$0xff]
    %v6737 = vld [vmem:[#allocation21 + $0xe0] sm:$0xff]
    %v6738 = vld [vmem:[#allocation21 + $0xe8] sm:$0xff]
    %v6739 = vld [vmem:[#allocation21 + $0xf0] sm:$0xff]
    %v6740 = vld [vmem:[#allocation21 + $0xf8] sm:$0xff]
    %v6741 = vld [vmem:[#allocation21 + $0x100] sm:$0xff]
    %v6742 = vld [vmem:[#allocation21 + $0x108] sm:$0xff]
    %v6743 = vld [vmem:[#allocation21 + $0x110] sm:$0xff]
    %v6744 = vld [vmem:[#allocation21 + $0x118] sm:$0xff]
    %v6745 = vld [vmem:[#allocation21 + $0x120] sm:$0xff]
    %v6746 = vld [vmem:[#allocation21 + $0x128] sm:$0xff]
    %v6747 = vld [vmem:[#allocation21 + $0x130] sm:$0xff]
    %v6748 = vld [vmem:[#allocation21 + $0x138] sm:$0xff]
    %v6749 = vld [vmem:[#allocation21 + $0x140] sm:$0xff]
    %v6750 = vld [vmem:[#allocation21 + $0x148] sm:$0xff]
    %v6751 = vld [vmem:[#allocation21 + $0x150] sm:$0xff]
    %v6752 = vld [vmem:[#allocation21 + $0x158] sm:$0xff]
    %v6753 = vld [vmem:[#allocation21 + $0x160] sm:$0xff]
    %v6754 = vld [vmem:[#allocation21 + $0x168] sm:$0xff]
    %v6755 = vld [vmem:[#allocation21 + $0x170] sm:$0xff]
    %v6756 = vld [vmem:[#allocation21 + $0x178] sm:$0xff]
    %v6757 = vld [vmem:[#allocation21 + $0x180] sm:$0xff]
    %v6758 = vld [vmem:[#allocation21 + $0x188] sm:$0xff]
    %v6759 = vld [vmem:[#allocation21 + $0x190] sm:$0xff]
    %v6760 = vld [vmem:[#allocation21 + $0x198] sm:$0xff]
    %v6761 = vld [vmem:[#allocation21 + $0x1a0] sm:$0xff]
    %v6762 = vld [vmem:[#allocation21 + $0x1a8] sm:$0xff]
    %v6763 = vld [vmem:[#allocation21 + $0x1b0] sm:$0xff]
    %v6764 = vld [vmem:[#allocation21 + $0x1b8] sm:$0xff]
    %v6765 = vld [vmem:[#allocation21 + $0x1c0] sm:$0xff]
    %v6766 = vld [vmem:[#allocation21 + $0x1c8] sm:$0xff]
    %v6767 = vld [vmem:[#allocation21 + $0x1d0] sm:$0xff]
    %v6768 = vld [vmem:[#allocation21 + $0x1d8] sm:$0xff]
    %v6769 = vld [vmem:[#allocation21 + $0x1e0] sm:$0xff]
    %v6770 = vld [vmem:[#allocation21 + $0x1e8] sm:$0xff]
    %v6771 = vld [vmem:[#allocation21 + $0x1f0] sm:$0xff]
    %v6772 = vld [vmem:[#allocation21 + $0x1f8] sm:$0xff]
    %v6773 = vld [vmem:[#allocation22] sm:$0x3]
    %v6775 = vlaneseq
    %v6776 = vshrl.u32 %v6775, 7
    %v6777 = vsub.s32 0, %v6776
    %v6778 = vrot.slane %v6773, %v6777
    %v6779 = vlaneseq
    %v6780 = vshrl.u32 %v6779, 7
    %v6781 = vsub.s32 1, %v6780
    %v6782 = vrot.slane %v6773, %v6781
    %6785 = vmatprep.subr.mxu0 %v6710
    %6786 = vmatpush1.msra.mxu0 %v6709
    %6787 = vmatprep.subr.mxu0 %v6712
    %6788 = vmatpush1.msra.mxu0 %v6711
    %6789 = vmatprep.subr.mxu0 %v6714
    %6790 = vmatpush1.msra.mxu0 %v6713
    %6791 = vmatprep.subr.mxu0 %v6716
    %6792 = vmatpush1.msra.mxu0 %v6715
    %6793 = vmatprep.subr.mxu0 %v6718
    %6794 = vmatpush1.msra.mxu0 %v6717
    %6795 = vmatprep.subr.mxu0 %v6720
    %6796 = vmatpush1.msra.mxu0 %v6719
    %6797 = vmatprep.subr.mxu0 %v6722
    %6798 = vmatpush1.msra.mxu0 %v6721
    %6799 = vmatprep.subr.mxu0 %v6724
    %6800 = vmatpush1.msra.mxu0 %v6723
    %6801 = vmatprep.subr.mxu0 %v6726
    %6802 = vmatpush1.msra.mxu0 %v6725
    %6803 = vmatprep.subr.mxu0 %v6728
    %6804 = vmatpush1.msra.mxu0 %v6727
    %6805 = vmatprep.subr.mxu0 %v6730
    %6806 = vmatpush1.msra.mxu0 %v6729
    %6807 = vmatprep.subr.mxu0 %v6732
    %6808 = vmatpush1.msra.mxu0 %v6731
    %6809 = vmatprep.subr.mxu0 %v6734
    %6810 = vmatpush1.msra.mxu0 %v6733
    %6811 = vmatprep.subr.mxu0 %v6736
    %6812 = vmatpush1.msra.mxu0 %v6735
    %6813 = vmatprep.subr.mxu0 %v6738
    %6814 = vmatpush1.msra.mxu0 %v6737
    %6815 = vmatprep.subr.mxu0 %v6740
    %6816 = vmatpush1.msra.mxu0 %v6739
    %6817 = vmatprep.subr.mxu0 %v6742
    %6818 = vmatpush1.msra.mxu0 %v6741
    %6819 = vmatprep.subr.mxu0 %v6744
    %6820 = vmatpush1.msra.mxu0 %v6743
    %6821 = vmatprep.subr.mxu0 %v6746
    %6822 = vmatpush1.msra.mxu0 %v6745
    %6823 = vmatprep.subr.mxu0 %v6748
    %6824 = vmatpush1.msra.mxu0 %v6747
    %6825 = vmatprep.subr.mxu0 %v6750
    %6826 = vmatpush1.msra.mxu0 %v6749
    %6827 = vmatprep.subr.mxu0 %v6752
    %6828 = vmatpush1.msra.mxu0 %v6751
    %6829 = vmatprep.subr.mxu0 %v6754
    %6830 = vmatpush1.msra.mxu0 %v6753
    %6831 = vmatprep.subr.mxu0 %v6756
    %6832 = vmatpush1.msra.mxu0 %v6755
    %6833 = vmatprep.subr.mxu0 %v6758
    %6834 = vmatpush1.msra.mxu0 %v6757
    %6835 = vmatprep.subr.mxu0 %v6760
    %6836 = vmatpush1.msra.mxu0 %v6759
    %6837 = vmatprep.subr.mxu0 %v6762
    %6838 = vmatpush1.msra.mxu0 %v6761
    %6839 = vmatprep.subr.mxu0 %v6764
    %6840 = vmatpush1.msra.mxu0 %v6763
    %6841 = vmatprep.subr.mxu0 %v6766
    %6842 = vmatpush1.msra.mxu0 %v6765
    %6843 = vmatprep.subr.mxu0 %v6768
    %6844 = vmatpush1.msra.mxu0 %v6767
    %6845 = vmatprep.subr.mxu0 %v6770
    %6846 = vmatpush1.msra.mxu0 %v6769
    %6847 = vmatprep.subr.mxu0 %v6772
    %6848 = vmatpush1.msra.mxu0 %v6771
    %6849 = vmatprep.mubr.f32.mxu0 %v6701
    %6850 = vmatmul.mubr.f32.gmra.mrb[0].mxu0 %v6699
    %v6851 = vpop.f32.mrb[0].mxu0
    %v6852 = vadd.f32 %v6778, %v6851
    %v6853 = vpop.f32.mrb[0].mxu0
    %v6854 = vadd.f32 %v6782, %v6853
    %6855 = vmatprep.mubr.f32.mxu0 %v6707
    %6856 = vmatmul.mubr.f32.gmra.mrb[0].mxu0 %v6705
    %v6857 = vpop.f32.mrb[0].mxu0
    %v6858 = vadd.f32 %v6778, %v6857
    %v6859 = vpop.f32.mrb[0].mxu0
    %v6860 = vadd.f32 %v6782, %v6859
    %6861 = vdwg.mxu0
    %v6862 = vmul.f32 %v6852, 0.5
    %v6863 = vmul.f32 %v6854, 0.5
    %v6864 = vmul.f32 %v6858, 0.5
    %v6865 = vmul.f32 %v6860, 0.5
    %v6866 = vmul.f32 %v6852, 0.70710677
    %v6867 = vmul.f32 %v6854, 0.70710677
    %v6868 = vmul.f32 %v6858, 0.70710677
    %v6869 = vmul.f32 %v6860, 0.70710677
    %v6870 = verf.f32.pop %v6866
    %v6871 = verf.f32.pop %v6867
    %v6872 = verf.f32.pop %v6868
    %v6873 = verf.f32.pop %v6869
    %v6874 = vadd.f32 %v6870, 1.0
    %v6875 = vadd.f32 %v6871, 1.0
    %v6876 = vadd.f32 %v6872, 1.0
    %v6877 = vadd.f32 %v6873, 1.0
    %v6878 = vmul.f32 %v6862, %v6874
    %v6879 = vmul.f32 %v6863, %v6875
    %v6880 = vmul.f32 %v6864, %v6876
    %v6881 = vmul.f32 %v6865, %v6877
    %v6882 = vld [vmem:[#allocation24] sm:$0xff]
    %v6883 = vld [vmem:[#allocation24 + $0x8] sm:$0xff]
    %v6884 = vld [vmem:[#allocation24 + $0x10] sm:$0xff]
    %v6885 = vld [vmem:[#allocation24 + $0x18] sm:$0xff]
    %v6886 = vld [vmem:[#allocation24 + $0x20] sm:$0xff]
    %v6887 = vld [vmem:[#allocation24 + $0x28] sm:$0xff]
    %v6888 = vld [vmem:[#allocation24 + $0x30] sm:$0xff]
    %v6889 = vld [vmem:[#allocation24 + $0x38] sm:$0xff]
    %v6890 = vld [vmem:[#allocation24 + $0x40] sm:$0xff]
    %v6891 = vld [vmem:[#allocation24 + $0x48] sm:$0xff]
    %v6892 = vld [vmem:[#allocation24 + $0x50] sm:$0xff]
    %v6893 = vld [vmem:[#allocation24 + $0x58] sm:$0xff]
    %v6894 = vld [vmem:[#allocation24 + $0x60] sm:$0xff]
    %v6895 = vld [vmem:[#allocation24 + $0x68] sm:$0xff]
    %v6896 = vld [vmem:[#allocation24 + $0x70] sm:$0xff]
    %v6897 = vld [vmem:[#allocation24 + $0x78] sm:$0xff]
    %v6898 = vld [vmem:[#allocation24 + $0x80] sm:$0xff]
    %v6899 = vld [vmem:[#allocation24 + $0x88] sm:$0xff]
    %v6900 = vld [vmem:[#allocation24 + $0x90] sm:$0xff]
    %v6901 = vld [vmem:[#allocation24 + $0x98] sm:$0xff]
    %v6902 = vld [vmem:[#allocation24 + $0xa0] sm:$0xff]
    %v6903 = vld [vmem:[#allocation24 + $0xa8] sm:$0xff]
    %v6904 = vld [vmem:[#allocation24 + $0xb0] sm:$0xff]
    %v6905 = vld [vmem:[#allocation24 + $0xb8] sm:$0xff]
    %v6906 = vld [vmem:[#allocation24 + $0xc0] sm:$0xff]
    %v6907 = vld [vmem:[#allocation24 + $0xc8] sm:$0xff]
    %v6908 = vld [vmem:[#allocation24 + $0xd0] sm:$0xff]
    %v6909 = vld [vmem:[#allocation24 + $0xd8] sm:$0xff]
    %v6910 = vld [vmem:[#allocation24 + $0xe0] sm:$0xff]
    %v6911 = vld [vmem:[#allocation24 + $0xe8] sm:$0xff]
    %v6912 = vld [vmem:[#allocation24 + $0xf0] sm:$0xff]
    %v6913 = vld [vmem:[#allocation24 + $0xf8] sm:$0xff]
    %v6914 = vld [vmem:[#allocation25] sm:$0x1]
    %v6916 = vlaneseq
    %v6917 = vshrl.u32 %v6916, 7
    %v6918 = vsub.s32 0, %v6917
    %v6919 = vrot.slane %v6914, %v6918
    %6921 = vmatprep.subr.mxu0 0.0
    %6922 = vmatpush1.msra.mxu0 %v6882
    %6923 = vmatprep.subr.mxu0 0.0
    %6924 = vmatpush1.msra.mxu0 %v6883
    %6925 = vmatprep.subr.mxu0 0.0
    %6926 = vmatpush1.msra.mxu0 %v6884
    %6927 = vmatprep.subr.mxu0 0.0
    %6928 = vmatpush1.msra.mxu0 %v6885
    %6929 = vmatprep.subr.mxu0 0.0
    %6930 = vmatpush1.msra.mxu0 %v6886
    %6931 = vmatprep.subr.mxu0 0.0
    %6932 = vmatpush1.msra.mxu0 %v6887
    %6933 = vmatprep.subr.mxu0 0.0
    %6934 = vmatpush1.msra.mxu0 %v6888
    %6935 = vmatprep.subr.mxu0 0.0
    %6936 = vmatpush1.msra.mxu0 %v6889
    %6937 = vmatprep.subr.mxu0 0.0
    %6938 = vmatpush1.msra.mxu0 %v6890
    %6939 = vmatprep.subr.mxu0 0.0
    %6940 = vmatpush1.msra.mxu0 %v6891
    %6941 = vmatprep.subr.mxu0 0.0
    %6942 = vmatpush1.msra.mxu0 %v6892
    %6943 = vmatprep.subr.mxu0 0.0
    %6944 = vmatpush1.msra.mxu0 %v6893
    %6945 = vmatprep.subr.mxu0 0.0
    %6946 = vmatpush1.msra.mxu0 %v6894
    %6947 = vmatprep.subr.mxu0 0.0
    %6948 = vmatpush1.msra.mxu0 %v6895
    %6949 = vmatprep.subr.mxu0 0.0
    %6950 = vmatpush1.msra.mxu0 %v6896
    %6951 = vmatprep.subr.mxu0 0.0
    %6952 = vmatpush1.msra.mxu0 %v6897
    %6953 = vmatprep.subr.mxu0 0.0
    %6954 = vmatpush1.msra.mxu0 %v6898
    %6955 = vmatprep.subr.mxu0 0.0
    %6956 = vmatpush1.msra.mxu0 %v6899
    %6957 = vmatprep.subr.mxu0 0.0
    %6958 = vmatpush1.msra.mxu0 %v6900
    %6959 = vmatprep.subr.mxu0 0.0
    %6960 = vmatpush1.msra.mxu0 %v6901
    %6961 = vmatprep.subr.mxu0 0.0
    %6962 = vmatpush1.msra.mxu0 %v6902
    %6963 = vmatprep.subr.mxu0 0.0
    %6964 = vmatpush1.msra.mxu0 %v6903
    %6965 = vmatprep.subr.mxu0 0.0
    %6966 = vmatpush1.msra.mxu0 %v6904
    %6967 = vmatprep.subr.mxu0 0.0
    %6968 = vmatpush1.msra.mxu0 %v6905
    %6969 = vmatprep.subr.mxu0 0.0
    %6970 = vmatpush1.msra.mxu0 %v6906
    %6971 = vmatprep.subr.mxu0 0.0
    %6972 = vmatpush1.msra.mxu0 %v6907
    %6973 = vmatprep.subr.mxu0 0.0
    %6974 = vmatpush1.msra.mxu0 %v6908
    %6975 = vmatprep.subr.mxu0 0.0
    %6976 = vmatpush1.msra.mxu0 %v6909
    %6977 = vmatprep.subr.mxu0 0.0
    %6978 = vmatpush1.msra.mxu0 %v6910
    %6979 = vmatprep.subr.mxu0 0.0
    %6980 = vmatpush1.msra.mxu0 %v6911
    %6981 = vmatprep.subr.mxu0 0.0
    %6982 = vmatpush1.msra.mxu0 %v6912
    %6983 = vmatprep.subr.mxu0 0.0
    %6984 = vmatpush1.msra.mxu0 %v6913
    %6985 = vmatprep.mubr.f32.mxu0 %v6879
    %6986 = vmatmul.mubr.f32.gmra.mrb[0].mxu0 %v6878
    %v6987 = vpop.f32.mrb[0].mxu0
    %v6988 = vadd.f32 %v6919, %v6987
    %v6989 = vpop.f32.mrb[0].mxu0
    %6990 = vmatprep.mubr.f32.mxu0 %v6881
    %6991 = vmatmul.mubr.f32.gmra.mrb[0].mxu0 %v6880
    %v6992 = vpop.f32.mrb[0].mxu0
    %v6993 = vadd.f32 %v6919, %v6992
    %v6994 = vpop.f32.mrb[0].mxu0
    %6995 = vdwg.mxu0
    %vm6996 = vcmp.ge.s32.totalorder %v3326, 3
    %vm6997 = vcmp.lt.s32.totalorder %v3326, 6
    %vm6998 = vmand %vm6996, %vm6997
    %v6999 = vsub.f32 %v6988, 5.0
    %v7000 = vsub.f32 %v6993, 5.0
    %v7001 = vmul.f32 %v6999, 1.442695
    %v7002 = vpow.pop %v7001
    %v7003 = vmul.f32 %v7000, 1.442695
    %v7004 = vpow.pop %v7003
    %v7005 = vsel %vm6998, %v7002, %v6988
    %v7006 = vsel %vm6998, %v7004, %v6993
    %7007 = vst [vmem:[%s22] sm:$0xff] %v7005
    %7008 = vst [vmem:[%s22 + $0x8] sm:$0xf] %v7006
    // Predicated region
    $region154: #{codenet_motion_with_rot_forward.1} parent=1 // pred_check
      _
    $region155: #{codenet_motion_with_rot_forward.1} parent=1 // pred_check_branch
      %7010 = sbr.rel (0) target = $region157
    $region156: #{codenet_motion_with_rot_forward.1} parent=1 // pred_region
      _
    $region157: #{codenet_motion_with_rot_forward.1} parent=1 // pred_fallthru
      _
    // Predicated region
    $region158: #{codenet_motion_with_rot_forward.1} parent=1 // pred_check
      _
    $region159: #{codenet_motion_with_rot_forward.1} parent=1 // pred_check_branch
      %7012 = sbr.rel (0) target = $region161
    $region160: #{codenet_motion_with_rot_forward.1} parent=1 // pred_region
      _
    $region161: #{codenet_motion_with_rot_forward.1} parent=1 // pred_fallthru
      _
    %7013 = vsyncpa [#allocation3], 1
    %7014 = vsyncpa [#allocation5], 1
    %7015 = vsyncpa [#allocation8], 1
    %7016 = vsyncpa [#allocation11], 1
    %7017 = vsyncpa [#allocation14], 1
    %7018 = vsyncpa [#allocation17], 1
    %7019 = vsyncpa [#allocation20], 1
    %7020 = vsyncpa [#allocation23], 1
    %7021 = vsyncpa [#allocation26], 1

</llo_original>
